<compile_context>
chip_gen: v6e
topology: v6e:2x2x1
jax: 0.10.0
libtpu: 0.0.40
codegen_flags: <defaults>
</compile_context>

<pallas_src>
import functools

import jax
import jax.numpy as jnp
import numpy as np
from jax.experimental import pallas as pl
from jax.experimental.pallas import tpu as pltpu


# ------------------------------------------------------------------ utilities
def _layernorm(x, g, b, eps=1e-5):
    mu = jnp.mean(x, axis=-1, keepdims=True)
    var = jnp.mean((x - mu) ** 2, axis=-1, keepdims=True)
    return (x - mu) * jax.lax.rsqrt(var + eps) * g + b


def _round_up(x, m):
    return ((x + m - 1) // m) * m


def _chip_config():
    """Generation-aware tiling / precision knobs."""
    try:
        kind = jax.devices()[0].device_kind.lower()
    except Exception:  # pragma: no cover
        kind = ""
    if "v7" in kind:
        # 64 MiB VMEM / TC, 2 TCs: small batch tile, tight limit, chunked MLP.
        return dict(block_b=8, vmem=48 * 1024 * 1024, mlp_chunks=2, gelu_bf16=True)
    if "v5" in kind or "v4" in kind or "v3" in kind:
        # No native bf16 VPU/EUP -> keep elementwise math in f32; MXU-bound.
        return dict(block_b=16, vmem=96 * 1024 * 1024, mlp_chunks=1, gelu_bf16=False)
    # v6e (and default): 128 MiB VMEM, bf16 VPU/EUP -> bigger tile, bf16 GELU.
    return dict(block_b=16, vmem=96 * 1024 * 1024, mlp_chunks=1, gelu_bf16=True)


# ------------------------------- fused transformer stack + ln_final + project
def layer_kernel(eot_ref,                                    # SMEM (B_pad,) i32
                 x_ref, pe_ref, mask_ref,
                 ln1g_ref, ln1b_ref, wqkv_ref, bqkv_ref, wo_ref, bo_ref,
                 ln2g_ref, ln2b_ref, wfc_ref, bfc_ref, wproj_ref, bproj_ref,
                 lnf_g_ref, lnf_b_ref, tproj_ref,
                 o_ref, xs_ref, *, num_heads, gelu_bf16, mlp_chunks):
    bt = pl.program_id(0)
    l = pl.program_id(1)
    n_layers = pl.num_programs(1)

    TB, S, D = x_ref.shape
    H = num_heads
    Dh = D // H
    M = TB * S
    scale = 1.0 / (Dh ** 0.5)

    # First layer: load the activations and fold in the positional embedding.
    @pl.when(l == 0)
    def _():
        x0 = x_ref[...].astype(jnp.float32) + pe_ref[...][None, :, :]
        xs_ref[...] = x0.reshape(M, D)

    x = xs_ref[...]                                          # (M, D) f32 carry

    # ---- attention branch (pre-LN, causal mask as in CLIP) ----
    h = _layernorm(x, ln1g_ref[0], ln1b_ref[0])
    qkv = jnp.einsum('md,de->me', h.astype(jnp.bfloat16), wqkv_ref[0],
                     preferred_element_type=jnp.float32) + bqkv_ref[0]  # (M,3D)

    # head split: (TB,S,3D) -> (TB,3D,S) batched minor transpose, then
    # per-head (TB*H, Dh, S) slabs via tile-aligned reshapes only.
    qkv_t = jnp.transpose(qkv.reshape(TB, S, 3 * D), (0, 2, 1))          # (TB,3D,S)
    q = qkv_t[:, 0 * D:1 * D, :].reshape(TB * H, Dh, S)
    k = qkv_t[:, 1 * D:2 * D, :].reshape(TB * H, Dh, S)
    v = qkv_t[:, 2 * D:3 * D, :].reshape(TB * H, Dh, S)

    q_bf = (q * scale).astype(jnp.bfloat16)       # 1/sqrt(Dh) folded into cast
    s = jnp.einsum('ndq,ndk->nqk', q_bf, k.astype(jnp.bfloat16),
                   preferred_element_type=jnp.float32)                   # (N,S,S)
    s = s + mask_ref[...][None, :, :]
    m = jnp.max(s, axis=-1, keepdims=True)
    p = jnp.exp(s - m)
    p = p * pl.reciprocal(jnp.sum(p, axis=-1, keepdims=True), approx=True)

    ctx = jnp.einsum('ndk,nqk->ndq', v.astype(jnp.bfloat16),
                     p.astype(jnp.bfloat16),
                     preferred_element_type=jnp.float32)                  # (N,Dh,S)
    ctx = jnp.transpose(ctx.reshape(TB, D, S), (0, 2, 1)).reshape(M, D)

    attn = jnp.einsum('md,de->me', ctx.astype(jnp.bfloat16), wo_ref[0],
                      preferred_element_type=jnp.float32) + bo_ref[0]
    x = x + attn

    # ---- MLP branch (pre-LN, QuickGELU), optionally chunked over hidden 4D ----
    h2 = _layernorm(x, ln2g_ref[0], ln2b_ref[0])
    h2_bf = h2.astype(jnp.bfloat16)

    def quickgelu_bf16(fc):
        if gelu_bf16:
            fcb = fc.astype(jnp.bfloat16)
            return fcb * jax.nn.sigmoid(1.702 * fcb)
        return (fc * jax.nn.sigmoid(1.702 * fc)).astype(jnp.bfloat16)

    if mlp_chunks == 1:
        fc = jnp.einsum('md,df->mf', h2_bf, wfc_ref[0],
                        preferred_element_type=jnp.float32) + bfc_ref[0]
        mlp = jnp.einsum('mf,fd->md', quickgelu_bf16(fc), wproj_ref[0],
                         preferred_element_type=jnp.float32)
    else:
        w_fc = wfc_ref[0]
        w_pj = wproj_ref[0]
        b_fc = bfc_ref[0]
        F = w_fc.shape[-1]
        chunk = F // mlp_chunks
        mlp = jnp.zeros((M, D), jnp.float32)
        for c in range(mlp_chunks):
            lo, hi = c * chunk, (c + 1) * chunk
            fc = jnp.einsum('md,df->mf', h2_bf, w_fc[:, lo:hi],
                            preferred_element_type=jnp.float32) + b_fc[:, lo:hi]
            mlp = mlp + jnp.einsum('mf,fd->md', quickgelu_bf16(fc), w_pj[lo:hi, :],
                                   preferred_element_type=jnp.float32)
    x = x + mlp + bproj_ref[0]

    xs_ref[...] = x                                           # carry to next layer

    # ---- last layer: gather EOT rows, ln_final + text projection, store (TB,P)
    @pl.when(l == n_layers - 1)
    def _():
        rows = []
        for b in range(TB):
            e = eot_ref[bt * TB + b]
            rows.append(xs_ref[pl.ds(b * S + e, 1), :])
        x_eot = jnp.concatenate(rows, axis=0)                 # (TB, D) f32
        hf = _layernorm(x_eot, lnf_g_ref[...], lnf_b_ref[...])
        o_ref[...] = jnp.dot(hf.astype(jnp.bfloat16), tproj_ref[...],
                             preferred_element_type=jnp.float32).astype(o_ref.dtype)


# -------------------------------------------------------------- full forward
_STACKED_NAMES = ('ln1_g', 'ln1_b', 'w_qkv', 'b_qkv', 'w_o', 'b_o',
                  'ln2_g', 'ln2_b', 'w_fc', 'b_fc', 'w_proj', 'b_proj')


def text_encoder_forward(prompts, tokenized_prompts, params, *, block_b=None):
    B, S, D = prompts.shape
    H = params['num_heads']
    L = params['w_qkv'].shape[0]
    P = params['text_projection'].shape[1]

    cfg = _chip_config()
    if block_b is None:
        block_b = min(cfg['block_b'], _round_up(B, 8))
    B_pad = _round_up(B, block_b)

    # EOT indices (argmax over token ids), to SMEM via scalar prefetch.
    eot = jnp.argmax(tokenized_prompts, axis=-1).astype(jnp.int32)
    if B_pad != B:
        prompts = jnp.pad(prompts, ((0, B_pad - B), (0, 0), (0, 0)))
        eot = jnp.pad(eot, (0, B_pad - B))

    # causal attention mask, built once outside the layer grid
    idx = jnp.arange(S)
    mask = jnp.where(idx[None, :] > idx[:, None],
                     jnp.float32(-1e30), jnp.float32(0.0))

    stacked = [params[n] for n in _STACKED_NAMES]

    def stacked_spec(arr):
        nd = arr.ndim - 1
        return pl.BlockSpec((1,) + arr.shape[1:],
                            lambda bt, l, e, _n=nd: (l,) + (0,) * _n)

    def full_spec(arr):
        return pl.BlockSpec(arr.shape, lambda bt, l, e, _n=arr.ndim: (0,) * _n)

    mlp_chunks = cfg['mlp_chunks']
    if params['w_fc'].shape[-1] % mlp_chunks != 0:
        mlp_chunks = 1

    kernel = functools.partial(layer_kernel, num_heads=H,
                               gelu_bf16=cfg['gelu_bf16'], mlp_chunks=mlp_chunks)

    out = pl.pallas_call(
        kernel,
        out_shape=jax.ShapeDtypeStruct((B_pad, P), prompts.dtype),
        grid_spec=pltpu.PrefetchScalarGridSpec(
            num_scalar_prefetch=1,
            grid=(B_pad // block_b, L),
            in_specs=[pl.BlockSpec((block_b, S, D), lambda bt, l, e: (bt, 0, 0)),
                      pl.BlockSpec((S, D), lambda bt, l, e: (0, 0)),
                      pl.BlockSpec((S, S), lambda bt, l, e: (0, 0))]
                     + [stacked_spec(a) for a in stacked]
                     + [full_spec(params['ln_final_g']),
                        full_spec(params['ln_final_b']),
                        full_spec(params['text_projection'])],
            out_specs=pl.BlockSpec((block_b, P), lambda bt, l, e: (bt, 0)),
            scratch_shapes=[pltpu.VMEM((block_b * S, D), jnp.float32)]),
        compiler_params=pltpu.CompilerParams(
            dimension_semantics=("parallel", "arbitrary"),
            vmem_limit_bytes=cfg['vmem']),
    )(eot, prompts, params['pos_emb'], mask, *stacked,
      params['ln_final_g'], params['ln_final_b'], params['text_projection'])

    return out[:B]


# --------------------------------------------------- deterministic init + ref
def init_params(key, *, depth, d_model, n_head, seq_len, proj_dim):
    D = d_model
    ks = jax.random.split(key, 10)

    def rnd(k, shape, scale=0.05, dtype=jnp.float32):
        return (jax.random.normal(k, shape, jnp.float32) * scale).astype(dtype)

    # Weights stored in the [L, in, out] layout (pre-transposed once, HBM-side).
    return dict(
        num_heads=n_head,
        pos_emb=rnd(ks[0], (seq_len, D), 0.01),
        ln1_g=jnp.ones((depth, 1, D), jnp.float32),
        ln1_b=jnp.zeros((depth, 1, D), jnp.float32),
        w_qkv=rnd(ks[1], (depth, D, 3 * D), dtype=jnp.bfloat16),
        b_qkv=rnd(ks[2], (depth, 1, 3 * D), 0.02),
        w_o=rnd(ks[3], (depth, D, D), dtype=jnp.bfloat16),
        b_o=rnd(ks[4], (depth, 1, D), 0.02),
        ln2_g=jnp.ones((depth, 1, D), jnp.float32),
        ln2_b=jnp.zeros((depth, 1, D), jnp.float32),
        w_fc=rnd(ks[5], (depth, D, 4 * D), dtype=jnp.bfloat16),
        b_fc=rnd(ks[6], (depth, 1, 4 * D), 0.02),
        w_proj=rnd(ks[7], (depth, 4 * D, D), dtype=jnp.bfloat16),
        b_proj=rnd(ks[8], (depth, 1, D), 0.02),
        ln_final_g=jnp.ones((1, D), jnp.float32),
        ln_final_b=jnp.zeros((1, D), jnp.float32),
        text_projection=rnd(ks[9], (D, proj_dim), dtype=jnp.bfloat16),
    )


def reference_forward(prompts, tokenized_prompts, params):
    """Pure-JAX (f32 math, same bf16 weight values) mirror of the PyTorch forward."""
    H = params['num_heads']
    x = prompts + params['pos_emb']
    B, S, D = x.shape
    Dh = D // H
    L = params['w_qkv'].shape[0]
    mask = jnp.where(jnp.arange(S)[None, :] > jnp.arange(S)[:, None],
                     jnp.float32(-1e30), jnp.float32(0.0))
    f32 = lambda a: a.astype(jnp.float32)

    def ln(x, g, b):
        mu = x.mean(-1, keepdims=True)
        var = ((x - mu) ** 2).mean(-1, keepdims=True)
        return (x - mu) / jnp.sqrt(var + 1e-5) * g + b

    for i in range(L):
        h = ln(x, params['ln1_g'][i], params['ln1_b'][i])
        qkv = h @ f32(params['w_qkv'][i]) + params['b_qkv'][i]
        q, k, v = qkv[..., :D], qkv[..., D:2 * D], qkv[..., 2 * D:]
        q = q.reshape(B, S, H, Dh).transpose(0, 2, 1, 3)
        k = k.reshape(B, S, H, Dh).transpose(0, 2, 1, 3)
        v = v.reshape(B, S, H, Dh).transpose(0, 2, 1, 3)
        s = (q @ k.transpose(0, 1, 3, 2)) / jnp.sqrt(Dh) + mask
        a = jax.nn.softmax(s, axis=-1)
        o = (a @ v).transpose(0, 2, 1, 3).reshape(B, S, D)
        x = x + o @ f32(params['w_o'][i]) + params['b_o'][i]
        h2 = ln(x, params['ln2_g'][i], params['ln2_b'][i])
        f = h2 @ f32(params['w_fc'][i]) + params['b_fc'][i]
        f = f * jax.nn.sigmoid(1.702 * f)
        x = x + f @ f32(params['w_proj'][i]) + params['b_proj'][i]
    x = ln(x, params['ln_final_g'], params['ln_final_b'])
    eot = jnp.argmax(tokenized_prompts, axis=-1)
    return x[jnp.arange(B), eot] @ f32(params['text_projection'])


# ---------------------------------------------------------------------- main
if __name__ == "__main__":
    B, S, D, H, L, P = 2, 8, 32, 4, 2, 64   # batch, seq, width, heads, layers, proj
    key = jax.random.PRNGKey(0)
    k_prompt, k_param, k_tok = jax.random.split(key, 3)

    params = init_params(k_param, depth=L, d_model=D, n_head=H,
                         seq_len=S, proj_dim=P)
    prompts = jax.random.normal(k_prompt, (B, S, D), jnp.float32)

    # tokenized prompts: random ids with a dominant EOT token at known positions
    tok = jax.random.randint(k_tok, (B, S), 1, 100)
    tok = tok.at[jnp.arange(B), jnp.array([5, 7])].set(1000)

    out = text_encoder_forward(prompts, tok, params)
    out = jax.block_until_ready(out)

    ref = reference_forward(prompts, tok, params)
    assert out.shape == (B, P)
    # bf16 matmul inputs + approx reciprocal + (v6e/v7x) bf16 QuickGELU vs f32
    # reference -> looser tolerance.
    np.testing.assert_allclose(np.asarray(out), np.asarray(ref),
                               rtol=3e-2, atol=3e-2)
    print("KERNEL_OK")
</pallas_src>

<mosaic_0001>
module attributes {stable_mosaic.version = 11 : i64} {
  func.func @layer_kernel(%arg0: i32, %arg1: i32, %arg2: memref<8xi32, #tpu.memory_space<smem>>, %arg3: memref<8x8x32xf32, #tpu.memory_space<vmem>>, %arg4: memref<8x32xf32, #tpu.memory_space<vmem>>, %arg5: memref<8x8xf32, #tpu.memory_space<vmem>>, %arg6: memref<1x1x32xf32, #tpu.memory_space<vmem>>, %arg7: memref<1x1x32xf32, #tpu.memory_space<vmem>>, %arg8: memref<1x32x96xbf16, #tpu.memory_space<vmem>>, %arg9: memref<1x1x96xf32, #tpu.memory_space<vmem>>, %arg10: memref<1x32x32xbf16, #tpu.memory_space<vmem>>, %arg11: memref<1x1x32xf32, #tpu.memory_space<vmem>>, %arg12: memref<1x1x32xf32, #tpu.memory_space<vmem>>, %arg13: memref<1x1x32xf32, #tpu.memory_space<vmem>>, %arg14: memref<1x32x128xbf16, #tpu.memory_space<vmem>>, %arg15: memref<1x1x128xf32, #tpu.memory_space<vmem>>, %arg16: memref<1x128x32xbf16, #tpu.memory_space<vmem>>, %arg17: memref<1x1x32xf32, #tpu.memory_space<vmem>>, %arg18: memref<1x32xf32, #tpu.memory_space<vmem>>, %arg19: memref<1x32xf32, #tpu.memory_space<vmem>>, %arg20: memref<32x64xbf16, #tpu.memory_space<vmem>>, %arg21: memref<8x64xf32, #tpu.memory_space<vmem>>, %arg22: memref<64x32xf32, #tpu.memory_space<vmem>>) attributes {dimension_semantics = [#tpu.dimension_semantics<parallel>, #tpu.dimension_semantics<arbitrary>], iteration_bounds = array<i64: 1, 2>, scalar_prefetch = 1 : i64, scratch_operands = 1 : i64, tpu.core_type = #tpu.core_type<tc>, window_params = [{transform_indices = @transform_0, window_bounds = array<i64: 8, 8, 32>}, {pipeline_mode = #tpu.pipeline_mode<synchronous>, transform_indices = @transform_1, window_bounds = array<i64: 8, 32>}, {pipeline_mode = #tpu.pipeline_mode<synchronous>, transform_indices = @transform_2, window_bounds = array<i64: 8, 8>}, {transform_indices = @transform_3, window_bounds = array<i64: 1, 1, 32>}, {transform_indices = @transform_4, window_bounds = array<i64: 1, 1, 32>}, {transform_indices = @transform_5, window_bounds = array<i64: 1, 32, 96>}, {transform_indices = @transform_6, window_bounds = array<i64: 1, 1, 96>}, {transform_indices = @transform_7, window_bounds = array<i64: 1, 32, 32>}, {transform_indices = @transform_8, window_bounds = array<i64: 1, 1, 32>}, {transform_indices = @transform_9, window_bounds = array<i64: 1, 1, 32>}, {transform_indices = @transform_10, window_bounds = array<i64: 1, 1, 32>}, {transform_indices = @transform_11, window_bounds = array<i64: 1, 32, 128>}, {transform_indices = @transform_12, window_bounds = array<i64: 1, 1, 128>}, {transform_indices = @transform_13, window_bounds = array<i64: 1, 128, 32>}, {transform_indices = @transform_14, window_bounds = array<i64: 1, 1, 32>}, {pipeline_mode = #tpu.pipeline_mode<synchronous>, transform_indices = @transform_15, window_bounds = array<i64: 1, 32>}, {pipeline_mode = #tpu.pipeline_mode<synchronous>, transform_indices = @transform_16, window_bounds = array<i64: 1, 32>}, {pipeline_mode = #tpu.pipeline_mode<synchronous>, transform_indices = @transform_17, window_bounds = array<i64: 32, 64>}, {transform_indices = @transform_18, window_bounds = array<i64: 8, 64>}]} {
    %c0_i32 = arith.constant 0 : i32
    %0 = arith.cmpi eq, %arg1, %c0_i32 : i32
    %1 = arith.extui %0 : i1 to i32
    %c0_i32_0 = arith.constant 0 : i32
    %2 = arith.cmpi ne, %1, %c0_i32_0 : i32
    scf.if %2 {
      %c0_63 = arith.constant 0 : index
      %c0_64 = arith.constant 0 : index
      %c0_65 = arith.constant 0 : index
      %135 = vector.load %arg3[%c0_63, %c0_64, %c0_65] : memref<8x8x32xf32, #tpu.memory_space<vmem>>, vector<8x8x32xf32>
      %c0_66 = arith.constant 0 : index
      %c0_67 = arith.constant 0 : index
      %136 = vector.load %arg4[%c0_66, %c0_67] : memref<8x32xf32, #tpu.memory_space<vmem>>, vector<8x32xf32>
      %137 = vector.shape_cast %136 : vector<8x32xf32> to vector<1x8x32xf32>
      %138 = vector.broadcast %137 : vector<1x8x32xf32> to vector<8x8x32xf32>
      %139 = arith.addf %135, %138 : vector<8x8x32xf32>
      %140 = vector.shape_cast %139 : vector<8x8x32xf32> to vector<64x32xf32>
      %c0_68 = arith.constant 0 : index
      %c0_69 = arith.constant 0 : index
      %141 = vector.load %arg22[%c0_68, %c0_69] : memref<64x32xf32, #tpu.memory_space<vmem>>, vector<64x32xf32>
      tpu.vector_store %arg22[%c0_68, %c0_69], %140 {strides = array<i32>} : memref<64x32xf32, #tpu.memory_space<vmem>>, vector<64x32xf32>,
    } else {
    }
    %c0 = arith.constant 0 : index
    %c0_1 = arith.constant 0 : index
    %3 = vector.load %arg22[%c0, %c0_1] : memref<64x32xf32, #tpu.memory_space<vmem>>, vector<64x32xf32>
    %c0_2 = arith.constant 0 : index
    %c0_3 = arith.constant 0 : index
    %c0_4 = arith.constant 0 : index
    %4 = vector.load %arg6[%c0_2, %c0_3, %c0_4] : memref<1x1x32xf32, #tpu.memory_space<vmem>>, vector<1x1x32xf32>
    %5 = vector.shape_cast %4 : vector<1x1x32xf32> to vector<1x32xf32>
    %c0_5 = arith.constant 0 : index
    %c0_6 = arith.constant 0 : index
    %c0_7 = arith.constant 0 : index
    %6 = vector.load %arg7[%c0_5, %c0_6, %c0_7] : memref<1x1x32xf32, #tpu.memory_space<vmem>>, vector<1x1x32xf32>
    %7 = vector.shape_cast %6 : vector<1x1x32xf32> to vector<1x32xf32>
    %cst = arith.constant dense<0.000000e+00> : vector<64xf32>
    %8 = vector.multi_reduction <add>, %3, %cst [1] : vector<64x32xf32> to vector<64xf32>
    %9 = vector.shape_cast %8 : vector<64xf32> to vector<64x1xf32>
    %cst_8 = arith.constant 3.200000e+01 : f32
    %10 = vector.broadcast %cst_8 : f32 to vector<64x1xf32>
    %11 = arith.divf %9, %10 : vector<64x1xf32>
    %12 = vector.broadcast %11 : vector<64x1xf32> to vector<64x32xf32>
    %13 = arith.subf %3, %12 : vector<64x32xf32>
    %14 = arith.mulf %13, %13 : vector<64x32xf32>
    %cst_9 = arith.constant dense<0.000000e+00> : vector<64xf32>
    %15 = vector.multi_reduction <add>, %14, %cst_9 [1] : vector<64x32xf32> to vector<64xf32>
    %16 = vector.shape_cast %15 : vector<64xf32> to vector<64x1xf32>
    %cst_10 = arith.constant 3.200000e+01 : f32
    %17 = vector.broadcast %cst_10 : f32 to vector<64x1xf32>
    %18 = arith.divf %16, %17 : vector<64x1xf32>
    %19 = vector.broadcast %11 : vector<64x1xf32> to vector<64x32xf32>
    %20 = arith.subf %3, %19 : vector<64x32xf32>
    %cst_11 = arith.constant 9.99999974E-6 : f32
    %21 = vector.broadcast %cst_11 : f32 to vector<64x1xf32>
    %22 = arith.addf %18, %21 : vector<64x1xf32>
    %23 = math.rsqrt %22 : vector<64x1xf32>
    %24 = vector.broadcast %23 : vector<64x1xf32> to vector<64x32xf32>
    %25 = arith.mulf %20, %24 : vector<64x32xf32>
    %26 = vector.broadcast %5 : vector<1x32xf32> to vector<64x32xf32>
    %27 = arith.mulf %25, %26 : vector<64x32xf32>
    %28 = vector.broadcast %7 : vector<1x32xf32> to vector<64x32xf32>
    %29 = arith.addf %27, %28 : vector<64x32xf32>
    %30 = arith.truncf %29 : vector<64x32xf32> to vector<64x32xbf16>
    %c0_12 = arith.constant 0 : index
    %c0_13 = arith.constant 0 : index
    %c0_14 = arith.constant 0 : index
    %31 = vector.load %arg8[%c0_12, %c0_13, %c0_14] : memref<1x32x96xbf16, #tpu.memory_space<vmem>>, vector<1x32x96xbf16>
    %32 = vector.shape_cast %31 : vector<1x32x96xbf16> to vector<32x96xbf16>
    "tpu.trace_start"() <{level = 10 : i32, message = "md,de->me"}> : () -> ()
    %cst_15 = arith.constant dense<0.000000e+00> : vector<64x96xf32>
    %33 = tpu.matmul %30, %32, %cst_15 {dimension_numbers = #tpu.dot_dimension_numbers<[1], [0], [0], [1], [0, 0, 1, 1], [], []>} : vector<64x32xbf16>, vector<32x96xbf16>, vector<64x96xf32> -> vector<64x96xf32>
    "tpu.trace_stop"() : () -> ()
    %c0_16 = arith.constant 0 : index
    %c0_17 = arith.constant 0 : index
    %c0_18 = arith.constant 0 : index
    %34 = vector.load %arg9[%c0_16, %c0_17, %c0_18] : memref<1x1x96xf32, #tpu.memory_space<vmem>>, vector<1x1x96xf32>
    %35 = vector.shape_cast %34 : vector<1x1x96xf32> to vector<1x96xf32>
    %36 = vector.broadcast %35 : vector<1x96xf32> to vector<64x96xf32>
    %37 = arith.addf %33, %36 : vector<64x96xf32>
    %38 = vector.shape_cast %37 : vector<64x96xf32> to vector<8x8x96xf32>
    %39 = tpu.transpose %38, [0, 2, 1] : vector<8x8x96xf32> -> vector<8x96x8xf32>
    %40 = vector.extract_strided_slice %39 {offsets = [0, 0, 0], sizes = [8, 32, 8], strides = [1, 1, 1]} : vector<8x96x8xf32> to vector<8x32x8xf32>
    %41 = vector.shape_cast %40 : vector<8x32x8xf32> to vector<32x8x8xf32>
    %42 = vector.extract_strided_slice %39 {offsets = [0, 32, 0], sizes = [8, 32, 8], strides = [1, 1, 1]} : vector<8x96x8xf32> to vector<8x32x8xf32>
    %43 = vector.shape_cast %42 : vector<8x32x8xf32> to vector<32x8x8xf32>
    %44 = vector.extract_strided_slice %39 {offsets = [0, 64, 0], sizes = [8, 32, 8], strides = [1, 1, 1]} : vector<8x96x8xf32> to vector<8x32x8xf32>
    %45 = vector.shape_cast %44 : vector<8x32x8xf32> to vector<32x8x8xf32>
    %cst_19 = arith.constant 0.353553385 : f32
    %46 = vector.broadcast %cst_19 : f32 to vector<32x8x8xf32>
    %47 = arith.mulf %41, %46 : vector<32x8x8xf32>
    %48 = arith.truncf %47 : vector<32x8x8xf32> to vector<32x8x8xbf16>
    %49 = arith.truncf %43 : vector<32x8x8xf32> to vector<32x8x8xbf16>
    "tpu.trace_start"() <{level = 10 : i32, message = "ndq,ndk->nqk"}> : () -> ()
    %cst_20 = arith.constant dense<0.000000e+00> : vector<32x8x8xf32>
    %50 = tpu.matmul %48, %49, %cst_20 {dimension_numbers = #tpu.dot_dimension_numbers<[1], [1], [2], [2], [0, 0, 0, 2, 1, 2], [0], [0]>} : vector<32x8x8xbf16>, vector<32x8x8xbf16>, vector<32x8x8xf32> -> vector<32x8x8xf32>
    "tpu.trace_stop"() : () -> ()
    %c0_21 = arith.constant 0 : index
    %c0_22 = arith.constant 0 : index
    %51 = vector.load %arg5[%c0_21, %c0_22] : memref<8x8xf32, #tpu.memory_space<vmem>>, vector<8x8xf32>
    %52 = vector.shape_cast %51 : vector<8x8xf32> to vector<1x8x8xf32>
    %53 = vector.broadcast %52 : vector<1x8x8xf32> to vector<32x8x8xf32>
    %54 = arith.addf %50, %53 : vector<32x8x8xf32>
    %cst_23 = arith.constant dense<0xFF800000> : vector<32x8xf32>
    %55 = vector.multi_reduction <maximumf>, %54, %cst_23 [2] : vector<32x8x8xf32> to vector<32x8xf32>
    %56 = vector.shape_cast %55 : vector<32x8xf32> to vector<32x8x1xf32>
    %57 = vector.broadcast %56 : vector<32x8x1xf32> to vector<32x8x8xf32>
    %58 = arith.subf %54, %57 : vector<32x8x8xf32>
    %59 = math.exp %58 : vector<32x8x8xf32>
    %cst_24 = arith.constant dense<0.000000e+00> : vector<32x8xf32>
    %60 = vector.multi_reduction <add>, %59, %cst_24 [2] : vector<32x8x8xf32> to vector<32x8xf32>
    %61 = vector.shape_cast %60 : vector<32x8xf32> to vector<32x8x1xf32>
    %62 = tpu.reciprocal %61 {approx = true} : vector<32x8x1xf32> -> vector<32x8x1xf32>
    %63 = vector.broadcast %62 : vector<32x8x1xf32> to vector<32x8x8xf32>
    %64 = arith.mulf %59, %63 : vector<32x8x8xf32>
    %65 = arith.truncf %45 : vector<32x8x8xf32> to vector<32x8x8xbf16>
    %66 = arith.truncf %64 : vector<32x8x8xf32> to vector<32x8x8xbf16>
    "tpu.trace_start"() <{level = 10 : i32, message = "ndk,nqk->ndq"}> : () -> ()
    %cst_25 = arith.constant dense<0.000000e+00> : vector<32x8x8xf32>
    %67 = tpu.matmul %65, %66, %cst_25 {dimension_numbers = #tpu.dot_dimension_numbers<[2], [2], [1], [1], [0, 0, 0, 1, 1, 1], [0], [0]>} : vector<32x8x8xbf16>, vector<32x8x8xbf16>, vector<32x8x8xf32> -> vector<32x8x8xf32>
    "tpu.trace_stop"() : () -> ()
    %68 = vector.shape_cast %67 : vector<32x8x8xf32> to vector<8x32x8xf32>
    %69 = tpu.transpose %68, [0, 2, 1] : vector<8x32x8xf32> -> vector<8x8x32xf32>
    %70 = vector.shape_cast %69 : vector<8x8x32xf32> to vector<64x32xf32>
    %71 = arith.truncf %70 : vector<64x32xf32> to vector<64x32xbf16>
    %c0_26 = arith.constant 0 : index
    %c0_27 = arith.constant 0 : index
    %c0_28 = arith.constant 0 : index
    %72 = vector.load %arg10[%c0_26, %c0_27, %c0_28] : memref<1x32x32xbf16, #tpu.memory_space<vmem>>, vector<1x32x32xbf16>
    %73 = vector.shape_cast %72 : vector<1x32x32xbf16> to vector<32x32xbf16>
    "tpu.trace_start"() <{level = 10 : i32, message = "md,de->me"}> : () -> ()
    %cst_29 = arith.constant dense<0.000000e+00> : vector<64x32xf32>
    %74 = tpu.matmul %71, %73, %cst_29 {dimension_numbers = #tpu.dot_dimension_numbers<[1], [0], [0], [1], [0, 0, 1, 1], [], []>} : vector<64x32xbf16>, vector<32x32xbf16>, vector<64x32xf32> -> vector<64x32xf32>
    "tpu.trace_stop"() : () -> ()
    %c0_30 = arith.constant 0 : index
    %c0_31 = arith.constant 0 : index
    %c0_32 = arith.constant 0 : index
    %75 = vector.load %arg11[%c0_30, %c0_31, %c0_32] : memref<1x1x32xf32, #tpu.memory_space<vmem>>, vector<1x1x32xf32>
    %76 = vector.shape_cast %75 : vector<1x1x32xf32> to vector<1x32xf32>
    %77 = vector.broadcast %76 : vector<1x32xf32> to vector<64x32xf32>
    %78 = arith.addf %74, %77 : vector<64x32xf32>
    %79 = arith.addf %3, %78 : vector<64x32xf32>
    %c0_33 = arith.constant 0 : index
    %c0_34 = arith.constant 0 : index
    %c0_35 = arith.constant 0 : index
    %80 = vector.load %arg12[%c0_33, %c0_34, %c0_35] : memref<1x1x32xf32, #tpu.memory_space<vmem>>, vector<1x1x32xf32>
    %81 = vector.shape_cast %80 : vector<1x1x32xf32> to vector<1x32xf32>
    %c0_36 = arith.constant 0 : index
    %c0_37 = arith.constant 0 : index
    %c0_38 = arith.constant 0 : index
    %82 = vector.load %arg13[%c0_36, %c0_37, %c0_38] : memref<1x1x32xf32, #tpu.memory_space<vmem>>, vector<1x1x32xf32>
    %83 = vector.shape_cast %82 : vector<1x1x32xf32> to vector<1x32xf32>
    %cst_39 = arith.constant dense<0.000000e+00> : vector<64xf32>
    %84 = vector.multi_reduction <add>, %79, %cst_39 [1] : vector<64x32xf32> to vector<64xf32>
    %85 = vector.shape_cast %84 : vector<64xf32> to vector<64x1xf32>
    %cst_40 = arith.constant 3.200000e+01 : f32
    %86 = vector.broadcast %cst_40 : f32 to vector<64x1xf32>
    %87 = arith.divf %85, %86 : vector<64x1xf32>
    %88 = vector.broadcast %87 : vector<64x1xf32> to vector<64x32xf32>
    %89 = arith.subf %79, %88 : vector<64x32xf32>
    %90 = arith.mulf %89, %89 : vector<64x32xf32>
    %cst_41 = arith.constant dense<0.000000e+00> : vector<64xf32>
    %91 = vector.multi_reduction <add>, %90, %cst_41 [1] : vector<64x32xf32> to vector<64xf32>
    %92 = vector.shape_cast %91 : vector<64xf32> to vector<64x1xf32>
    %cst_42 = arith.constant 3.200000e+01 : f32
    %93 = vector.broadcast %cst_42 : f32 to vector<64x1xf32>
    %94 = arith.divf %92, %93 : vector<64x1xf32>
    %95 = vector.broadcast %87 : vector<64x1xf32> to vector<64x32xf32>
    %96 = arith.subf %79, %95 : vector<64x32xf32>
    %cst_43 = arith.constant 9.99999974E-6 : f32
    %97 = vector.broadcast %cst_43 : f32 to vector<64x1xf32>
    %98 = arith.addf %94, %97 : vector<64x1xf32>
    %99 = math.rsqrt %98 : vector<64x1xf32>
    %100 = vector.broadcast %99 : vector<64x1xf32> to vector<64x32xf32>
    %101 = arith.mulf %96, %100 : vector<64x32xf32>
    %102 = vector.broadcast %81 : vector<1x32xf32> to vector<64x32xf32>
    %103 = arith.mulf %101, %102 : vector<64x32xf32>
    %104 = vector.broadcast %83 : vector<1x32xf32> to vector<64x32xf32>
    %105 = arith.addf %103, %104 : vector<64x32xf32>
    %106 = arith.truncf %105 : vector<64x32xf32> to vector<64x32xbf16>
    %c0_44 = arith.constant 0 : index
    %c0_45 = arith.constant 0 : index
    %c0_46 = arith.constant 0 : index
    %107 = vector.load %arg14[%c0_44, %c0_45, %c0_46] : memref<1x32x128xbf16, #tpu.memory_space<vmem>>, vector<1x32x128xbf16>
    %108 = vector.shape_cast %107 : vector<1x32x128xbf16> to vector<32x128xbf16>
    "tpu.trace_start"() <{level = 10 : i32, message = "md,df->mf"}> : () -> ()
    %cst_47 = arith.constant dense<0.000000e+00> : vector<64x128xf32>
    %109 = tpu.matmul %106, %108, %cst_47 {dimension_numbers = #tpu.dot_dimension_numbers<[1], [0], [0], [1], [0, 0, 1, 1], [], []>} : vector<64x32xbf16>, vector<32x128xbf16>, vector<64x128xf32> -> vector<64x128xf32>
    "tpu.trace_stop"() : () -> ()
    %c0_48 = arith.constant 0 : index
    %c0_49 = arith.constant 0 : index
    %c0_50 = arith.constant 0 : index
    %110 = vector.load %arg15[%c0_48, %c0_49, %c0_50] : memref<1x1x128xf32, #tpu.memory_space<vmem>>, vector<1x1x128xf32>
    %111 = vector.shape_cast %110 : vector<1x1x128xf32> to vector<1x128xf32>
    %112 = vector.broadcast %111 : vector<1x128xf32> to vector<64x128xf32>
    %113 = arith.addf %109, %112 : vector<64x128xf32>
    %114 = arith.truncf %113 : vector<64x128xf32> to vector<64x128xbf16>
    %cst_51 = arith.constant 1.703130e+00 : bf16
    %115 = vector.broadcast %cst_51 : bf16 to vector<64x128xbf16>
    %116 = arith.mulf %115, %114 : vector<64x128xbf16>
    %117 = arith.negf %116 : vector<64x128xbf16>
    %118 = math.exp %117 : vector<64x128xbf16>
    %cst_52 = arith.constant 1.000000e+00 : bf16
    %119 = vector.broadcast %cst_52 : bf16 to vector<64x128xbf16>
    %120 = arith.addf %119, %118 : vector<64x128xbf16>
    %121 = arith.divf %119, %120 : vector<64x128xbf16>
    %122 = arith.mulf %114, %121 : vector<64x128xbf16>
    %c0_53 = arith.constant 0 : index
    %c0_54 = arith.constant 0 : index
    %c0_55 = arith.constant 0 : index
    %123 = vector.load %arg16[%c0_53, %c0_54, %c0_55] : memref<1x128x32xbf16, #tpu.memory_space<vmem>>, vector<1x128x32xbf16>
    %124 = vector.shape_cast %123 : vector<1x128x32xbf16> to vector<128x32xbf16>
    "tpu.trace_start"() <{level = 10 : i32, message = "mf,fd->md"}> : () -> ()
    %cst_56 = arith.constant dense<0.000000e+00> : vector<64x32xf32>
    %125 = tpu.matmul %122, %124, %cst_56 {dimension_numbers = #tpu.dot_dimension_numbers<[1], [0], [0], [1], [0, 0, 1, 1], [], []>} : vector<64x128xbf16>, vector<128x32xbf16>, vector<64x32xf32> -> vector<64x32xf32>
    "tpu.trace_stop"() : () -> ()
    %126 = arith.addf %79, %125 : vector<64x32xf32>
    %c0_57 = arith.constant 0 : index
    %c0_58 = arith.constant 0 : index
    %c0_59 = arith.constant 0 : index
    %127 = vector.load %arg17[%c0_57, %c0_58, %c0_59] : memref<1x1x32xf32, #tpu.memory_space<vmem>>, vector<1x1x32xf32>
    %128 = vector.shape_cast %127 : vector<1x1x32xf32> to vector<1x32xf32>
    %129 = vector.broadcast %128 : vector<1x32xf32> to vector<64x32xf32>
    %130 = arith.addf %126, %129 : vector<64x32xf32>
    %c0_60 = arith.constant 0 : index
    %c0_61 = arith.constant 0 : index
    %131 = vector.load %arg22[%c0_60, %c0_61] : memref<64x32xf32, #tpu.memory_space<vmem>>, vector<64x32xf32>
    tpu.vector_store %arg22[%c0_60, %c0_61], %130 {strides = array<i32>} : memref<64x32xf32, #tpu.memory_space<vmem>>, vector<64x32xf32>,
    %c1_i32 = arith.constant 1 : i32
    %132 = arith.cmpi eq, %arg1, %c1_i32 : i32
    %133 = arith.extui %132 : i1 to i32
    %c0_i32_62 = arith.constant 0 : i32
    %134 = arith.cmpi ne, %133, %c0_i32_62 : i32
    scf.if %134 {
      %c8_i32 = arith.constant 8 : i32
      %135 = arith.muli %arg0, %c8_i32 : i32
      %c0_i32_63 = arith.constant 0 : i32
      %136 = arith.addi %135, %c0_i32_63 : i32
      %137 = arith.index_cast %136 : i32 to index
      %138 = memref.load %arg2[%137] : memref<8xi32, #tpu.memory_space<smem>>
      %c0_i32_64 = arith.constant 0 : i32
      %139 = arith.addi %c0_i32_64, %138 : i32
      %140 = arith.index_cast %139 : i32 to index
      %c0_65 = arith.constant 0 : index
      %141 = vector.load %arg22[%140, %c0_65] : memref<64x32xf32, #tpu.memory_space<vmem>>, vector<1x32xf32>
      %c8_i32_66 = arith.constant 8 : i32
      %142 = arith.muli %arg0, %c8_i32_66 : i32
      %c1_i32_67 = arith.constant 1 : i32
      %143 = arith.addi %142, %c1_i32_67 : i32
      %144 = arith.index_cast %143 : i32 to index
      %145 = memref.load %arg2[%144] : memref<8xi32, #tpu.memory_space<smem>>
      %c8_i32_68 = arith.constant 8 : i32
      %146 = arith.addi %c8_i32_68, %145 : i32
      %147 = arith.index_cast %146 : i32 to index
      %c0_69 = arith.constant 0 : index
      %148 = vector.load %arg22[%147, %c0_69] : memref<64x32xf32, #tpu.memory_space<vmem>>, vector<1x32xf32>
      %c8_i32_70 = arith.constant 8 : i32
      %149 = arith.muli %arg0, %c8_i32_70 : i32
      %c2_i32 = arith.constant 2 : i32
      %150 = arith.addi %149, %c2_i32 : i32
      %151 = arith.index_cast %150 : i32 to index
      %152 = memref.load %arg2[%151] : memref<8xi32, #tpu.memory_space<smem>>
      %c16_i32 = arith.constant 16 : i32
      %153 = arith.addi %c16_i32, %152 : i32
      %154 = arith.index_cast %153 : i32 to index
      %c0_71 = arith.constant 0 : index
      %155 = vector.load %arg22[%154, %c0_71] : memref<64x32xf32, #tpu.memory_space<vmem>>, vector<1x32xf32>
      %c8_i32_72 = arith.constant 8 : i32
      %156 = arith.muli %arg0, %c8_i32_72 : i32
      %c3_i32 = arith.constant 3 : i32
      %157 = arith.addi %156, %c3_i32 : i32
      %158 = arith.index_cast %157 : i32 to index
      %159 = memref.load %arg2[%158] : memref<8xi32, #tpu.memory_space<smem>>
      %c24_i32 = arith.constant 24 : i32
      %160 = arith.addi %c24_i32, %159 : i32
      %161 = arith.index_cast %160 : i32 to index
      %c0_73 = arith.constant 0 : index
      %162 = vector.load %arg22[%161, %c0_73] : memref<64x32xf32, #tpu.memory_space<vmem>>, vector<1x32xf32>
      %c8_i32_74 = arith.constant 8 : i32
      %163 = arith.muli %arg0, %c8_i32_74 : i32
      %c4_i32 = arith.constant 4 : i32
      %164 = arith.addi %163, %c4_i32 : i32
      %165 = arith.index_cast %164 : i32 to index
      %166 = memref.load %arg2[%165] : memref<8xi32, #tpu.memory_space<smem>>
      %c32_i32 = arith.constant 32 : i32
      %167 = arith.addi %c32_i32, %166 : i32
      %168 = arith.index_cast %167 : i32 to index
      %c0_75 = arith.constant 0 : index
      %169 = vector.load %arg22[%168, %c0_75] : memref<64x32xf32, #tpu.memory_space<vmem>>, vector<1x32xf32>
      %c8_i32_76 = arith.constant 8 : i32
      %170 = arith.muli %arg0, %c8_i32_76 : i32
      %c5_i32 = arith.constant 5 : i32
      %171 = arith.addi %170, %c5_i32 : i32
      %172 = arith.index_cast %171 : i32 to index
      %173 = memref.load %arg2[%172] : memref<8xi32, #tpu.memory_space<smem>>
      %c40_i32 = arith.constant 40 : i32
      %174 = arith.addi %c40_i32, %173 : i32
      %175 = arith.index_cast %174 : i32 to index
      %c0_77 = arith.constant 0 : index
      %176 = vector.load %arg22[%175, %c0_77] : memref<64x32xf32, #tpu.memory_space<vmem>>, vector<1x32xf32>
      %c8_i32_78 = arith.constant 8 : i32
      %177 = arith.muli %arg0, %c8_i32_78 : i32
      %c6_i32 = arith.constant 6 : i32
      %178 = arith.addi %177, %c6_i32 : i32
      %179 = arith.index_cast %178 : i32 to index
      %180 = memref.load %arg2[%179] : memref<8xi32, #tpu.memory_space<smem>>
      %c48_i32 = arith.constant 48 : i32
      %181 = arith.addi %c48_i32, %180 : i32
      %182 = arith.index_cast %181 : i32 to index
      %c0_79 = arith.constant 0 : index
      %183 = vector.load %arg22[%182, %c0_79] : memref<64x32xf32, #tpu.memory_space<vmem>>, vector<1x32xf32>
      %c8_i32_80 = arith.constant 8 : i32
      %184 = arith.muli %arg0, %c8_i32_80 : i32
      %c7_i32 = arith.constant 7 : i32
      %185 = arith.addi %184, %c7_i32 : i32
      %186 = arith.index_cast %185 : i32 to index
      %187 = memref.load %arg2[%186] : memref<8xi32, #tpu.memory_space<smem>>
      %c56_i32 = arith.constant 56 : i32
      %188 = arith.addi %c56_i32, %187 : i32
      %189 = arith.index_cast %188 : i32 to index
      %c0_81 = arith.constant 0 : index
      %190 = vector.load %arg22[%189, %c0_81] : memref<64x32xf32, #tpu.memory_space<vmem>>, vector<1x32xf32>
      %191 = tpu.concatenate %141, %148, %155, %162, %169, %176, %183, %190 in 0 : vector<1x32xf32>, vector<1x32xf32>, vector<1x32xf32>, vector<1x32xf32>, vector<1x32xf32>, vector<1x32xf32>, vector<1x32xf32>, vector<1x32xf32> -> vector<8x32xf32>
      %c0_82 = arith.constant 0 : index
      %c0_83 = arith.constant 0 : index
      %192 = vector.load %arg18[%c0_82, %c0_83] : memref<1x32xf32, #tpu.memory_space<vmem>>, vector<1x32xf32>
      %c0_84 = arith.constant 0 : index
      %c0_85 = arith.constant 0 : index
      %193 = vector.load %arg19[%c0_84, %c0_85] : memref<1x32xf32, #tpu.memory_space<vmem>>, vector<1x32xf32>
      %cst_86 = arith.constant dense<0.000000e+00> : vector<8xf32>
      %194 = vector.multi_reduction <add>, %191, %cst_86 [1] : vector<8x32xf32> to vector<8xf32>
      %195 = vector.shape_cast %194 : vector<8xf32> to vector<8x1xf32>
      %cst_87 = arith.constant 3.200000e+01 : f32
      %196 = vector.broadcast %cst_87 : f32 to vector<8x1xf32>
      %197 = arith.divf %195, %196 : vector<8x1xf32>
      %198 = vector.broadcast %197 : vector<8x1xf32> to vector<8x32xf32>
      %199 = arith.subf %191, %198 : vector<8x32xf32>
      %200 = arith.mulf %199, %199 : vector<8x32xf32>
      %cst_88 = arith.constant dense<0.000000e+00> : vector<8xf32>
      %201 = vector.multi_reduction <add>, %200, %cst_88 [1] : vector<8x32xf32> to vector<8xf32>
      %202 = vector.shape_cast %201 : vector<8xf32> to vector<8x1xf32>
      %cst_89 = arith.constant 3.200000e+01 : f32
      %203 = vector.broadcast %cst_89 : f32 to vector<8x1xf32>
      %204 = arith.divf %202, %203 : vector<8x1xf32>
      %205 = vector.broadcast %197 : vector<8x1xf32> to vector<8x32xf32>
      %206 = arith.subf %191, %205 : vector<8x32xf32>
      %cst_90 = arith.constant 9.99999974E-6 : f32
      %207 = vector.broadcast %cst_90 : f32 to vector<8x1xf32>
      %208 = arith.addf %204, %207 : vector<8x1xf32>
      %209 = math.rsqrt %208 : vector<8x1xf32>
      %210 = vector.broadcast %209 : vector<8x1xf32> to vector<8x32xf32>
      %211 = arith.mulf %206, %210 : vector<8x32xf32>
      %212 = vector.broadcast %192 : vector<1x32xf32> to vector<8x32xf32>
      %213 = arith.mulf %211, %212 : vector<8x32xf32>
      %214 = vector.broadcast %193 : vector<1x32xf32> to vector<8x32xf32>
      %215 = arith.addf %213, %214 : vector<8x32xf32>
      %216 = arith.truncf %215 : vector<8x32xf32> to vector<8x32xbf16>
      %c0_91 = arith.constant 0 : index
      %c0_92 = arith.constant 0 : index
      %217 = vector.load %arg20[%c0_91, %c0_92] : memref<32x64xbf16, #tpu.memory_space<vmem>>, vector<32x64xbf16>
      %cst_93 = arith.constant dense<0.000000e+00> : vector<8x64xf32>
      %218 = tpu.matmul %216, %217, %cst_93 {dimension_numbers = #tpu.dot_dimension_numbers<[1], [0], [0], [1], [0, 0, 1, 1], [], []>} : vector<8x32xbf16>, vector<32x64xbf16>, vector<8x64xf32> -> vector<8x64xf32>
      %c0_94 = arith.constant 0 : index
      %c0_95 = arith.constant 0 : index
      %219 = vector.load %arg21[%c0_94, %c0_95] : memref<8x64xf32, #tpu.memory_space<vmem>>, vector<8x64xf32>
      tpu.vector_store %arg21[%c0_94, %c0_95], %218 {strides = array<i32>} : memref<8x64xf32, #tpu.memory_space<vmem>>, vector<8x64xf32>,
    } else {
    }
    return
  }
  func.func @transform_0(%arg0: i32, %arg1: i32, %arg2: memref<8xi32, #tpu.memory_space<smem>>) -> (i32, i32, i32) {
    %c0_i32 = arith.constant 0 : i32
    %c0_i32_0 = arith.constant 0 : i32
    %c0_i32_1 = arith.constant 0 : i32
    return %arg0, %c0_i32, %c0_i32_0 : i32, i32, i32
  }
  func.func @transform_1(%arg0: i32, %arg1: i32, %arg2: memref<8xi32, #tpu.memory_space<smem>>) -> (i32, i32) {
    %c0_i32 = arith.constant 0 : i32
    %c0_i32_0 = arith.constant 0 : i32
    %c0_i32_1 = arith.constant 0 : i32
    return %c0_i32, %c0_i32_0 : i32, i32
  }
  func.func @transform_2(%arg0: i32, %arg1: i32, %arg2: memref<8xi32, #tpu.memory_space<smem>>) -> (i32, i32) {
    %c0_i32 = arith.constant 0 : i32
    %c0_i32_0 = arith.constant 0 : i32
    %c0_i32_1 = arith.constant 0 : i32
    return %c0_i32, %c0_i32_0 : i32, i32
  }
  func.func @transform_3(%arg0: i32, %arg1: i32, %arg2: memref<8xi32, #tpu.memory_space<smem>>) -> (i32, i32, i32) {
    %c0_i32 = arith.constant 0 : i32
    %c0_i32_0 = arith.constant 0 : i32
    %c0_i32_1 = arith.constant 0 : i32
    return %arg1, %c0_i32, %c0_i32_0 : i32, i32, i32
  }
  func.func @transform_4(%arg0: i32, %arg1: i32, %arg2: memref<8xi32, #tpu.memory_space<smem>>) -> (i32, i32, i32) {
    %c0_i32 = arith.constant 0 : i32
    %c0_i32_0 = arith.constant 0 : i32
    %c0_i32_1 = arith.constant 0 : i32
    return %arg1, %c0_i32, %c0_i32_0 : i32, i32, i32
  }
  func.func @transform_5(%arg0: i32, %arg1: i32, %arg2: memref<8xi32, #tpu.memory_space<smem>>) -> (i32, i32, i32) {
    %c0_i32 = arith.constant 0 : i32
    %c0_i32_0 = arith.constant 0 : i32
    %c0_i32_1 = arith.constant 0 : i32
    return %arg1, %c0_i32, %c0_i32_0 : i32, i32, i32
  }
  func.func @transform_6(%arg0: i32, %arg1: i32, %arg2: memref<8xi32, #tpu.memory_space<smem>>) -> (i32, i32, i32) {
    %c0_i32 = arith.constant 0 : i32
    %c0_i32_0 = arith.constant 0 : i32
    %c0_i32_1 = arith.constant 0 : i32
    return %arg1, %c0_i32, %c0_i32_0 : i32, i32, i32
  }
  func.func @transform_7(%arg0: i32, %arg1: i32, %arg2: memref<8xi32, #tpu.memory_space<smem>>) -> (i32, i32, i32) {
    %c0_i32 = arith.constant 0 : i32
    %c0_i32_0 = arith.constant 0 : i32
    %c0_i32_1 = arith.constant 0 : i32
    return %arg1, %c0_i32, %c0_i32_0 : i32, i32, i32
  }
  func.func @transform_8(%arg0: i32, %arg1: i32, %arg2: memref<8xi32, #tpu.memory_space<smem>>) -> (i32, i32, i32) {
    %c0_i32 = arith.constant 0 : i32
    %c0_i32_0 = arith.constant 0 : i32
    %c0_i32_1 = arith.constant 0 : i32
    return %arg1, %c0_i32, %c0_i32_0 : i32, i32, i32
  }
  func.func @transform_9(%arg0: i32, %arg1: i32, %arg2: memref<8xi32, #tpu.memory_space<smem>>) -> (i32, i32, i32) {
    %c0_i32 = arith.constant 0 : i32
    %c0_i32_0 = arith.constant 0 : i32
    %c0_i32_1 = arith.constant 0 : i32
    return %arg1, %c0_i32, %c0_i32_0 : i32, i32, i32
  }
  func.func @transform_10(%arg0: i32, %arg1: i32, %arg2: memref<8xi32, #tpu.memory_space<smem>>) -> (i32, i32, i32) {
    %c0_i32 = arith.constant 0 : i32
    %c0_i32_0 = arith.constant 0 : i32
    %c0_i32_1 = arith.constant 0 : i32
    return %arg1, %c0_i32, %c0_i32_0 : i32, i32, i32
  }
  func.func @transform_11(%arg0: i32, %arg1: i32, %arg2: memref<8xi32, #tpu.memory_space<smem>>) -> (i32, i32, i32) {
    %c0_i32 = arith.constant 0 : i32
    %c0_i32_0 = arith.constant 0 : i32
    %c0_i32_1 = arith.constant 0 : i32
    return %arg1, %c0_i32, %c0_i32_0 : i32, i32, i32
  }
  func.func @transform_12(%arg0: i32, %arg1: i32, %arg2: memref<8xi32, #tpu.memory_space<smem>>) -> (i32, i32, i32) {
    %c0_i32 = arith.constant 0 : i32
    %c0_i32_0 = arith.constant 0 : i32
    %c0_i32_1 = arith.constant 0 : i32
    return %arg1, %c0_i32, %c0_i32_0 : i32, i32, i32
  }
  func.func @transform_13(%arg0: i32, %arg1: i32, %arg2: memref<8xi32, #tpu.memory_space<smem>>) -> (i32, i32, i32) {
    %c0_i32 = arith.constant 0 : i32
    %c0_i32_0 = arith.constant 0 : i32
    %c0_i32_1 = arith.constant 0 : i32
    return %arg1, %c0_i32, %c0_i32_0 : i32, i32, i32
  }
  func.func @transform_14(%arg0: i32, %arg1: i32, %arg2: memref<8xi32, #tpu.memory_space<smem>>) -> (i32, i32, i32) {
    %c0_i32 = arith.constant 0 : i32
    %c0_i32_0 = arith.constant 0 : i32
    %c0_i32_1 = arith.constant 0 : i32
    return %arg1, %c0_i32, %c0_i32_0 : i32, i32, i32
  }
  func.func @transform_15(%arg0: i32, %arg1: i32, %arg2: memref<8xi32, #tpu.memory_space<smem>>) -> (i32, i32) {
    %c0_i32 = arith.constant 0 : i32
    %c0_i32_0 = arith.constant 0 : i32
    %c0_i32_1 = arith.constant 0 : i32
    return %c0_i32, %c0_i32_0 : i32, i32
  }
  func.func @transform_16(%arg0: i32, %arg1: i32, %arg2: memref<8xi32, #tpu.memory_space<smem>>) -> (i32, i32) {
    %c0_i32 = arith.constant 0 : i32
    %c0_i32_0 = arith.constant 0 : i32
    %c0_i32_1 = arith.constant 0 : i32
    return %c0_i32, %c0_i32_0 : i32, i32
  }
  func.func @transform_17(%arg0: i32, %arg1: i32, %arg2: memref<8xi32, #tpu.memory_space<smem>>) -> (i32, i32) {
    %c0_i32 = arith.constant 0 : i32
    %c0_i32_0 = arith.constant 0 : i32
    %c0_i32_1 = arith.constant 0 : i32
    return %c0_i32, %c0_i32_0 : i32, i32
  }
  func.func @transform_18(%arg0: i32, %arg1: i32, %arg2: memref<8xi32, #tpu.memory_space<smem>>) -> (i32, i32) {
    %c0_i32 = arith.constant 0 : i32
    %c0_i32_0 = arith.constant 0 : i32
    return %arg0, %c0_i32 : i32, i32
  }
}

</mosaic_0001>

<llo_original>
// kernel: tpu_custom_call.1
$region0: #{tpu_custom_call.1}
  #allocation0 [shape = 'u32[]', space=smem, size = 0x4, offset = 0x4, fixed_abs, tag = 'smem constant byte address 0x4 - core index']
  #allocation1 [shape = 'u32[144,128]{1,0:T(1,128)}', space=vmem, size = 0x12000, scoped, tag = 'internal scratch']
  #allocation2 [shape = 'f32[64,32]{1,0:T(8,128)}', space=vmem, size = 0x8000, scoped, tag = 'scratch operand']
  #allocation3 [shape = 's32[1]{0}', space=sflag, size = 0x4, scoped, tag = 'scoped memory for tpu_custom_call.1']
  #allocation4 [shape = 'u8[512]{0}', space=smem, size = 0x200, scoped, tag = 'prefetched SMEM operand 0']
  %s0 = inlined_call_operand.hbm [shape: s32[8], index: 0, kind: input, shape index: {}]
  %s1 = inlined_call_operand.vmem [shape: f32[8,8,32], index: 1, kind: input, shape index: {}]
  %s2 = inlined_call_operand.hbm [shape: f32[8,32], index: 2, kind: input, shape index: {}]
  %s3 = inlined_call_operand.hbm [shape: f32[8,8], index: 3, kind: input, shape index: {}]
  %s4 = inlined_call_operand.vmem [shape: f32[2,1,32], index: 4, kind: input, shape index: {}]
  %s5 = inlined_call_operand.hbm [shape: f32[2,1,32], index: 5, kind: input, shape index: {}]
  %s6 = inlined_call_operand.vmem [shape: bf16[2,32,96], index: 6, kind: input, shape index: {}]
  %s7 = inlined_call_operand.hbm [shape: f32[2,1,96], index: 7, kind: input, shape index: {}]
  %s8 = inlined_call_operand.vmem [shape: bf16[2,32,32], index: 8, kind: input, shape index: {}]
  %s9 = inlined_call_operand.hbm [shape: f32[2,1,32], index: 9, kind: input, shape index: {}]
  %s10 = inlined_call_operand.hbm [shape: f32[2,1,32], index: 10, kind: input, shape index: {}]
  %s11 = inlined_call_operand.vmem [shape: f32[2,1,32], index: 11, kind: input, shape index: {}]
  %s12 = inlined_call_operand.vmem [shape: bf16[2,32,128], index: 12, kind: input, shape index: {}]
  %s13 = inlined_call_operand.hbm [shape: f32[2,1,128], index: 13, kind: input, shape index: {}]
  %s14 = inlined_call_operand.vmem [shape: bf16[2,128,32], index: 14, kind: input, shape index: {}]
  %s15 = inlined_call_operand.vmem [shape: f32[2,1,32], index: 15, kind: input, shape index: {}]
  %s16 = inlined_call_operand.vmem [shape: f32[1,32], index: 16, kind: input, shape index: {}]
  %s17 = inlined_call_operand.vmem [shape: f32[1,32], index: 17, kind: input, shape index: {}]
  %s18 = inlined_call_operand.vmem [shape: bf16[32,64], index: 18, kind: input, shape index: {}]
  %s19 = inlined_call_operand.hbm [shape: f32[8,64], index: 19, kind: output, shape index: {}]
  %s20 = sld [smem:[#allocation0]]
  $region141: #{tpu_custom_call.1} parent=0
    _
  %s22 = ssub.s32 1, %s20
  %s23 = scalar_select 0, %s22, %s20
  %25 = dma.hbm_to_smem %s0, 16, [#allocation4], [#allocation3]
  %26 = dma.done [#allocation3], 16
  %27 = sfence
  $region1: #{tpu_custom_call.1} parent=0
    #allocation5 [shape = 'u8[4096]{0}', space=vmem, size = 0x1000, scoped, tag = 'input window, operand 2, single buffered']
    #allocation6 [shape = 's32[2]{0}', space=sflag, size = 0x8, scoped, tag = 'scoped memory for tpu_custom_call.1']
    #allocation7 [shape = 's32[2]{0}', space=sflag, size = 0x8, scoped, tag = 'scoped memory for tpu_custom_call.1']
    #allocation8 [shape = 'u8[4096]{0}', space=vmem, size = 0x1000, scoped, tag = 'input window, operand 3, single buffered']
    #allocation9 [shape = 's32[1]{0}', space=sflag, size = 0x4, scoped, tag = 'scoped memory for tpu_custom_call.1']
    #allocation10 [shape = 'u8[1024]{0}', space=vmem, size = 0x400, scoped, tag = 'input window, operand 5']
    #allocation11 [shape = 'u8[1024]{0}', space=vmem, size = 0x400, scoped, tag = 'input window, operand 7']
    #allocation12 [shape = 'u8[1024]{0}', space=vmem, size = 0x400, scoped, tag = 'input window, operand 9']
    #allocation13 [shape = 'u8[1024]{0}', space=vmem, size = 0x400, scoped, tag = 'input window, operand 10']
    #allocation14 [shape = 'u8[1024]{0}', space=vmem, size = 0x400, scoped, tag = 'input window, operand 13']
    #allocation15 [shape = 'u8[4096]{0}', space=vmem, size = 0x1000, scoped, tag = 'output window, operand 0, single buffered']
    %28 = vsyncpa [#allocation6], 0
    %29 = vsyncpa [#allocation9], 0
    %30 = vsyncpa [#allocation7], 0
    loop: start=0, step=1, limit=4
    $region2: #{tpu_custom_call.1} parent=1 // loop_pre_header
      _
    $region3: #{tpu_custom_call.1} parent=1 // loop_header
      %s32 = sphi 0, %s36
      %p33 = scmp.ge.s32.totalorder %s32, 4
      %s39 = sphi 0, %s51
      %s40 = sphi 0, %s47
      %s41 = sphi 0, %s39
      %s42 = sphi 0, %s40
      %s43 = sphi 0, %s41
      %s44 = sphi 0, %s42
      %s54 = sphi 0, %s56
      %s57 = sphi 0, %s54
      %s58 = sphi 0, %s57
      %s74 = sphi 0, %s58
      %s78 = sphi 0, %s78
      %s80 = sphi 0, %s78
      %s81 = sphi 0, %s80
      %s95 = sphi 0, %s81
      %s99 = sphi 0, %s99
      %s101 = sphi 0, %s99
      %s102 = sphi 0, %s101
      %s116 = sphi 0, %s102
      %s122 = sphi 0, %s124
      %s125 = sphi 0, %s122
      %s126 = sphi 0, %s125
      %s142 = sphi 0, %s126
      %s148 = sphi 0, %s150
      %s151 = sphi 0, %s148
      %s152 = sphi 0, %s151
      %s168 = sphi 0, %s152
      %s174 = sphi 0, %s176
      %s177 = sphi 0, %s174
      %s178 = sphi 0, %s177
      %s194 = sphi 0, %s178
      %s200 = sphi 0, %s202
      %s203 = sphi 0, %s200
      %s204 = sphi 0, %s203
      %s220 = sphi 0, %s204
      %s226 = sphi 0, %s228
      %s229 = sphi 0, %s226
      %s230 = sphi 0, %s229
      %s246 = sphi 0, %s230
      %s252 = sphi 0, %s254
      %s255 = sphi 0, %s252
      %s256 = sphi 0, %s255
      %s272 = sphi 0, %s256
      %s278 = sphi 0, %s280
      %s281 = sphi 0, %s278
      %s282 = sphi 0, %s281
      %s298 = sphi 0, %s282
      %s304 = sphi 0, %s306
      %s307 = sphi 0, %s304
      %s308 = sphi 0, %s307
      %s324 = sphi 0, %s308
      %s330 = sphi 0, %s332
      %s333 = sphi 0, %s330
      %s334 = sphi 0, %s333
      %s350 = sphi 0, %s334
      %s356 = sphi 0, %s358
      %s359 = sphi 0, %s356
      %s360 = sphi 0, %s359
      %s376 = sphi 0, %s360
      %s382 = sphi 0, %s384
      %s385 = sphi 0, %s382
      %s386 = sphi 0, %s385
      %s402 = sphi 0, %s386
      %s408 = sphi 0, %s410
      %s411 = sphi 0, %s408
      %s412 = sphi 0, %s411
      %s428 = sphi 0, %s412
      %s432 = sphi 0, %s432
      %s434 = sphi 0, %s432
      %s435 = sphi 0, %s434
      %s449 = sphi 0, %s435
      %s453 = sphi 0, %s453
      %s455 = sphi 0, %s453
      %s456 = sphi 0, %s455
      %s470 = sphi 0, %s456
      %s474 = sphi 0, %s474
      %s476 = sphi 0, %s474
      %s477 = sphi 0, %s476
      %s491 = sphi 0, %s477
      %s497 = sphi 0, %s499
      %s500 = sphi 0, %s497
      %s501 = sphi 0, %s500
      %s517 = sphi 0, %s501
    $region4: #{tpu_custom_call.1} parent=1 // loop_header_branch
      %35 = sbr.rel (%p33) target = $region8
    $region5: #{tpu_custom_call.1} parent=1 // loop_body
      %s37 = ssub.s32 %s32, 1
      %s38 = ssub.s32 %s32, 2
      %s45 = sadd.s32 1, %s40
      %p46 = scmp.ge.s32.totalorder %s45, 2
      %s47 = scalar_select %p46, 0, %s45
      %s48 = sadd.s32 1, %s39
      %s49 = scalar_select %p46, %s48, %s39
      %p50 = scmp.ge.s32.totalorder %s49, 1
      %s51 = scalar_select %p50, 0, %s49
      %s52 = ssub.s32 %s39, %s51
      %p53 = scmp.eq.s32.totalorder %s52, 0
      %s55 = sadd.s32 %s54, 1
      %s56 = scalar_select %p53, %s54, %s55
      %p59 = pneg %p53
      %p60 = scmp.eq.s32.totalorder %s32, 1
      %p61 = por %p59, %p60
      %p62 = scmp.ne.s32.totalorder %s54, %s57
      %p63 = scmp.eq.s32.totalorder %s32, 0
      %p64 = por %p62, %p63
      %p65 = scmp.ne.s32.totalorder %s54, %s57
      %p66 = scmp.eq.s32.totalorder %s37, 1
      %p67 = por %p65, %p66
      %p68 = scmp.ne.s32.totalorder %s57, %s58
      %p69 = scmp.eq.s32.totalorder %s37, 0
      %p70 = por %p68, %p69
      %p71 = scmp.ne.s32.totalorder %s57, %s58
      %p72 = scmp.eq.s32.totalorder %s38, 1
      %p73 = por %p71, %p72
      %p75 = scmp.ne.s32.totalorder %s58, %s74
      %p76 = scmp.eq.s32.totalorder %s38, 0
      %p77 = por %p75, %p76
      %s79 = sadd.s32 %s78, 1
      %p82 = scmp.eq.s32.totalorder %s32, 1
      %p83 = scmp.ne.s32.totalorder %s78, %s80
      %p84 = scmp.eq.s32.totalorder %s32, 0
      %p85 = por %p83, %p84
      %p86 = scmp.ne.s32.totalorder %s78, %s80
      %p87 = scmp.eq.s32.totalorder %s37, 1
      %p88 = por %p86, %p87
      %p89 = scmp.ne.s32.totalorder %s80, %s81
      %p90 = scmp.eq.s32.totalorder %s37, 0
      %p91 = por %p89, %p90
      %p92 = scmp.ne.s32.totalorder %s80, %s81
      %p93 = scmp.eq.s32.totalorder %s38, 1
      %p94 = por %p92, %p93
      %p96 = scmp.ne.s32.totalorder %s81, %s95
      %p97 = scmp.eq.s32.totalorder %s38, 0
      %p98 = por %p96, %p97
      %s100 = sadd.s32 %s99, 1
      %p103 = scmp.eq.s32.totalorder %s32, 1
      %p104 = scmp.ne.s32.totalorder %s99, %s101
      %p105 = scmp.eq.s32.totalorder %s32, 0
      %p106 = por %p104, %p105
      %p107 = scmp.ne.s32.totalorder %s99, %s101
      %p108 = scmp.eq.s32.totalorder %s37, 1
      %p109 = por %p107, %p108
      %p110 = scmp.ne.s32.totalorder %s101, %s102
      %p111 = scmp.eq.s32.totalorder %s37, 0
      %p112 = por %p110, %p111
      %p113 = scmp.ne.s32.totalorder %s101, %s102
      %p114 = scmp.eq.s32.totalorder %s38, 1
      %p115 = por %p113, %p114
      %p117 = scmp.ne.s32.totalorder %s102, %s116
      %p118 = scmp.eq.s32.totalorder %s38, 0
      %p119 = por %p117, %p118
      %s120 = ssub.s32 %s40, %s47
      %p121 = scmp.eq.s32.totalorder %s120, 0
      %s123 = sadd.s32 %s122, 1
      %s124 = scalar_select %p121, %s122, %s123
      %p127 = pneg %p121
      %p128 = scmp.eq.s32.totalorder %s32, 1
      %p129 = por %p127, %p128
      %p130 = scmp.ne.s32.totalorder %s122, %s125
      %p131 = scmp.eq.s32.totalorder %s32, 0
      %p132 = por %p130, %p131
      %p133 = scmp.ne.s32.totalorder %s122, %s125
      %p134 = scmp.eq.s32.totalorder %s37, 1
      %p135 = por %p133, %p134
      %p136 = scmp.ne.s32.totalorder %s125, %s126
      %p137 = scmp.eq.s32.totalorder %s37, 0
      %p138 = por %p136, %p137
      %p139 = scmp.ne.s32.totalorder %s125, %s126
      %p140 = scmp.eq.s32.totalorder %s38, 1
      %p141 = por %p139, %p140
      %p143 = scmp.ne.s32.totalorder %s126, %s142
      %p144 = scmp.eq.s32.totalorder %s38, 0
      %p145 = por %p143, %p144
      %s146 = ssub.s32 %s40, %s47
      %p147 = scmp.eq.s32.totalorder %s146, 0
      %s149 = sadd.s32 %s148, 1
      %s150 = scalar_select %p147, %s148, %s149
      %p153 = pneg %p147
      %p154 = scmp.eq.s32.totalorder %s32, 1
      %p155 = por %p153, %p154
      %p156 = scmp.ne.s32.totalorder %s148, %s151
      %p157 = scmp.eq.s32.totalorder %s32, 0
      %p158 = por %p156, %p157
      %p159 = scmp.ne.s32.totalorder %s148, %s151
      %p160 = scmp.eq.s32.totalorder %s37, 1
      %p161 = por %p159, %p160
      %p162 = scmp.ne.s32.totalorder %s151, %s152
      %p163 = scmp.eq.s32.totalorder %s37, 0
      %p164 = por %p162, %p163
      %p165 = scmp.ne.s32.totalorder %s151, %s152
      %p166 = scmp.eq.s32.totalorder %s38, 1
      %p167 = por %p165, %p166
      %p169 = scmp.ne.s32.totalorder %s152, %s168
      %p170 = scmp.eq.s32.totalorder %s38, 0
      %p171 = por %p169, %p170
      %s172 = ssub.s32 %s40, %s47
      %p173 = scmp.eq.s32.totalorder %s172, 0
      %s175 = sadd.s32 %s174, 1
      %s176 = scalar_select %p173, %s174, %s175
      %p179 = pneg %p173
      %p180 = scmp.eq.s32.totalorder %s32, 1
      %p181 = por %p179, %p180
      %p182 = scmp.ne.s32.totalorder %s174, %s177
      %p183 = scmp.eq.s32.totalorder %s32, 0
      %p184 = por %p182, %p183
      %p185 = scmp.ne.s32.totalorder %s174, %s177
      %p186 = scmp.eq.s32.totalorder %s37, 1
      %p187 = por %p185, %p186
      %p188 = scmp.ne.s32.totalorder %s177, %s178
      %p189 = scmp.eq.s32.totalorder %s37, 0
      %p190 = por %p188, %p189
      %p191 = scmp.ne.s32.totalorder %s177, %s178
      %p192 = scmp.eq.s32.totalorder %s38, 1
      %p193 = por %p191, %p192
      %p195 = scmp.ne.s32.totalorder %s178, %s194
      %p196 = scmp.eq.s32.totalorder %s38, 0
      %p197 = por %p195, %p196
      %s198 = ssub.s32 %s40, %s47
      %p199 = scmp.eq.s32.totalorder %s198, 0
      %s201 = sadd.s32 %s200, 1
      %s202 = scalar_select %p199, %s200, %s201
      %p205 = pneg %p199
      %p206 = scmp.eq.s32.totalorder %s32, 1
      %p207 = por %p205, %p206
      %p208 = scmp.ne.s32.totalorder %s200, %s203
      %p209 = scmp.eq.s32.totalorder %s32, 0
      %p210 = por %p208, %p209
      %p211 = scmp.ne.s32.totalorder %s200, %s203
      %p212 = scmp.eq.s32.totalorder %s37, 1
      %p213 = por %p211, %p212
      %p214 = scmp.ne.s32.totalorder %s203, %s204
      %p215 = scmp.eq.s32.totalorder %s37, 0
      %p216 = por %p214, %p215
      %p217 = scmp.ne.s32.totalorder %s203, %s204
      %p218 = scmp.eq.s32.totalorder %s38, 1
      %p219 = por %p217, %p218
      %p221 = scmp.ne.s32.totalorder %s204, %s220
      %p222 = scmp.eq.s32.totalorder %s38, 0
      %p223 = por %p221, %p222
      %s224 = ssub.s32 %s40, %s47
      %p225 = scmp.eq.s32.totalorder %s224, 0
      %s227 = sadd.s32 %s226, 1
      %s228 = scalar_select %p225, %s226, %s227
      %p231 = pneg %p225
      %p232 = scmp.eq.s32.totalorder %s32, 1
      %p233 = por %p231, %p232
      %p234 = scmp.ne.s32.totalorder %s226, %s229
      %p235 = scmp.eq.s32.totalorder %s32, 0
      %p236 = por %p234, %p235
      %p237 = scmp.ne.s32.totalorder %s226, %s229
      %p238 = scmp.eq.s32.totalorder %s37, 1
      %p239 = por %p237, %p238
      %p240 = scmp.ne.s32.totalorder %s229, %s230
      %p241 = scmp.eq.s32.totalorder %s37, 0
      %p242 = por %p240, %p241
      %p243 = scmp.ne.s32.totalorder %s229, %s230
      %p244 = scmp.eq.s32.totalorder %s38, 1
      %p245 = por %p243, %p244
      %p247 = scmp.ne.s32.totalorder %s230, %s246
      %p248 = scmp.eq.s32.totalorder %s38, 0
      %p249 = por %p247, %p248
      %s250 = ssub.s32 %s40, %s47
      %p251 = scmp.eq.s32.totalorder %s250, 0
      %s253 = sadd.s32 %s252, 1
      %s254 = scalar_select %p251, %s252, %s253
      %p257 = pneg %p251
      %p258 = scmp.eq.s32.totalorder %s32, 1
      %p259 = por %p257, %p258
      %p260 = scmp.ne.s32.totalorder %s252, %s255
      %p261 = scmp.eq.s32.totalorder %s32, 0
      %p262 = por %p260, %p261
      %p263 = scmp.ne.s32.totalorder %s252, %s255
      %p264 = scmp.eq.s32.totalorder %s37, 1
      %p265 = por %p263, %p264
      %p266 = scmp.ne.s32.totalorder %s255, %s256
      %p267 = scmp.eq.s32.totalorder %s37, 0
      %p268 = por %p266, %p267
      %p269 = scmp.ne.s32.totalorder %s255, %s256
      %p270 = scmp.eq.s32.totalorder %s38, 1
      %p271 = por %p269, %p270
      %p273 = scmp.ne.s32.totalorder %s256, %s272
      %p274 = scmp.eq.s32.totalorder %s38, 0
      %p275 = por %p273, %p274
      %s276 = ssub.s32 %s40, %s47
      %p277 = scmp.eq.s32.totalorder %s276, 0
      %s279 = sadd.s32 %s278, 1
      %s280 = scalar_select %p277, %s278, %s279
      %p283 = pneg %p277
      %p284 = scmp.eq.s32.totalorder %s32, 1
      %p285 = por %p283, %p284
      %p286 = scmp.ne.s32.totalorder %s278, %s281
      %p287 = scmp.eq.s32.totalorder %s32, 0
      %p288 = por %p286, %p287
      %p289 = scmp.ne.s32.totalorder %s278, %s281
      %p290 = scmp.eq.s32.totalorder %s37, 1
      %p291 = por %p289, %p290
      %p292 = scmp.ne.s32.totalorder %s281, %s282
      %p293 = scmp.eq.s32.totalorder %s37, 0
      %p294 = por %p292, %p293
      %p295 = scmp.ne.s32.totalorder %s281, %s282
      %p296 = scmp.eq.s32.totalorder %s38, 1
      %p297 = por %p295, %p296
      %p299 = scmp.ne.s32.totalorder %s282, %s298
      %p300 = scmp.eq.s32.totalorder %s38, 0
      %p301 = por %p299, %p300
      %s302 = ssub.s32 %s40, %s47
      %p303 = scmp.eq.s32.totalorder %s302, 0
      %s305 = sadd.s32 %s304, 1
      %s306 = scalar_select %p303, %s304, %s305
      %p309 = pneg %p303
      %p310 = scmp.eq.s32.totalorder %s32, 1
      %p311 = por %p309, %p310
      %p312 = scmp.ne.s32.totalorder %s304, %s307
      %p313 = scmp.eq.s32.totalorder %s32, 0
      %p314 = por %p312, %p313
      %p315 = scmp.ne.s32.totalorder %s304, %s307
      %p316 = scmp.eq.s32.totalorder %s37, 1
      %p317 = por %p315, %p316
      %p318 = scmp.ne.s32.totalorder %s307, %s308
      %p319 = scmp.eq.s32.totalorder %s37, 0
      %p320 = por %p318, %p319
      %p321 = scmp.ne.s32.totalorder %s307, %s308
      %p322 = scmp.eq.s32.totalorder %s38, 1
      %p323 = por %p321, %p322
      %p325 = scmp.ne.s32.totalorder %s308, %s324
      %p326 = scmp.eq.s32.totalorder %s38, 0
      %p327 = por %p325, %p326
      %s328 = ssub.s32 %s40, %s47
      %p329 = scmp.eq.s32.totalorder %s328, 0
      %s331 = sadd.s32 %s330, 1
      %s332 = scalar_select %p329, %s330, %s331
      %p335 = pneg %p329
      %p336 = scmp.eq.s32.totalorder %s32, 1
      %p337 = por %p335, %p336
      %p338 = scmp.ne.s32.totalorder %s330, %s333
      %p339 = scmp.eq.s32.totalorder %s32, 0
      %p340 = por %p338, %p339
      %p341 = scmp.ne.s32.totalorder %s330, %s333
      %p342 = scmp.eq.s32.totalorder %s37, 1
      %p343 = por %p341, %p342
      %p344 = scmp.ne.s32.totalorder %s333, %s334
      %p345 = scmp.eq.s32.totalorder %s37, 0
      %p346 = por %p344, %p345
      %p347 = scmp.ne.s32.totalorder %s333, %s334
      %p348 = scmp.eq.s32.totalorder %s38, 1
      %p349 = por %p347, %p348
      %p351 = scmp.ne.s32.totalorder %s334, %s350
      %p352 = scmp.eq.s32.totalorder %s38, 0
      %p353 = por %p351, %p352
      %s354 = ssub.s32 %s40, %s47
      %p355 = scmp.eq.s32.totalorder %s354, 0
      %s357 = sadd.s32 %s356, 1
      %s358 = scalar_select %p355, %s356, %s357
      %p361 = pneg %p355
      %p362 = scmp.eq.s32.totalorder %s32, 1
      %p363 = por %p361, %p362
      %p364 = scmp.ne.s32.totalorder %s356, %s359
      %p365 = scmp.eq.s32.totalorder %s32, 0
      %p366 = por %p364, %p365
      %p367 = scmp.ne.s32.totalorder %s356, %s359
      %p368 = scmp.eq.s32.totalorder %s37, 1
      %p369 = por %p367, %p368
      %p370 = scmp.ne.s32.totalorder %s359, %s360
      %p371 = scmp.eq.s32.totalorder %s37, 0
      %p372 = por %p370, %p371
      %p373 = scmp.ne.s32.totalorder %s359, %s360
      %p374 = scmp.eq.s32.totalorder %s38, 1
      %p375 = por %p373, %p374
      %p377 = scmp.ne.s32.totalorder %s360, %s376
      %p378 = scmp.eq.s32.totalorder %s38, 0
      %p379 = por %p377, %p378
      %s380 = ssub.s32 %s40, %s47
      %p381 = scmp.eq.s32.totalorder %s380, 0
      %s383 = sadd.s32 %s382, 1
      %s384 = scalar_select %p381, %s382, %s383
      %p387 = pneg %p381
      %p388 = scmp.eq.s32.totalorder %s32, 1
      %p389 = por %p387, %p388
      %p390 = scmp.ne.s32.totalorder %s382, %s385
      %p391 = scmp.eq.s32.totalorder %s32, 0
      %p392 = por %p390, %p391
      %p393 = scmp.ne.s32.totalorder %s382, %s385
      %p394 = scmp.eq.s32.totalorder %s37, 1
      %p395 = por %p393, %p394
      %p396 = scmp.ne.s32.totalorder %s385, %s386
      %p397 = scmp.eq.s32.totalorder %s37, 0
      %p398 = por %p396, %p397
      %p399 = scmp.ne.s32.totalorder %s385, %s386
      %p400 = scmp.eq.s32.totalorder %s38, 1
      %p401 = por %p399, %p400
      %p403 = scmp.ne.s32.totalorder %s386, %s402
      %p404 = scmp.eq.s32.totalorder %s38, 0
      %p405 = por %p403, %p404
      %s406 = ssub.s32 %s40, %s47
      %p407 = scmp.eq.s32.totalorder %s406, 0
      %s409 = sadd.s32 %s408, 1
      %s410 = scalar_select %p407, %s408, %s409
      %p413 = pneg %p407
      %p414 = scmp.eq.s32.totalorder %s32, 1
      %p415 = por %p413, %p414
      %p416 = scmp.ne.s32.totalorder %s408, %s411
      %p417 = scmp.eq.s32.totalorder %s32, 0
      %p418 = por %p416, %p417
      %p419 = scmp.ne.s32.totalorder %s408, %s411
      %p420 = scmp.eq.s32.totalorder %s37, 1
      %p421 = por %p419, %p420
      %p422 = scmp.ne.s32.totalorder %s411, %s412
      %p423 = scmp.eq.s32.totalorder %s37, 0
      %p424 = por %p422, %p423
      %p425 = scmp.ne.s32.totalorder %s411, %s412
      %p426 = scmp.eq.s32.totalorder %s38, 1
      %p427 = por %p425, %p426
      %p429 = scmp.ne.s32.totalorder %s412, %s428
      %p430 = scmp.eq.s32.totalorder %s38, 0
      %p431 = por %p429, %p430
      %s433 = sadd.s32 %s432, 1
      %p436 = scmp.eq.s32.totalorder %s32, 1
      %p437 = scmp.ne.s32.totalorder %s432, %s434
      %p438 = scmp.eq.s32.totalorder %s32, 0
      %p439 = por %p437, %p438
      %p440 = scmp.ne.s32.totalorder %s432, %s434
      %p441 = scmp.eq.s32.totalorder %s37, 1
      %p442 = por %p440, %p441
      %p443 = scmp.ne.s32.totalorder %s434, %s435
      %p444 = scmp.eq.s32.totalorder %s37, 0
      %p445 = por %p443, %p444
      %p446 = scmp.ne.s32.totalorder %s434, %s435
      %p447 = scmp.eq.s32.totalorder %s38, 1
      %p448 = por %p446, %p447
      %p450 = scmp.ne.s32.totalorder %s435, %s449
      %p451 = scmp.eq.s32.totalorder %s38, 0
      %p452 = por %p450, %p451
      %s454 = sadd.s32 %s453, 1
      %p457 = scmp.eq.s32.totalorder %s32, 1
      %p458 = scmp.ne.s32.totalorder %s453, %s455
      %p459 = scmp.eq.s32.totalorder %s32, 0
      %p460 = por %p458, %p459
      %p461 = scmp.ne.s32.totalorder %s453, %s455
      %p462 = scmp.eq.s32.totalorder %s37, 1
      %p463 = por %p461, %p462
      %p464 = scmp.ne.s32.totalorder %s455, %s456
      %p465 = scmp.eq.s32.totalorder %s37, 0
      %p466 = por %p464, %p465
      %p467 = scmp.ne.s32.totalorder %s455, %s456
      %p468 = scmp.eq.s32.totalorder %s38, 1
      %p469 = por %p467, %p468
      %p471 = scmp.ne.s32.totalorder %s456, %s470
      %p472 = scmp.eq.s32.totalorder %s38, 0
      %p473 = por %p471, %p472
      %s475 = sadd.s32 %s474, 1
      %p478 = scmp.eq.s32.totalorder %s32, 1
      %p479 = scmp.ne.s32.totalorder %s474, %s476
      %p480 = scmp.eq.s32.totalorder %s32, 0
      %p481 = por %p479, %p480
      %p482 = scmp.ne.s32.totalorder %s474, %s476
      %p483 = scmp.eq.s32.totalorder %s37, 1
      %p484 = por %p482, %p483
      %p485 = scmp.ne.s32.totalorder %s476, %s477
      %p486 = scmp.eq.s32.totalorder %s37, 0
      %p487 = por %p485, %p486
      %p488 = scmp.ne.s32.totalorder %s476, %s477
      %p489 = scmp.eq.s32.totalorder %s38, 1
      %p490 = por %p488, %p489
      %p492 = scmp.ne.s32.totalorder %s477, %s491
      %p493 = scmp.eq.s32.totalorder %s38, 0
      %p494 = por %p492, %p493
      %s495 = ssub.s32 %s39, %s51
      %p496 = scmp.eq.s32.totalorder %s495, 0
      %s498 = sadd.s32 %s497, 1
      %s499 = scalar_select %p496, %s497, %s498
      %p502 = pneg %p496
      %p503 = scmp.eq.s32.totalorder %s32, 1
      %p504 = por %p502, %p503
      %p505 = scmp.ne.s32.totalorder %s497, %s500
      %p506 = scmp.eq.s32.totalorder %s32, 0
      %p507 = por %p505, %p506
      %p508 = scmp.ne.s32.totalorder %s497, %s500
      %p509 = scmp.eq.s32.totalorder %s37, 1
      %p510 = por %p508, %p509
      %p511 = scmp.ne.s32.totalorder %s500, %s501
      %p512 = scmp.eq.s32.totalorder %s37, 0
      %p513 = por %p511, %p512
      %p514 = scmp.ne.s32.totalorder %s500, %s501
      %p515 = scmp.eq.s32.totalorder %s38, 1
      %p516 = por %p514, %p515
      %p518 = scmp.ne.s32.totalorder %s501, %s517
      %p519 = scmp.eq.s32.totalorder %s38, 0
      %p520 = por %p518, %p519
      %p521 = scmp.le.s32.totalorder 1, %s32
      %p522 = scmp.lt.s32.totalorder %s32, 3
      %p523 = pnand %p521, %p522
      %p524 = pneg %p523
      // Predicated region
      $region9: #{tpu_custom_call.1} parent=5 // pred_check
        _
      $region10: #{tpu_custom_call.1} parent=5 // pred_check_branch
        %526 = sbr.rel (%p523) target = $region12
      $region11: #{tpu_custom_call.1} parent=5 // pred_region
        %s527 = ssub.s32 %s32, 1
        // Predicated region
        $region13: #{tpu_custom_call.1} parent=11 // pred_check
          %p528 = pneg %p70
        $region14: #{tpu_custom_call.1} parent=11 // pred_check_branch
          %530 = sbr.rel (%p528) target = $region16
        $region15: #{tpu_custom_call.1} parent=11 // pred_region
          %s531 = smul.u32 8, %s41
          %p532 = scmp.lt.s32.totalorder %s531, 7
          %s533 = scalar_select %p532, %s531, 7
          %s534 = smul.addr %s533, 8
          %s535 = scalar_lea.vmem %s1, %s534
          %s536 = smul.u32 8, %s41
        $region16: #{tpu_custom_call.1} parent=11 // pred_fallthru
          _
        // Predicated region
        $region17: #{tpu_custom_call.1} parent=11 // pred_check
          %p537 = pneg %p91
        $region18: #{tpu_custom_call.1} parent=11 // pred_check_branch
          %539 = sbr.rel (%p537) target = $region20
        $region19: #{tpu_custom_call.1} parent=11 // pred_region
          %s541 = ssub.s32 128, 128
          %542 = vsyncadd [#allocation6], %s541
          %s544 = sshll.u32 [#allocation5], 4
          %s545 = int_to_ptr.vmem [resolvable:$true] %s544
          %547 = dma.hbm_to_vmem [thread:$0]  %s2, 128, %s545, [#allocation6]
        $region20: #{tpu_custom_call.1} parent=11 // pred_fallthru
          _
        // Predicated region
        $region21: #{tpu_custom_call.1} parent=11 // pred_check
          %p548 = pneg %p112
        $region22: #{tpu_custom_call.1} parent=11 // pred_check_branch
          %550 = sbr.rel (%p548) target = $region24
        $region23: #{tpu_custom_call.1} parent=11 // pred_region
          %s552 = ssub.s32 128, 128
          %553 = vsyncadd [#allocation9], %s552
          %s555 = sshll.u32 [#allocation8], 4
          %s556 = int_to_ptr.vmem [resolvable:$true] %s555
          %558 = dma.hbm_to_vmem [thread:$0]  %s3, 128, %s556, [#allocation9]
        $region24: #{tpu_custom_call.1} parent=11 // pred_fallthru
          _
        // Predicated region
        $region25: #{tpu_custom_call.1} parent=11 // pred_check
          %p559 = pneg %p445
        $region26: #{tpu_custom_call.1} parent=11 // pred_check_branch
          %561 = sbr.rel (%p559) target = $region28
        $region27: #{tpu_custom_call.1} parent=11 // pred_region
          _
        $region28: #{tpu_custom_call.1} parent=11 // pred_fallthru
          _
        // Predicated region
        $region29: #{tpu_custom_call.1} parent=11 // pred_check
          %p562 = pneg %p466
        $region30: #{tpu_custom_call.1} parent=11 // pred_check_branch
          %564 = sbr.rel (%p562) target = $region32
        $region31: #{tpu_custom_call.1} parent=11 // pred_region
          _
        $region32: #{tpu_custom_call.1} parent=11 // pred_fallthru
          _
        // Predicated region
        $region33: #{tpu_custom_call.1} parent=11 // pred_check
          %p565 = pneg %p487
        $region34: #{tpu_custom_call.1} parent=11 // pred_check_branch
          %567 = sbr.rel (%p565) target = $region36
        $region35: #{tpu_custom_call.1} parent=11 // pred_region
          _
        $region36: #{tpu_custom_call.1} parent=11 // pred_fallthru
          _
      $region12: #{tpu_custom_call.1} parent=5 // pred_fallthru
        _
      %p568 = scmp.lt.s32.totalorder %s32, 2
      // Predicated region
      $region37: #{tpu_custom_call.1} parent=5 // pred_check
        %p569 = pneg %p568
      $region38: #{tpu_custom_call.1} parent=5 // pred_check_branch
        %571 = sbr.rel (%p569) target = $region40
      $region39: #{tpu_custom_call.1} parent=5 // pred_region
        // Predicated region
        $region41: #{tpu_custom_call.1} parent=39 // pred_check
          %p572 = pneg %p132
        $region42: #{tpu_custom_call.1} parent=39 // pred_check_branch
          %574 = sbr.rel (%p572) target = $region44
        $region43: #{tpu_custom_call.1} parent=39 // pred_region
          %p575 = scmp.lt.s32.totalorder %s40, 1
          %s576 = scalar_select %p575, %s40, 1
          %s577 = scalar_lea.vmem %s4, %s576
        $region44: #{tpu_custom_call.1} parent=39 // pred_fallthru
          _
        // Predicated region
        $region45: #{tpu_custom_call.1} parent=39 // pred_check
          %p578 = pneg %p158
        $region46: #{tpu_custom_call.1} parent=39 // pred_check_branch
          %580 = sbr.rel (%p578) target = $region48
        $region47: #{tpu_custom_call.1} parent=39 // pred_region
          %s581 = sand.u32 %s32, 1
          %s582 = scalar_lea.sflag [#allocation6], %s581
          %s583 = sand.u32 %s148, 1
          %s584 = scalar_lea.vmem [#allocation10], %s583
          %s586 = ssub.s32 16, 16
          %587 = vsyncadd %s582, %s586
          %s588 = smul.addr %s40, 16
          %s589 = scalar_lea.hbm %s5, %s588
          %s591 = sshll.u32 %s584, 4
          %s592 = int_to_ptr.vmem [resolvable:$true] %s591
          %594 = dma.hbm_to_vmem [thread:$0]  %s589, 16, %s592, %s582
        $region48: #{tpu_custom_call.1} parent=39 // pred_fallthru
          _
        // Predicated region
        $region49: #{tpu_custom_call.1} parent=39 // pred_check
          %p595 = pneg %p184
        $region50: #{tpu_custom_call.1} parent=39 // pred_check_branch
          %597 = sbr.rel (%p595) target = $region52
        $region51: #{tpu_custom_call.1} parent=39 // pred_region
          %p598 = scmp.lt.s32.totalorder %s40, 1
          %s599 = scalar_select %p598, %s40, 1
          %s600 = smul.addr %s599, 4
          %s601 = smul.addr %s600, 4
          %s602 = scalar_lea.vmem %s6, %s601
        $region52: #{tpu_custom_call.1} parent=39 // pred_fallthru
          _
        // Predicated region
        $region53: #{tpu_custom_call.1} parent=39 // pred_check
          %p603 = pneg %p210
        $region54: #{tpu_custom_call.1} parent=39 // pred_check_branch
          %605 = sbr.rel (%p603) target = $region56
        $region55: #{tpu_custom_call.1} parent=39 // pred_region
          %s606 = sand.u32 %s32, 1
          %s607 = scalar_lea.sflag [#allocation6], %s606
          %s608 = sand.u32 %s200, 1
          %s609 = scalar_lea.vmem [#allocation11], %s608
          %s611 = ssub.s32 16, 16
          %612 = vsyncadd %s607, %s611
          %s613 = smul.addr %s40, 16
          %s614 = scalar_lea.hbm %s7, %s613
          %s616 = sshll.u32 %s609, 4
          %s617 = int_to_ptr.vmem [resolvable:$true] %s616
          %619 = dma.hbm_to_vmem [thread:$0]  %s614, 16, %s617, %s607
        $region56: #{tpu_custom_call.1} parent=39 // pred_fallthru
          _
        // Predicated region
        $region57: #{tpu_custom_call.1} parent=39 // pred_check
          %p620 = pneg %p236
        $region58: #{tpu_custom_call.1} parent=39 // pred_check_branch
          %622 = sbr.rel (%p620) target = $region60
        $region59: #{tpu_custom_call.1} parent=39 // pred_region
          %p623 = scmp.lt.s32.totalorder %s40, 1
          %s624 = scalar_select %p623, %s40, 1
          %s625 = smul.addr %s624, 4
          %s626 = smul.addr %s625, 4
          %s627 = scalar_lea.vmem %s8, %s626
        $region60: #{tpu_custom_call.1} parent=39 // pred_fallthru
          _
        // Predicated region
        $region61: #{tpu_custom_call.1} parent=39 // pred_check
          %p628 = pneg %p262
        $region62: #{tpu_custom_call.1} parent=39 // pred_check_branch
          %630 = sbr.rel (%p628) target = $region64
        $region63: #{tpu_custom_call.1} parent=39 // pred_region
          %s631 = sand.u32 %s32, 1
          %s632 = scalar_lea.sflag [#allocation6], %s631
          %s633 = sand.u32 %s252, 1
          %s634 = scalar_lea.vmem [#allocation12], %s633
          %s636 = ssub.s32 16, 16
          %637 = vsyncadd %s632, %s636
          %s638 = smul.addr %s40, 16
          %s639 = scalar_lea.hbm %s9, %s638
          %s641 = sshll.u32 %s634, 4
          %s642 = int_to_ptr.vmem [resolvable:$true] %s641
          %644 = dma.hbm_to_vmem [thread:$0]  %s639, 16, %s642, %s632
        $region64: #{tpu_custom_call.1} parent=39 // pred_fallthru
          _
        // Predicated region
        $region65: #{tpu_custom_call.1} parent=39 // pred_check
          %p645 = pneg %p288
        $region66: #{tpu_custom_call.1} parent=39 // pred_check_branch
          %647 = sbr.rel (%p645) target = $region68
        $region67: #{tpu_custom_call.1} parent=39 // pred_region
          %s648 = sand.u32 %s32, 1
          %s649 = scalar_lea.sflag [#allocation6], %s648
          %s650 = sand.u32 %s278, 1
          %s651 = scalar_lea.vmem [#allocation13], %s650
          %s653 = ssub.s32 16, 16
          %654 = vsyncadd %s649, %s653
          %s655 = smul.addr %s40, 16
          %s656 = scalar_lea.hbm %s10, %s655
          %s658 = sshll.u32 %s651, 4
          %s659 = int_to_ptr.vmem [resolvable:$true] %s658
          %661 = dma.hbm_to_vmem [thread:$0]  %s656, 16, %s659, %s649
        $region68: #{tpu_custom_call.1} parent=39 // pred_fallthru
          _
        // Predicated region
        $region69: #{tpu_custom_call.1} parent=39 // pred_check
          %p662 = pneg %p314
        $region70: #{tpu_custom_call.1} parent=39 // pred_check_branch
          %664 = sbr.rel (%p662) target = $region72
        $region71: #{tpu_custom_call.1} parent=39 // pred_region
          %p665 = scmp.lt.s32.totalorder %s40, 1
          %s666 = scalar_select %p665, %s40, 1
          %s667 = scalar_lea.vmem %s11, %s666
        $region72: #{tpu_custom_call.1} parent=39 // pred_fallthru
          _
        // Predicated region
        $region73: #{tpu_custom_call.1} parent=39 // pred_check
          %p668 = pneg %p340
        $region74: #{tpu_custom_call.1} parent=39 // pred_check_branch
          %670 = sbr.rel (%p668) target = $region76
        $region75: #{tpu_custom_call.1} parent=39 // pred_region
          %p671 = scmp.lt.s32.totalorder %s40, 1
          %s672 = scalar_select %p671, %s40, 1
          %s673 = smul.addr %s672, 4
          %s674 = smul.addr %s673, 4
          %s675 = scalar_lea.vmem %s12, %s674
        $region76: #{tpu_custom_call.1} parent=39 // pred_fallthru
          _
        // Predicated region
        $region77: #{tpu_custom_call.1} parent=39 // pred_check
          %p676 = pneg %p366
        $region78: #{tpu_custom_call.1} parent=39 // pred_check_branch
          %678 = sbr.rel (%p676) target = $region80
        $region79: #{tpu_custom_call.1} parent=39 // pred_region
          %s679 = sand.u32 %s32, 1
          %s680 = scalar_lea.sflag [#allocation6], %s679
          %s681 = sand.u32 %s356, 1
          %s682 = scalar_lea.vmem [#allocation14], %s681
          %s684 = ssub.s32 16, 16
          %685 = vsyncadd %s680, %s684
          %s686 = smul.addr %s40, 16
          %s687 = scalar_lea.hbm %s13, %s686
          %s689 = sshll.u32 %s682, 4
          %s690 = int_to_ptr.vmem [resolvable:$true] %s689
          %692 = dma.hbm_to_vmem [thread:$0]  %s687, 16, %s690, %s680
        $region80: #{tpu_custom_call.1} parent=39 // pred_fallthru
          _
        // Predicated region
        $region81: #{tpu_custom_call.1} parent=39 // pred_check
          %p693 = pneg %p392
        $region82: #{tpu_custom_call.1} parent=39 // pred_check_branch
          %695 = sbr.rel (%p693) target = $region84
        $region83: #{tpu_custom_call.1} parent=39 // pred_region
          %p696 = scmp.lt.s32.totalorder %s40, 1
          %s697 = scalar_select %p696, %s40, 1
          %s698 = smul.addr %s697, 16
          %s699 = smul.addr %s698, 4
          %s700 = scalar_lea.vmem %s14, %s699
        $region84: #{tpu_custom_call.1} parent=39 // pred_fallthru
          _
        // Predicated region
        $region85: #{tpu_custom_call.1} parent=39 // pred_check
          %p701 = pneg %p418
        $region86: #{tpu_custom_call.1} parent=39 // pred_check_branch
          %703 = sbr.rel (%p701) target = $region88
        $region87: #{tpu_custom_call.1} parent=39 // pred_region
          %p704 = scmp.lt.s32.totalorder %s40, 1
          %s705 = scalar_select %p704, %s40, 1
          %s706 = scalar_lea.vmem %s15, %s705
        $region88: #{tpu_custom_call.1} parent=39 // pred_fallthru
          _
      $region40: #{tpu_custom_call.1} parent=5 // pred_fallthru
        _
      %p707 = scmp.le.s32.totalorder 1, %s32
      %p708 = scmp.lt.s32.totalorder %s32, 3
      %p709 = pnand %p707, %p708
      %p710 = pneg %p709
      // Predicated region
      $region89: #{tpu_custom_call.1} parent=5 // pred_check
        _
      $region90: #{tpu_custom_call.1} parent=5 // pred_check_branch
        %712 = sbr.rel (%p709) target = $region92
      $region91: #{tpu_custom_call.1} parent=5 // pred_region
        %s713 = ssub.s32 %s32, 1
        // Predicated region
        $region93: #{tpu_custom_call.1} parent=91 // pred_check
          %p714 = pneg %p91
        $region94: #{tpu_custom_call.1} parent=91 // pred_check_branch
          %716 = sbr.rel (%p714) target = $region96
        $region95: #{tpu_custom_call.1} parent=91 // pred_region
          %717 = dma.done [#allocation6], 128
        $region96: #{tpu_custom_call.1} parent=91 // pred_fallthru
          _
        // Predicated region
        $region97: #{tpu_custom_call.1} parent=91 // pred_check
          %p718 = pneg %p112
        $region98: #{tpu_custom_call.1} parent=91 // pred_check_branch
          %720 = sbr.rel (%p718) target = $region100
        $region99: #{tpu_custom_call.1} parent=91 // pred_region
          %721 = dma.done [#allocation9], 128
        $region100: #{tpu_custom_call.1} parent=91 // pred_fallthru
          _
        %s722 = sand.u32 %s37, 1
        %s723 = scalar_lea.sflag [#allocation6], %s722
        %s724 = sand.u32 %s151, 1
        %s725 = scalar_lea.vmem [#allocation10], %s724
        // Predicated region
        $region101: #{tpu_custom_call.1} parent=91 // pred_check
          %p726 = pneg %p164
        $region102: #{tpu_custom_call.1} parent=91 // pred_check_branch
          %728 = sbr.rel (%p726) target = $region104
        $region103: #{tpu_custom_call.1} parent=91 // pred_region
          %729 = dma.done %s723, 16
        $region104: #{tpu_custom_call.1} parent=91 // pred_fallthru
          _
        %s730 = sand.u32 %s37, 1
        %s731 = scalar_lea.sflag [#allocation6], %s730
        %s732 = sand.u32 %s203, 1
        %s733 = scalar_lea.vmem [#allocation11], %s732
        // Predicated region
        $region105: #{tpu_custom_call.1} parent=91 // pred_check
          %p734 = pneg %p216
        $region106: #{tpu_custom_call.1} parent=91 // pred_check_branch
          %736 = sbr.rel (%p734) target = $region108
        $region107: #{tpu_custom_call.1} parent=91 // pred_region
          %737 = dma.done %s731, 16
        $region108: #{tpu_custom_call.1} parent=91 // pred_fallthru
          _
        %s738 = sand.u32 %s37, 1
        %s739 = scalar_lea.sflag [#allocation6], %s738
        %s740 = sand.u32 %s255, 1
        %s741 = scalar_lea.vmem [#allocation12], %s740
        // Predicated region
        $region109: #{tpu_custom_call.1} parent=91 // pred_check
          %p742 = pneg %p268
        $region110: #{tpu_custom_call.1} parent=91 // pred_check_branch
          %744 = sbr.rel (%p742) target = $region112
        $region111: #{tpu_custom_call.1} parent=91 // pred_region
          %745 = dma.done %s739, 16
        $region112: #{tpu_custom_call.1} parent=91 // pred_fallthru
          _
        %s746 = sand.u32 %s37, 1
        %s747 = scalar_lea.sflag [#allocation6], %s746
        %s748 = sand.u32 %s281, 1
        %s749 = scalar_lea.vmem [#allocation13], %s748
        // Predicated region
        $region113: #{tpu_custom_call.1} parent=91 // pred_check
          %p750 = pneg %p294
        $region114: #{tpu_custom_call.1} parent=91 // pred_check_branch
          %752 = sbr.rel (%p750) target = $region116
        $region115: #{tpu_custom_call.1} parent=91 // pred_region
          %753 = dma.done %s747, 16
        $region116: #{tpu_custom_call.1} parent=91 // pred_fallthru
          _
        %s754 = sand.u32 %s37, 1
        %s755 = scalar_lea.sflag [#allocation6], %s754
        %s756 = sand.u32 %s359, 1
        %s757 = scalar_lea.vmem [#allocation14], %s756
        // Predicated region
        $region117: #{tpu_custom_call.1} parent=91 // pred_check
          %p758 = pneg %p372
        $region118: #{tpu_custom_call.1} parent=91 // pred_check_branch
          %760 = sbr.rel (%p758) target = $region120
        $region119: #{tpu_custom_call.1} parent=91 // pred_region
          %761 = dma.done %s755, 16
        $region120: #{tpu_custom_call.1} parent=91 // pred_fallthru
          _
        %s762 = smul.u32 8, %s41
        %p763 = scmp.lt.s32.totalorder %s762, 7
        %s764 = scalar_select %p763, %s762, 7
        %s765 = smul.addr %s764, 8
        %s766 = scalar_lea.vmem %s1, %s765
        %p767 = pneg %p70
        %p768 = pneg %p67
        %p769 = pneg %p91
        %p770 = pneg %p88
        %p771 = pneg %p112
        %p772 = pneg %p109
        %p773 = scmp.lt.s32.totalorder %s42, 1
        %s774 = scalar_select %p773, %s42, 1
        %s775 = scalar_lea.vmem %s4, %s774
        %p776 = pneg %p138
        %p777 = pneg %p135
        %s778 = sand.u32 %s37, 1
        %s779 = scalar_lea.sflag [#allocation6], %s778
        %s780 = sand.u32 %s151, 1
        %s781 = scalar_lea.vmem [#allocation10], %s780
        %p782 = pneg %p164
        %p783 = pneg %p161
        %p784 = scmp.lt.s32.totalorder %s42, 1
        %s785 = scalar_select %p784, %s42, 1
        %s786 = smul.addr %s785, 4
        %s787 = smul.addr %s786, 4
        %s788 = scalar_lea.vmem %s6, %s787
        %p789 = pneg %p190
        %p790 = pneg %p187
        %s791 = sand.u32 %s37, 1
        %s792 = scalar_lea.sflag [#allocation6], %s791
        %s793 = sand.u32 %s203, 1
        %s794 = scalar_lea.vmem [#allocation11], %s793
        %p795 = pneg %p216
        %p796 = pneg %p213
        %p797 = scmp.lt.s32.totalorder %s42, 1
        %s798 = scalar_select %p797, %s42, 1
        %s799 = smul.addr %s798, 4
        %s800 = smul.addr %s799, 4
        %s801 = scalar_lea.vmem %s8, %s800
        %p802 = pneg %p242
        %p803 = pneg %p239
        %s804 = sand.u32 %s37, 1
        %s805 = scalar_lea.sflag [#allocation6], %s804
        %s806 = sand.u32 %s255, 1
        %s807 = scalar_lea.vmem [#allocation12], %s806
        %p808 = pneg %p268
        %p809 = pneg %p265
        %s810 = sand.u32 %s37, 1
        %s811 = scalar_lea.sflag [#allocation6], %s810
        %s812 = sand.u32 %s281, 1
        %s813 = scalar_lea.vmem [#allocation13], %s812
        %p814 = pneg %p294
        %p815 = pneg %p291
        %p816 = scmp.lt.s32.totalorder %s42, 1
        %s817 = scalar_select %p816, %s42, 1
        %s818 = scalar_lea.vmem %s11, %s817
        %p819 = pneg %p320
        %p820 = pneg %p317
        %p821 = scmp.lt.s32.totalorder %s42, 1
        %s822 = scalar_select %p821, %s42, 1
        %s823 = smul.addr %s822, 4
        %s824 = smul.addr %s823, 4
        %s825 = scalar_lea.vmem %s12, %s824
        %p826 = pneg %p346
        %p827 = pneg %p343
        %s828 = sand.u32 %s37, 1
        %s829 = scalar_lea.sflag [#allocation6], %s828
        %s830 = sand.u32 %s359, 1
        %s831 = scalar_lea.vmem [#allocation14], %s830
        %p832 = pneg %p372
        %p833 = pneg %p369
        %p834 = scmp.lt.s32.totalorder %s42, 1
        %s835 = scalar_select %p834, %s42, 1
        %s836 = smul.addr %s835, 16
        %s837 = smul.addr %s836, 4
        %s838 = scalar_lea.vmem %s14, %s837
        %p839 = pneg %p398
        %p840 = pneg %p395
        %p841 = scmp.lt.s32.totalorder %s42, 1
        %s842 = scalar_select %p841, %s42, 1
        %s843 = scalar_lea.vmem %s15, %s842
        %p844 = pneg %p424
        %p845 = pneg %p421
        %p846 = pneg %p445
        %p847 = pneg %p442
        %p848 = pneg %p466
        %p849 = pneg %p463
        %p850 = pneg %p487
        %p851 = pneg %p484
        %p852 = pneg %p513
        %p853 = pneg %p510
        %s854 = smul.u32 8, %s41
        %p855 = scmp.lt.s32.totalorder %s854, 7
        %s856 = scalar_select %p855, %s854, 7
        %s857 = smul.addr %s856, 8
        %s858 = scalar_lea.vmem %s1, %s857
        %s859 = smul.u32 8, %s41
        %p860 = scmp.lt.s32.totalorder %s42, 1
        %s861 = scalar_select %p860, %s42, 1
        %s862 = scalar_lea.vmem %s4, %s861
        %p863 = scmp.lt.s32.totalorder %s42, 1
        %s864 = scalar_select %p863, %s42, 1
        %s865 = smul.addr %s864, 4
        %s866 = smul.addr %s865, 4
        %s867 = scalar_lea.vmem %s6, %s866
        %p868 = scmp.lt.s32.totalorder %s42, 1
        %s869 = scalar_select %p868, %s42, 1
        %s870 = smul.addr %s869, 4
        %s871 = smul.addr %s870, 4
        %s872 = scalar_lea.vmem %s8, %s871
        %p873 = scmp.lt.s32.totalorder %s42, 1
        %s874 = scalar_select %p873, %s42, 1
        %s875 = scalar_lea.vmem %s11, %s874
        %p876 = scmp.lt.s32.totalorder %s42, 1
        %s877 = scalar_select %p876, %s42, 1
        %s878 = smul.addr %s877, 4
        %s879 = smul.addr %s878, 4
        %s880 = scalar_lea.vmem %s12, %s879
        %p881 = scmp.lt.s32.totalorder %s42, 1
        %s882 = scalar_select %p881, %s42, 1
        %s883 = smul.addr %s882, 16
        %s884 = smul.addr %s883, 4
        %s885 = scalar_lea.vmem %s14, %s884
        %p886 = scmp.lt.s32.totalorder %s42, 1
        %s887 = scalar_select %p886, %s42, 1
        %s888 = scalar_lea.vmem %s15, %s887
        %p892 = scmp.eq.s32.totalorder %s42, 0
        // Predicated region
        $region121: #{tpu_custom_call.1} parent=91 // pred_check
          %p893 = pneg %p892
        $region122: #{tpu_custom_call.1} parent=91 // pred_check_branch
          %895 = sbr.rel (%p893) target = $region124
        $region123: #{tpu_custom_call.1} parent=91 // pred_region
          %v896 = vld [vmem:[%s858] sm:$0xff]
          %v897 = vld [vmem:[%s858 + $0x8] sm:$0xff]
          %v898 = vld [vmem:[%s858 + $0x10] sm:$0xff]
          %v899 = vld [vmem:[%s858 + $0x18] sm:$0xff]
          %v900 = vld [vmem:[%s858 + $0x20] sm:$0xff]
          %v901 = vld [vmem:[%s858 + $0x28] sm:$0xff]
          %v902 = vld [vmem:[%s858 + $0x30] sm:$0xff]
          %v903 = vld [vmem:[%s858 + $0x38] sm:$0xff]
          %v904 = vld [vmem:[#allocation5] sm:$0xff]
          %v905 = vadd.f32 %v896, %v904
          %v906 = vadd.f32 %v897, %v904
          %v907 = vadd.f32 %v898, %v904
          %v908 = vadd.f32 %v899, %v904
          %v909 = vadd.f32 %v900, %v904
          %v910 = vadd.f32 %v901, %v904
          %v911 = vadd.f32 %v902, %v904
          %v912 = vadd.f32 %v903, %v904
          %vm913 = vcmask 261120
          %914 = vst.msk [vmem:[#allocation2] sm:$0xff] %vm913, %v905
          %915 = vst.msk [vmem:[#allocation2 + $0x8] sm:$0xff] %vm913, %v906
          %916 = vst.msk [vmem:[#allocation2 + $0x10] sm:$0xff] %vm913, %v907
          %917 = vst.msk [vmem:[#allocation2 + $0x18] sm:$0xff] %vm913, %v908
          %918 = vst.msk [vmem:[#allocation2 + $0x20] sm:$0xff] %vm913, %v909
          %919 = vst.msk [vmem:[#allocation2 + $0x28] sm:$0xff] %vm913, %v910
          %920 = vst.msk [vmem:[#allocation2 + $0x30] sm:$0xff] %vm913, %v911
          %921 = vst.msk [vmem:[#allocation2 + $0x38] sm:$0xff] %vm913, %v912
        $region124: #{tpu_custom_call.1} parent=91 // pred_fallthru
          _
        %v922 = vld [vmem:[#allocation2] sm:$0xff]
        %v923 = vld [vmem:[#allocation2 + $0x8] sm:$0xff]
        %v924 = vld [vmem:[#allocation2 + $0x10] sm:$0xff]
        %v925 = vld [vmem:[#allocation2 + $0x18] sm:$0xff]
        %v926 = vld [vmem:[#allocation2 + $0x20] sm:$0xff]
        %v927 = vld [vmem:[#allocation2 + $0x28] sm:$0xff]
        %v928 = vld [vmem:[#allocation2 + $0x30] sm:$0xff]
        %v929 = vld [vmem:[#allocation2 + $0x38] sm:$0xff]
        %v930 = vld [vmem:[%s862] sm:$0x1]
        %v931 = vld [vmem:[%s725] sm:$0x1]
        %vm932 = vcmask 261120
        %v933 = vsel %vm932, %v922, 0.0
        %934 = vadd.xlane.f32.xlu0 %v933
        %v935 = vpop.xlane.xlu0 %934
        %v936 = vsel %vm932, %v923, 0.0
        %937 = vadd.xlane.f32.xlu0 %v936
        %v938 = vpop.xlane.xlu0 %937
        %v939 = vsel %vm932, %v924, 0.0
        %940 = vadd.xlane.f32.xlu0 %v939
        %v941 = vpop.xlane.xlu0 %940
        %v942 = vsel %vm932, %v925, 0.0
        %943 = vadd.xlane.f32.xlu0 %v942
        %v944 = vpop.xlane.xlu0 %943
        %v945 = vsel %vm932, %v926, 0.0
        %946 = vadd.xlane.f32.xlu0 %v945
        %v947 = vpop.xlane.xlu0 %946
        %v948 = vsel %vm932, %v927, 0.0
        %949 = vadd.xlane.f32.xlu0 %v948
        %v950 = vpop.xlane.xlu0 %949
        %v951 = vsel %vm932, %v928, 0.0
        %952 = vadd.xlane.f32.xlu0 %v951
        %v953 = vpop.xlane.xlu0 %952
        %v954 = vsel %vm932, %v929, 0.0
        %955 = vadd.xlane.f32.xlu0 %v954
        %v956 = vpop.xlane.xlu0 %955
        %v957 = vrcp.pop 32.0
        %v958 = vmul.f32 %v935, %v957
        %v959 = vmul.f32 %v938, %v957
        %v960 = vmul.f32 %v941, %v957
        %v961 = vmul.f32 %v944, %v957
        %v962 = vmul.f32 %v947, %v957
        %v963 = vmul.f32 %v950, %v957
        %v964 = vmul.f32 %v953, %v957
        %v965 = vmul.f32 %v956, %v957
        %v966 = vsub.f32 %v922, %v958
        %v967 = vsub.f32 %v923, %v959
        %v968 = vsub.f32 %v924, %v960
        %v969 = vsub.f32 %v925, %v961
        %v970 = vsub.f32 %v926, %v962
        %v971 = vsub.f32 %v927, %v963
        %v972 = vsub.f32 %v928, %v964
        %v973 = vsub.f32 %v929, %v965
        %v974 = vmul.f32 %v966, %v966
        %v975 = vmul.f32 %v967, %v967
        %v976 = vmul.f32 %v968, %v968
        %v977 = vmul.f32 %v969, %v969
        %v978 = vmul.f32 %v970, %v970
        %v979 = vmul.f32 %v971, %v971
        %v980 = vmul.f32 %v972, %v972
        %v981 = vmul.f32 %v973, %v973
        %v982 = vsel %vm932, %v974, 0.0
        %983 = vadd.xlane.f32.xlu0 %v982
        %v984 = vpop.xlane.xlu0 %983
        %v985 = vsel %vm932, %v975, 0.0
        %986 = vadd.xlane.f32.xlu0 %v985
        %v987 = vpop.xlane.xlu0 %986
        %v988 = vsel %vm932, %v976, 0.0
        %989 = vadd.xlane.f32.xlu0 %v988
        %v990 = vpop.xlane.xlu0 %989
        %v991 = vsel %vm932, %v977, 0.0
        %992 = vadd.xlane.f32.xlu0 %v991
        %v993 = vpop.xlane.xlu0 %992
        %v994 = vsel %vm932, %v978, 0.0
        %995 = vadd.xlane.f32.xlu0 %v994
        %v996 = vpop.xlane.xlu0 %995
        %v997 = vsel %vm932, %v979, 0.0
        %998 = vadd.xlane.f32.xlu0 %v997
        %v999 = vpop.xlane.xlu0 %998
        %v1000 = vsel %vm932, %v980, 0.0
        %1001 = vadd.xlane.f32.xlu0 %v1000
        %v1002 = vpop.xlane.xlu0 %1001
        %v1003 = vsel %vm932, %v981, 0.0
        %1004 = vadd.xlane.f32.xlu0 %v1003
        %v1005 = vpop.xlane.xlu0 %1004
        %v1006 = vmul.f32 %v984, %v957
        %v1007 = vmul.f32 %v987, %v957
        %v1008 = vmul.f32 %v990, %v957
        %v1009 = vmul.f32 %v993, %v957
        %v1010 = vmul.f32 %v996, %v957
        %v1011 = vmul.f32 %v999, %v957
        %v1012 = vmul.f32 %v1002, %v957
        %v1013 = vmul.f32 %v1005, %v957
        %v1014 = vadd.f32 %v1006, 1e-05
        %v1015 = vadd.f32 %v1007, 1e-05
        %v1016 = vadd.f32 %v1008, 1e-05
        %v1017 = vadd.f32 %v1009, 1e-05
        %v1018 = vadd.f32 %v1010, 1e-05
        %v1019 = vadd.f32 %v1011, 1e-05
        %v1020 = vadd.f32 %v1012, 1e-05
        %v1021 = vadd.f32 %v1013, 1e-05
        %v1022 = vrsqrt.pop %v1014
        %v1023 = vrsqrt.pop %v1015
        %v1024 = vrsqrt.pop %v1016
        %v1025 = vrsqrt.pop %v1017
        %v1026 = vrsqrt.pop %v1018
        %v1027 = vrsqrt.pop %v1019
        %v1028 = vrsqrt.pop %v1020
        %v1029 = vrsqrt.pop %v1021
        %v1030 = vmul.f32 %v966, %v1022
        %v1031 = vmul.f32 %v967, %v1023
        %v1032 = vmul.f32 %v968, %v1024
        %v1033 = vmul.f32 %v969, %v1025
        %v1034 = vmul.f32 %v970, %v1026
        %v1035 = vmul.f32 %v971, %v1027
        %v1036 = vmul.f32 %v972, %v1028
        %v1037 = vmul.f32 %v973, %v1029
        %v1039 = vlaneseq
        %v1040 = vshrl.u32 %v1039, 7
        %v1041 = vsub.s32 0, %v1040
        %v1042 = vrot.slane %v930, %v1041
        %v1044 = vmul.f32 %v1030, %v1042
        %v1045 = vmul.f32 %v1031, %v1042
        %v1046 = vmul.f32 %v1032, %v1042
        %v1047 = vmul.f32 %v1033, %v1042
        %v1048 = vmul.f32 %v1034, %v1042
        %v1049 = vmul.f32 %v1035, %v1042
        %v1050 = vmul.f32 %v1036, %v1042
        %v1051 = vmul.f32 %v1037, %v1042
        %v1053 = vlaneseq
        %v1054 = vshrl.u32 %v1053, 7
        %v1055 = vsub.s32 0, %v1054
        %v1056 = vrot.slane %v931, %v1055
        %v1058 = vadd.f32 %v1044, %v1056
        %v1059 = vadd.f32 %v1045, %v1056
        %v1060 = vadd.f32 %v1046, %v1056
        %v1061 = vadd.f32 %v1047, %v1056
        %v1062 = vadd.f32 %v1048, %v1056
        %v1063 = vadd.f32 %v1049, %v1056
        %v1064 = vadd.f32 %v1050, %v1056
        %v1065 = vadd.f32 %v1051, %v1056
        %v1066 = vpack.c.bf16 %v1059, %v1058
        %v1067 = vpack.c.bf16 %v1061, %v1060
        %v1068 = vpack.c.bf16 %v1063, %v1062
        %v1069 = vpack.c.bf16 %v1065, %v1064
        %v1070 = vld [vmem:[%s867] sm:$0xf]
        %v1071 = vld [vmem:[%s867 + $0x4] sm:$0xf]
        %v1072 = vld [vmem:[%s867 + $0x8] sm:$0xf]
        %v1073 = vld [vmem:[%s867 + $0xc] sm:$0xf]
        %v1074 = vld [vmem:[%s733] sm:$0x1]
        %v1076 = vlaneseq
        %v1077 = vshrl.u32 %v1076, 7
        %v1078 = vsub.s32 0, %v1077
        %v1079 = vrot.slane %v1074, %v1078
        %v1085 = vunpack.c.l.b16 %v1070
        %v1086 = vunpack.c.l.b16 %v1071
        %v1087 = vunpack.c.l.b16 %v1072
        %v1088 = vunpack.c.l.b16 %v1073
        %v1089 = vpack.c.b16 %v1086, %v1085
        %v1090 = vpack.c.b16 %v1088, %v1087
        %v1094 = vsel %vm932, %v1066, 0
        %v1097 = vsel %vm932, %v1067, 0
        %v1100 = vsel %vm932, %v1068, 0
        %v1103 = vsel %vm932, %v1069, 0
        %1105 = vmatprep.subr.bf16.mxu0 0
        %1106 = vmatpush1.bf16.msra.mxu0 0
        %1107 = vmatprep.subr.bf16.mxu0 0
        %1108 = vmatpush1.bf16.msra.mxu0 0
        %1109 = vmatprep.subr.bf16.mxu0 0
        %1110 = vmatpush1.bf16.msra.mxu0 0
        %1111 = vmatprep.subr.bf16.mxu0 0
        %1112 = vmatpush1.bf16.msra.mxu0 0
        %1113 = vmatprep.subr.bf16.mxu0 0
        %1114 = vmatpush1.bf16.msra.mxu0 0
        %1115 = vmatprep.subr.bf16.mxu0 0
        %1116 = vmatpush1.bf16.msra.mxu0 0
        %1117 = vmatprep.subr.bf16.mxu0 0
        %1118 = vmatpush1.bf16.msra.mxu0 %v1090
        %1119 = vmatprep.subr.bf16.mxu0 0
        %1120 = vmatpush1.bf16.msra.mxu0 %v1089
        %1121 = vmatprep.subr.bf16.mxu0 0
        %1122 = vmatpush2.bf16.msra.mxu0 0
        %1123 = vmatprep.subr.bf16.mxu0 0
        %1124 = vmatpush2.bf16.msra.mxu0 0
        %1125 = vmatprep.subr.bf16.mxu0 0
        %1126 = vmatpush2.bf16.msra.mxu0 0
        %1127 = vmatprep.subr.bf16.mxu0 0
        %1128 = vmatpush2.bf16.msra.mxu0 0
        %1129 = vmatprep.subr.bf16.mxu0 0
        %1130 = vmatpush2.bf16.msra.mxu0 0
        %1131 = vmatprep.subr.bf16.mxu0 0
        %1132 = vmatpush2.bf16.msra.mxu0 0
        %1133 = vmatprep.subr.bf16.mxu0 0
        %1134 = vmatpush2.bf16.msra.mxu0 0
        %1135 = vmatprep.subr.bf16.mxu0 0
        %1136 = vmatpush2.bf16.msra.mxu0 0
        %1137 = vmatprep.mubr.bf16.mxu0 0
        %1138 = vmatmul.mubr.bf16.gmra.mxu0 %v1094
        %v1139 = vpop.f32.mrf.mxu0
        %v1140 = vadd.f32 %v1079, %v1139
        %v1141 = vpop.f32.mrf.mxu0
        %v1142 = vpop.f32.mrf.mxu0
        %v1143 = vadd.f32 %v1079, %v1142
        %v1144 = vpop.f32.mrf.mxu0
        %1145 = vmatprep.mubr.bf16.mxu0 0
        %1146 = vmatmul.mubr.bf16.gmra.mxu0 %v1097
        %v1147 = vpop.f32.mrf.mxu0
        %v1148 = vadd.f32 %v1079, %v1147
        %v1149 = vpop.f32.mrf.mxu0
        %v1150 = vpop.f32.mrf.mxu0
        %v1151 = vadd.f32 %v1079, %v1150
        %v1152 = vpop.f32.mrf.mxu0
        %1153 = vmatprep.mubr.bf16.mxu0 0
        %1154 = vmatmul.mubr.bf16.gmra.mxu0 %v1100
        %v1155 = vpop.f32.mrf.mxu0
        %v1156 = vadd.f32 %v1079, %v1155
        %v1157 = vpop.f32.mrf.mxu0
        %v1158 = vpop.f32.mrf.mxu0
        %v1159 = vadd.f32 %v1079, %v1158
        %v1160 = vpop.f32.mrf.mxu0
        %1161 = vmatprep.mubr.bf16.mxu0 0
        %1162 = vmatmul.mubr.bf16.gmra.mxu0 %v1103
        %v1163 = vpop.f32.mrf.mxu0
        %v1164 = vadd.f32 %v1079, %v1163
        %v1165 = vpop.f32.mrf.mxu0
        %v1166 = vpop.f32.mrf.mxu0
        %v1167 = vadd.f32 %v1079, %v1166
        %v1168 = vpop.f32.mrf.mxu0
        %1169 = vdwg.mxu0
        %1170 = vxpose.xlu0.b32.start [1/16] %v1140, 128
        %1171 = vxpose.xlu0.b32.cont [2/16] 0.0, 128
        %1172 = vxpose.xlu0.b32.cont [3/16] 0.0, 128
        %1173 = vxpose.xlu0.b32.cont [4/16] 0.0, 128
        %1174 = vxpose.xlu0.b32.cont [5/16] 0.0, 128
        %1175 = vxpose.xlu0.b32.cont [6/16] 0.0, 128
        %1176 = vxpose.xlu0.b32.cont [7/16] 0.0, 128
        %1177 = vxpose.xlu0.b32.cont [8/16] 0.0, 128
        %1178 = vxpose.xlu0.b32.cont [9/16] 0.0, 128
        %1179 = vxpose.xlu0.b32.cont [10/16] 0.0, 128
        %1180 = vxpose.xlu0.b32.cont [11/16] 0.0, 128
        %1181 = vxpose.xlu0.b32.cont [12/16] 0.0, 128
        %1182 = vxpose.xlu0.b32.cont [13/16] 0.0, 128
        %1183 = vxpose.xlu0.b32.cont [14/16] 0.0, 128
        %1184 = vxpose.xlu0.b32.cont [15/16] 0.0, 128
        %1185 = vxpose.xlu0.b32.end [16/16] 0.0, 128
        %v1186 = vpop.trf.xlu0
        %v1187 = vpop.trf.xlu0
        %v1188 = vpop.trf.xlu0
        %v1189 = vpop.trf.xlu0
        %v1190 = vpop.trf.xlu0
        %v1191 = vpop.trf.xlu0
        %v1192 = vpop.trf.xlu0
        %v1193 = vpop.trf.xlu0
        %v1194 = vpop.trf.xlu0
        %v1195 = vpop.trf.xlu0
        %v1196 = vpop.trf.xlu0
        %v1197 = vpop.trf.xlu0
        %v1198 = vpop.trf.xlu0
        %v1199 = vpop.trf.xlu0
        %v1200 = vpop.trf.xlu0
        %v1201 = vpop.trf.xlu0
        %1202 = vxpose.xlu0.b32.start [1/16] %v1143, 128
        %1203 = vxpose.xlu0.b32.cont [2/16] 0.0, 128
        %1204 = vxpose.xlu0.b32.cont [3/16] 0.0, 128
        %1205 = vxpose.xlu0.b32.cont [4/16] 0.0, 128
        %1206 = vxpose.xlu0.b32.cont [5/16] 0.0, 128
        %1207 = vxpose.xlu0.b32.cont [6/16] 0.0, 128
        %1208 = vxpose.xlu0.b32.cont [7/16] 0.0, 128
        %1209 = vxpose.xlu0.b32.cont [8/16] 0.0, 128
        %1210 = vxpose.xlu0.b32.cont [9/16] 0.0, 128
        %1211 = vxpose.xlu0.b32.cont [10/16] 0.0, 128
        %1212 = vxpose.xlu0.b32.cont [11/16] 0.0, 128
        %1213 = vxpose.xlu0.b32.cont [12/16] 0.0, 128
        %1214 = vxpose.xlu0.b32.cont [13/16] 0.0, 128
        %1215 = vxpose.xlu0.b32.cont [14/16] 0.0, 128
        %1216 = vxpose.xlu0.b32.cont [15/16] 0.0, 128
        %1217 = vxpose.xlu0.b32.end [16/16] 0.0, 128
        %v1218 = vpop.trf.xlu0
        %v1219 = vpop.trf.xlu0
        %v1220 = vpop.trf.xlu0
        %v1221 = vpop.trf.xlu0
        %v1222 = vpop.trf.xlu0
        %v1223 = vpop.trf.xlu0
        %v1224 = vpop.trf.xlu0
        %v1225 = vpop.trf.xlu0
        %v1226 = vpop.trf.xlu0
        %v1227 = vpop.trf.xlu0
        %v1228 = vpop.trf.xlu0
        %v1229 = vpop.trf.xlu0
        %v1230 = vpop.trf.xlu0
        %v1231 = vpop.trf.xlu0
        %v1232 = vpop.trf.xlu0
        %v1233 = vpop.trf.xlu0
        %1234 = vxpose.xlu0.b32.start [1/16] %v1148, 128
        %1235 = vxpose.xlu0.b32.cont [2/16] 0.0, 128
        %1236 = vxpose.xlu0.b32.cont [3/16] 0.0, 128
        %1237 = vxpose.xlu0.b32.cont [4/16] 0.0, 128
        %1238 = vxpose.xlu0.b32.cont [5/16] 0.0, 128
        %1239 = vxpose.xlu0.b32.cont [6/16] 0.0, 128
        %1240 = vxpose.xlu0.b32.cont [7/16] 0.0, 128
        %1241 = vxpose.xlu0.b32.cont [8/16] 0.0, 128
        %1242 = vxpose.xlu0.b32.cont [9/16] 0.0, 128
        %1243 = vxpose.xlu0.b32.cont [10/16] 0.0, 128
        %1244 = vxpose.xlu0.b32.cont [11/16] 0.0, 128
        %1245 = vxpose.xlu0.b32.cont [12/16] 0.0, 128
        %1246 = vxpose.xlu0.b32.cont [13/16] 0.0, 128
        %1247 = vxpose.xlu0.b32.cont [14/16] 0.0, 128
        %1248 = vxpose.xlu0.b32.cont [15/16] 0.0, 128
        %1249 = vxpose.xlu0.b32.end [16/16] 0.0, 128
        %v1250 = vpop.trf.xlu0
        %v1251 = vpop.trf.xlu0
        %v1252 = vpop.trf.xlu0
        %v1253 = vpop.trf.xlu0
        %v1254 = vpop.trf.xlu0
        %v1255 = vpop.trf.xlu0
        %v1256 = vpop.trf.xlu0
        %v1257 = vpop.trf.xlu0
        %v1258 = vpop.trf.xlu0
        %v1259 = vpop.trf.xlu0
        %v1260 = vpop.trf.xlu0
        %v1261 = vpop.trf.xlu0
        %v1262 = vpop.trf.xlu0
        %v1263 = vpop.trf.xlu0
        %v1264 = vpop.trf.xlu0
        %v1265 = vpop.trf.xlu0
        %1266 = vxpose.xlu0.b32.start [1/16] %v1151, 128
        %1267 = vxpose.xlu0.b32.cont [2/16] 0.0, 128
        %1268 = vxpose.xlu0.b32.cont [3/16] 0.0, 128
        %1269 = vxpose.xlu0.b32.cont [4/16] 0.0, 128
        %1270 = vxpose.xlu0.b32.cont [5/16] 0.0, 128
        %1271 = vxpose.xlu0.b32.cont [6/16] 0.0, 128
        %1272 = vxpose.xlu0.b32.cont [7/16] 0.0, 128
        %1273 = vxpose.xlu0.b32.cont [8/16] 0.0, 128
        %1274 = vxpose.xlu0.b32.cont [9/16] 0.0, 128
        %1275 = vxpose.xlu0.b32.cont [10/16] 0.0, 128
        %1276 = vxpose.xlu0.b32.cont [11/16] 0.0, 128
        %1277 = vxpose.xlu0.b32.cont [12/16] 0.0, 128
        %1278 = vxpose.xlu0.b32.cont [13/16] 0.0, 128
        %1279 = vxpose.xlu0.b32.cont [14/16] 0.0, 128
        %1280 = vxpose.xlu0.b32.cont [15/16] 0.0, 128
        %1281 = vxpose.xlu0.b32.end [16/16] 0.0, 128
        %v1282 = vpop.trf.xlu0
        %v1283 = vpop.trf.xlu0
        %v1284 = vpop.trf.xlu0
        %v1285 = vpop.trf.xlu0
        %v1286 = vpop.trf.xlu0
        %v1287 = vpop.trf.xlu0
        %v1288 = vpop.trf.xlu0
        %v1289 = vpop.trf.xlu0
        %v1290 = vpop.trf.xlu0
        %v1291 = vpop.trf.xlu0
        %v1292 = vpop.trf.xlu0
        %v1293 = vpop.trf.xlu0
        %v1294 = vpop.trf.xlu0
        %v1295 = vpop.trf.xlu0
        %v1296 = vpop.trf.xlu0
        %v1297 = vpop.trf.xlu0
        %1298 = vxpose.xlu0.b32.start [1/16] %v1156, 128
        %1299 = vxpose.xlu0.b32.cont [2/16] 0.0, 128
        %1300 = vxpose.xlu0.b32.cont [3/16] 0.0, 128
        %1301 = vxpose.xlu0.b32.cont [4/16] 0.0, 128
        %1302 = vxpose.xlu0.b32.cont [5/16] 0.0, 128
        %1303 = vxpose.xlu0.b32.cont [6/16] 0.0, 128
        %1304 = vxpose.xlu0.b32.cont [7/16] 0.0, 128
        %1305 = vxpose.xlu0.b32.cont [8/16] 0.0, 128
        %1306 = vxpose.xlu0.b32.cont [9/16] 0.0, 128
        %1307 = vxpose.xlu0.b32.cont [10/16] 0.0, 128
        %1308 = vxpose.xlu0.b32.cont [11/16] 0.0, 128
        %1309 = vxpose.xlu0.b32.cont [12/16] 0.0, 128
        %1310 = vxpose.xlu0.b32.cont [13/16] 0.0, 128
        %1311 = vxpose.xlu0.b32.cont [14/16] 0.0, 128
        %1312 = vxpose.xlu0.b32.cont [15/16] 0.0, 128
        %1313 = vxpose.xlu0.b32.end [16/16] 0.0, 128
        %v1314 = vpop.trf.xlu0
        %v1315 = vpop.trf.xlu0
        %v1316 = vpop.trf.xlu0
        %v1317 = vpop.trf.xlu0
        %v1318 = vpop.trf.xlu0
        %v1319 = vpop.trf.xlu0
        %v1320 = vpop.trf.xlu0
        %v1321 = vpop.trf.xlu0
        %v1322 = vpop.trf.xlu0
        %v1323 = vpop.trf.xlu0
        %v1324 = vpop.trf.xlu0
        %v1325 = vpop.trf.xlu0
        %v1326 = vpop.trf.xlu0
        %v1327 = vpop.trf.xlu0
        %v1328 = vpop.trf.xlu0
        %v1329 = vpop.trf.xlu0
        %1330 = vxpose.xlu0.b32.start [1/16] %v1159, 128
        %1331 = vxpose.xlu0.b32.cont [2/16] 0.0, 128
        %1332 = vxpose.xlu0.b32.cont [3/16] 0.0, 128
        %1333 = vxpose.xlu0.b32.cont [4/16] 0.0, 128
        %1334 = vxpose.xlu0.b32.cont [5/16] 0.0, 128
        %1335 = vxpose.xlu0.b32.cont [6/16] 0.0, 128
        %1336 = vxpose.xlu0.b32.cont [7/16] 0.0, 128
        %1337 = vxpose.xlu0.b32.cont [8/16] 0.0, 128
        %1338 = vxpose.xlu0.b32.cont [9/16] 0.0, 128
        %1339 = vxpose.xlu0.b32.cont [10/16] 0.0, 128
        %1340 = vxpose.xlu0.b32.cont [11/16] 0.0, 128
        %1341 = vxpose.xlu0.b32.cont [12/16] 0.0, 128
        %1342 = vxpose.xlu0.b32.cont [13/16] 0.0, 128
        %1343 = vxpose.xlu0.b32.cont [14/16] 0.0, 128
        %1344 = vxpose.xlu0.b32.cont [15/16] 0.0, 128
        %1345 = vxpose.xlu0.b32.end [16/16] 0.0, 128
        %v1346 = vpop.trf.xlu0
        %v1347 = vpop.trf.xlu0
        %v1348 = vpop.trf.xlu0
        %v1349 = vpop.trf.xlu0
        %v1350 = vpop.trf.xlu0
        %v1351 = vpop.trf.xlu0
        %v1352 = vpop.trf.xlu0
        %v1353 = vpop.trf.xlu0
        %v1354 = vpop.trf.xlu0
        %v1355 = vpop.trf.xlu0
        %v1356 = vpop.trf.xlu0
        %v1357 = vpop.trf.xlu0
        %v1358 = vpop.trf.xlu0
        %v1359 = vpop.trf.xlu0
        %v1360 = vpop.trf.xlu0
        %v1361 = vpop.trf.xlu0
        %1362 = vxpose.xlu0.b32.start [1/16] %v1164, 128
        %1363 = vxpose.xlu0.b32.cont [2/16] 0.0, 128
        %1364 = vxpose.xlu0.b32.cont [3/16] 0.0, 128
        %1365 = vxpose.xlu0.b32.cont [4/16] 0.0, 128
        %1366 = vxpose.xlu0.b32.cont [5/16] 0.0, 128
        %1367 = vxpose.xlu0.b32.cont [6/16] 0.0, 128
        %1368 = vxpose.xlu0.b32.cont [7/16] 0.0, 128
        %1369 = vxpose.xlu0.b32.cont [8/16] 0.0, 128
        %1370 = vxpose.xlu0.b32.cont [9/16] 0.0, 128
        %1371 = vxpose.xlu0.b32.cont [10/16] 0.0, 128
        %1372 = vxpose.xlu0.b32.cont [11/16] 0.0, 128
        %1373 = vxpose.xlu0.b32.cont [12/16] 0.0, 128
        %1374 = vxpose.xlu0.b32.cont [13/16] 0.0, 128
        %1375 = vxpose.xlu0.b32.cont [14/16] 0.0, 128
        %1376 = vxpose.xlu0.b32.cont [15/16] 0.0, 128
        %1377 = vxpose.xlu0.b32.end [16/16] 0.0, 128
        %v1378 = vpop.trf.xlu0
        %v1379 = vpop.trf.xlu0
        %v1380 = vpop.trf.xlu0
        %v1381 = vpop.trf.xlu0
        %v1382 = vpop.trf.xlu0
        %v1383 = vpop.trf.xlu0
        %v1384 = vpop.trf.xlu0
        %v1385 = vpop.trf.xlu0
        %v1386 = vpop.trf.xlu0
        %v1387 = vpop.trf.xlu0
        %v1388 = vpop.trf.xlu0
        %v1389 = vpop.trf.xlu0
        %v1390 = vpop.trf.xlu0
        %v1391 = vpop.trf.xlu0
        %v1392 = vpop.trf.xlu0
        %v1393 = vpop.trf.xlu0
        %1394 = vxpose.xlu0.b32.start [1/16] %v1167, 128
        %1395 = vxpose.xlu0.b32.cont [2/16] 0.0, 128
        %1396 = vxpose.xlu0.b32.cont [3/16] 0.0, 128
        %1397 = vxpose.xlu0.b32.cont [4/16] 0.0, 128
        %1398 = vxpose.xlu0.b32.cont [5/16] 0.0, 128
        %1399 = vxpose.xlu0.b32.cont [6/16] 0.0, 128
        %1400 = vxpose.xlu0.b32.cont [7/16] 0.0, 128
        %1401 = vxpose.xlu0.b32.cont [8/16] 0.0, 128
        %1402 = vxpose.xlu0.b32.cont [9/16] 0.0, 128
        %1403 = vxpose.xlu0.b32.cont [10/16] 0.0, 128
        %1404 = vxpose.xlu0.b32.cont [11/16] 0.0, 128
        %1405 = vxpose.xlu0.b32.cont [12/16] 0.0, 128
        %1406 = vxpose.xlu0.b32.cont [13/16] 0.0, 128
        %1407 = vxpose.xlu0.b32.cont [14/16] 0.0, 128
        %1408 = vxpose.xlu0.b32.cont [15/16] 0.0, 128
        %1409 = vxpose.xlu0.b32.end [16/16] 0.0, 128
        %v1410 = vpop.trf.xlu0
        %v1411 = vpop.trf.xlu0
        %v1412 = vpop.trf.xlu0
        %v1413 = vpop.trf.xlu0
        %v1414 = vpop.trf.xlu0
        %v1415 = vpop.trf.xlu0
        %v1416 = vpop.trf.xlu0
        %v1417 = vpop.trf.xlu0
        %v1418 = vpop.trf.xlu0
        %v1419 = vpop.trf.xlu0
        %v1420 = vpop.trf.xlu0
        %v1421 = vpop.trf.xlu0
        %v1422 = vpop.trf.xlu0
        %v1423 = vpop.trf.xlu0
        %v1424 = vpop.trf.xlu0
        %v1425 = vpop.trf.xlu0
        %v1426 = vmul.f32 %v1186, 0.35355338
        %v1427 = vmul.f32 %v1187, 0.35355338
        %v1428 = vmul.f32 %v1188, 0.35355338
        %v1429 = vmul.f32 %v1189, 0.35355338
        %v1430 = vmul.f32 %v1218, 0.35355338
        %v1431 = vmul.f32 %v1219, 0.35355338
        %v1432 = vmul.f32 %v1220, 0.35355338
        %v1433 = vmul.f32 %v1221, 0.35355338
        %v1434 = vmul.f32 %v1250, 0.35355338
        %v1435 = vmul.f32 %v1251, 0.35355338
        %v1436 = vmul.f32 %v1252, 0.35355338
        %v1437 = vmul.f32 %v1253, 0.35355338
        %v1438 = vmul.f32 %v1282, 0.35355338
        %v1439 = vmul.f32 %v1283, 0.35355338
        %v1440 = vmul.f32 %v1284, 0.35355338
        %v1441 = vmul.f32 %v1285, 0.35355338
        %v1442 = vmul.f32 %v1314, 0.35355338
        %v1443 = vmul.f32 %v1315, 0.35355338
        %v1444 = vmul.f32 %v1316, 0.35355338
        %v1445 = vmul.f32 %v1317, 0.35355338
        %v1446 = vmul.f32 %v1346, 0.35355338
        %v1447 = vmul.f32 %v1347, 0.35355338
        %v1448 = vmul.f32 %v1348, 0.35355338
        %v1449 = vmul.f32 %v1349, 0.35355338
        %v1450 = vmul.f32 %v1378, 0.35355338
        %v1451 = vmul.f32 %v1379, 0.35355338
        %v1452 = vmul.f32 %v1380, 0.35355338
        %v1453 = vmul.f32 %v1381, 0.35355338
        %v1454 = vmul.f32 %v1410, 0.35355338
        %v1455 = vmul.f32 %v1411, 0.35355338
        %v1456 = vmul.f32 %v1412, 0.35355338
        %v1457 = vmul.f32 %v1413, 0.35355338
        %v1458 = vpack.c.bf16 %v1426, %v1426
        %v1459 = vpack.c.bf16 %v1427, %v1427
        %v1460 = vpack.c.bf16 %v1428, %v1428
        %v1461 = vpack.c.bf16 %v1429, %v1429
        %v1462 = vpack.c.bf16 %v1430, %v1430
        %v1463 = vpack.c.bf16 %v1431, %v1431
        %v1464 = vpack.c.bf16 %v1432, %v1432
        %v1465 = vpack.c.bf16 %v1433, %v1433
        %v1466 = vpack.c.bf16 %v1434, %v1434
        %v1467 = vpack.c.bf16 %v1435, %v1435
        %v1468 = vpack.c.bf16 %v1436, %v1436
        %v1469 = vpack.c.bf16 %v1437, %v1437
        %v1470 = vpack.c.bf16 %v1438, %v1438
        %v1471 = vpack.c.bf16 %v1439, %v1439
        %v1472 = vpack.c.bf16 %v1440, %v1440
        %v1473 = vpack.c.bf16 %v1441, %v1441
        %v1474 = vpack.c.bf16 %v1442, %v1442
        %v1475 = vpack.c.bf16 %v1443, %v1443
        %v1476 = vpack.c.bf16 %v1444, %v1444
        %v1477 = vpack.c.bf16 %v1445, %v1445
        %v1478 = vpack.c.bf16 %v1446, %v1446
        %v1479 = vpack.c.bf16 %v1447, %v1447
        %v1480 = vpack.c.bf16 %v1448, %v1448
        %v1481 = vpack.c.bf16 %v1449, %v1449
        %v1482 = vpack.c.bf16 %v1450, %v1450
        %v1483 = vpack.c.bf16 %v1451, %v1451
        %v1484 = vpack.c.bf16 %v1452, %v1452
        %v1485 = vpack.c.bf16 %v1453, %v1453
        %v1486 = vpack.c.bf16 %v1454, %v1454
        %v1487 = vpack.c.bf16 %v1455, %v1455
        %v1488 = vpack.c.bf16 %v1456, %v1456
        %v1489 = vpack.c.bf16 %v1457, %v1457
        %v1490 = vpack.c.bf16 %v1190, %v1190
        %v1491 = vpack.c.bf16 %v1191, %v1191
        %v1492 = vpack.c.bf16 %v1192, %v1192
        %v1493 = vpack.c.bf16 %v1193, %v1193
        %v1494 = vpack.c.bf16 %v1222, %v1222
        %v1495 = vpack.c.bf16 %v1223, %v1223
        %v1496 = vpack.c.bf16 %v1224, %v1224
        %v1497 = vpack.c.bf16 %v1225, %v1225
        %v1498 = vpack.c.bf16 %v1254, %v1254
        %v1499 = vpack.c.bf16 %v1255, %v1255
        %v1500 = vpack.c.bf16 %v1256, %v1256
        %v1501 = vpack.c.bf16 %v1257, %v1257
        %v1502 = vpack.c.bf16 %v1286, %v1286
        %v1503 = vpack.c.bf16 %v1287, %v1287
        %v1504 = vpack.c.bf16 %v1288, %v1288
        %v1505 = vpack.c.bf16 %v1289, %v1289
        %v1506 = vpack.c.bf16 %v1318, %v1318
        %v1507 = vpack.c.bf16 %v1319, %v1319
        %v1508 = vpack.c.bf16 %v1320, %v1320
        %v1509 = vpack.c.bf16 %v1321, %v1321
        %v1510 = vpack.c.bf16 %v1350, %v1350
        %v1511 = vpack.c.bf16 %v1351, %v1351
        %v1512 = vpack.c.bf16 %v1352, %v1352
        %v1513 = vpack.c.bf16 %v1353, %v1353
        %v1514 = vpack.c.bf16 %v1382, %v1382
        %v1515 = vpack.c.bf16 %v1383, %v1383
        %v1516 = vpack.c.bf16 %v1384, %v1384
        %v1517 = vpack.c.bf16 %v1385, %v1385
        %v1518 = vpack.c.bf16 %v1414, %v1414
        %v1519 = vpack.c.bf16 %v1415, %v1415
        %v1520 = vpack.c.bf16 %v1416, %v1416
        %v1521 = vpack.c.bf16 %v1417, %v1417
        %v1522 = vld [vmem:[#allocation8] sm:$0xff]
        %1523 = vxpose.xlu0.c.b16.start [1/8] %v1458, 128
        %1524 = vxpose.xlu0.c.b16.cont [2/8] 0, 128
        %1525 = vxpose.xlu0.c.b16.cont [3/8] 0, 128
        %1526 = vxpose.xlu0.c.b16.cont [4/8] 0, 128
        %1527 = vxpose.xlu0.c.b16.cont [5/8] 0, 128
        %1528 = vxpose.xlu0.c.b16.cont [6/8] 0, 128
        %1529 = vxpose.xlu0.c.b16.cont [7/8] 0, 128
        %1530 = vxpose.xlu0.c.b16.end [8/8] 0, 128
        %v1531 = vpop.trf.xlu0
        %v1532 = vpop.trf.xlu0
        %v1533 = vpop.trf.xlu0
        %v1534 = vpop.trf.xlu0
        %v1535 = vpop.trf.xlu0
        %v1536 = vpop.trf.xlu0
        %v1537 = vpop.trf.xlu0
        %v1538 = vpop.trf.xlu0
        %vm1539 = vcmask 64512
        %v1541 = vsel %vm1539, %v1531, 0
        %vm1543 = vcmask 1043456
        %v1545 = vsel %vm1543, %v1490, 0
        %1547 = vmatprep.subr.bf16.mxu0 0
        %1548 = vmatpush1.bf16.msra.mxu0 0
        %1549 = vmatprep.subr.bf16.mxu0 0
        %1550 = vmatpush1.bf16.msra.mxu0 0
        %1551 = vmatprep.subr.bf16.mxu0 0
        %1552 = vmatpush1.bf16.msra.mxu0 0
        %1553 = vmatprep.subr.bf16.mxu0 0
        %1554 = vmatpush1.bf16.msra.mxu0 0
        %1555 = vmatprep.subr.bf16.mxu0 0
        %1556 = vmatpush1.bf16.msra.mxu0 0
        %1557 = vmatprep.subr.bf16.mxu0 0
        %1558 = vmatpush1.bf16.msra.mxu0 0
        %1559 = vmatprep.subr.bf16.mxu0 0
        %1560 = vmatpush1.bf16.msra.mxu0 0
        %1561 = vmatprep.subr.bf16.mxu0 0
        %1562 = vmatpush1.bf16.msra.mxu0 %v1545
        %1563 = vmatprep.subr.bf16.mxu0 0
        %1564 = vmatpush2.bf16.msra.mxu0 0
        %1565 = vmatprep.subr.bf16.mxu0 0
        %1566 = vmatpush2.bf16.msra.mxu0 0
        %1567 = vmatprep.subr.bf16.mxu0 0
        %1568 = vmatpush2.bf16.msra.mxu0 0
        %1569 = vmatprep.subr.bf16.mxu0 0
        %1570 = vmatpush2.bf16.msra.mxu0 0
        %1571 = vmatprep.subr.bf16.mxu0 0
        %1572 = vmatpush2.bf16.msra.mxu0 0
        %1573 = vmatprep.subr.bf16.mxu0 0
        %1574 = vmatpush2.bf16.msra.mxu0 0
        %1575 = vmatprep.subr.bf16.mxu0 0
        %1576 = vmatpush2.bf16.msra.mxu0 0
        %1577 = vmatprep.subr.bf16.mxu0 0
        %1578 = vmatpush2.bf16.msra.mxu0 0
        %1579 = vmatprep.mubr.bf16.mxu0 0
        %1580 = vmatmul.mubr.bf16.gmra.mxu0 %v1541
        %v1581 = vpop.f32.mrf.mxu0
        %v1582 = vadd.f32 %v1522, %v1581
        %v1583 = vpop.f32.mrf.mxu0
        %v1584 = vpop.f32.mrf.mxu0
        %v1585 = vpop.f32.mrf.mxu0
        %1586 = vdwg.mxu0
        %1587 = vxpose.xlu0.c.b16.start [1/8] %v1459, 128
        %1588 = vxpose.xlu0.c.b16.cont [2/8] 0, 128
        %1589 = vxpose.xlu0.c.b16.cont [3/8] 0, 128
        %1590 = vxpose.xlu0.c.b16.cont [4/8] 0, 128
        %1591 = vxpose.xlu0.c.b16.cont [5/8] 0, 128
        %1592 = vxpose.xlu0.c.b16.cont [6/8] 0, 128
        %1593 = vxpose.xlu0.c.b16.cont [7/8] 0, 128
        %1594 = vxpose.xlu0.c.b16.end [8/8] 0, 128
        %v1595 = vpop.trf.xlu0
        %v1596 = vpop.trf.xlu0
        %v1597 = vpop.trf.xlu0
        %v1598 = vpop.trf.xlu0
        %v1599 = vpop.trf.xlu0
        %v1600 = vpop.trf.xlu0
        %v1601 = vpop.trf.xlu0
        %v1602 = vpop.trf.xlu0
        %v1604 = vsel %vm1539, %v1595, 0
        %v1607 = vsel %vm1543, %v1491, 0
        %1609 = vmatprep.subr.bf16.mxu0 0
        %1610 = vmatpush1.bf16.msra.mxu0 0
        %1611 = vmatprep.subr.bf16.mxu0 0
        %1612 = vmatpush1.bf16.msra.mxu0 0
        %1613 = vmatprep.subr.bf16.mxu0 0
        %1614 = vmatpush1.bf16.msra.mxu0 0
        %1615 = vmatprep.subr.bf16.mxu0 0
        %1616 = vmatpush1.bf16.msra.mxu0 0
        %1617 = vmatprep.subr.bf16.mxu0 0
        %1618 = vmatpush1.bf16.msra.mxu0 0
        %1619 = vmatprep.subr.bf16.mxu0 0
        %1620 = vmatpush1.bf16.msra.mxu0 0
        %1621 = vmatprep.subr.bf16.mxu0 0
        %1622 = vmatpush1.bf16.msra.mxu0 0
        %1623 = vmatprep.subr.bf16.mxu0 0
        %1624 = vmatpush1.bf16.msra.mxu0 %v1607
        %1625 = vmatprep.subr.bf16.mxu0 0
        %1626 = vmatpush2.bf16.msra.mxu0 0
        %1627 = vmatprep.subr.bf16.mxu0 0
        %1628 = vmatpush2.bf16.msra.mxu0 0
        %1629 = vmatprep.subr.bf16.mxu0 0
        %1630 = vmatpush2.bf16.msra.mxu0 0
        %1631 = vmatprep.subr.bf16.mxu0 0
        %1632 = vmatpush2.bf16.msra.mxu0 0
        %1633 = vmatprep.subr.bf16.mxu0 0
        %1634 = vmatpush2.bf16.msra.mxu0 0
        %1635 = vmatprep.subr.bf16.mxu0 0
        %1636 = vmatpush2.bf16.msra.mxu0 0
        %1637 = vmatprep.subr.bf16.mxu0 0
        %1638 = vmatpush2.bf16.msra.mxu0 0
        %1639 = vmatprep.subr.bf16.mxu0 0
        %1640 = vmatpush2.bf16.msra.mxu0 0
        %1641 = vmatprep.mubr.bf16.mxu0 0
        %1642 = vmatmul.mubr.bf16.gmra.mxu0 %v1604
        %v1643 = vpop.f32.mrf.mxu0
        %v1644 = vadd.f32 %v1522, %v1643
        %v1645 = vpop.f32.mrf.mxu0
        %v1646 = vpop.f32.mrf.mxu0
        %v1647 = vpop.f32.mrf.mxu0
        %1648 = vdwg.mxu0
        %1649 = vxpose.xlu0.c.b16.start [1/8] %v1460, 128
        %1650 = vxpose.xlu0.c.b16.cont [2/8] 0, 128
        %1651 = vxpose.xlu0.c.b16.cont [3/8] 0, 128
        %1652 = vxpose.xlu0.c.b16.cont [4/8] 0, 128
        %1653 = vxpose.xlu0.c.b16.cont [5/8] 0, 128
        %1654 = vxpose.xlu0.c.b16.cont [6/8] 0, 128
        %1655 = vxpose.xlu0.c.b16.cont [7/8] 0, 128
        %1656 = vxpose.xlu0.c.b16.end [8/8] 0, 128
        %v1657 = vpop.trf.xlu0
        %v1658 = vpop.trf.xlu0
        %v1659 = vpop.trf.xlu0
        %v1660 = vpop.trf.xlu0
        %v1661 = vpop.trf.xlu0
        %v1662 = vpop.trf.xlu0
        %v1663 = vpop.trf.xlu0
        %v1664 = vpop.trf.xlu0
        %v1666 = vsel %vm1539, %v1657, 0
        %v1669 = vsel %vm1543, %v1492, 0
        %1671 = vmatprep.subr.bf16.mxu0 0
        %1672 = vmatpush1.bf16.msra.mxu0 0
        %1673 = vmatprep.subr.bf16.mxu0 0
        %1674 = vmatpush1.bf16.msra.mxu0 0
        %1675 = vmatprep.subr.bf16.mxu0 0
        %1676 = vmatpush1.bf16.msra.mxu0 0
        %1677 = vmatprep.subr.bf16.mxu0 0
        %1678 = vmatpush1.bf16.msra.mxu0 0
        %1679 = vmatprep.subr.bf16.mxu0 0
        %1680 = vmatpush1.bf16.msra.mxu0 0
        %1681 = vmatprep.subr.bf16.mxu0 0
        %1682 = vmatpush1.bf16.msra.mxu0 0
        %1683 = vmatprep.subr.bf16.mxu0 0
        %1684 = vmatpush1.bf16.msra.mxu0 0
        %1685 = vmatprep.subr.bf16.mxu0 0
        %1686 = vmatpush1.bf16.msra.mxu0 %v1669
        %1687 = vmatprep.subr.bf16.mxu0 0
        %1688 = vmatpush2.bf16.msra.mxu0 0
        %1689 = vmatprep.subr.bf16.mxu0 0
        %1690 = vmatpush2.bf16.msra.mxu0 0
        %1691 = vmatprep.subr.bf16.mxu0 0
        %1692 = vmatpush2.bf16.msra.mxu0 0
        %1693 = vmatprep.subr.bf16.mxu0 0
        %1694 = vmatpush2.bf16.msra.mxu0 0
        %1695 = vmatprep.subr.bf16.mxu0 0
        %1696 = vmatpush2.bf16.msra.mxu0 0
        %1697 = vmatprep.subr.bf16.mxu0 0
        %1698 = vmatpush2.bf16.msra.mxu0 0
        %1699 = vmatprep.subr.bf16.mxu0 0
        %1700 = vmatpush2.bf16.msra.mxu0 0
        %1701 = vmatprep.subr.bf16.mxu0 0
        %1702 = vmatpush2.bf16.msra.mxu0 0
        %1703 = vmatprep.mubr.bf16.mxu0 0
        %1704 = vmatmul.mubr.bf16.gmra.mxu0 %v1666
        %v1705 = vpop.f32.mrf.mxu0
        %v1706 = vadd.f32 %v1522, %v1705
        %v1707 = vpop.f32.mrf.mxu0
        %v1708 = vpop.f32.mrf.mxu0
        %v1709 = vpop.f32.mrf.mxu0
        %1710 = vdwg.mxu0
        %1711 = vxpose.xlu0.c.b16.start [1/8] %v1461, 128
        %1712 = vxpose.xlu0.c.b16.cont [2/8] 0, 128
        %1713 = vxpose.xlu0.c.b16.cont [3/8] 0, 128
        %1714 = vxpose.xlu0.c.b16.cont [4/8] 0, 128
        %1715 = vxpose.xlu0.c.b16.cont [5/8] 0, 128
        %1716 = vxpose.xlu0.c.b16.cont [6/8] 0, 128
        %1717 = vxpose.xlu0.c.b16.cont [7/8] 0, 128
        %1718 = vxpose.xlu0.c.b16.end [8/8] 0, 128
        %v1719 = vpop.trf.xlu0
        %v1720 = vpop.trf.xlu0
        %v1721 = vpop.trf.xlu0
        %v1722 = vpop.trf.xlu0
        %v1723 = vpop.trf.xlu0
        %v1724 = vpop.trf.xlu0
        %v1725 = vpop.trf.xlu0
        %v1726 = vpop.trf.xlu0
        %v1728 = vsel %vm1539, %v1719, 0
        %v1731 = vsel %vm1543, %v1493, 0
        %1733 = vmatprep.subr.bf16.mxu0 0
        %1734 = vmatpush1.bf16.msra.mxu0 0
        %1735 = vmatprep.subr.bf16.mxu0 0
        %1736 = vmatpush1.bf16.msra.mxu0 0
        %1737 = vmatprep.subr.bf16.mxu0 0
        %1738 = vmatpush1.bf16.msra.mxu0 0
        %1739 = vmatprep.subr.bf16.mxu0 0
        %1740 = vmatpush1.bf16.msra.mxu0 0
        %1741 = vmatprep.subr.bf16.mxu0 0
        %1742 = vmatpush1.bf16.msra.mxu0 0
        %1743 = vmatprep.subr.bf16.mxu0 0
        %1744 = vmatpush1.bf16.msra.mxu0 0
        %1745 = vmatprep.subr.bf16.mxu0 0
        %1746 = vmatpush1.bf16.msra.mxu0 0
        %1747 = vmatprep.subr.bf16.mxu0 0
        %1748 = vmatpush1.bf16.msra.mxu0 %v1731
        %1749 = vmatprep.subr.bf16.mxu0 0
        %1750 = vmatpush2.bf16.msra.mxu0 0
        %1751 = vmatprep.subr.bf16.mxu0 0
        %1752 = vmatpush2.bf16.msra.mxu0 0
        %1753 = vmatprep.subr.bf16.mxu0 0
        %1754 = vmatpush2.bf16.msra.mxu0 0
        %1755 = vmatprep.subr.bf16.mxu0 0
        %1756 = vmatpush2.bf16.msra.mxu0 0
        %1757 = vmatprep.subr.bf16.mxu0 0
        %1758 = vmatpush2.bf16.msra.mxu0 0
        %1759 = vmatprep.subr.bf16.mxu0 0
        %1760 = vmatpush2.bf16.msra.mxu0 0
        %1761 = vmatprep.subr.bf16.mxu0 0
        %1762 = vmatpush2.bf16.msra.mxu0 0
        %1763 = vmatprep.subr.bf16.mxu0 0
        %1764 = vmatpush2.bf16.msra.mxu0 0
        %1765 = vmatprep.mubr.bf16.mxu0 0
        %1766 = vmatmul.mubr.bf16.gmra.mxu0 %v1728
        %v1767 = vpop.f32.mrf.mxu0
        %v1768 = vadd.f32 %v1522, %v1767
        %v1769 = vpop.f32.mrf.mxu0
        %v1770 = vpop.f32.mrf.mxu0
        %v1771 = vpop.f32.mrf.mxu0
        %1772 = vdwg.mxu0
        %1773 = vxpose.xlu0.c.b16.start [1/8] %v1462, 128
        %1774 = vxpose.xlu0.c.b16.cont [2/8] 0, 128
        %1775 = vxpose.xlu0.c.b16.cont [3/8] 0, 128
        %1776 = vxpose.xlu0.c.b16.cont [4/8] 0, 128
        %1777 = vxpose.xlu0.c.b16.cont [5/8] 0, 128
        %1778 = vxpose.xlu0.c.b16.cont [6/8] 0, 128
        %1779 = vxpose.xlu0.c.b16.cont [7/8] 0, 128
        %1780 = vxpose.xlu0.c.b16.end [8/8] 0, 128
        %v1781 = vpop.trf.xlu0
        %v1782 = vpop.trf.xlu0
        %v1783 = vpop.trf.xlu0
        %v1784 = vpop.trf.xlu0
        %v1785 = vpop.trf.xlu0
        %v1786 = vpop.trf.xlu0
        %v1787 = vpop.trf.xlu0
        %v1788 = vpop.trf.xlu0
        %v1790 = vsel %vm1539, %v1781, 0
        %v1793 = vsel %vm1543, %v1494, 0
        %1795 = vmatprep.subr.bf16.mxu0 0
        %1796 = vmatpush1.bf16.msra.mxu0 0
        %1797 = vmatprep.subr.bf16.mxu0 0
        %1798 = vmatpush1.bf16.msra.mxu0 0
        %1799 = vmatprep.subr.bf16.mxu0 0
        %1800 = vmatpush1.bf16.msra.mxu0 0
        %1801 = vmatprep.subr.bf16.mxu0 0
        %1802 = vmatpush1.bf16.msra.mxu0 0
        %1803 = vmatprep.subr.bf16.mxu0 0
        %1804 = vmatpush1.bf16.msra.mxu0 0
        %1805 = vmatprep.subr.bf16.mxu0 0
        %1806 = vmatpush1.bf16.msra.mxu0 0
        %1807 = vmatprep.subr.bf16.mxu0 0
        %1808 = vmatpush1.bf16.msra.mxu0 0
        %1809 = vmatprep.subr.bf16.mxu0 0
        %1810 = vmatpush1.bf16.msra.mxu0 %v1793
        %1811 = vmatprep.subr.bf16.mxu0 0
        %1812 = vmatpush2.bf16.msra.mxu0 0
        %1813 = vmatprep.subr.bf16.mxu0 0
        %1814 = vmatpush2.bf16.msra.mxu0 0
        %1815 = vmatprep.subr.bf16.mxu0 0
        %1816 = vmatpush2.bf16.msra.mxu0 0
        %1817 = vmatprep.subr.bf16.mxu0 0
        %1818 = vmatpush2.bf16.msra.mxu0 0
        %1819 = vmatprep.subr.bf16.mxu0 0
        %1820 = vmatpush2.bf16.msra.mxu0 0
        %1821 = vmatprep.subr.bf16.mxu0 0
        %1822 = vmatpush2.bf16.msra.mxu0 0
        %1823 = vmatprep.subr.bf16.mxu0 0
        %1824 = vmatpush2.bf16.msra.mxu0 0
        %1825 = vmatprep.subr.bf16.mxu0 0
        %1826 = vmatpush2.bf16.msra.mxu0 0
        %1827 = vmatprep.mubr.bf16.mxu0 0
        %1828 = vmatmul.mubr.bf16.gmra.mxu0 %v1790
        %v1829 = vpop.f32.mrf.mxu0
        %v1830 = vadd.f32 %v1522, %v1829
        %v1831 = vpop.f32.mrf.mxu0
        %v1832 = vpop.f32.mrf.mxu0
        %v1833 = vpop.f32.mrf.mxu0
        %1834 = vdwg.mxu0
        %1835 = vxpose.xlu0.c.b16.start [1/8] %v1463, 128
        %1836 = vxpose.xlu0.c.b16.cont [2/8] 0, 128
        %1837 = vxpose.xlu0.c.b16.cont [3/8] 0, 128
        %1838 = vxpose.xlu0.c.b16.cont [4/8] 0, 128
        %1839 = vxpose.xlu0.c.b16.cont [5/8] 0, 128
        %1840 = vxpose.xlu0.c.b16.cont [6/8] 0, 128
        %1841 = vxpose.xlu0.c.b16.cont [7/8] 0, 128
        %1842 = vxpose.xlu0.c.b16.end [8/8] 0, 128
        %v1843 = vpop.trf.xlu0
        %v1844 = vpop.trf.xlu0
        %v1845 = vpop.trf.xlu0
        %v1846 = vpop.trf.xlu0
        %v1847 = vpop.trf.xlu0
        %v1848 = vpop.trf.xlu0
        %v1849 = vpop.trf.xlu0
        %v1850 = vpop.trf.xlu0
        %v1852 = vsel %vm1539, %v1843, 0
        %v1855 = vsel %vm1543, %v1495, 0
        %1857 = vmatprep.subr.bf16.mxu0 0
        %1858 = vmatpush1.bf16.msra.mxu0 0
        %1859 = vmatprep.subr.bf16.mxu0 0
        %1860 = vmatpush1.bf16.msra.mxu0 0
        %1861 = vmatprep.subr.bf16.mxu0 0
        %1862 = vmatpush1.bf16.msra.mxu0 0
        %1863 = vmatprep.subr.bf16.mxu0 0
        %1864 = vmatpush1.bf16.msra.mxu0 0
        %1865 = vmatprep.subr.bf16.mxu0 0
        %1866 = vmatpush1.bf16.msra.mxu0 0
        %1867 = vmatprep.subr.bf16.mxu0 0
        %1868 = vmatpush1.bf16.msra.mxu0 0
        %1869 = vmatprep.subr.bf16.mxu0 0
        %1870 = vmatpush1.bf16.msra.mxu0 0
        %1871 = vmatprep.subr.bf16.mxu0 0
        %1872 = vmatpush1.bf16.msra.mxu0 %v1855
        %1873 = vmatprep.subr.bf16.mxu0 0
        %1874 = vmatpush2.bf16.msra.mxu0 0
        %1875 = vmatprep.subr.bf16.mxu0 0
        %1876 = vmatpush2.bf16.msra.mxu0 0
        %1877 = vmatprep.subr.bf16.mxu0 0
        %1878 = vmatpush2.bf16.msra.mxu0 0
        %1879 = vmatprep.subr.bf16.mxu0 0
        %1880 = vmatpush2.bf16.msra.mxu0 0
        %1881 = vmatprep.subr.bf16.mxu0 0
        %1882 = vmatpush2.bf16.msra.mxu0 0
        %1883 = vmatprep.subr.bf16.mxu0 0
        %1884 = vmatpush2.bf16.msra.mxu0 0
        %1885 = vmatprep.subr.bf16.mxu0 0
        %1886 = vmatpush2.bf16.msra.mxu0 0
        %1887 = vmatprep.subr.bf16.mxu0 0
        %1888 = vmatpush2.bf16.msra.mxu0 0
        %1889 = vmatprep.mubr.bf16.mxu0 0
        %1890 = vmatmul.mubr.bf16.gmra.mxu0 %v1852
        %v1891 = vpop.f32.mrf.mxu0
        %v1892 = vadd.f32 %v1522, %v1891
        %v1893 = vpop.f32.mrf.mxu0
        %v1894 = vpop.f32.mrf.mxu0
        %v1895 = vpop.f32.mrf.mxu0
        %1896 = vdwg.mxu0
        %1897 = vxpose.xlu0.c.b16.start [1/8] %v1464, 128
        %1898 = vxpose.xlu0.c.b16.cont [2/8] 0, 128
        %1899 = vxpose.xlu0.c.b16.cont [3/8] 0, 128
        %1900 = vxpose.xlu0.c.b16.cont [4/8] 0, 128
        %1901 = vxpose.xlu0.c.b16.cont [5/8] 0, 128
        %1902 = vxpose.xlu0.c.b16.cont [6/8] 0, 128
        %1903 = vxpose.xlu0.c.b16.cont [7/8] 0, 128
        %1904 = vxpose.xlu0.c.b16.end [8/8] 0, 128
        %v1905 = vpop.trf.xlu0
        %v1906 = vpop.trf.xlu0
        %v1907 = vpop.trf.xlu0
        %v1908 = vpop.trf.xlu0
        %v1909 = vpop.trf.xlu0
        %v1910 = vpop.trf.xlu0
        %v1911 = vpop.trf.xlu0
        %v1912 = vpop.trf.xlu0
        %v1914 = vsel %vm1539, %v1905, 0
        %v1917 = vsel %vm1543, %v1496, 0
        %1919 = vmatprep.subr.bf16.mxu0 0
        %1920 = vmatpush1.bf16.msra.mxu0 0
        %1921 = vmatprep.subr.bf16.mxu0 0
        %1922 = vmatpush1.bf16.msra.mxu0 0
        %1923 = vmatprep.subr.bf16.mxu0 0
        %1924 = vmatpush1.bf16.msra.mxu0 0
        %1925 = vmatprep.subr.bf16.mxu0 0
        %1926 = vmatpush1.bf16.msra.mxu0 0
        %1927 = vmatprep.subr.bf16.mxu0 0
        %1928 = vmatpush1.bf16.msra.mxu0 0
        %1929 = vmatprep.subr.bf16.mxu0 0
        %1930 = vmatpush1.bf16.msra.mxu0 0
        %1931 = vmatprep.subr.bf16.mxu0 0
        %1932 = vmatpush1.bf16.msra.mxu0 0
        %1933 = vmatprep.subr.bf16.mxu0 0
        %1934 = vmatpush1.bf16.msra.mxu0 %v1917
        %1935 = vmatprep.subr.bf16.mxu0 0
        %1936 = vmatpush2.bf16.msra.mxu0 0
        %1937 = vmatprep.subr.bf16.mxu0 0
        %1938 = vmatpush2.bf16.msra.mxu0 0
        %1939 = vmatprep.subr.bf16.mxu0 0
        %1940 = vmatpush2.bf16.msra.mxu0 0
        %1941 = vmatprep.subr.bf16.mxu0 0
        %1942 = vmatpush2.bf16.msra.mxu0 0
        %1943 = vmatprep.subr.bf16.mxu0 0
        %1944 = vmatpush2.bf16.msra.mxu0 0
        %1945 = vmatprep.subr.bf16.mxu0 0
        %1946 = vmatpush2.bf16.msra.mxu0 0
        %1947 = vmatprep.subr.bf16.mxu0 0
        %1948 = vmatpush2.bf16.msra.mxu0 0
        %1949 = vmatprep.subr.bf16.mxu0 0
        %1950 = vmatpush2.bf16.msra.mxu0 0
        %1951 = vmatprep.mubr.bf16.mxu0 0
        %1952 = vmatmul.mubr.bf16.gmra.mxu0 %v1914
        %v1953 = vpop.f32.mrf.mxu0
        %v1954 = vadd.f32 %v1522, %v1953
        %v1955 = vpop.f32.mrf.mxu0
        %v1956 = vpop.f32.mrf.mxu0
        %v1957 = vpop.f32.mrf.mxu0
        %1958 = vdwg.mxu0
        %1959 = vxpose.xlu0.c.b16.start [1/8] %v1465, 128
        %1960 = vxpose.xlu0.c.b16.cont [2/8] 0, 128
        %1961 = vxpose.xlu0.c.b16.cont [3/8] 0, 128
        %1962 = vxpose.xlu0.c.b16.cont [4/8] 0, 128
        %1963 = vxpose.xlu0.c.b16.cont [5/8] 0, 128
        %1964 = vxpose.xlu0.c.b16.cont [6/8] 0, 128
        %1965 = vxpose.xlu0.c.b16.cont [7/8] 0, 128
        %1966 = vxpose.xlu0.c.b16.end [8/8] 0, 128
        %v1967 = vpop.trf.xlu0
        %v1968 = vpop.trf.xlu0
        %v1969 = vpop.trf.xlu0
        %v1970 = vpop.trf.xlu0
        %v1971 = vpop.trf.xlu0
        %v1972 = vpop.trf.xlu0
        %v1973 = vpop.trf.xlu0
        %v1974 = vpop.trf.xlu0
        %v1976 = vsel %vm1539, %v1967, 0
        %v1979 = vsel %vm1543, %v1497, 0
        %1981 = vmatprep.subr.bf16.mxu0 0
        %1982 = vmatpush1.bf16.msra.mxu0 0
        %1983 = vmatprep.subr.bf16.mxu0 0
        %1984 = vmatpush1.bf16.msra.mxu0 0
        %1985 = vmatprep.subr.bf16.mxu0 0
        %1986 = vmatpush1.bf16.msra.mxu0 0
        %1987 = vmatprep.subr.bf16.mxu0 0
        %1988 = vmatpush1.bf16.msra.mxu0 0
        %1989 = vmatprep.subr.bf16.mxu0 0
        %1990 = vmatpush1.bf16.msra.mxu0 0
        %1991 = vmatprep.subr.bf16.mxu0 0
        %1992 = vmatpush1.bf16.msra.mxu0 0
        %1993 = vmatprep.subr.bf16.mxu0 0
        %1994 = vmatpush1.bf16.msra.mxu0 0
        %1995 = vmatprep.subr.bf16.mxu0 0
        %1996 = vmatpush1.bf16.msra.mxu0 %v1979
        %1997 = vmatprep.subr.bf16.mxu0 0
        %1998 = vmatpush2.bf16.msra.mxu0 0
        %1999 = vmatprep.subr.bf16.mxu0 0
        %2000 = vmatpush2.bf16.msra.mxu0 0
        %2001 = vmatprep.subr.bf16.mxu0 0
        %2002 = vmatpush2.bf16.msra.mxu0 0
        %2003 = vmatprep.subr.bf16.mxu0 0
        %2004 = vmatpush2.bf16.msra.mxu0 0
        %2005 = vmatprep.subr.bf16.mxu0 0
        %2006 = vmatpush2.bf16.msra.mxu0 0
        %2007 = vmatprep.subr.bf16.mxu0 0
        %2008 = vmatpush2.bf16.msra.mxu0 0
        %2009 = vmatprep.subr.bf16.mxu0 0
        %2010 = vmatpush2.bf16.msra.mxu0 0
        %2011 = vmatprep.subr.bf16.mxu0 0
        %2012 = vmatpush2.bf16.msra.mxu0 0
        %2013 = vmatprep.mubr.bf16.mxu0 0
        %2014 = vmatmul.mubr.bf16.gmra.mxu0 %v1976
        %v2015 = vpop.f32.mrf.mxu0
        %v2016 = vadd.f32 %v1522, %v2015
        %v2017 = vpop.f32.mrf.mxu0
        %v2018 = vpop.f32.mrf.mxu0
        %v2019 = vpop.f32.mrf.mxu0
        %2020 = vdwg.mxu0
        %2021 = vxpose.xlu0.c.b16.start [1/8] %v1466, 128
        %2022 = vxpose.xlu0.c.b16.cont [2/8] 0, 128
        %2023 = vxpose.xlu0.c.b16.cont [3/8] 0, 128
        %2024 = vxpose.xlu0.c.b16.cont [4/8] 0, 128
        %2025 = vxpose.xlu0.c.b16.cont [5/8] 0, 128
        %2026 = vxpose.xlu0.c.b16.cont [6/8] 0, 128
        %2027 = vxpose.xlu0.c.b16.cont [7/8] 0, 128
        %2028 = vxpose.xlu0.c.b16.end [8/8] 0, 128
        %v2029 = vpop.trf.xlu0
        %v2030 = vpop.trf.xlu0
        %v2031 = vpop.trf.xlu0
        %v2032 = vpop.trf.xlu0
        %v2033 = vpop.trf.xlu0
        %v2034 = vpop.trf.xlu0
        %v2035 = vpop.trf.xlu0
        %v2036 = vpop.trf.xlu0
        %v2038 = vsel %vm1539, %v2029, 0
        %v2041 = vsel %vm1543, %v1498, 0
        %2043 = vmatprep.subr.bf16.mxu0 0
        %2044 = vmatpush1.bf16.msra.mxu0 0
        %2045 = vmatprep.subr.bf16.mxu0 0
        %2046 = vmatpush1.bf16.msra.mxu0 0
        %2047 = vmatprep.subr.bf16.mxu0 0
        %2048 = vmatpush1.bf16.msra.mxu0 0
        %2049 = vmatprep.subr.bf16.mxu0 0
        %2050 = vmatpush1.bf16.msra.mxu0 0
        %2051 = vmatprep.subr.bf16.mxu0 0
        %2052 = vmatpush1.bf16.msra.mxu0 0
        %2053 = vmatprep.subr.bf16.mxu0 0
        %2054 = vmatpush1.bf16.msra.mxu0 0
        %2055 = vmatprep.subr.bf16.mxu0 0
        %2056 = vmatpush1.bf16.msra.mxu0 0
        %2057 = vmatprep.subr.bf16.mxu0 0
        %2058 = vmatpush1.bf16.msra.mxu0 %v2041
        %2059 = vmatprep.subr.bf16.mxu0 0
        %2060 = vmatpush2.bf16.msra.mxu0 0
        %2061 = vmatprep.subr.bf16.mxu0 0
        %2062 = vmatpush2.bf16.msra.mxu0 0
        %2063 = vmatprep.subr.bf16.mxu0 0
        %2064 = vmatpush2.bf16.msra.mxu0 0
        %2065 = vmatprep.subr.bf16.mxu0 0
        %2066 = vmatpush2.bf16.msra.mxu0 0
        %2067 = vmatprep.subr.bf16.mxu0 0
        %2068 = vmatpush2.bf16.msra.mxu0 0
        %2069 = vmatprep.subr.bf16.mxu0 0
        %2070 = vmatpush2.bf16.msra.mxu0 0
        %2071 = vmatprep.subr.bf16.mxu0 0
        %2072 = vmatpush2.bf16.msra.mxu0 0
        %2073 = vmatprep.subr.bf16.mxu0 0
        %2074 = vmatpush2.bf16.msra.mxu0 0
        %2075 = vmatprep.mubr.bf16.mxu0 0
        %2076 = vmatmul.mubr.bf16.gmra.mxu0 %v2038
        %v2077 = vpop.f32.mrf.mxu0
        %v2078 = vadd.f32 %v1522, %v2077
        %v2079 = vpop.f32.mrf.mxu0
        %v2080 = vpop.f32.mrf.mxu0
        %v2081 = vpop.f32.mrf.mxu0
        %2082 = vdwg.mxu0
        %2083 = vxpose.xlu0.c.b16.start [1/8] %v1467, 128
        %2084 = vxpose.xlu0.c.b16.cont [2/8] 0, 128
        %2085 = vxpose.xlu0.c.b16.cont [3/8] 0, 128
        %2086 = vxpose.xlu0.c.b16.cont [4/8] 0, 128
        %2087 = vxpose.xlu0.c.b16.cont [5/8] 0, 128
        %2088 = vxpose.xlu0.c.b16.cont [6/8] 0, 128
        %2089 = vxpose.xlu0.c.b16.cont [7/8] 0, 128
        %2090 = vxpose.xlu0.c.b16.end [8/8] 0, 128
        %v2091 = vpop.trf.xlu0
        %v2092 = vpop.trf.xlu0
        %v2093 = vpop.trf.xlu0
        %v2094 = vpop.trf.xlu0
        %v2095 = vpop.trf.xlu0
        %v2096 = vpop.trf.xlu0
        %v2097 = vpop.trf.xlu0
        %v2098 = vpop.trf.xlu0
        %v2100 = vsel %vm1539, %v2091, 0
        %v2103 = vsel %vm1543, %v1499, 0
        %2105 = vmatprep.subr.bf16.mxu0 0
        %2106 = vmatpush1.bf16.msra.mxu0 0
        %2107 = vmatprep.subr.bf16.mxu0 0
        %2108 = vmatpush1.bf16.msra.mxu0 0
        %2109 = vmatprep.subr.bf16.mxu0 0
        %2110 = vmatpush1.bf16.msra.mxu0 0
        %2111 = vmatprep.subr.bf16.mxu0 0
        %2112 = vmatpush1.bf16.msra.mxu0 0
        %2113 = vmatprep.subr.bf16.mxu0 0
        %2114 = vmatpush1.bf16.msra.mxu0 0
        %2115 = vmatprep.subr.bf16.mxu0 0
        %2116 = vmatpush1.bf16.msra.mxu0 0
        %2117 = vmatprep.subr.bf16.mxu0 0
        %2118 = vmatpush1.bf16.msra.mxu0 0
        %2119 = vmatprep.subr.bf16.mxu0 0
        %2120 = vmatpush1.bf16.msra.mxu0 %v2103
        %2121 = vmatprep.subr.bf16.mxu0 0
        %2122 = vmatpush2.bf16.msra.mxu0 0
        %2123 = vmatprep.subr.bf16.mxu0 0
        %2124 = vmatpush2.bf16.msra.mxu0 0
        %2125 = vmatprep.subr.bf16.mxu0 0
        %2126 = vmatpush2.bf16.msra.mxu0 0
        %2127 = vmatprep.subr.bf16.mxu0 0
        %2128 = vmatpush2.bf16.msra.mxu0 0
        %2129 = vmatprep.subr.bf16.mxu0 0
        %2130 = vmatpush2.bf16.msra.mxu0 0
        %2131 = vmatprep.subr.bf16.mxu0 0
        %2132 = vmatpush2.bf16.msra.mxu0 0
        %2133 = vmatprep.subr.bf16.mxu0 0
        %2134 = vmatpush2.bf16.msra.mxu0 0
        %2135 = vmatprep.subr.bf16.mxu0 0
        %2136 = vmatpush2.bf16.msra.mxu0 0
        %2137 = vmatprep.mubr.bf16.mxu0 0
        %2138 = vmatmul.mubr.bf16.gmra.mxu0 %v2100
        %v2139 = vpop.f32.mrf.mxu0
        %v2140 = vadd.f32 %v1522, %v2139
        %v2141 = vpop.f32.mrf.mxu0
        %v2142 = vpop.f32.mrf.mxu0
        %v2143 = vpop.f32.mrf.mxu0
        %2144 = vdwg.mxu0
        %2145 = vxpose.xlu0.c.b16.start [1/8] %v1468, 128
        %2146 = vxpose.xlu0.c.b16.cont [2/8] 0, 128
        %2147 = vxpose.xlu0.c.b16.cont [3/8] 0, 128
        %2148 = vxpose.xlu0.c.b16.cont [4/8] 0, 128
        %2149 = vxpose.xlu0.c.b16.cont [5/8] 0, 128
        %2150 = vxpose.xlu0.c.b16.cont [6/8] 0, 128
        %2151 = vxpose.xlu0.c.b16.cont [7/8] 0, 128
        %2152 = vxpose.xlu0.c.b16.end [8/8] 0, 128
        %v2153 = vpop.trf.xlu0
        %v2154 = vpop.trf.xlu0
        %v2155 = vpop.trf.xlu0
        %v2156 = vpop.trf.xlu0
        %v2157 = vpop.trf.xlu0
        %v2158 = vpop.trf.xlu0
        %v2159 = vpop.trf.xlu0
        %v2160 = vpop.trf.xlu0
        %v2162 = vsel %vm1539, %v2153, 0
        %v2165 = vsel %vm1543, %v1500, 0
        %2167 = vmatprep.subr.bf16.mxu0 0
        %2168 = vmatpush1.bf16.msra.mxu0 0
        %2169 = vmatprep.subr.bf16.mxu0 0
        %2170 = vmatpush1.bf16.msra.mxu0 0
        %2171 = vmatprep.subr.bf16.mxu0 0
        %2172 = vmatpush1.bf16.msra.mxu0 0
        %2173 = vmatprep.subr.bf16.mxu0 0
        %2174 = vmatpush1.bf16.msra.mxu0 0
        %2175 = vmatprep.subr.bf16.mxu0 0
        %2176 = vmatpush1.bf16.msra.mxu0 0
        %2177 = vmatprep.subr.bf16.mxu0 0
        %2178 = vmatpush1.bf16.msra.mxu0 0
        %2179 = vmatprep.subr.bf16.mxu0 0
        %2180 = vmatpush1.bf16.msra.mxu0 0
        %2181 = vmatprep.subr.bf16.mxu0 0
        %2182 = vmatpush1.bf16.msra.mxu0 %v2165
        %2183 = vmatprep.subr.bf16.mxu0 0
        %2184 = vmatpush2.bf16.msra.mxu0 0
        %2185 = vmatprep.subr.bf16.mxu0 0
        %2186 = vmatpush2.bf16.msra.mxu0 0
        %2187 = vmatprep.subr.bf16.mxu0 0
        %2188 = vmatpush2.bf16.msra.mxu0 0
        %2189 = vmatprep.subr.bf16.mxu0 0
        %2190 = vmatpush2.bf16.msra.mxu0 0
        %2191 = vmatprep.subr.bf16.mxu0 0
        %2192 = vmatpush2.bf16.msra.mxu0 0
        %2193 = vmatprep.subr.bf16.mxu0 0
        %2194 = vmatpush2.bf16.msra.mxu0 0
        %2195 = vmatprep.subr.bf16.mxu0 0
        %2196 = vmatpush2.bf16.msra.mxu0 0
        %2197 = vmatprep.subr.bf16.mxu0 0
        %2198 = vmatpush2.bf16.msra.mxu0 0
        %2199 = vmatprep.mubr.bf16.mxu0 0
        %2200 = vmatmul.mubr.bf16.gmra.mxu0 %v2162
        %v2201 = vpop.f32.mrf.mxu0
        %v2202 = vadd.f32 %v1522, %v2201
        %v2203 = vpop.f32.mrf.mxu0
        %v2204 = vpop.f32.mrf.mxu0
        %v2205 = vpop.f32.mrf.mxu0
        %2206 = vdwg.mxu0
        %2207 = vxpose.xlu0.c.b16.start [1/8] %v1469, 128
        %2208 = vxpose.xlu0.c.b16.cont [2/8] 0, 128
        %2209 = vxpose.xlu0.c.b16.cont [3/8] 0, 128
        %2210 = vxpose.xlu0.c.b16.cont [4/8] 0, 128
        %2211 = vxpose.xlu0.c.b16.cont [5/8] 0, 128
        %2212 = vxpose.xlu0.c.b16.cont [6/8] 0, 128
        %2213 = vxpose.xlu0.c.b16.cont [7/8] 0, 128
        %2214 = vxpose.xlu0.c.b16.end [8/8] 0, 128
        %v2215 = vpop.trf.xlu0
        %v2216 = vpop.trf.xlu0
        %v2217 = vpop.trf.xlu0
        %v2218 = vpop.trf.xlu0
        %v2219 = vpop.trf.xlu0
        %v2220 = vpop.trf.xlu0
        %v2221 = vpop.trf.xlu0
        %v2222 = vpop.trf.xlu0
        %v2224 = vsel %vm1539, %v2215, 0
        %v2227 = vsel %vm1543, %v1501, 0
        %2229 = vmatprep.subr.bf16.mxu0 0
        %2230 = vmatpush1.bf16.msra.mxu0 0
        %2231 = vmatprep.subr.bf16.mxu0 0
        %2232 = vmatpush1.bf16.msra.mxu0 0
        %2233 = vmatprep.subr.bf16.mxu0 0
        %2234 = vmatpush1.bf16.msra.mxu0 0
        %2235 = vmatprep.subr.bf16.mxu0 0
        %2236 = vmatpush1.bf16.msra.mxu0 0
        %2237 = vmatprep.subr.bf16.mxu0 0
        %2238 = vmatpush1.bf16.msra.mxu0 0
        %2239 = vmatprep.subr.bf16.mxu0 0
        %2240 = vmatpush1.bf16.msra.mxu0 0
        %2241 = vmatprep.subr.bf16.mxu0 0
        %2242 = vmatpush1.bf16.msra.mxu0 0
        %2243 = vmatprep.subr.bf16.mxu0 0
        %2244 = vmatpush1.bf16.msra.mxu0 %v2227
        %2245 = vmatprep.subr.bf16.mxu0 0
        %2246 = vmatpush2.bf16.msra.mxu0 0
        %2247 = vmatprep.subr.bf16.mxu0 0
        %2248 = vmatpush2.bf16.msra.mxu0 0
        %2249 = vmatprep.subr.bf16.mxu0 0
        %2250 = vmatpush2.bf16.msra.mxu0 0
        %2251 = vmatprep.subr.bf16.mxu0 0
        %2252 = vmatpush2.bf16.msra.mxu0 0
        %2253 = vmatprep.subr.bf16.mxu0 0
        %2254 = vmatpush2.bf16.msra.mxu0 0
        %2255 = vmatprep.subr.bf16.mxu0 0
        %2256 = vmatpush2.bf16.msra.mxu0 0
        %2257 = vmatprep.subr.bf16.mxu0 0
        %2258 = vmatpush2.bf16.msra.mxu0 0
        %2259 = vmatprep.subr.bf16.mxu0 0
        %2260 = vmatpush2.bf16.msra.mxu0 0
        %2261 = vmatprep.mubr.bf16.mxu0 0
        %2262 = vmatmul.mubr.bf16.gmra.mxu0 %v2224
        %v2263 = vpop.f32.mrf.mxu0
        %v2264 = vadd.f32 %v1522, %v2263
        %v2265 = vpop.f32.mrf.mxu0
        %v2266 = vpop.f32.mrf.mxu0
        %v2267 = vpop.f32.mrf.mxu0
        %2268 = vdwg.mxu0
        %2269 = vxpose.xlu0.c.b16.start [1/8] %v1470, 128
        %2270 = vxpose.xlu0.c.b16.cont [2/8] 0, 128
        %2271 = vxpose.xlu0.c.b16.cont [3/8] 0, 128
        %2272 = vxpose.xlu0.c.b16.cont [4/8] 0, 128
        %2273 = vxpose.xlu0.c.b16.cont [5/8] 0, 128
        %2274 = vxpose.xlu0.c.b16.cont [6/8] 0, 128
        %2275 = vxpose.xlu0.c.b16.cont [7/8] 0, 128
        %2276 = vxpose.xlu0.c.b16.end [8/8] 0, 128
        %v2277 = vpop.trf.xlu0
        %v2278 = vpop.trf.xlu0
        %v2279 = vpop.trf.xlu0
        %v2280 = vpop.trf.xlu0
        %v2281 = vpop.trf.xlu0
        %v2282 = vpop.trf.xlu0
        %v2283 = vpop.trf.xlu0
        %v2284 = vpop.trf.xlu0
        %v2286 = vsel %vm1539, %v2277, 0
        %v2289 = vsel %vm1543, %v1502, 0
        %2291 = vmatprep.subr.bf16.mxu0 0
        %2292 = vmatpush1.bf16.msra.mxu0 0
        %2293 = vmatprep.subr.bf16.mxu0 0
        %2294 = vmatpush1.bf16.msra.mxu0 0
        %2295 = vmatprep.subr.bf16.mxu0 0
        %2296 = vmatpush1.bf16.msra.mxu0 0
        %2297 = vmatprep.subr.bf16.mxu0 0
        %2298 = vmatpush1.bf16.msra.mxu0 0
        %2299 = vmatprep.subr.bf16.mxu0 0
        %2300 = vmatpush1.bf16.msra.mxu0 0
        %2301 = vmatprep.subr.bf16.mxu0 0
        %2302 = vmatpush1.bf16.msra.mxu0 0
        %2303 = vmatprep.subr.bf16.mxu0 0
        %2304 = vmatpush1.bf16.msra.mxu0 0
        %2305 = vmatprep.subr.bf16.mxu0 0
        %2306 = vmatpush1.bf16.msra.mxu0 %v2289
        %2307 = vmatprep.subr.bf16.mxu0 0
        %2308 = vmatpush2.bf16.msra.mxu0 0
        %2309 = vmatprep.subr.bf16.mxu0 0
        %2310 = vmatpush2.bf16.msra.mxu0 0
        %2311 = vmatprep.subr.bf16.mxu0 0
        %2312 = vmatpush2.bf16.msra.mxu0 0
        %2313 = vmatprep.subr.bf16.mxu0 0
        %2314 = vmatpush2.bf16.msra.mxu0 0
        %2315 = vmatprep.subr.bf16.mxu0 0
        %2316 = vmatpush2.bf16.msra.mxu0 0
        %2317 = vmatprep.subr.bf16.mxu0 0
        %2318 = vmatpush2.bf16.msra.mxu0 0
        %2319 = vmatprep.subr.bf16.mxu0 0
        %2320 = vmatpush2.bf16.msra.mxu0 0
        %2321 = vmatprep.subr.bf16.mxu0 0
        %2322 = vmatpush2.bf16.msra.mxu0 0
        %2323 = vmatprep.mubr.bf16.mxu0 0
        %2324 = vmatmul.mubr.bf16.gmra.mxu0 %v2286
        %v2325 = vpop.f32.mrf.mxu0
        %v2326 = vadd.f32 %v1522, %v2325
        %v2327 = vpop.f32.mrf.mxu0
        %v2328 = vpop.f32.mrf.mxu0
        %v2329 = vpop.f32.mrf.mxu0
        %2330 = vdwg.mxu0
        %2331 = vxpose.xlu0.c.b16.start [1/8] %v1471, 128
        %2332 = vxpose.xlu0.c.b16.cont [2/8] 0, 128
        %2333 = vxpose.xlu0.c.b16.cont [3/8] 0, 128
        %2334 = vxpose.xlu0.c.b16.cont [4/8] 0, 128
        %2335 = vxpose.xlu0.c.b16.cont [5/8] 0, 128
        %2336 = vxpose.xlu0.c.b16.cont [6/8] 0, 128
        %2337 = vxpose.xlu0.c.b16.cont [7/8] 0, 128
        %2338 = vxpose.xlu0.c.b16.end [8/8] 0, 128
        %v2339 = vpop.trf.xlu0
        %v2340 = vpop.trf.xlu0
        %v2341 = vpop.trf.xlu0
        %v2342 = vpop.trf.xlu0
        %v2343 = vpop.trf.xlu0
        %v2344 = vpop.trf.xlu0
        %v2345 = vpop.trf.xlu0
        %v2346 = vpop.trf.xlu0
        %v2348 = vsel %vm1539, %v2339, 0
        %v2351 = vsel %vm1543, %v1503, 0
        %2353 = vmatprep.subr.bf16.mxu0 0
        %2354 = vmatpush1.bf16.msra.mxu0 0
        %2355 = vmatprep.subr.bf16.mxu0 0
        %2356 = vmatpush1.bf16.msra.mxu0 0
        %2357 = vmatprep.subr.bf16.mxu0 0
        %2358 = vmatpush1.bf16.msra.mxu0 0
        %2359 = vmatprep.subr.bf16.mxu0 0
        %2360 = vmatpush1.bf16.msra.mxu0 0
        %2361 = vmatprep.subr.bf16.mxu0 0
        %2362 = vmatpush1.bf16.msra.mxu0 0
        %2363 = vmatprep.subr.bf16.mxu0 0
        %2364 = vmatpush1.bf16.msra.mxu0 0
        %2365 = vmatprep.subr.bf16.mxu0 0
        %2366 = vmatpush1.bf16.msra.mxu0 0
        %2367 = vmatprep.subr.bf16.mxu0 0
        %2368 = vmatpush1.bf16.msra.mxu0 %v2351
        %2369 = vmatprep.subr.bf16.mxu0 0
        %2370 = vmatpush2.bf16.msra.mxu0 0
        %2371 = vmatprep.subr.bf16.mxu0 0
        %2372 = vmatpush2.bf16.msra.mxu0 0
        %2373 = vmatprep.subr.bf16.mxu0 0
        %2374 = vmatpush2.bf16.msra.mxu0 0
        %2375 = vmatprep.subr.bf16.mxu0 0
        %2376 = vmatpush2.bf16.msra.mxu0 0
        %2377 = vmatprep.subr.bf16.mxu0 0
        %2378 = vmatpush2.bf16.msra.mxu0 0
        %2379 = vmatprep.subr.bf16.mxu0 0
        %2380 = vmatpush2.bf16.msra.mxu0 0
        %2381 = vmatprep.subr.bf16.mxu0 0
        %2382 = vmatpush2.bf16.msra.mxu0 0
        %2383 = vmatprep.subr.bf16.mxu0 0
        %2384 = vmatpush2.bf16.msra.mxu0 0
        %2385 = vmatprep.mubr.bf16.mxu0 0
        %2386 = vmatmul.mubr.bf16.gmra.mxu0 %v2348
        %v2387 = vpop.f32.mrf.mxu0
        %v2388 = vadd.f32 %v1522, %v2387
        %v2389 = vpop.f32.mrf.mxu0
        %v2390 = vpop.f32.mrf.mxu0
        %v2391 = vpop.f32.mrf.mxu0
        %2392 = vdwg.mxu0
        %2393 = vxpose.xlu0.c.b16.start [1/8] %v1472, 128
        %2394 = vxpose.xlu0.c.b16.cont [2/8] 0, 128
        %2395 = vxpose.xlu0.c.b16.cont [3/8] 0, 128
        %2396 = vxpose.xlu0.c.b16.cont [4/8] 0, 128
        %2397 = vxpose.xlu0.c.b16.cont [5/8] 0, 128
        %2398 = vxpose.xlu0.c.b16.cont [6/8] 0, 128
        %2399 = vxpose.xlu0.c.b16.cont [7/8] 0, 128
        %2400 = vxpose.xlu0.c.b16.end [8/8] 0, 128
        %v2401 = vpop.trf.xlu0
        %v2402 = vpop.trf.xlu0
        %v2403 = vpop.trf.xlu0
        %v2404 = vpop.trf.xlu0
        %v2405 = vpop.trf.xlu0
        %v2406 = vpop.trf.xlu0
        %v2407 = vpop.trf.xlu0
        %v2408 = vpop.trf.xlu0
        %v2410 = vsel %vm1539, %v2401, 0
        %v2413 = vsel %vm1543, %v1504, 0
        %2415 = vmatprep.subr.bf16.mxu0 0
        %2416 = vmatpush1.bf16.msra.mxu0 0
        %2417 = vmatprep.subr.bf16.mxu0 0
        %2418 = vmatpush1.bf16.msra.mxu0 0
        %2419 = vmatprep.subr.bf16.mxu0 0
        %2420 = vmatpush1.bf16.msra.mxu0 0
        %2421 = vmatprep.subr.bf16.mxu0 0
        %2422 = vmatpush1.bf16.msra.mxu0 0
        %2423 = vmatprep.subr.bf16.mxu0 0
        %2424 = vmatpush1.bf16.msra.mxu0 0
        %2425 = vmatprep.subr.bf16.mxu0 0
        %2426 = vmatpush1.bf16.msra.mxu0 0
        %2427 = vmatprep.subr.bf16.mxu0 0
        %2428 = vmatpush1.bf16.msra.mxu0 0
        %2429 = vmatprep.subr.bf16.mxu0 0
        %2430 = vmatpush1.bf16.msra.mxu0 %v2413
        %2431 = vmatprep.subr.bf16.mxu0 0
        %2432 = vmatpush2.bf16.msra.mxu0 0
        %2433 = vmatprep.subr.bf16.mxu0 0
        %2434 = vmatpush2.bf16.msra.mxu0 0
        %2435 = vmatprep.subr.bf16.mxu0 0
        %2436 = vmatpush2.bf16.msra.mxu0 0
        %2437 = vmatprep.subr.bf16.mxu0 0
        %2438 = vmatpush2.bf16.msra.mxu0 0
        %2439 = vmatprep.subr.bf16.mxu0 0
        %2440 = vmatpush2.bf16.msra.mxu0 0
        %2441 = vmatprep.subr.bf16.mxu0 0
        %2442 = vmatpush2.bf16.msra.mxu0 0
        %2443 = vmatprep.subr.bf16.mxu0 0
        %2444 = vmatpush2.bf16.msra.mxu0 0
        %2445 = vmatprep.subr.bf16.mxu0 0
        %2446 = vmatpush2.bf16.msra.mxu0 0
        %2447 = vmatprep.mubr.bf16.mxu0 0
        %2448 = vmatmul.mubr.bf16.gmra.mxu0 %v2410
        %v2449 = vpop.f32.mrf.mxu0
        %v2450 = vadd.f32 %v1522, %v2449
        %v2451 = vpop.f32.mrf.mxu0
        %v2452 = vpop.f32.mrf.mxu0
        %v2453 = vpop.f32.mrf.mxu0
        %2454 = vdwg.mxu0
        %2455 = vxpose.xlu0.c.b16.start [1/8] %v1473, 128
        %2456 = vxpose.xlu0.c.b16.cont [2/8] 0, 128
        %2457 = vxpose.xlu0.c.b16.cont [3/8] 0, 128
        %2458 = vxpose.xlu0.c.b16.cont [4/8] 0, 128
        %2459 = vxpose.xlu0.c.b16.cont [5/8] 0, 128
        %2460 = vxpose.xlu0.c.b16.cont [6/8] 0, 128
        %2461 = vxpose.xlu0.c.b16.cont [7/8] 0, 128
        %2462 = vxpose.xlu0.c.b16.end [8/8] 0, 128
        %v2463 = vpop.trf.xlu0
        %v2464 = vpop.trf.xlu0
        %v2465 = vpop.trf.xlu0
        %v2466 = vpop.trf.xlu0
        %v2467 = vpop.trf.xlu0
        %v2468 = vpop.trf.xlu0
        %v2469 = vpop.trf.xlu0
        %v2470 = vpop.trf.xlu0
        %v2472 = vsel %vm1539, %v2463, 0
        %v2475 = vsel %vm1543, %v1505, 0
        %2477 = vmatprep.subr.bf16.mxu0 0
        %2478 = vmatpush1.bf16.msra.mxu0 0
        %2479 = vmatprep.subr.bf16.mxu0 0
        %2480 = vmatpush1.bf16.msra.mxu0 0
        %2481 = vmatprep.subr.bf16.mxu0 0
        %2482 = vmatpush1.bf16.msra.mxu0 0
        %2483 = vmatprep.subr.bf16.mxu0 0
        %2484 = vmatpush1.bf16.msra.mxu0 0
        %2485 = vmatprep.subr.bf16.mxu0 0
        %2486 = vmatpush1.bf16.msra.mxu0 0
        %2487 = vmatprep.subr.bf16.mxu0 0
        %2488 = vmatpush1.bf16.msra.mxu0 0
        %2489 = vmatprep.subr.bf16.mxu0 0
        %2490 = vmatpush1.bf16.msra.mxu0 0
        %2491 = vmatprep.subr.bf16.mxu0 0
        %2492 = vmatpush1.bf16.msra.mxu0 %v2475
        %2493 = vmatprep.subr.bf16.mxu0 0
        %2494 = vmatpush2.bf16.msra.mxu0 0
        %2495 = vmatprep.subr.bf16.mxu0 0
        %2496 = vmatpush2.bf16.msra.mxu0 0
        %2497 = vmatprep.subr.bf16.mxu0 0
        %2498 = vmatpush2.bf16.msra.mxu0 0
        %2499 = vmatprep.subr.bf16.mxu0 0
        %2500 = vmatpush2.bf16.msra.mxu0 0
        %2501 = vmatprep.subr.bf16.mxu0 0
        %2502 = vmatpush2.bf16.msra.mxu0 0
        %2503 = vmatprep.subr.bf16.mxu0 0
        %2504 = vmatpush2.bf16.msra.mxu0 0
        %2505 = vmatprep.subr.bf16.mxu0 0
        %2506 = vmatpush2.bf16.msra.mxu0 0
        %2507 = vmatprep.subr.bf16.mxu0 0
        %2508 = vmatpush2.bf16.msra.mxu0 0
        %2509 = vmatprep.mubr.bf16.mxu0 0
        %2510 = vmatmul.mubr.bf16.gmra.mxu0 %v2472
        %v2511 = vpop.f32.mrf.mxu0
        %v2512 = vadd.f32 %v1522, %v2511
        %v2513 = vpop.f32.mrf.mxu0
        %v2514 = vpop.f32.mrf.mxu0
        %v2515 = vpop.f32.mrf.mxu0
        %2516 = vdwg.mxu0
        %2517 = vxpose.xlu0.c.b16.start [1/8] %v1474, 128
        %2518 = vxpose.xlu0.c.b16.cont [2/8] 0, 128
        %2519 = vxpose.xlu0.c.b16.cont [3/8] 0, 128
        %2520 = vxpose.xlu0.c.b16.cont [4/8] 0, 128
        %2521 = vxpose.xlu0.c.b16.cont [5/8] 0, 128
        %2522 = vxpose.xlu0.c.b16.cont [6/8] 0, 128
        %2523 = vxpose.xlu0.c.b16.cont [7/8] 0, 128
        %2524 = vxpose.xlu0.c.b16.end [8/8] 0, 128
        %v2525 = vpop.trf.xlu0
        %v2526 = vpop.trf.xlu0
        %v2527 = vpop.trf.xlu0
        %v2528 = vpop.trf.xlu0
        %v2529 = vpop.trf.xlu0
        %v2530 = vpop.trf.xlu0
        %v2531 = vpop.trf.xlu0
        %v2532 = vpop.trf.xlu0
        %v2534 = vsel %vm1539, %v2525, 0
        %v2537 = vsel %vm1543, %v1506, 0
        %2539 = vmatprep.subr.bf16.mxu0 0
        %2540 = vmatpush1.bf16.msra.mxu0 0
        %2541 = vmatprep.subr.bf16.mxu0 0
        %2542 = vmatpush1.bf16.msra.mxu0 0
        %2543 = vmatprep.subr.bf16.mxu0 0
        %2544 = vmatpush1.bf16.msra.mxu0 0
        %2545 = vmatprep.subr.bf16.mxu0 0
        %2546 = vmatpush1.bf16.msra.mxu0 0
        %2547 = vmatprep.subr.bf16.mxu0 0
        %2548 = vmatpush1.bf16.msra.mxu0 0
        %2549 = vmatprep.subr.bf16.mxu0 0
        %2550 = vmatpush1.bf16.msra.mxu0 0
        %2551 = vmatprep.subr.bf16.mxu0 0
        %2552 = vmatpush1.bf16.msra.mxu0 0
        %2553 = vmatprep.subr.bf16.mxu0 0
        %2554 = vmatpush1.bf16.msra.mxu0 %v2537
        %2555 = vmatprep.subr.bf16.mxu0 0
        %2556 = vmatpush2.bf16.msra.mxu0 0
        %2557 = vmatprep.subr.bf16.mxu0 0
        %2558 = vmatpush2.bf16.msra.mxu0 0
        %2559 = vmatprep.subr.bf16.mxu0 0
        %2560 = vmatpush2.bf16.msra.mxu0 0
        %2561 = vmatprep.subr.bf16.mxu0 0
        %2562 = vmatpush2.bf16.msra.mxu0 0
        %2563 = vmatprep.subr.bf16.mxu0 0
        %2564 = vmatpush2.bf16.msra.mxu0 0
        %2565 = vmatprep.subr.bf16.mxu0 0
        %2566 = vmatpush2.bf16.msra.mxu0 0
        %2567 = vmatprep.subr.bf16.mxu0 0
        %2568 = vmatpush2.bf16.msra.mxu0 0
        %2569 = vmatprep.subr.bf16.mxu0 0
        %2570 = vmatpush2.bf16.msra.mxu0 0
        %2571 = vmatprep.mubr.bf16.mxu0 0
        %2572 = vmatmul.mubr.bf16.gmra.mxu0 %v2534
        %v2573 = vpop.f32.mrf.mxu0
        %v2574 = vadd.f32 %v1522, %v2573
        %v2575 = vpop.f32.mrf.mxu0
        %v2576 = vpop.f32.mrf.mxu0
        %v2577 = vpop.f32.mrf.mxu0
        %2578 = vdwg.mxu0
        %2579 = vxpose.xlu0.c.b16.start [1/8] %v1475, 128
        %2580 = vxpose.xlu0.c.b16.cont [2/8] 0, 128
        %2581 = vxpose.xlu0.c.b16.cont [3/8] 0, 128
        %2582 = vxpose.xlu0.c.b16.cont [4/8] 0, 128
        %2583 = vxpose.xlu0.c.b16.cont [5/8] 0, 128
        %2584 = vxpose.xlu0.c.b16.cont [6/8] 0, 128
        %2585 = vxpose.xlu0.c.b16.cont [7/8] 0, 128
        %2586 = vxpose.xlu0.c.b16.end [8/8] 0, 128
        %v2587 = vpop.trf.xlu0
        %v2588 = vpop.trf.xlu0
        %v2589 = vpop.trf.xlu0
        %v2590 = vpop.trf.xlu0
        %v2591 = vpop.trf.xlu0
        %v2592 = vpop.trf.xlu0
        %v2593 = vpop.trf.xlu0
        %v2594 = vpop.trf.xlu0
        %v2596 = vsel %vm1539, %v2587, 0
        %v2599 = vsel %vm1543, %v1507, 0
        %2601 = vmatprep.subr.bf16.mxu0 0
        %2602 = vmatpush1.bf16.msra.mxu0 0
        %2603 = vmatprep.subr.bf16.mxu0 0
        %2604 = vmatpush1.bf16.msra.mxu0 0
        %2605 = vmatprep.subr.bf16.mxu0 0
        %2606 = vmatpush1.bf16.msra.mxu0 0
        %2607 = vmatprep.subr.bf16.mxu0 0
        %2608 = vmatpush1.bf16.msra.mxu0 0
        %2609 = vmatprep.subr.bf16.mxu0 0
        %2610 = vmatpush1.bf16.msra.mxu0 0
        %2611 = vmatprep.subr.bf16.mxu0 0
        %2612 = vmatpush1.bf16.msra.mxu0 0
        %2613 = vmatprep.subr.bf16.mxu0 0
        %2614 = vmatpush1.bf16.msra.mxu0 0
        %2615 = vmatprep.subr.bf16.mxu0 0
        %2616 = vmatpush1.bf16.msra.mxu0 %v2599
        %2617 = vmatprep.subr.bf16.mxu0 0
        %2618 = vmatpush2.bf16.msra.mxu0 0
        %2619 = vmatprep.subr.bf16.mxu0 0
        %2620 = vmatpush2.bf16.msra.mxu0 0
        %2621 = vmatprep.subr.bf16.mxu0 0
        %2622 = vmatpush2.bf16.msra.mxu0 0
        %2623 = vmatprep.subr.bf16.mxu0 0
        %2624 = vmatpush2.bf16.msra.mxu0 0
        %2625 = vmatprep.subr.bf16.mxu0 0
        %2626 = vmatpush2.bf16.msra.mxu0 0
        %2627 = vmatprep.subr.bf16.mxu0 0
        %2628 = vmatpush2.bf16.msra.mxu0 0
        %2629 = vmatprep.subr.bf16.mxu0 0
        %2630 = vmatpush2.bf16.msra.mxu0 0
        %2631 = vmatprep.subr.bf16.mxu0 0
        %2632 = vmatpush2.bf16.msra.mxu0 0
        %2633 = vmatprep.mubr.bf16.mxu0 0
        %2634 = vmatmul.mubr.bf16.gmra.mxu0 %v2596
        %v2635 = vpop.f32.mrf.mxu0
        %v2636 = vadd.f32 %v1522, %v2635
        %v2637 = vpop.f32.mrf.mxu0
        %v2638 = vpop.f32.mrf.mxu0
        %v2639 = vpop.f32.mrf.mxu0
        %2640 = vdwg.mxu0
        %2641 = vxpose.xlu0.c.b16.start [1/8] %v1476, 128
        %2642 = vxpose.xlu0.c.b16.cont [2/8] 0, 128
        %2643 = vxpose.xlu0.c.b16.cont [3/8] 0, 128
        %2644 = vxpose.xlu0.c.b16.cont [4/8] 0, 128
        %2645 = vxpose.xlu0.c.b16.cont [5/8] 0, 128
        %2646 = vxpose.xlu0.c.b16.cont [6/8] 0, 128
        %2647 = vxpose.xlu0.c.b16.cont [7/8] 0, 128
        %2648 = vxpose.xlu0.c.b16.end [8/8] 0, 128
        %v2649 = vpop.trf.xlu0
        %v2650 = vpop.trf.xlu0
        %v2651 = vpop.trf.xlu0
        %v2652 = vpop.trf.xlu0
        %v2653 = vpop.trf.xlu0
        %v2654 = vpop.trf.xlu0
        %v2655 = vpop.trf.xlu0
        %v2656 = vpop.trf.xlu0
        %v2658 = vsel %vm1539, %v2649, 0
        %v2661 = vsel %vm1543, %v1508, 0
        %2663 = vmatprep.subr.bf16.mxu0 0
        %2664 = vmatpush1.bf16.msra.mxu0 0
        %2665 = vmatprep.subr.bf16.mxu0 0
        %2666 = vmatpush1.bf16.msra.mxu0 0
        %2667 = vmatprep.subr.bf16.mxu0 0
        %2668 = vmatpush1.bf16.msra.mxu0 0
        %2669 = vmatprep.subr.bf16.mxu0 0
        %2670 = vmatpush1.bf16.msra.mxu0 0
        %2671 = vmatprep.subr.bf16.mxu0 0
        %2672 = vmatpush1.bf16.msra.mxu0 0
        %2673 = vmatprep.subr.bf16.mxu0 0
        %2674 = vmatpush1.bf16.msra.mxu0 0
        %2675 = vmatprep.subr.bf16.mxu0 0
        %2676 = vmatpush1.bf16.msra.mxu0 0
        %2677 = vmatprep.subr.bf16.mxu0 0
        %2678 = vmatpush1.bf16.msra.mxu0 %v2661
        %2679 = vmatprep.subr.bf16.mxu0 0
        %2680 = vmatpush2.bf16.msra.mxu0 0
        %2681 = vmatprep.subr.bf16.mxu0 0
        %2682 = vmatpush2.bf16.msra.mxu0 0
        %2683 = vmatprep.subr.bf16.mxu0 0
        %2684 = vmatpush2.bf16.msra.mxu0 0
        %2685 = vmatprep.subr.bf16.mxu0 0
        %2686 = vmatpush2.bf16.msra.mxu0 0
        %2687 = vmatprep.subr.bf16.mxu0 0
        %2688 = vmatpush2.bf16.msra.mxu0 0
        %2689 = vmatprep.subr.bf16.mxu0 0
        %2690 = vmatpush2.bf16.msra.mxu0 0
        %2691 = vmatprep.subr.bf16.mxu0 0
        %2692 = vmatpush2.bf16.msra.mxu0 0
        %2693 = vmatprep.subr.bf16.mxu0 0
        %2694 = vmatpush2.bf16.msra.mxu0 0
        %2695 = vmatprep.mubr.bf16.mxu0 0
        %2696 = vmatmul.mubr.bf16.gmra.mxu0 %v2658
        %v2697 = vpop.f32.mrf.mxu0
        %v2698 = vadd.f32 %v1522, %v2697
        %v2699 = vpop.f32.mrf.mxu0
        %v2700 = vpop.f32.mrf.mxu0
        %v2701 = vpop.f32.mrf.mxu0
        %2702 = vdwg.mxu0
        %2703 = vxpose.xlu0.c.b16.start [1/8] %v1477, 128
        %2704 = vxpose.xlu0.c.b16.cont [2/8] 0, 128
        %2705 = vxpose.xlu0.c.b16.cont [3/8] 0, 128
        %2706 = vxpose.xlu0.c.b16.cont [4/8] 0, 128
        %2707 = vxpose.xlu0.c.b16.cont [5/8] 0, 128
        %2708 = vxpose.xlu0.c.b16.cont [6/8] 0, 128
        %2709 = vxpose.xlu0.c.b16.cont [7/8] 0, 128
        %2710 = vxpose.xlu0.c.b16.end [8/8] 0, 128
        %v2711 = vpop.trf.xlu0
        %v2712 = vpop.trf.xlu0
        %v2713 = vpop.trf.xlu0
        %v2714 = vpop.trf.xlu0
        %v2715 = vpop.trf.xlu0
        %v2716 = vpop.trf.xlu0
        %v2717 = vpop.trf.xlu0
        %v2718 = vpop.trf.xlu0
        %v2720 = vsel %vm1539, %v2711, 0
        %v2723 = vsel %vm1543, %v1509, 0
        %2725 = vmatprep.subr.bf16.mxu0 0
        %2726 = vmatpush1.bf16.msra.mxu0 0
        %2727 = vmatprep.subr.bf16.mxu0 0
        %2728 = vmatpush1.bf16.msra.mxu0 0
        %2729 = vmatprep.subr.bf16.mxu0 0
        %2730 = vmatpush1.bf16.msra.mxu0 0
        %2731 = vmatprep.subr.bf16.mxu0 0
        %2732 = vmatpush1.bf16.msra.mxu0 0
        %2733 = vmatprep.subr.bf16.mxu0 0
        %2734 = vmatpush1.bf16.msra.mxu0 0
        %2735 = vmatprep.subr.bf16.mxu0 0
        %2736 = vmatpush1.bf16.msra.mxu0 0
        %2737 = vmatprep.subr.bf16.mxu0 0
        %2738 = vmatpush1.bf16.msra.mxu0 0
        %2739 = vmatprep.subr.bf16.mxu0 0
        %2740 = vmatpush1.bf16.msra.mxu0 %v2723
        %2741 = vmatprep.subr.bf16.mxu0 0
        %2742 = vmatpush2.bf16.msra.mxu0 0
        %2743 = vmatprep.subr.bf16.mxu0 0
        %2744 = vmatpush2.bf16.msra.mxu0 0
        %2745 = vmatprep.subr.bf16.mxu0 0
        %2746 = vmatpush2.bf16.msra.mxu0 0
        %2747 = vmatprep.subr.bf16.mxu0 0
        %2748 = vmatpush2.bf16.msra.mxu0 0
        %2749 = vmatprep.subr.bf16.mxu0 0
        %2750 = vmatpush2.bf16.msra.mxu0 0
        %2751 = vmatprep.subr.bf16.mxu0 0
        %2752 = vmatpush2.bf16.msra.mxu0 0
        %2753 = vmatprep.subr.bf16.mxu0 0
        %2754 = vmatpush2.bf16.msra.mxu0 0
        %2755 = vmatprep.subr.bf16.mxu0 0
        %2756 = vmatpush2.bf16.msra.mxu0 0
        %2757 = vmatprep.mubr.bf16.mxu0 0
        %2758 = vmatmul.mubr.bf16.gmra.mxu0 %v2720
        %v2759 = vpop.f32.mrf.mxu0
        %v2760 = vadd.f32 %v1522, %v2759
        %v2761 = vpop.f32.mrf.mxu0
        %v2762 = vpop.f32.mrf.mxu0
        %v2763 = vpop.f32.mrf.mxu0
        %2764 = vdwg.mxu0
        %2765 = vxpose.xlu0.c.b16.start [1/8] %v1478, 128
        %2766 = vxpose.xlu0.c.b16.cont [2/8] 0, 128
        %2767 = vxpose.xlu0.c.b16.cont [3/8] 0, 128
        %2768 = vxpose.xlu0.c.b16.cont [4/8] 0, 128
        %2769 = vxpose.xlu0.c.b16.cont [5/8] 0, 128
        %2770 = vxpose.xlu0.c.b16.cont [6/8] 0, 128
        %2771 = vxpose.xlu0.c.b16.cont [7/8] 0, 128
        %2772 = vxpose.xlu0.c.b16.end [8/8] 0, 128
        %v2773 = vpop.trf.xlu0
        %v2774 = vpop.trf.xlu0
        %v2775 = vpop.trf.xlu0
        %v2776 = vpop.trf.xlu0
        %v2777 = vpop.trf.xlu0
        %v2778 = vpop.trf.xlu0
        %v2779 = vpop.trf.xlu0
        %v2780 = vpop.trf.xlu0
        %v2782 = vsel %vm1539, %v2773, 0
        %v2785 = vsel %vm1543, %v1510, 0
        %2787 = vmatprep.subr.bf16.mxu0 0
        %2788 = vmatpush1.bf16.msra.mxu0 0
        %2789 = vmatprep.subr.bf16.mxu0 0
        %2790 = vmatpush1.bf16.msra.mxu0 0
        %2791 = vmatprep.subr.bf16.mxu0 0
        %2792 = vmatpush1.bf16.msra.mxu0 0
        %2793 = vmatprep.subr.bf16.mxu0 0
        %2794 = vmatpush1.bf16.msra.mxu0 0
        %2795 = vmatprep.subr.bf16.mxu0 0
        %2796 = vmatpush1.bf16.msra.mxu0 0
        %2797 = vmatprep.subr.bf16.mxu0 0
        %2798 = vmatpush1.bf16.msra.mxu0 0
        %2799 = vmatprep.subr.bf16.mxu0 0
        %2800 = vmatpush1.bf16.msra.mxu0 0
        %2801 = vmatprep.subr.bf16.mxu0 0
        %2802 = vmatpush1.bf16.msra.mxu0 %v2785
        %2803 = vmatprep.subr.bf16.mxu0 0
        %2804 = vmatpush2.bf16.msra.mxu0 0
        %2805 = vmatprep.subr.bf16.mxu0 0
        %2806 = vmatpush2.bf16.msra.mxu0 0
        %2807 = vmatprep.subr.bf16.mxu0 0
        %2808 = vmatpush2.bf16.msra.mxu0 0
        %2809 = vmatprep.subr.bf16.mxu0 0
        %2810 = vmatpush2.bf16.msra.mxu0 0
        %2811 = vmatprep.subr.bf16.mxu0 0
        %2812 = vmatpush2.bf16.msra.mxu0 0
        %2813 = vmatprep.subr.bf16.mxu0 0
        %2814 = vmatpush2.bf16.msra.mxu0 0
        %2815 = vmatprep.subr.bf16.mxu0 0
        %2816 = vmatpush2.bf16.msra.mxu0 0
        %2817 = vmatprep.subr.bf16.mxu0 0
        %2818 = vmatpush2.bf16.msra.mxu0 0
        %2819 = vmatprep.mubr.bf16.mxu0 0
        %2820 = vmatmul.mubr.bf16.gmra.mxu0 %v2782
        %v2821 = vpop.f32.mrf.mxu0
        %v2822 = vadd.f32 %v1522, %v2821
        %v2823 = vpop.f32.mrf.mxu0
        %v2824 = vpop.f32.mrf.mxu0
        %v2825 = vpop.f32.mrf.mxu0
        %2826 = vdwg.mxu0
        %2827 = vxpose.xlu0.c.b16.start [1/8] %v1479, 128
        %2828 = vxpose.xlu0.c.b16.cont [2/8] 0, 128
        %2829 = vxpose.xlu0.c.b16.cont [3/8] 0, 128
        %2830 = vxpose.xlu0.c.b16.cont [4/8] 0, 128
        %2831 = vxpose.xlu0.c.b16.cont [5/8] 0, 128
        %2832 = vxpose.xlu0.c.b16.cont [6/8] 0, 128
        %2833 = vxpose.xlu0.c.b16.cont [7/8] 0, 128
        %2834 = vxpose.xlu0.c.b16.end [8/8] 0, 128
        %v2835 = vpop.trf.xlu0
        %v2836 = vpop.trf.xlu0
        %v2837 = vpop.trf.xlu0
        %v2838 = vpop.trf.xlu0
        %v2839 = vpop.trf.xlu0
        %v2840 = vpop.trf.xlu0
        %v2841 = vpop.trf.xlu0
        %v2842 = vpop.trf.xlu0
        %v2844 = vsel %vm1539, %v2835, 0
        %v2847 = vsel %vm1543, %v1511, 0
        %2849 = vmatprep.subr.bf16.mxu0 0
        %2850 = vmatpush1.bf16.msra.mxu0 0
        %2851 = vmatprep.subr.bf16.mxu0 0
        %2852 = vmatpush1.bf16.msra.mxu0 0
        %2853 = vmatprep.subr.bf16.mxu0 0
        %2854 = vmatpush1.bf16.msra.mxu0 0
        %2855 = vmatprep.subr.bf16.mxu0 0
        %2856 = vmatpush1.bf16.msra.mxu0 0
        %2857 = vmatprep.subr.bf16.mxu0 0
        %2858 = vmatpush1.bf16.msra.mxu0 0
        %2859 = vmatprep.subr.bf16.mxu0 0
        %2860 = vmatpush1.bf16.msra.mxu0 0
        %2861 = vmatprep.subr.bf16.mxu0 0
        %2862 = vmatpush1.bf16.msra.mxu0 0
        %2863 = vmatprep.subr.bf16.mxu0 0
        %2864 = vmatpush1.bf16.msra.mxu0 %v2847
        %2865 = vmatprep.subr.bf16.mxu0 0
        %2866 = vmatpush2.bf16.msra.mxu0 0
        %2867 = vmatprep.subr.bf16.mxu0 0
        %2868 = vmatpush2.bf16.msra.mxu0 0
        %2869 = vmatprep.subr.bf16.mxu0 0
        %2870 = vmatpush2.bf16.msra.mxu0 0
        %2871 = vmatprep.subr.bf16.mxu0 0
        %2872 = vmatpush2.bf16.msra.mxu0 0
        %2873 = vmatprep.subr.bf16.mxu0 0
        %2874 = vmatpush2.bf16.msra.mxu0 0
        %2875 = vmatprep.subr.bf16.mxu0 0
        %2876 = vmatpush2.bf16.msra.mxu0 0
        %2877 = vmatprep.subr.bf16.mxu0 0
        %2878 = vmatpush2.bf16.msra.mxu0 0
        %2879 = vmatprep.subr.bf16.mxu0 0
        %2880 = vmatpush2.bf16.msra.mxu0 0
        %2881 = vmatprep.mubr.bf16.mxu0 0
        %2882 = vmatmul.mubr.bf16.gmra.mxu0 %v2844
        %v2883 = vpop.f32.mrf.mxu0
        %v2884 = vadd.f32 %v1522, %v2883
        %v2885 = vpop.f32.mrf.mxu0
        %v2886 = vpop.f32.mrf.mxu0
        %v2887 = vpop.f32.mrf.mxu0
        %2888 = vdwg.mxu0
        %2889 = vxpose.xlu0.c.b16.start [1/8] %v1480, 128
        %2890 = vxpose.xlu0.c.b16.cont [2/8] 0, 128
        %2891 = vxpose.xlu0.c.b16.cont [3/8] 0, 128
        %2892 = vxpose.xlu0.c.b16.cont [4/8] 0, 128
        %2893 = vxpose.xlu0.c.b16.cont [5/8] 0, 128
        %2894 = vxpose.xlu0.c.b16.cont [6/8] 0, 128
        %2895 = vxpose.xlu0.c.b16.cont [7/8] 0, 128
        %2896 = vxpose.xlu0.c.b16.end [8/8] 0, 128
        %v2897 = vpop.trf.xlu0
        %v2898 = vpop.trf.xlu0
        %v2899 = vpop.trf.xlu0
        %v2900 = vpop.trf.xlu0
        %v2901 = vpop.trf.xlu0
        %v2902 = vpop.trf.xlu0
        %v2903 = vpop.trf.xlu0
        %v2904 = vpop.trf.xlu0
        %v2906 = vsel %vm1539, %v2897, 0
        %v2909 = vsel %vm1543, %v1512, 0
        %2911 = vmatprep.subr.bf16.mxu0 0
        %2912 = vmatpush1.bf16.msra.mxu0 0
        %2913 = vmatprep.subr.bf16.mxu0 0
        %2914 = vmatpush1.bf16.msra.mxu0 0
        %2915 = vmatprep.subr.bf16.mxu0 0
        %2916 = vmatpush1.bf16.msra.mxu0 0
        %2917 = vmatprep.subr.bf16.mxu0 0
        %2918 = vmatpush1.bf16.msra.mxu0 0
        %2919 = vmatprep.subr.bf16.mxu0 0
        %2920 = vmatpush1.bf16.msra.mxu0 0
        %2921 = vmatprep.subr.bf16.mxu0 0
        %2922 = vmatpush1.bf16.msra.mxu0 0
        %2923 = vmatprep.subr.bf16.mxu0 0
        %2924 = vmatpush1.bf16.msra.mxu0 0
        %2925 = vmatprep.subr.bf16.mxu0 0
        %2926 = vmatpush1.bf16.msra.mxu0 %v2909
        %2927 = vmatprep.subr.bf16.mxu0 0
        %2928 = vmatpush2.bf16.msra.mxu0 0
        %2929 = vmatprep.subr.bf16.mxu0 0
        %2930 = vmatpush2.bf16.msra.mxu0 0
        %2931 = vmatprep.subr.bf16.mxu0 0
        %2932 = vmatpush2.bf16.msra.mxu0 0
        %2933 = vmatprep.subr.bf16.mxu0 0
        %2934 = vmatpush2.bf16.msra.mxu0 0
        %2935 = vmatprep.subr.bf16.mxu0 0
        %2936 = vmatpush2.bf16.msra.mxu0 0
        %2937 = vmatprep.subr.bf16.mxu0 0
        %2938 = vmatpush2.bf16.msra.mxu0 0
        %2939 = vmatprep.subr.bf16.mxu0 0
        %2940 = vmatpush2.bf16.msra.mxu0 0
        %2941 = vmatprep.subr.bf16.mxu0 0
        %2942 = vmatpush2.bf16.msra.mxu0 0
        %2943 = vmatprep.mubr.bf16.mxu0 0
        %2944 = vmatmul.mubr.bf16.gmra.mxu0 %v2906
        %v2945 = vpop.f32.mrf.mxu0
        %v2946 = vadd.f32 %v1522, %v2945
        %v2947 = vpop.f32.mrf.mxu0
        %v2948 = vpop.f32.mrf.mxu0
        %v2949 = vpop.f32.mrf.mxu0
        %2950 = vdwg.mxu0
        %2951 = vxpose.xlu0.c.b16.start [1/8] %v1481, 128
        %2952 = vxpose.xlu0.c.b16.cont [2/8] 0, 128
        %2953 = vxpose.xlu0.c.b16.cont [3/8] 0, 128
        %2954 = vxpose.xlu0.c.b16.cont [4/8] 0, 128
        %2955 = vxpose.xlu0.c.b16.cont [5/8] 0, 128
        %2956 = vxpose.xlu0.c.b16.cont [6/8] 0, 128
        %2957 = vxpose.xlu0.c.b16.cont [7/8] 0, 128
        %2958 = vxpose.xlu0.c.b16.end [8/8] 0, 128
        %v2959 = vpop.trf.xlu0
        %v2960 = vpop.trf.xlu0
        %v2961 = vpop.trf.xlu0
        %v2962 = vpop.trf.xlu0
        %v2963 = vpop.trf.xlu0
        %v2964 = vpop.trf.xlu0
        %v2965 = vpop.trf.xlu0
        %v2966 = vpop.trf.xlu0
        %v2968 = vsel %vm1539, %v2959, 0
        %v2971 = vsel %vm1543, %v1513, 0
        %2973 = vmatprep.subr.bf16.mxu0 0
        %2974 = vmatpush1.bf16.msra.mxu0 0
        %2975 = vmatprep.subr.bf16.mxu0 0
        %2976 = vmatpush1.bf16.msra.mxu0 0
        %2977 = vmatprep.subr.bf16.mxu0 0
        %2978 = vmatpush1.bf16.msra.mxu0 0
        %2979 = vmatprep.subr.bf16.mxu0 0
        %2980 = vmatpush1.bf16.msra.mxu0 0
        %2981 = vmatprep.subr.bf16.mxu0 0
        %2982 = vmatpush1.bf16.msra.mxu0 0
        %2983 = vmatprep.subr.bf16.mxu0 0
        %2984 = vmatpush1.bf16.msra.mxu0 0
        %2985 = vmatprep.subr.bf16.mxu0 0
        %2986 = vmatpush1.bf16.msra.mxu0 0
        %2987 = vmatprep.subr.bf16.mxu0 0
        %2988 = vmatpush1.bf16.msra.mxu0 %v2971
        %2989 = vmatprep.subr.bf16.mxu0 0
        %2990 = vmatpush2.bf16.msra.mxu0 0
        %2991 = vmatprep.subr.bf16.mxu0 0
        %2992 = vmatpush2.bf16.msra.mxu0 0
        %2993 = vmatprep.subr.bf16.mxu0 0
        %2994 = vmatpush2.bf16.msra.mxu0 0
        %2995 = vmatprep.subr.bf16.mxu0 0
        %2996 = vmatpush2.bf16.msra.mxu0 0
        %2997 = vmatprep.subr.bf16.mxu0 0
        %2998 = vmatpush2.bf16.msra.mxu0 0
        %2999 = vmatprep.subr.bf16.mxu0 0
        %3000 = vmatpush2.bf16.msra.mxu0 0
        %3001 = vmatprep.subr.bf16.mxu0 0
        %3002 = vmatpush2.bf16.msra.mxu0 0
        %3003 = vmatprep.subr.bf16.mxu0 0
        %3004 = vmatpush2.bf16.msra.mxu0 0
        %3005 = vmatprep.mubr.bf16.mxu0 0
        %3006 = vmatmul.mubr.bf16.gmra.mxu0 %v2968
        %v3007 = vpop.f32.mrf.mxu0
        %v3008 = vadd.f32 %v1522, %v3007
        %v3009 = vpop.f32.mrf.mxu0
        %v3010 = vpop.f32.mrf.mxu0
        %v3011 = vpop.f32.mrf.mxu0
        %3012 = vdwg.mxu0
        %3013 = vxpose.xlu0.c.b16.start [1/8] %v1482, 128
        %3014 = vxpose.xlu0.c.b16.cont [2/8] 0, 128
        %3015 = vxpose.xlu0.c.b16.cont [3/8] 0, 128
        %3016 = vxpose.xlu0.c.b16.cont [4/8] 0, 128
        %3017 = vxpose.xlu0.c.b16.cont [5/8] 0, 128
        %3018 = vxpose.xlu0.c.b16.cont [6/8] 0, 128
        %3019 = vxpose.xlu0.c.b16.cont [7/8] 0, 128
        %3020 = vxpose.xlu0.c.b16.end [8/8] 0, 128
        %v3021 = vpop.trf.xlu0
        %v3022 = vpop.trf.xlu0
        %v3023 = vpop.trf.xlu0
        %v3024 = vpop.trf.xlu0
        %v3025 = vpop.trf.xlu0
        %v3026 = vpop.trf.xlu0
        %v3027 = vpop.trf.xlu0
        %v3028 = vpop.trf.xlu0
        %v3030 = vsel %vm1539, %v3021, 0
        %v3033 = vsel %vm1543, %v1514, 0
        %3035 = vmatprep.subr.bf16.mxu0 0
        %3036 = vmatpush1.bf16.msra.mxu0 0
        %3037 = vmatprep.subr.bf16.mxu0 0
        %3038 = vmatpush1.bf16.msra.mxu0 0
        %3039 = vmatprep.subr.bf16.mxu0 0
        %3040 = vmatpush1.bf16.msra.mxu0 0
        %3041 = vmatprep.subr.bf16.mxu0 0
        %3042 = vmatpush1.bf16.msra.mxu0 0
        %3043 = vmatprep.subr.bf16.mxu0 0
        %3044 = vmatpush1.bf16.msra.mxu0 0
        %3045 = vmatprep.subr.bf16.mxu0 0
        %3046 = vmatpush1.bf16.msra.mxu0 0
        %3047 = vmatprep.subr.bf16.mxu0 0
        %3048 = vmatpush1.bf16.msra.mxu0 0
        %3049 = vmatprep.subr.bf16.mxu0 0
        %3050 = vmatpush1.bf16.msra.mxu0 %v3033
        %3051 = vmatprep.subr.bf16.mxu0 0
        %3052 = vmatpush2.bf16.msra.mxu0 0
        %3053 = vmatprep.subr.bf16.mxu0 0
        %3054 = vmatpush2.bf16.msra.mxu0 0
        %3055 = vmatprep.subr.bf16.mxu0 0
        %3056 = vmatpush2.bf16.msra.mxu0 0
        %3057 = vmatprep.subr.bf16.mxu0 0
        %3058 = vmatpush2.bf16.msra.mxu0 0
        %3059 = vmatprep.subr.bf16.mxu0 0
        %3060 = vmatpush2.bf16.msra.mxu0 0
        %3061 = vmatprep.subr.bf16.mxu0 0
        %3062 = vmatpush2.bf16.msra.mxu0 0
        %3063 = vmatprep.subr.bf16.mxu0 0
        %3064 = vmatpush2.bf16.msra.mxu0 0
        %3065 = vmatprep.subr.bf16.mxu0 0
        %3066 = vmatpush2.bf16.msra.mxu0 0
        %3067 = vmatprep.mubr.bf16.mxu0 0
        %3068 = vmatmul.mubr.bf16.gmra.mxu0 %v3030
        %v3069 = vpop.f32.mrf.mxu0
        %v3070 = vadd.f32 %v1522, %v3069
        %v3071 = vpop.f32.mrf.mxu0
        %v3072 = vpop.f32.mrf.mxu0
        %v3073 = vpop.f32.mrf.mxu0
        %3074 = vdwg.mxu0
        %3075 = vxpose.xlu0.c.b16.start [1/8] %v1483, 128
        %3076 = vxpose.xlu0.c.b16.cont [2/8] 0, 128
        %3077 = vxpose.xlu0.c.b16.cont [3/8] 0, 128
        %3078 = vxpose.xlu0.c.b16.cont [4/8] 0, 128
        %3079 = vxpose.xlu0.c.b16.cont [5/8] 0, 128
        %3080 = vxpose.xlu0.c.b16.cont [6/8] 0, 128
        %3081 = vxpose.xlu0.c.b16.cont [7/8] 0, 128
        %3082 = vxpose.xlu0.c.b16.end [8/8] 0, 128
        %v3083 = vpop.trf.xlu0
        %v3084 = vpop.trf.xlu0
        %v3085 = vpop.trf.xlu0
        %v3086 = vpop.trf.xlu0
        %v3087 = vpop.trf.xlu0
        %v3088 = vpop.trf.xlu0
        %v3089 = vpop.trf.xlu0
        %v3090 = vpop.trf.xlu0
        %v3092 = vsel %vm1539, %v3083, 0
        %v3095 = vsel %vm1543, %v1515, 0
        %3097 = vmatprep.subr.bf16.mxu0 0
        %3098 = vmatpush1.bf16.msra.mxu0 0
        %3099 = vmatprep.subr.bf16.mxu0 0
        %3100 = vmatpush1.bf16.msra.mxu0 0
        %3101 = vmatprep.subr.bf16.mxu0 0
        %3102 = vmatpush1.bf16.msra.mxu0 0
        %3103 = vmatprep.subr.bf16.mxu0 0
        %3104 = vmatpush1.bf16.msra.mxu0 0
        %3105 = vmatprep.subr.bf16.mxu0 0
        %3106 = vmatpush1.bf16.msra.mxu0 0
        %3107 = vmatprep.subr.bf16.mxu0 0
        %3108 = vmatpush1.bf16.msra.mxu0 0
        %3109 = vmatprep.subr.bf16.mxu0 0
        %3110 = vmatpush1.bf16.msra.mxu0 0
        %3111 = vmatprep.subr.bf16.mxu0 0
        %3112 = vmatpush1.bf16.msra.mxu0 %v3095
        %3113 = vmatprep.subr.bf16.mxu0 0
        %3114 = vmatpush2.bf16.msra.mxu0 0
        %3115 = vmatprep.subr.bf16.mxu0 0
        %3116 = vmatpush2.bf16.msra.mxu0 0
        %3117 = vmatprep.subr.bf16.mxu0 0
        %3118 = vmatpush2.bf16.msra.mxu0 0
        %3119 = vmatprep.subr.bf16.mxu0 0
        %3120 = vmatpush2.bf16.msra.mxu0 0
        %3121 = vmatprep.subr.bf16.mxu0 0
        %3122 = vmatpush2.bf16.msra.mxu0 0
        %3123 = vmatprep.subr.bf16.mxu0 0
        %3124 = vmatpush2.bf16.msra.mxu0 0
        %3125 = vmatprep.subr.bf16.mxu0 0
        %3126 = vmatpush2.bf16.msra.mxu0 0
        %3127 = vmatprep.subr.bf16.mxu0 0
        %3128 = vmatpush2.bf16.msra.mxu0 0
        %3129 = vmatprep.mubr.bf16.mxu0 0
        %3130 = vmatmul.mubr.bf16.gmra.mxu0 %v3092
        %v3131 = vpop.f32.mrf.mxu0
        %v3132 = vadd.f32 %v1522, %v3131
        %v3133 = vpop.f32.mrf.mxu0
        %v3134 = vpop.f32.mrf.mxu0
        %v3135 = vpop.f32.mrf.mxu0
        %3136 = vdwg.mxu0
        %3137 = vxpose.xlu0.c.b16.start [1/8] %v1484, 128
        %3138 = vxpose.xlu0.c.b16.cont [2/8] 0, 128
        %3139 = vxpose.xlu0.c.b16.cont [3/8] 0, 128
        %3140 = vxpose.xlu0.c.b16.cont [4/8] 0, 128
        %3141 = vxpose.xlu0.c.b16.cont [5/8] 0, 128
        %3142 = vxpose.xlu0.c.b16.cont [6/8] 0, 128
        %3143 = vxpose.xlu0.c.b16.cont [7/8] 0, 128
        %3144 = vxpose.xlu0.c.b16.end [8/8] 0, 128
        %v3145 = vpop.trf.xlu0
        %v3146 = vpop.trf.xlu0
        %v3147 = vpop.trf.xlu0
        %v3148 = vpop.trf.xlu0
        %v3149 = vpop.trf.xlu0
        %v3150 = vpop.trf.xlu0
        %v3151 = vpop.trf.xlu0
        %v3152 = vpop.trf.xlu0
        %v3154 = vsel %vm1539, %v3145, 0
        %v3157 = vsel %vm1543, %v1516, 0
        %3159 = vmatprep.subr.bf16.mxu0 0
        %3160 = vmatpush1.bf16.msra.mxu0 0
        %3161 = vmatprep.subr.bf16.mxu0 0
        %3162 = vmatpush1.bf16.msra.mxu0 0
        %3163 = vmatprep.subr.bf16.mxu0 0
        %3164 = vmatpush1.bf16.msra.mxu0 0
        %3165 = vmatprep.subr.bf16.mxu0 0
        %3166 = vmatpush1.bf16.msra.mxu0 0
        %3167 = vmatprep.subr.bf16.mxu0 0
        %3168 = vmatpush1.bf16.msra.mxu0 0
        %3169 = vmatprep.subr.bf16.mxu0 0
        %3170 = vmatpush1.bf16.msra.mxu0 0
        %3171 = vmatprep.subr.bf16.mxu0 0
        %3172 = vmatpush1.bf16.msra.mxu0 0
        %3173 = vmatprep.subr.bf16.mxu0 0
        %3174 = vmatpush1.bf16.msra.mxu0 %v3157
        %3175 = vmatprep.subr.bf16.mxu0 0
        %3176 = vmatpush2.bf16.msra.mxu0 0
        %3177 = vmatprep.subr.bf16.mxu0 0
        %3178 = vmatpush2.bf16.msra.mxu0 0
        %3179 = vmatprep.subr.bf16.mxu0 0
        %3180 = vmatpush2.bf16.msra.mxu0 0
        %3181 = vmatprep.subr.bf16.mxu0 0
        %3182 = vmatpush2.bf16.msra.mxu0 0
        %3183 = vmatprep.subr.bf16.mxu0 0
        %3184 = vmatpush2.bf16.msra.mxu0 0
        %3185 = vmatprep.subr.bf16.mxu0 0
        %3186 = vmatpush2.bf16.msra.mxu0 0
        %3187 = vmatprep.subr.bf16.mxu0 0
        %3188 = vmatpush2.bf16.msra.mxu0 0
        %3189 = vmatprep.subr.bf16.mxu0 0
        %3190 = vmatpush2.bf16.msra.mxu0 0
        %3191 = vmatprep.mubr.bf16.mxu0 0
        %3192 = vmatmul.mubr.bf16.gmra.mxu0 %v3154
        %v3193 = vpop.f32.mrf.mxu0
        %v3194 = vadd.f32 %v1522, %v3193
        %v3195 = vpop.f32.mrf.mxu0
        %v3196 = vpop.f32.mrf.mxu0
        %v3197 = vpop.f32.mrf.mxu0
        %3198 = vdwg.mxu0
        %3199 = vxpose.xlu0.c.b16.start [1/8] %v1485, 128
        %3200 = vxpose.xlu0.c.b16.cont [2/8] 0, 128
        %3201 = vxpose.xlu0.c.b16.cont [3/8] 0, 128
        %3202 = vxpose.xlu0.c.b16.cont [4/8] 0, 128
        %3203 = vxpose.xlu0.c.b16.cont [5/8] 0, 128
        %3204 = vxpose.xlu0.c.b16.cont [6/8] 0, 128
        %3205 = vxpose.xlu0.c.b16.cont [7/8] 0, 128
        %3206 = vxpose.xlu0.c.b16.end [8/8] 0, 128
        %v3207 = vpop.trf.xlu0
        %v3208 = vpop.trf.xlu0
        %v3209 = vpop.trf.xlu0
        %v3210 = vpop.trf.xlu0
        %v3211 = vpop.trf.xlu0
        %v3212 = vpop.trf.xlu0
        %v3213 = vpop.trf.xlu0
        %v3214 = vpop.trf.xlu0
        %v3216 = vsel %vm1539, %v3207, 0
        %v3219 = vsel %vm1543, %v1517, 0
        %3221 = vmatprep.subr.bf16.mxu0 0
        %3222 = vmatpush1.bf16.msra.mxu0 0
        %3223 = vmatprep.subr.bf16.mxu0 0
        %3224 = vmatpush1.bf16.msra.mxu0 0
        %3225 = vmatprep.subr.bf16.mxu0 0
        %3226 = vmatpush1.bf16.msra.mxu0 0
        %3227 = vmatprep.subr.bf16.mxu0 0
        %3228 = vmatpush1.bf16.msra.mxu0 0
        %3229 = vmatprep.subr.bf16.mxu0 0
        %3230 = vmatpush1.bf16.msra.mxu0 0
        %3231 = vmatprep.subr.bf16.mxu0 0
        %3232 = vmatpush1.bf16.msra.mxu0 0
        %3233 = vmatprep.subr.bf16.mxu0 0
        %3234 = vmatpush1.bf16.msra.mxu0 0
        %3235 = vmatprep.subr.bf16.mxu0 0
        %3236 = vmatpush1.bf16.msra.mxu0 %v3219
        %3237 = vmatprep.subr.bf16.mxu0 0
        %3238 = vmatpush2.bf16.msra.mxu0 0
        %3239 = vmatprep.subr.bf16.mxu0 0
        %3240 = vmatpush2.bf16.msra.mxu0 0
        %3241 = vmatprep.subr.bf16.mxu0 0
        %3242 = vmatpush2.bf16.msra.mxu0 0
        %3243 = vmatprep.subr.bf16.mxu0 0
        %3244 = vmatpush2.bf16.msra.mxu0 0
        %3245 = vmatprep.subr.bf16.mxu0 0
        %3246 = vmatpush2.bf16.msra.mxu0 0
        %3247 = vmatprep.subr.bf16.mxu0 0
        %3248 = vmatpush2.bf16.msra.mxu0 0
        %3249 = vmatprep.subr.bf16.mxu0 0
        %3250 = vmatpush2.bf16.msra.mxu0 0
        %3251 = vmatprep.subr.bf16.mxu0 0
        %3252 = vmatpush2.bf16.msra.mxu0 0
        %3253 = vmatprep.mubr.bf16.mxu0 0
        %3254 = vmatmul.mubr.bf16.gmra.mxu0 %v3216
        %v3255 = vpop.f32.mrf.mxu0
        %v3256 = vadd.f32 %v1522, %v3255
        %v3257 = vpop.f32.mrf.mxu0
        %v3258 = vpop.f32.mrf.mxu0
        %v3259 = vpop.f32.mrf.mxu0
        %3260 = vdwg.mxu0
        %3261 = vxpose.xlu0.c.b16.start [1/8] %v1486, 128
        %3262 = vxpose.xlu0.c.b16.cont [2/8] 0, 128
        %3263 = vxpose.xlu0.c.b16.cont [3/8] 0, 128
        %3264 = vxpose.xlu0.c.b16.cont [4/8] 0, 128
        %3265 = vxpose.xlu0.c.b16.cont [5/8] 0, 128
        %3266 = vxpose.xlu0.c.b16.cont [6/8] 0, 128
        %3267 = vxpose.xlu0.c.b16.cont [7/8] 0, 128
        %3268 = vxpose.xlu0.c.b16.end [8/8] 0, 128
        %v3269 = vpop.trf.xlu0
        %v3270 = vpop.trf.xlu0
        %v3271 = vpop.trf.xlu0
        %v3272 = vpop.trf.xlu0
        %v3273 = vpop.trf.xlu0
        %v3274 = vpop.trf.xlu0
        %v3275 = vpop.trf.xlu0
        %v3276 = vpop.trf.xlu0
        %v3278 = vsel %vm1539, %v3269, 0
        %v3281 = vsel %vm1543, %v1518, 0
        %3283 = vmatprep.subr.bf16.mxu0 0
        %3284 = vmatpush1.bf16.msra.mxu0 0
        %3285 = vmatprep.subr.bf16.mxu0 0
        %3286 = vmatpush1.bf16.msra.mxu0 0
        %3287 = vmatprep.subr.bf16.mxu0 0
        %3288 = vmatpush1.bf16.msra.mxu0 0
        %3289 = vmatprep.subr.bf16.mxu0 0
        %3290 = vmatpush1.bf16.msra.mxu0 0
        %3291 = vmatprep.subr.bf16.mxu0 0
        %3292 = vmatpush1.bf16.msra.mxu0 0
        %3293 = vmatprep.subr.bf16.mxu0 0
        %3294 = vmatpush1.bf16.msra.mxu0 0
        %3295 = vmatprep.subr.bf16.mxu0 0
        %3296 = vmatpush1.bf16.msra.mxu0 0
        %3297 = vmatprep.subr.bf16.mxu0 0
        %3298 = vmatpush1.bf16.msra.mxu0 %v3281
        %3299 = vmatprep.subr.bf16.mxu0 0
        %3300 = vmatpush2.bf16.msra.mxu0 0
        %3301 = vmatprep.subr.bf16.mxu0 0
        %3302 = vmatpush2.bf16.msra.mxu0 0
        %3303 = vmatprep.subr.bf16.mxu0 0
        %3304 = vmatpush2.bf16.msra.mxu0 0
        %3305 = vmatprep.subr.bf16.mxu0 0
        %3306 = vmatpush2.bf16.msra.mxu0 0
        %3307 = vmatprep.subr.bf16.mxu0 0
        %3308 = vmatpush2.bf16.msra.mxu0 0
        %3309 = vmatprep.subr.bf16.mxu0 0
        %3310 = vmatpush2.bf16.msra.mxu0 0
        %3311 = vmatprep.subr.bf16.mxu0 0
        %3312 = vmatpush2.bf16.msra.mxu0 0
        %3313 = vmatprep.subr.bf16.mxu0 0
        %3314 = vmatpush2.bf16.msra.mxu0 0
        %3315 = vmatprep.mubr.bf16.mxu0 0
        %3316 = vmatmul.mubr.bf16.gmra.mxu0 %v3278
        %v3317 = vpop.f32.mrf.mxu0
        %v3318 = vadd.f32 %v1522, %v3317
        %v3319 = vpop.f32.mrf.mxu0
        %v3320 = vpop.f32.mrf.mxu0
        %v3321 = vpop.f32.mrf.mxu0
        %3322 = vdwg.mxu0
        %3323 = vxpose.xlu0.c.b16.start [1/8] %v1487, 128
        %3324 = vxpose.xlu0.c.b16.cont [2/8] 0, 128
        %3325 = vxpose.xlu0.c.b16.cont [3/8] 0, 128
        %3326 = vxpose.xlu0.c.b16.cont [4/8] 0, 128
        %3327 = vxpose.xlu0.c.b16.cont [5/8] 0, 128
        %3328 = vxpose.xlu0.c.b16.cont [6/8] 0, 128
        %3329 = vxpose.xlu0.c.b16.cont [7/8] 0, 128
        %3330 = vxpose.xlu0.c.b16.end [8/8] 0, 128
        %v3331 = vpop.trf.xlu0
        %v3332 = vpop.trf.xlu0
        %v3333 = vpop.trf.xlu0
        %v3334 = vpop.trf.xlu0
        %v3335 = vpop.trf.xlu0
        %v3336 = vpop.trf.xlu0
        %v3337 = vpop.trf.xlu0
        %v3338 = vpop.trf.xlu0
        %v3340 = vsel %vm1539, %v3331, 0
        %v3343 = vsel %vm1543, %v1519, 0
        %3345 = vmatprep.subr.bf16.mxu0 0
        %3346 = vmatpush1.bf16.msra.mxu0 0
        %3347 = vmatprep.subr.bf16.mxu0 0
        %3348 = vmatpush1.bf16.msra.mxu0 0
        %3349 = vmatprep.subr.bf16.mxu0 0
        %3350 = vmatpush1.bf16.msra.mxu0 0
        %3351 = vmatprep.subr.bf16.mxu0 0
        %3352 = vmatpush1.bf16.msra.mxu0 0
        %3353 = vmatprep.subr.bf16.mxu0 0
        %3354 = vmatpush1.bf16.msra.mxu0 0
        %3355 = vmatprep.subr.bf16.mxu0 0
        %3356 = vmatpush1.bf16.msra.mxu0 0
        %3357 = vmatprep.subr.bf16.mxu0 0
        %3358 = vmatpush1.bf16.msra.mxu0 0
        %3359 = vmatprep.subr.bf16.mxu0 0
        %3360 = vmatpush1.bf16.msra.mxu0 %v3343
        %3361 = vmatprep.subr.bf16.mxu0 0
        %3362 = vmatpush2.bf16.msra.mxu0 0
        %3363 = vmatprep.subr.bf16.mxu0 0
        %3364 = vmatpush2.bf16.msra.mxu0 0
        %3365 = vmatprep.subr.bf16.mxu0 0
        %3366 = vmatpush2.bf16.msra.mxu0 0
        %3367 = vmatprep.subr.bf16.mxu0 0
        %3368 = vmatpush2.bf16.msra.mxu0 0
        %3369 = vmatprep.subr.bf16.mxu0 0
        %3370 = vmatpush2.bf16.msra.mxu0 0
        %3371 = vmatprep.subr.bf16.mxu0 0
        %3372 = vmatpush2.bf16.msra.mxu0 0
        %3373 = vmatprep.subr.bf16.mxu0 0
        %3374 = vmatpush2.bf16.msra.mxu0 0
        %3375 = vmatprep.subr.bf16.mxu0 0
        %3376 = vmatpush2.bf16.msra.mxu0 0
        %3377 = vmatprep.mubr.bf16.mxu0 0
        %3378 = vmatmul.mubr.bf16.gmra.mxu0 %v3340
        %v3379 = vpop.f32.mrf.mxu0
        %v3380 = vadd.f32 %v1522, %v3379
        %v3381 = vpop.f32.mrf.mxu0
        %v3382 = vpop.f32.mrf.mxu0
        %v3383 = vpop.f32.mrf.mxu0
        %3384 = vdwg.mxu0
        %3385 = vxpose.xlu0.c.b16.start [1/8] %v1488, 128
        %3386 = vxpose.xlu0.c.b16.cont [2/8] 0, 128
        %3387 = vxpose.xlu0.c.b16.cont [3/8] 0, 128
        %3388 = vxpose.xlu0.c.b16.cont [4/8] 0, 128
        %3389 = vxpose.xlu0.c.b16.cont [5/8] 0, 128
        %3390 = vxpose.xlu0.c.b16.cont [6/8] 0, 128
        %3391 = vxpose.xlu0.c.b16.cont [7/8] 0, 128
        %3392 = vxpose.xlu0.c.b16.end [8/8] 0, 128
        %v3393 = vpop.trf.xlu0
        %v3394 = vpop.trf.xlu0
        %v3395 = vpop.trf.xlu0
        %v3396 = vpop.trf.xlu0
        %v3397 = vpop.trf.xlu0
        %v3398 = vpop.trf.xlu0
        %v3399 = vpop.trf.xlu0
        %v3400 = vpop.trf.xlu0
        %v3402 = vsel %vm1539, %v3393, 0
        %v3405 = vsel %vm1543, %v1520, 0
        %3407 = vmatprep.subr.bf16.mxu0 0
        %3408 = vmatpush1.bf16.msra.mxu0 0
        %3409 = vmatprep.subr.bf16.mxu0 0
        %3410 = vmatpush1.bf16.msra.mxu0 0
        %3411 = vmatprep.subr.bf16.mxu0 0
        %3412 = vmatpush1.bf16.msra.mxu0 0
        %3413 = vmatprep.subr.bf16.mxu0 0
        %3414 = vmatpush1.bf16.msra.mxu0 0
        %3415 = vmatprep.subr.bf16.mxu0 0
        %3416 = vmatpush1.bf16.msra.mxu0 0
        %3417 = vmatprep.subr.bf16.mxu0 0
        %3418 = vmatpush1.bf16.msra.mxu0 0
        %3419 = vmatprep.subr.bf16.mxu0 0
        %3420 = vmatpush1.bf16.msra.mxu0 0
        %3421 = vmatprep.subr.bf16.mxu0 0
        %3422 = vmatpush1.bf16.msra.mxu0 %v3405
        %3423 = vmatprep.subr.bf16.mxu0 0
        %3424 = vmatpush2.bf16.msra.mxu0 0
        %3425 = vmatprep.subr.bf16.mxu0 0
        %3426 = vmatpush2.bf16.msra.mxu0 0
        %3427 = vmatprep.subr.bf16.mxu0 0
        %3428 = vmatpush2.bf16.msra.mxu0 0
        %3429 = vmatprep.subr.bf16.mxu0 0
        %3430 = vmatpush2.bf16.msra.mxu0 0
        %3431 = vmatprep.subr.bf16.mxu0 0
        %3432 = vmatpush2.bf16.msra.mxu0 0
        %3433 = vmatprep.subr.bf16.mxu0 0
        %3434 = vmatpush2.bf16.msra.mxu0 0
        %3435 = vmatprep.subr.bf16.mxu0 0
        %3436 = vmatpush2.bf16.msra.mxu0 0
        %3437 = vmatprep.subr.bf16.mxu0 0
        %3438 = vmatpush2.bf16.msra.mxu0 0
        %3439 = vmatprep.mubr.bf16.mxu0 0
        %3440 = vmatmul.mubr.bf16.gmra.mxu0 %v3402
        %v3441 = vpop.f32.mrf.mxu0
        %v3442 = vadd.f32 %v1522, %v3441
        %v3443 = vpop.f32.mrf.mxu0
        %v3444 = vpop.f32.mrf.mxu0
        %v3445 = vpop.f32.mrf.mxu0
        %3446 = vdwg.mxu0
        %3447 = vxpose.xlu0.c.b16.start [1/8] %v1489, 128
        %3448 = vxpose.xlu0.c.b16.cont [2/8] 0, 128
        %3449 = vxpose.xlu0.c.b16.cont [3/8] 0, 128
        %3450 = vxpose.xlu0.c.b16.cont [4/8] 0, 128
        %3451 = vxpose.xlu0.c.b16.cont [5/8] 0, 128
        %3452 = vxpose.xlu0.c.b16.cont [6/8] 0, 128
        %3453 = vxpose.xlu0.c.b16.cont [7/8] 0, 128
        %3454 = vxpose.xlu0.c.b16.end [8/8] 0, 128
        %v3455 = vpop.trf.xlu0
        %v3456 = vpop.trf.xlu0
        %v3457 = vpop.trf.xlu0
        %v3458 = vpop.trf.xlu0
        %v3459 = vpop.trf.xlu0
        %v3460 = vpop.trf.xlu0
        %v3461 = vpop.trf.xlu0
        %v3462 = vpop.trf.xlu0
        %v3464 = vsel %vm1539, %v3455, 0
        %v3467 = vsel %vm1543, %v1521, 0
        %3469 = vmatprep.subr.bf16.mxu0 0
        %3470 = vmatpush1.bf16.msra.mxu0 0
        %3471 = vmatprep.subr.bf16.mxu0 0
        %3472 = vmatpush1.bf16.msra.mxu0 0
        %3473 = vmatprep.subr.bf16.mxu0 0
        %3474 = vmatpush1.bf16.msra.mxu0 0
        %3475 = vmatprep.subr.bf16.mxu0 0
        %3476 = vmatpush1.bf16.msra.mxu0 0
        %3477 = vmatprep.subr.bf16.mxu0 0
        %3478 = vmatpush1.bf16.msra.mxu0 0
        %3479 = vmatprep.subr.bf16.mxu0 0
        %3480 = vmatpush1.bf16.msra.mxu0 0
        %3481 = vmatprep.subr.bf16.mxu0 0
        %3482 = vmatpush1.bf16.msra.mxu0 0
        %3483 = vmatprep.subr.bf16.mxu0 0
        %3484 = vmatpush1.bf16.msra.mxu0 %v3467
        %3485 = vmatprep.subr.bf16.mxu0 0
        %3486 = vmatpush2.bf16.msra.mxu0 0
        %3487 = vmatprep.subr.bf16.mxu0 0
        %3488 = vmatpush2.bf16.msra.mxu0 0
        %3489 = vmatprep.subr.bf16.mxu0 0
        %3490 = vmatpush2.bf16.msra.mxu0 0
        %3491 = vmatprep.subr.bf16.mxu0 0
        %3492 = vmatpush2.bf16.msra.mxu0 0
        %3493 = vmatprep.subr.bf16.mxu0 0
        %3494 = vmatpush2.bf16.msra.mxu0 0
        %3495 = vmatprep.subr.bf16.mxu0 0
        %3496 = vmatpush2.bf16.msra.mxu0 0
        %3497 = vmatprep.subr.bf16.mxu0 0
        %3498 = vmatpush2.bf16.msra.mxu0 0
        %3499 = vmatprep.subr.bf16.mxu0 0
        %3500 = vmatpush2.bf16.msra.mxu0 0
        %3501 = vmatprep.mubr.bf16.mxu0 0
        %3502 = vmatmul.mubr.bf16.gmra.mxu0 %v3464
        %v3503 = vpop.f32.mrf.mxu0
        %v3504 = vadd.f32 %v1522, %v3503
        %v3505 = vpop.f32.mrf.mxu0
        %v3506 = vpop.f32.mrf.mxu0
        %v3507 = vpop.f32.mrf.mxu0
        %3508 = vdwg.mxu0
        %v3509 = vsel %vm1539, %v1582, -inf
        %3510 = vmax.xlane.f32.xlu0 %v3509
        %v3511 = vpop.xlane.xlu0 %3510
        %v3512 = vsel %vm1539, %v1644, -inf
        %3513 = vmax.xlane.f32.xlu0 %v3512
        %v3514 = vpop.xlane.xlu0 %3513
        %v3515 = vsel %vm1539, %v1706, -inf
        %3516 = vmax.xlane.f32.xlu0 %v3515
        %v3517 = vpop.xlane.xlu0 %3516
        %v3518 = vsel %vm1539, %v1768, -inf
        %3519 = vmax.xlane.f32.xlu0 %v3518
        %v3520 = vpop.xlane.xlu0 %3519
        %v3521 = vsel %vm1539, %v1830, -inf
        %3522 = vmax.xlane.f32.xlu0 %v3521
        %v3523 = vpop.xlane.xlu0 %3522
        %v3524 = vsel %vm1539, %v1892, -inf
        %3525 = vmax.xlane.f32.xlu0 %v3524
        %v3526 = vpop.xlane.xlu0 %3525
        %v3527 = vsel %vm1539, %v1954, -inf
        %3528 = vmax.xlane.f32.xlu0 %v3527
        %v3529 = vpop.xlane.xlu0 %3528
        %v3530 = vsel %vm1539, %v2016, -inf
        %3531 = vmax.xlane.f32.xlu0 %v3530
        %v3532 = vpop.xlane.xlu0 %3531
        %v3533 = vsel %vm1539, %v2078, -inf
        %3534 = vmax.xlane.f32.xlu0 %v3533
        %v3535 = vpop.xlane.xlu0 %3534
        %v3536 = vsel %vm1539, %v2140, -inf
        %3537 = vmax.xlane.f32.xlu0 %v3536
        %v3538 = vpop.xlane.xlu0 %3537
        %v3539 = vsel %vm1539, %v2202, -inf
        %3540 = vmax.xlane.f32.xlu0 %v3539
        %v3541 = vpop.xlane.xlu0 %3540
        %v3542 = vsel %vm1539, %v2264, -inf
        %3543 = vmax.xlane.f32.xlu0 %v3542
        %v3544 = vpop.xlane.xlu0 %3543
        %v3545 = vsel %vm1539, %v2326, -inf
        %3546 = vmax.xlane.f32.xlu0 %v3545
        %v3547 = vpop.xlane.xlu0 %3546
        %v3548 = vsel %vm1539, %v2388, -inf
        %3549 = vmax.xlane.f32.xlu0 %v3548
        %v3550 = vpop.xlane.xlu0 %3549
        %v3551 = vsel %vm1539, %v2450, -inf
        %3552 = vmax.xlane.f32.xlu0 %v3551
        %v3553 = vpop.xlane.xlu0 %3552
        %v3554 = vsel %vm1539, %v2512, -inf
        %3555 = vmax.xlane.f32.xlu0 %v3554
        %v3556 = vpop.xlane.xlu0 %3555
        %v3557 = vsel %vm1539, %v2574, -inf
        %3558 = vmax.xlane.f32.xlu0 %v3557
        %v3559 = vpop.xlane.xlu0 %3558
        %v3560 = vsel %vm1539, %v2636, -inf
        %3561 = vmax.xlane.f32.xlu0 %v3560
        %v3562 = vpop.xlane.xlu0 %3561
        %v3563 = vsel %vm1539, %v2698, -inf
        %3564 = vmax.xlane.f32.xlu0 %v3563
        %v3565 = vpop.xlane.xlu0 %3564
        %v3566 = vsel %vm1539, %v2760, -inf
        %3567 = vmax.xlane.f32.xlu0 %v3566
        %v3568 = vpop.xlane.xlu0 %3567
        %v3569 = vsel %vm1539, %v2822, -inf
        %3570 = vmax.xlane.f32.xlu0 %v3569
        %v3571 = vpop.xlane.xlu0 %3570
        %v3572 = vsel %vm1539, %v2884, -inf
        %3573 = vmax.xlane.f32.xlu0 %v3572
        %v3574 = vpop.xlane.xlu0 %3573
        %v3575 = vsel %vm1539, %v2946, -inf
        %3576 = vmax.xlane.f32.xlu0 %v3575
        %v3577 = vpop.xlane.xlu0 %3576
        %v3578 = vsel %vm1539, %v3008, -inf
        %3579 = vmax.xlane.f32.xlu0 %v3578
        %v3580 = vpop.xlane.xlu0 %3579
        %v3581 = vsel %vm1539, %v3070, -inf
        %3582 = vmax.xlane.f32.xlu0 %v3581
        %v3583 = vpop.xlane.xlu0 %3582
        %v3584 = vsel %vm1539, %v3132, -inf
        %3585 = vmax.xlane.f32.xlu0 %v3584
        %v3586 = vpop.xlane.xlu0 %3585
        %v3587 = vsel %vm1539, %v3194, -inf
        %3588 = vmax.xlane.f32.xlu0 %v3587
        %v3589 = vpop.xlane.xlu0 %3588
        %v3590 = vsel %vm1539, %v3256, -inf
        %3591 = vmax.xlane.f32.xlu0 %v3590
        %v3592 = vpop.xlane.xlu0 %3591
        %v3593 = vsel %vm1539, %v3318, -inf
        %3594 = vmax.xlane.f32.xlu0 %v3593
        %v3595 = vpop.xlane.xlu0 %3594
        %v3596 = vsel %vm1539, %v3380, -inf
        %3597 = vmax.xlane.f32.xlu0 %v3596
        %v3598 = vpop.xlane.xlu0 %3597
        %v3599 = vsel %vm1539, %v3442, -inf
        %3600 = vmax.xlane.f32.xlu0 %v3599
        %v3601 = vpop.xlane.xlu0 %3600
        %v3602 = vsel %vm1539, %v3504, -inf
        %3603 = vmax.xlane.f32.xlu0 %v3602
        %v3604 = vpop.xlane.xlu0 %3603
        %v3605 = vsub.f32 %v1582, %v3511
        %v3606 = vsub.f32 %v1644, %v3514
        %v3607 = vsub.f32 %v1706, %v3517
        %v3608 = vsub.f32 %v1768, %v3520
        %v3609 = vsub.f32 %v1830, %v3523
        %v3610 = vsub.f32 %v1892, %v3526
        %v3611 = vsub.f32 %v1954, %v3529
        %v3612 = vsub.f32 %v2016, %v3532
        %v3613 = vsub.f32 %v2078, %v3535
        %v3614 = vsub.f32 %v2140, %v3538
        %v3615 = vsub.f32 %v2202, %v3541
        %v3616 = vsub.f32 %v2264, %v3544
        %v3617 = vsub.f32 %v2326, %v3547
        %v3618 = vsub.f32 %v2388, %v3550
        %v3619 = vsub.f32 %v2450, %v3553
        %v3620 = vsub.f32 %v2512, %v3556
        %v3621 = vsub.f32 %v2574, %v3559
        %v3622 = vsub.f32 %v2636, %v3562
        %v3623 = vsub.f32 %v2698, %v3565
        %v3624 = vsub.f32 %v2760, %v3568
        %v3625 = vsub.f32 %v2822, %v3571
        %v3626 = vsub.f32 %v2884, %v3574
        %v3627 = vsub.f32 %v2946, %v3577
        %v3628 = vsub.f32 %v3008, %v3580
        %v3629 = vsub.f32 %v3070, %v3583
        %v3630 = vsub.f32 %v3132, %v3586
        %v3631 = vsub.f32 %v3194, %v3589
        %v3632 = vsub.f32 %v3256, %v3592
        %v3633 = vsub.f32 %v3318, %v3595
        %v3634 = vsub.f32 %v3380, %v3598
        %v3635 = vsub.f32 %v3442, %v3601
        %v3636 = vsub.f32 %v3504, %v3604
        %v3637 = vmul.f32 %v3605, 1.442695
        %v3638 = vpow.pop %v3637
        %v3639 = vmul.f32 %v3606, 1.442695
        %v3640 = vpow.pop %v3639
        %v3641 = vmul.f32 %v3607, 1.442695
        %v3642 = vpow.pop %v3641
        %v3643 = vmul.f32 %v3608, 1.442695
        %v3644 = vpow.pop %v3643
        %v3645 = vmul.f32 %v3609, 1.442695
        %v3646 = vpow.pop %v3645
        %v3647 = vmul.f32 %v3610, 1.442695
        %v3648 = vpow.pop %v3647
        %v3649 = vmul.f32 %v3611, 1.442695
        %v3650 = vpow.pop %v3649
        %v3651 = vmul.f32 %v3612, 1.442695
        %v3652 = vpow.pop %v3651
        %v3653 = vmul.f32 %v3613, 1.442695
        %v3654 = vpow.pop %v3653
        %v3655 = vmul.f32 %v3614, 1.442695
        %v3656 = vpow.pop %v3655
        %v3657 = vmul.f32 %v3615, 1.442695
        %v3658 = vpow.pop %v3657
        %v3659 = vmul.f32 %v3616, 1.442695
        %v3660 = vpow.pop %v3659
        %v3661 = vmul.f32 %v3617, 1.442695
        %v3662 = vpow.pop %v3661
        %v3663 = vmul.f32 %v3618, 1.442695
        %v3664 = vpow.pop %v3663
        %v3665 = vmul.f32 %v3619, 1.442695
        %v3666 = vpow.pop %v3665
        %v3667 = vmul.f32 %v3620, 1.442695
        %v3668 = vpow.pop %v3667
        %v3669 = vmul.f32 %v3621, 1.442695
        %v3670 = vpow.pop %v3669
        %v3671 = vmul.f32 %v3622, 1.442695
        %v3672 = vpow.pop %v3671
        %v3673 = vmul.f32 %v3623, 1.442695
        %v3674 = vpow.pop %v3673
        %v3675 = vmul.f32 %v3624, 1.442695
        %v3676 = vpow.pop %v3675
        %v3677 = vmul.f32 %v3625, 1.442695
        %v3678 = vpow.pop %v3677
        %v3679 = vmul.f32 %v3626, 1.442695
        %v3680 = vpow.pop %v3679
        %v3681 = vmul.f32 %v3627, 1.442695
        %v3682 = vpow.pop %v3681
        %v3683 = vmul.f32 %v3628, 1.442695
        %v3684 = vpow.pop %v3683
        %v3685 = vmul.f32 %v3629, 1.442695
        %v3686 = vpow.pop %v3685
        %v3687 = vmul.f32 %v3630, 1.442695
        %v3688 = vpow.pop %v3687
        %v3689 = vmul.f32 %v3631, 1.442695
        %v3690 = vpow.pop %v3689
        %v3691 = vmul.f32 %v3632, 1.442695
        %v3692 = vpow.pop %v3691
        %v3693 = vmul.f32 %v3633, 1.442695
        %v3694 = vpow.pop %v3693
        %v3695 = vmul.f32 %v3634, 1.442695
        %v3696 = vpow.pop %v3695
        %v3697 = vmul.f32 %v3635, 1.442695
        %v3698 = vpow.pop %v3697
        %v3699 = vmul.f32 %v3636, 1.442695
        %v3700 = vpow.pop %v3699
        %v3701 = vsel %vm1539, %v3638, 0.0
        %3702 = vadd.xlane.f32.xlu0 %v3701
        %v3703 = vpop.xlane.xlu0 %3702
        %v3704 = vsel %vm1539, %v3640, 0.0
        %3705 = vadd.xlane.f32.xlu0 %v3704
        %v3706 = vpop.xlane.xlu0 %3705
        %v3707 = vsel %vm1539, %v3642, 0.0
        %3708 = vadd.xlane.f32.xlu0 %v3707
        %v3709 = vpop.xlane.xlu0 %3708
        %v3710 = vsel %vm1539, %v3644, 0.0
        %3711 = vadd.xlane.f32.xlu0 %v3710
        %v3712 = vpop.xlane.xlu0 %3711
        %v3713 = vsel %vm1539, %v3646, 0.0
        %3714 = vadd.xlane.f32.xlu0 %v3713
        %v3715 = vpop.xlane.xlu0 %3714
        %v3716 = vsel %vm1539, %v3648, 0.0
        %3717 = vadd.xlane.f32.xlu0 %v3716
        %v3718 = vpop.xlane.xlu0 %3717
        %v3719 = vsel %vm1539, %v3650, 0.0
        %3720 = vadd.xlane.f32.xlu0 %v3719
        %v3721 = vpop.xlane.xlu0 %3720
        %v3722 = vsel %vm1539, %v3652, 0.0
        %3723 = vadd.xlane.f32.xlu0 %v3722
        %v3724 = vpop.xlane.xlu0 %3723
        %v3725 = vsel %vm1539, %v3654, 0.0
        %3726 = vadd.xlane.f32.xlu0 %v3725
        %v3727 = vpop.xlane.xlu0 %3726
        %v3728 = vsel %vm1539, %v3656, 0.0
        %3729 = vadd.xlane.f32.xlu0 %v3728
        %v3730 = vpop.xlane.xlu0 %3729
        %v3731 = vsel %vm1539, %v3658, 0.0
        %3732 = vadd.xlane.f32.xlu0 %v3731
        %v3733 = vpop.xlane.xlu0 %3732
        %v3734 = vsel %vm1539, %v3660, 0.0
        %3735 = vadd.xlane.f32.xlu0 %v3734
        %v3736 = vpop.xlane.xlu0 %3735
        %v3737 = vsel %vm1539, %v3662, 0.0
        %3738 = vadd.xlane.f32.xlu0 %v3737
        %v3739 = vpop.xlane.xlu0 %3738
        %v3740 = vsel %vm1539, %v3664, 0.0
        %3741 = vadd.xlane.f32.xlu0 %v3740
        %v3742 = vpop.xlane.xlu0 %3741
        %v3743 = vsel %vm1539, %v3666, 0.0
        %3744 = vadd.xlane.f32.xlu0 %v3743
        %v3745 = vpop.xlane.xlu0 %3744
        %v3746 = vsel %vm1539, %v3668, 0.0
        %3747 = vadd.xlane.f32.xlu0 %v3746
        %v3748 = vpop.xlane.xlu0 %3747
        %v3749 = vsel %vm1539, %v3670, 0.0
        %3750 = vadd.xlane.f32.xlu0 %v3749
        %v3751 = vpop.xlane.xlu0 %3750
        %v3752 = vsel %vm1539, %v3672, 0.0
        %3753 = vadd.xlane.f32.xlu0 %v3752
        %v3754 = vpop.xlane.xlu0 %3753
        %v3755 = vsel %vm1539, %v3674, 0.0
        %3756 = vadd.xlane.f32.xlu0 %v3755
        %v3757 = vpop.xlane.xlu0 %3756
        %v3758 = vsel %vm1539, %v3676, 0.0
        %3759 = vadd.xlane.f32.xlu0 %v3758
        %v3760 = vpop.xlane.xlu0 %3759
        %v3761 = vsel %vm1539, %v3678, 0.0
        %3762 = vadd.xlane.f32.xlu0 %v3761
        %v3763 = vpop.xlane.xlu0 %3762
        %v3764 = vsel %vm1539, %v3680, 0.0
        %3765 = vadd.xlane.f32.xlu0 %v3764
        %v3766 = vpop.xlane.xlu0 %3765
        %v3767 = vsel %vm1539, %v3682, 0.0
        %3768 = vadd.xlane.f32.xlu0 %v3767
        %v3769 = vpop.xlane.xlu0 %3768
        %v3770 = vsel %vm1539, %v3684, 0.0
        %3771 = vadd.xlane.f32.xlu0 %v3770
        %v3772 = vpop.xlane.xlu0 %3771
        %v3773 = vsel %vm1539, %v3686, 0.0
        %3774 = vadd.xlane.f32.xlu0 %v3773
        %v3775 = vpop.xlane.xlu0 %3774
        %v3776 = vsel %vm1539, %v3688, 0.0
        %3777 = vadd.xlane.f32.xlu0 %v3776
        %v3778 = vpop.xlane.xlu0 %3777
        %v3779 = vsel %vm1539, %v3690, 0.0
        %3780 = vadd.xlane.f32.xlu0 %v3779
        %v3781 = vpop.xlane.xlu0 %3780
        %v3782 = vsel %vm1539, %v3692, 0.0
        %3783 = vadd.xlane.f32.xlu0 %v3782
        %v3784 = vpop.xlane.xlu0 %3783
        %v3785 = vsel %vm1539, %v3694, 0.0
        %3786 = vadd.xlane.f32.xlu0 %v3785
        %v3787 = vpop.xlane.xlu0 %3786
        %v3788 = vsel %vm1539, %v3696, 0.0
        %3789 = vadd.xlane.f32.xlu0 %v3788
        %v3790 = vpop.xlane.xlu0 %3789
        %v3791 = vsel %vm1539, %v3698, 0.0
        %3792 = vadd.xlane.f32.xlu0 %v3791
        %v3793 = vpop.xlane.xlu0 %3792
        %v3794 = vsel %vm1539, %v3700, 0.0
        %3795 = vadd.xlane.f32.xlu0 %v3794
        %v3796 = vpop.xlane.xlu0 %3795
        %v3797 = vrcp.pop %v3703
        %v3798 = vrcp.pop %v3706
        %v3799 = vrcp.pop %v3709
        %v3800 = vrcp.pop %v3712
        %v3801 = vrcp.pop %v3715
        %v3802 = vrcp.pop %v3718
        %v3803 = vrcp.pop %v3721
        %v3804 = vrcp.pop %v3724
        %v3805 = vrcp.pop %v3727
        %v3806 = vrcp.pop %v3730
        %v3807 = vrcp.pop %v3733
        %v3808 = vrcp.pop %v3736
        %v3809 = vrcp.pop %v3739
        %v3810 = vrcp.pop %v3742
        %v3811 = vrcp.pop %v3745
        %v3812 = vrcp.pop %v3748
        %v3813 = vrcp.pop %v3751
        %v3814 = vrcp.pop %v3754
        %v3815 = vrcp.pop %v3757
        %v3816 = vrcp.pop %v3760
        %v3817 = vrcp.pop %v3763
        %v3818 = vrcp.pop %v3766
        %v3819 = vrcp.pop %v3769
        %v3820 = vrcp.pop %v3772
        %v3821 = vrcp.pop %v3775
        %v3822 = vrcp.pop %v3778
        %v3823 = vrcp.pop %v3781
        %v3824 = vrcp.pop %v3784
        %v3825 = vrcp.pop %v3787
        %v3826 = vrcp.pop %v3790
        %v3827 = vrcp.pop %v3793
        %v3828 = vrcp.pop %v3796
        %v3829 = vmul.f32 %v3638, %v3797
        %v3830 = vmul.f32 %v3640, %v3798
        %v3831 = vmul.f32 %v3642, %v3799
        %v3832 = vmul.f32 %v3644, %v3800
        %v3833 = vmul.f32 %v3646, %v3801
        %v3834 = vmul.f32 %v3648, %v3802
        %v3835 = vmul.f32 %v3650, %v3803
        %v3836 = vmul.f32 %v3652, %v3804
        %v3837 = vmul.f32 %v3654, %v3805
        %v3838 = vmul.f32 %v3656, %v3806
        %v3839 = vmul.f32 %v3658, %v3807
        %v3840 = vmul.f32 %v3660, %v3808
        %v3841 = vmul.f32 %v3662, %v3809
        %v3842 = vmul.f32 %v3664, %v3810
        %v3843 = vmul.f32 %v3666, %v3811
        %v3844 = vmul.f32 %v3668, %v3812
        %v3845 = vmul.f32 %v3670, %v3813
        %v3846 = vmul.f32 %v3672, %v3814
        %v3847 = vmul.f32 %v3674, %v3815
        %v3848 = vmul.f32 %v3676, %v3816
        %v3849 = vmul.f32 %v3678, %v3817
        %v3850 = vmul.f32 %v3680, %v3818
        %v3851 = vmul.f32 %v3682, %v3819
        %v3852 = vmul.f32 %v3684, %v3820
        %v3853 = vmul.f32 %v3686, %v3821
        %v3854 = vmul.f32 %v3688, %v3822
        %v3855 = vmul.f32 %v3690, %v3823
        %v3856 = vmul.f32 %v3692, %v3824
        %v3857 = vmul.f32 %v3694, %v3825
        %v3858 = vmul.f32 %v3696, %v3826
        %v3859 = vmul.f32 %v3698, %v3827
        %v3860 = vmul.f32 %v3700, %v3828
        %v3861 = vpack.c.bf16 %v1194, %v1194
        %v3862 = vpack.c.bf16 %v1195, %v1195
        %v3863 = vpack.c.bf16 %v1196, %v1196
        %v3864 = vpack.c.bf16 %v1197, %v1197
        %v3865 = vpack.c.bf16 %v1226, %v1226
        %v3866 = vpack.c.bf16 %v1227, %v1227
        %v3867 = vpack.c.bf16 %v1228, %v1228
        %v3868 = vpack.c.bf16 %v1229, %v1229
        %v3869 = vpack.c.bf16 %v1258, %v1258
        %v3870 = vpack.c.bf16 %v1259, %v1259
        %v3871 = vpack.c.bf16 %v1260, %v1260
        %v3872 = vpack.c.bf16 %v1261, %v1261
        %v3873 = vpack.c.bf16 %v1290, %v1290
        %v3874 = vpack.c.bf16 %v1291, %v1291
        %v3875 = vpack.c.bf16 %v1292, %v1292
        %v3876 = vpack.c.bf16 %v1293, %v1293
        %v3877 = vpack.c.bf16 %v1322, %v1322
        %v3878 = vpack.c.bf16 %v1323, %v1323
        %v3879 = vpack.c.bf16 %v1324, %v1324
        %v3880 = vpack.c.bf16 %v1325, %v1325
        %v3881 = vpack.c.bf16 %v1354, %v1354
        %v3882 = vpack.c.bf16 %v1355, %v1355
        %v3883 = vpack.c.bf16 %v1356, %v1356
        %v3884 = vpack.c.bf16 %v1357, %v1357
        %v3885 = vpack.c.bf16 %v1386, %v1386
        %v3886 = vpack.c.bf16 %v1387, %v1387
        %v3887 = vpack.c.bf16 %v1388, %v1388
        %v3888 = vpack.c.bf16 %v1389, %v1389
        %v3889 = vpack.c.bf16 %v1418, %v1418
        %v3890 = vpack.c.bf16 %v1419, %v1419
        %v3891 = vpack.c.bf16 %v1420, %v1420
        %v3892 = vpack.c.bf16 %v1421, %v1421
        %v3893 = vpack.c.bf16 %v3829, %v3829
        %v3894 = vpack.c.bf16 %v3830, %v3830
        %v3895 = vpack.c.bf16 %v3831, %v3831
        %v3896 = vpack.c.bf16 %v3832, %v3832
        %v3897 = vpack.c.bf16 %v3833, %v3833
        %v3898 = vpack.c.bf16 %v3834, %v3834
        %v3899 = vpack.c.bf16 %v3835, %v3835
        %v3900 = vpack.c.bf16 %v3836, %v3836
        %v3901 = vpack.c.bf16 %v3837, %v3837
        %v3902 = vpack.c.bf16 %v3838, %v3838
        %v3903 = vpack.c.bf16 %v3839, %v3839
        %v3904 = vpack.c.bf16 %v3840, %v3840
        %v3905 = vpack.c.bf16 %v3841, %v3841
        %v3906 = vpack.c.bf16 %v3842, %v3842
        %v3907 = vpack.c.bf16 %v3843, %v3843
        %v3908 = vpack.c.bf16 %v3844, %v3844
        %v3909 = vpack.c.bf16 %v3845, %v3845
        %v3910 = vpack.c.bf16 %v3846, %v3846
        %v3911 = vpack.c.bf16 %v3847, %v3847
        %v3912 = vpack.c.bf16 %v3848, %v3848
        %v3913 = vpack.c.bf16 %v3849, %v3849
        %v3914 = vpack.c.bf16 %v3850, %v3850
        %v3915 = vpack.c.bf16 %v3851, %v3851
        %v3916 = vpack.c.bf16 %v3852, %v3852
        %v3917 = vpack.c.bf16 %v3853, %v3853
        %v3918 = vpack.c.bf16 %v3854, %v3854
        %v3919 = vpack.c.bf16 %v3855, %v3855
        %v3920 = vpack.c.bf16 %v3856, %v3856
        %v3921 = vpack.c.bf16 %v3857, %v3857
        %v3922 = vpack.c.bf16 %v3858, %v3858
        %v3923 = vpack.c.bf16 %v3859, %v3859
        %v3924 = vpack.c.bf16 %v3860, %v3860
        %v3926 = vsel %vm1539, %v3861, 0
        %v3929 = vsel %vm1539, %v3893, 0
        %3931 = vmatprep.subr.bf16.mxu0 0
        %3932 = vmatpush1.bf16.xpose.msra.mxu0 0
        %3933 = vmatprep.subr.bf16.mxu0 0
        %3934 = vmatpush1.bf16.xpose.msra.mxu0 0
        %3935 = vmatprep.subr.bf16.mxu0 0
        %3936 = vmatpush1.bf16.xpose.msra.mxu0 0
        %3937 = vmatprep.subr.bf16.mxu0 0
        %3938 = vmatpush1.bf16.xpose.msra.mxu0 0
        %3939 = vmatprep.subr.bf16.mxu0 0
        %3940 = vmatpush1.bf16.xpose.msra.mxu0 0
        %3941 = vmatprep.subr.bf16.mxu0 0
        %3942 = vmatpush1.bf16.xpose.msra.mxu0 0
        %3943 = vmatprep.subr.bf16.mxu0 0
        %3944 = vmatpush1.bf16.xpose.msra.mxu0 0
        %3945 = vmatprep.subr.bf16.mxu0 0
        %3946 = vmatpush1.bf16.xpose.msra.mxu0 %v3929
        %3947 = vmatprep.subr.bf16.mxu0 0
        %3948 = vmatpush2.bf16.xpose.msra.mxu0 0
        %3949 = vmatprep.subr.bf16.mxu0 0
        %3950 = vmatpush2.bf16.xpose.msra.mxu0 0
        %3951 = vmatprep.subr.bf16.mxu0 0
        %3952 = vmatpush2.bf16.xpose.msra.mxu0 0
        %3953 = vmatprep.subr.bf16.mxu0 0
        %3954 = vmatpush2.bf16.xpose.msra.mxu0 0
        %3955 = vmatprep.subr.bf16.mxu0 0
        %3956 = vmatpush2.bf16.xpose.msra.mxu0 0
        %3957 = vmatprep.subr.bf16.mxu0 0
        %3958 = vmatpush2.bf16.xpose.msra.mxu0 0
        %3959 = vmatprep.subr.bf16.mxu0 0
        %3960 = vmatpush2.bf16.xpose.msra.mxu0 0
        %3961 = vmatprep.subr.bf16.mxu0 0
        %3962 = vmatpush2.bf16.xpose.msra.mxu0 0
        %3963 = vmatprep.mubr.bf16.mxu0 0
        %3964 = vmatmul.mubr.bf16.gmra.mxu0 %v3926
        %v3965 = vpop.f32.mrf.mxu0
        %v3966 = vadd.f32 0.0, %v3965
        %v3967 = vpop.f32.mrf.mxu0
        %v3968 = vpop.f32.mrf.mxu0
        %v3969 = vpop.f32.mrf.mxu0
        %3970 = vdwg.mxu0
        %v3972 = vsel %vm1539, %v3862, 0
        %v3975 = vsel %vm1539, %v3894, 0
        %3977 = vmatprep.subr.bf16.mxu0 0
        %3978 = vmatpush1.bf16.xpose.msra.mxu0 0
        %3979 = vmatprep.subr.bf16.mxu0 0
        %3980 = vmatpush1.bf16.xpose.msra.mxu0 0
        %3981 = vmatprep.subr.bf16.mxu0 0
        %3982 = vmatpush1.bf16.xpose.msra.mxu0 0
        %3983 = vmatprep.subr.bf16.mxu0 0
        %3984 = vmatpush1.bf16.xpose.msra.mxu0 0
        %3985 = vmatprep.subr.bf16.mxu0 0
        %3986 = vmatpush1.bf16.xpose.msra.mxu0 0
        %3987 = vmatprep.subr.bf16.mxu0 0
        %3988 = vmatpush1.bf16.xpose.msra.mxu0 0
        %3989 = vmatprep.subr.bf16.mxu0 0
        %3990 = vmatpush1.bf16.xpose.msra.mxu0 0
        %3991 = vmatprep.subr.bf16.mxu0 0
        %3992 = vmatpush1.bf16.xpose.msra.mxu0 %v3975
        %3993 = vmatprep.subr.bf16.mxu0 0
        %3994 = vmatpush2.bf16.xpose.msra.mxu0 0
        %3995 = vmatprep.subr.bf16.mxu0 0
        %3996 = vmatpush2.bf16.xpose.msra.mxu0 0
        %3997 = vmatprep.subr.bf16.mxu0 0
        %3998 = vmatpush2.bf16.xpose.msra.mxu0 0
        %3999 = vmatprep.subr.bf16.mxu0 0
        %4000 = vmatpush2.bf16.xpose.msra.mxu0 0
        %4001 = vmatprep.subr.bf16.mxu0 0
        %4002 = vmatpush2.bf16.xpose.msra.mxu0 0
        %4003 = vmatprep.subr.bf16.mxu0 0
        %4004 = vmatpush2.bf16.xpose.msra.mxu0 0
        %4005 = vmatprep.subr.bf16.mxu0 0
        %4006 = vmatpush2.bf16.xpose.msra.mxu0 0
        %4007 = vmatprep.subr.bf16.mxu0 0
        %4008 = vmatpush2.bf16.xpose.msra.mxu0 0
        %4009 = vmatprep.mubr.bf16.mxu0 0
        %4010 = vmatmul.mubr.bf16.gmra.mxu0 %v3972
        %v4011 = vpop.f32.mrf.mxu0
        %v4012 = vadd.f32 0.0, %v4011
        %v4013 = vpop.f32.mrf.mxu0
        %v4014 = vpop.f32.mrf.mxu0
        %v4015 = vpop.f32.mrf.mxu0
        %4016 = vdwg.mxu0
        %v4018 = vsel %vm1539, %v3863, 0
        %v4021 = vsel %vm1539, %v3895, 0
        %4023 = vmatprep.subr.bf16.mxu0 0
        %4024 = vmatpush1.bf16.xpose.msra.mxu0 0
        %4025 = vmatprep.subr.bf16.mxu0 0
        %4026 = vmatpush1.bf16.xpose.msra.mxu0 0
        %4027 = vmatprep.subr.bf16.mxu0 0
        %4028 = vmatpush1.bf16.xpose.msra.mxu0 0
        %4029 = vmatprep.subr.bf16.mxu0 0
        %4030 = vmatpush1.bf16.xpose.msra.mxu0 0
        %4031 = vmatprep.subr.bf16.mxu0 0
        %4032 = vmatpush1.bf16.xpose.msra.mxu0 0
        %4033 = vmatprep.subr.bf16.mxu0 0
        %4034 = vmatpush1.bf16.xpose.msra.mxu0 0
        %4035 = vmatprep.subr.bf16.mxu0 0
        %4036 = vmatpush1.bf16.xpose.msra.mxu0 0
        %4037 = vmatprep.subr.bf16.mxu0 0
        %4038 = vmatpush1.bf16.xpose.msra.mxu0 %v4021
        %4039 = vmatprep.subr.bf16.mxu0 0
        %4040 = vmatpush2.bf16.xpose.msra.mxu0 0
        %4041 = vmatprep.subr.bf16.mxu0 0
        %4042 = vmatpush2.bf16.xpose.msra.mxu0 0
        %4043 = vmatprep.subr.bf16.mxu0 0
        %4044 = vmatpush2.bf16.xpose.msra.mxu0 0
        %4045 = vmatprep.subr.bf16.mxu0 0
        %4046 = vmatpush2.bf16.xpose.msra.mxu0 0
        %4047 = vmatprep.subr.bf16.mxu0 0
        %4048 = vmatpush2.bf16.xpose.msra.mxu0 0
        %4049 = vmatprep.subr.bf16.mxu0 0
        %4050 = vmatpush2.bf16.xpose.msra.mxu0 0
        %4051 = vmatprep.subr.bf16.mxu0 0
        %4052 = vmatpush2.bf16.xpose.msra.mxu0 0
        %4053 = vmatprep.subr.bf16.mxu0 0
        %4054 = vmatpush2.bf16.xpose.msra.mxu0 0
        %4055 = vmatprep.mubr.bf16.mxu0 0
        %4056 = vmatmul.mubr.bf16.gmra.mxu0 %v4018
        %v4057 = vpop.f32.mrf.mxu0
        %v4058 = vadd.f32 0.0, %v4057
        %v4059 = vpop.f32.mrf.mxu0
        %v4060 = vpop.f32.mrf.mxu0
        %v4061 = vpop.f32.mrf.mxu0
        %4062 = vdwg.mxu0
        %v4064 = vsel %vm1539, %v3864, 0
        %v4067 = vsel %vm1539, %v3896, 0
        %4069 = vmatprep.subr.bf16.mxu0 0
        %4070 = vmatpush1.bf16.xpose.msra.mxu0 0
        %4071 = vmatprep.subr.bf16.mxu0 0
        %4072 = vmatpush1.bf16.xpose.msra.mxu0 0
        %4073 = vmatprep.subr.bf16.mxu0 0
        %4074 = vmatpush1.bf16.xpose.msra.mxu0 0
        %4075 = vmatprep.subr.bf16.mxu0 0
        %4076 = vmatpush1.bf16.xpose.msra.mxu0 0
        %4077 = vmatprep.subr.bf16.mxu0 0
        %4078 = vmatpush1.bf16.xpose.msra.mxu0 0
        %4079 = vmatprep.subr.bf16.mxu0 0
        %4080 = vmatpush1.bf16.xpose.msra.mxu0 0
        %4081 = vmatprep.subr.bf16.mxu0 0
        %4082 = vmatpush1.bf16.xpose.msra.mxu0 0
        %4083 = vmatprep.subr.bf16.mxu0 0
        %4084 = vmatpush1.bf16.xpose.msra.mxu0 %v4067
        %4085 = vmatprep.subr.bf16.mxu0 0
        %4086 = vmatpush2.bf16.xpose.msra.mxu0 0
        %4087 = vmatprep.subr.bf16.mxu0 0
        %4088 = vmatpush2.bf16.xpose.msra.mxu0 0
        %4089 = vmatprep.subr.bf16.mxu0 0
        %4090 = vmatpush2.bf16.xpose.msra.mxu0 0
        %4091 = vmatprep.subr.bf16.mxu0 0
        %4092 = vmatpush2.bf16.xpose.msra.mxu0 0
        %4093 = vmatprep.subr.bf16.mxu0 0
        %4094 = vmatpush2.bf16.xpose.msra.mxu0 0
        %4095 = vmatprep.subr.bf16.mxu0 0
        %4096 = vmatpush2.bf16.xpose.msra.mxu0 0
        %4097 = vmatprep.subr.bf16.mxu0 0
        %4098 = vmatpush2.bf16.xpose.msra.mxu0 0
        %4099 = vmatprep.subr.bf16.mxu0 0
        %4100 = vmatpush2.bf16.xpose.msra.mxu0 0
        %4101 = vmatprep.mubr.bf16.mxu0 0
        %4102 = vmatmul.mubr.bf16.gmra.mxu0 %v4064
        %v4103 = vpop.f32.mrf.mxu0
        %v4104 = vadd.f32 0.0, %v4103
        %v4105 = vpop.f32.mrf.mxu0
        %v4106 = vpop.f32.mrf.mxu0
        %v4107 = vpop.f32.mrf.mxu0
        %4108 = vdwg.mxu0
        %v4110 = vsel %vm1539, %v3865, 0
        %v4113 = vsel %vm1539, %v3897, 0
        %4115 = vmatprep.subr.bf16.mxu0 0
        %4116 = vmatpush1.bf16.xpose.msra.mxu0 0
        %4117 = vmatprep.subr.bf16.mxu0 0
        %4118 = vmatpush1.bf16.xpose.msra.mxu0 0
        %4119 = vmatprep.subr.bf16.mxu0 0
        %4120 = vmatpush1.bf16.xpose.msra.mxu0 0
        %4121 = vmatprep.subr.bf16.mxu0 0
        %4122 = vmatpush1.bf16.xpose.msra.mxu0 0
        %4123 = vmatprep.subr.bf16.mxu0 0
        %4124 = vmatpush1.bf16.xpose.msra.mxu0 0
        %4125 = vmatprep.subr.bf16.mxu0 0
        %4126 = vmatpush1.bf16.xpose.msra.mxu0 0
        %4127 = vmatprep.subr.bf16.mxu0 0
        %4128 = vmatpush1.bf16.xpose.msra.mxu0 0
        %4129 = vmatprep.subr.bf16.mxu0 0
        %4130 = vmatpush1.bf16.xpose.msra.mxu0 %v4113
        %4131 = vmatprep.subr.bf16.mxu0 0
        %4132 = vmatpush2.bf16.xpose.msra.mxu0 0
        %4133 = vmatprep.subr.bf16.mxu0 0
        %4134 = vmatpush2.bf16.xpose.msra.mxu0 0
        %4135 = vmatprep.subr.bf16.mxu0 0
        %4136 = vmatpush2.bf16.xpose.msra.mxu0 0
        %4137 = vmatprep.subr.bf16.mxu0 0
        %4138 = vmatpush2.bf16.xpose.msra.mxu0 0
        %4139 = vmatprep.subr.bf16.mxu0 0
        %4140 = vmatpush2.bf16.xpose.msra.mxu0 0
        %4141 = vmatprep.subr.bf16.mxu0 0
        %4142 = vmatpush2.bf16.xpose.msra.mxu0 0
        %4143 = vmatprep.subr.bf16.mxu0 0
        %4144 = vmatpush2.bf16.xpose.msra.mxu0 0
        %4145 = vmatprep.subr.bf16.mxu0 0
        %4146 = vmatpush2.bf16.xpose.msra.mxu0 0
        %4147 = vmatprep.mubr.bf16.mxu0 0
        %4148 = vmatmul.mubr.bf16.gmra.mxu0 %v4110
        %v4149 = vpop.f32.mrf.mxu0
        %v4150 = vadd.f32 0.0, %v4149
        %v4151 = vpop.f32.mrf.mxu0
        %v4152 = vpop.f32.mrf.mxu0
        %v4153 = vpop.f32.mrf.mxu0
        %4154 = vdwg.mxu0
        %v4156 = vsel %vm1539, %v3866, 0
        %v4159 = vsel %vm1539, %v3898, 0
        %4161 = vmatprep.subr.bf16.mxu0 0
        %4162 = vmatpush1.bf16.xpose.msra.mxu0 0
        %4163 = vmatprep.subr.bf16.mxu0 0
        %4164 = vmatpush1.bf16.xpose.msra.mxu0 0
        %4165 = vmatprep.subr.bf16.mxu0 0
        %4166 = vmatpush1.bf16.xpose.msra.mxu0 0
        %4167 = vmatprep.subr.bf16.mxu0 0
        %4168 = vmatpush1.bf16.xpose.msra.mxu0 0
        %4169 = vmatprep.subr.bf16.mxu0 0
        %4170 = vmatpush1.bf16.xpose.msra.mxu0 0
        %4171 = vmatprep.subr.bf16.mxu0 0
        %4172 = vmatpush1.bf16.xpose.msra.mxu0 0
        %4173 = vmatprep.subr.bf16.mxu0 0
        %4174 = vmatpush1.bf16.xpose.msra.mxu0 0
        %4175 = vmatprep.subr.bf16.mxu0 0
        %4176 = vmatpush1.bf16.xpose.msra.mxu0 %v4159
        %4177 = vmatprep.subr.bf16.mxu0 0
        %4178 = vmatpush2.bf16.xpose.msra.mxu0 0
        %4179 = vmatprep.subr.bf16.mxu0 0
        %4180 = vmatpush2.bf16.xpose.msra.mxu0 0
        %4181 = vmatprep.subr.bf16.mxu0 0
        %4182 = vmatpush2.bf16.xpose.msra.mxu0 0
        %4183 = vmatprep.subr.bf16.mxu0 0
        %4184 = vmatpush2.bf16.xpose.msra.mxu0 0
        %4185 = vmatprep.subr.bf16.mxu0 0
        %4186 = vmatpush2.bf16.xpose.msra.mxu0 0
        %4187 = vmatprep.subr.bf16.mxu0 0
        %4188 = vmatpush2.bf16.xpose.msra.mxu0 0
        %4189 = vmatprep.subr.bf16.mxu0 0
        %4190 = vmatpush2.bf16.xpose.msra.mxu0 0
        %4191 = vmatprep.subr.bf16.mxu0 0
        %4192 = vmatpush2.bf16.xpose.msra.mxu0 0
        %4193 = vmatprep.mubr.bf16.mxu0 0
        %4194 = vmatmul.mubr.bf16.gmra.mxu0 %v4156
        %v4195 = vpop.f32.mrf.mxu0
        %v4196 = vadd.f32 0.0, %v4195
        %v4197 = vpop.f32.mrf.mxu0
        %v4198 = vpop.f32.mrf.mxu0
        %v4199 = vpop.f32.mrf.mxu0
        %4200 = vdwg.mxu0
        %v4202 = vsel %vm1539, %v3867, 0
        %v4205 = vsel %vm1539, %v3899, 0
        %4207 = vmatprep.subr.bf16.mxu0 0
        %4208 = vmatpush1.bf16.xpose.msra.mxu0 0
        %4209 = vmatprep.subr.bf16.mxu0 0
        %4210 = vmatpush1.bf16.xpose.msra.mxu0 0
        %4211 = vmatprep.subr.bf16.mxu0 0
        %4212 = vmatpush1.bf16.xpose.msra.mxu0 0
        %4213 = vmatprep.subr.bf16.mxu0 0
        %4214 = vmatpush1.bf16.xpose.msra.mxu0 0
        %4215 = vmatprep.subr.bf16.mxu0 0
        %4216 = vmatpush1.bf16.xpose.msra.mxu0 0
        %4217 = vmatprep.subr.bf16.mxu0 0
        %4218 = vmatpush1.bf16.xpose.msra.mxu0 0
        %4219 = vmatprep.subr.bf16.mxu0 0
        %4220 = vmatpush1.bf16.xpose.msra.mxu0 0
        %4221 = vmatprep.subr.bf16.mxu0 0
        %4222 = vmatpush1.bf16.xpose.msra.mxu0 %v4205
        %4223 = vmatprep.subr.bf16.mxu0 0
        %4224 = vmatpush2.bf16.xpose.msra.mxu0 0
        %4225 = vmatprep.subr.bf16.mxu0 0
        %4226 = vmatpush2.bf16.xpose.msra.mxu0 0
        %4227 = vmatprep.subr.bf16.mxu0 0
        %4228 = vmatpush2.bf16.xpose.msra.mxu0 0
        %4229 = vmatprep.subr.bf16.mxu0 0
        %4230 = vmatpush2.bf16.xpose.msra.mxu0 0
        %4231 = vmatprep.subr.bf16.mxu0 0
        %4232 = vmatpush2.bf16.xpose.msra.mxu0 0
        %4233 = vmatprep.subr.bf16.mxu0 0
        %4234 = vmatpush2.bf16.xpose.msra.mxu0 0
        %4235 = vmatprep.subr.bf16.mxu0 0
        %4236 = vmatpush2.bf16.xpose.msra.mxu0 0
        %4237 = vmatprep.subr.bf16.mxu0 0
        %4238 = vmatpush2.bf16.xpose.msra.mxu0 0
        %4239 = vmatprep.mubr.bf16.mxu0 0
        %4240 = vmatmul.mubr.bf16.gmra.mxu0 %v4202
        %v4241 = vpop.f32.mrf.mxu0
        %v4242 = vadd.f32 0.0, %v4241
        %v4243 = vpop.f32.mrf.mxu0
        %v4244 = vpop.f32.mrf.mxu0
        %v4245 = vpop.f32.mrf.mxu0
        %4246 = vdwg.mxu0
        %v4248 = vsel %vm1539, %v3868, 0
        %v4251 = vsel %vm1539, %v3900, 0
        %4253 = vmatprep.subr.bf16.mxu0 0
        %4254 = vmatpush1.bf16.xpose.msra.mxu0 0
        %4255 = vmatprep.subr.bf16.mxu0 0
        %4256 = vmatpush1.bf16.xpose.msra.mxu0 0
        %4257 = vmatprep.subr.bf16.mxu0 0
        %4258 = vmatpush1.bf16.xpose.msra.mxu0 0
        %4259 = vmatprep.subr.bf16.mxu0 0
        %4260 = vmatpush1.bf16.xpose.msra.mxu0 0
        %4261 = vmatprep.subr.bf16.mxu0 0
        %4262 = vmatpush1.bf16.xpose.msra.mxu0 0
        %4263 = vmatprep.subr.bf16.mxu0 0
        %4264 = vmatpush1.bf16.xpose.msra.mxu0 0
        %4265 = vmatprep.subr.bf16.mxu0 0
        %4266 = vmatpush1.bf16.xpose.msra.mxu0 0
        %4267 = vmatprep.subr.bf16.mxu0 0
        %4268 = vmatpush1.bf16.xpose.msra.mxu0 %v4251
        %4269 = vmatprep.subr.bf16.mxu0 0
        %4270 = vmatpush2.bf16.xpose.msra.mxu0 0
        %4271 = vmatprep.subr.bf16.mxu0 0
        %4272 = vmatpush2.bf16.xpose.msra.mxu0 0
        %4273 = vmatprep.subr.bf16.mxu0 0
        %4274 = vmatpush2.bf16.xpose.msra.mxu0 0
        %4275 = vmatprep.subr.bf16.mxu0 0
        %4276 = vmatpush2.bf16.xpose.msra.mxu0 0
        %4277 = vmatprep.subr.bf16.mxu0 0
        %4278 = vmatpush2.bf16.xpose.msra.mxu0 0
        %4279 = vmatprep.subr.bf16.mxu0 0
        %4280 = vmatpush2.bf16.xpose.msra.mxu0 0
        %4281 = vmatprep.subr.bf16.mxu0 0
        %4282 = vmatpush2.bf16.xpose.msra.mxu0 0
        %4283 = vmatprep.subr.bf16.mxu0 0
        %4284 = vmatpush2.bf16.xpose.msra.mxu0 0
        %4285 = vmatprep.mubr.bf16.mxu0 0
        %4286 = vmatmul.mubr.bf16.gmra.mxu0 %v4248
        %v4287 = vpop.f32.mrf.mxu0
        %v4288 = vadd.f32 0.0, %v4287
        %v4289 = vpop.f32.mrf.mxu0
        %v4290 = vpop.f32.mrf.mxu0
        %v4291 = vpop.f32.mrf.mxu0
        %4292 = vdwg.mxu0
        %v4294 = vsel %vm1539, %v3869, 0
        %v4297 = vsel %vm1539, %v3901, 0
        %4299 = vmatprep.subr.bf16.mxu0 0
        %4300 = vmatpush1.bf16.xpose.msra.mxu0 0
        %4301 = vmatprep.subr.bf16.mxu0 0
        %4302 = vmatpush1.bf16.xpose.msra.mxu0 0
        %4303 = vmatprep.subr.bf16.mxu0 0
        %4304 = vmatpush1.bf16.xpose.msra.mxu0 0
        %4305 = vmatprep.subr.bf16.mxu0 0
        %4306 = vmatpush1.bf16.xpose.msra.mxu0 0
        %4307 = vmatprep.subr.bf16.mxu0 0
        %4308 = vmatpush1.bf16.xpose.msra.mxu0 0
        %4309 = vmatprep.subr.bf16.mxu0 0
        %4310 = vmatpush1.bf16.xpose.msra.mxu0 0
        %4311 = vmatprep.subr.bf16.mxu0 0
        %4312 = vmatpush1.bf16.xpose.msra.mxu0 0
        %4313 = vmatprep.subr.bf16.mxu0 0
        %4314 = vmatpush1.bf16.xpose.msra.mxu0 %v4297
        %4315 = vmatprep.subr.bf16.mxu0 0
        %4316 = vmatpush2.bf16.xpose.msra.mxu0 0
        %4317 = vmatprep.subr.bf16.mxu0 0
        %4318 = vmatpush2.bf16.xpose.msra.mxu0 0
        %4319 = vmatprep.subr.bf16.mxu0 0
        %4320 = vmatpush2.bf16.xpose.msra.mxu0 0
        %4321 = vmatprep.subr.bf16.mxu0 0
        %4322 = vmatpush2.bf16.xpose.msra.mxu0 0
        %4323 = vmatprep.subr.bf16.mxu0 0
        %4324 = vmatpush2.bf16.xpose.msra.mxu0 0
        %4325 = vmatprep.subr.bf16.mxu0 0
        %4326 = vmatpush2.bf16.xpose.msra.mxu0 0
        %4327 = vmatprep.subr.bf16.mxu0 0
        %4328 = vmatpush2.bf16.xpose.msra.mxu0 0
        %4329 = vmatprep.subr.bf16.mxu0 0
        %4330 = vmatpush2.bf16.xpose.msra.mxu0 0
        %4331 = vmatprep.mubr.bf16.mxu0 0
        %4332 = vmatmul.mubr.bf16.gmra.mxu0 %v4294
        %v4333 = vpop.f32.mrf.mxu0
        %v4334 = vadd.f32 0.0, %v4333
        %v4335 = vpop.f32.mrf.mxu0
        %v4336 = vpop.f32.mrf.mxu0
        %v4337 = vpop.f32.mrf.mxu0
        %4338 = vdwg.mxu0
        %v4340 = vsel %vm1539, %v3870, 0
        %v4343 = vsel %vm1539, %v3902, 0
        %4345 = vmatprep.subr.bf16.mxu0 0
        %4346 = vmatpush1.bf16.xpose.msra.mxu0 0
        %4347 = vmatprep.subr.bf16.mxu0 0
        %4348 = vmatpush1.bf16.xpose.msra.mxu0 0
        %4349 = vmatprep.subr.bf16.mxu0 0
        %4350 = vmatpush1.bf16.xpose.msra.mxu0 0
        %4351 = vmatprep.subr.bf16.mxu0 0
        %4352 = vmatpush1.bf16.xpose.msra.mxu0 0
        %4353 = vmatprep.subr.bf16.mxu0 0
        %4354 = vmatpush1.bf16.xpose.msra.mxu0 0
        %4355 = vmatprep.subr.bf16.mxu0 0
        %4356 = vmatpush1.bf16.xpose.msra.mxu0 0
        %4357 = vmatprep.subr.bf16.mxu0 0
        %4358 = vmatpush1.bf16.xpose.msra.mxu0 0
        %4359 = vmatprep.subr.bf16.mxu0 0
        %4360 = vmatpush1.bf16.xpose.msra.mxu0 %v4343
        %4361 = vmatprep.subr.bf16.mxu0 0
        %4362 = vmatpush2.bf16.xpose.msra.mxu0 0
        %4363 = vmatprep.subr.bf16.mxu0 0
        %4364 = vmatpush2.bf16.xpose.msra.mxu0 0
        %4365 = vmatprep.subr.bf16.mxu0 0
        %4366 = vmatpush2.bf16.xpose.msra.mxu0 0
        %4367 = vmatprep.subr.bf16.mxu0 0
        %4368 = vmatpush2.bf16.xpose.msra.mxu0 0
        %4369 = vmatprep.subr.bf16.mxu0 0
        %4370 = vmatpush2.bf16.xpose.msra.mxu0 0
        %4371 = vmatprep.subr.bf16.mxu0 0
        %4372 = vmatpush2.bf16.xpose.msra.mxu0 0
        %4373 = vmatprep.subr.bf16.mxu0 0
        %4374 = vmatpush2.bf16.xpose.msra.mxu0 0
        %4375 = vmatprep.subr.bf16.mxu0 0
        %4376 = vmatpush2.bf16.xpose.msra.mxu0 0
        %4377 = vmatprep.mubr.bf16.mxu0 0
        %4378 = vmatmul.mubr.bf16.gmra.mxu0 %v4340
        %v4379 = vpop.f32.mrf.mxu0
        %v4380 = vadd.f32 0.0, %v4379
        %v4381 = vpop.f32.mrf.mxu0
        %v4382 = vpop.f32.mrf.mxu0
        %v4383 = vpop.f32.mrf.mxu0
        %4384 = vdwg.mxu0
        %v4386 = vsel %vm1539, %v3871, 0
        %v4389 = vsel %vm1539, %v3903, 0
        %4391 = vmatprep.subr.bf16.mxu0 0
        %4392 = vmatpush1.bf16.xpose.msra.mxu0 0
        %4393 = vmatprep.subr.bf16.mxu0 0
        %4394 = vmatpush1.bf16.xpose.msra.mxu0 0
        %4395 = vmatprep.subr.bf16.mxu0 0
        %4396 = vmatpush1.bf16.xpose.msra.mxu0 0
        %4397 = vmatprep.subr.bf16.mxu0 0
        %4398 = vmatpush1.bf16.xpose.msra.mxu0 0
        %4399 = vmatprep.subr.bf16.mxu0 0
        %4400 = vmatpush1.bf16.xpose.msra.mxu0 0
        %4401 = vmatprep.subr.bf16.mxu0 0
        %4402 = vmatpush1.bf16.xpose.msra.mxu0 0
        %4403 = vmatprep.subr.bf16.mxu0 0
        %4404 = vmatpush1.bf16.xpose.msra.mxu0 0
        %4405 = vmatprep.subr.bf16.mxu0 0
        %4406 = vmatpush1.bf16.xpose.msra.mxu0 %v4389
        %4407 = vmatprep.subr.bf16.mxu0 0
        %4408 = vmatpush2.bf16.xpose.msra.mxu0 0
        %4409 = vmatprep.subr.bf16.mxu0 0
        %4410 = vmatpush2.bf16.xpose.msra.mxu0 0
        %4411 = vmatprep.subr.bf16.mxu0 0
        %4412 = vmatpush2.bf16.xpose.msra.mxu0 0
        %4413 = vmatprep.subr.bf16.mxu0 0
        %4414 = vmatpush2.bf16.xpose.msra.mxu0 0
        %4415 = vmatprep.subr.bf16.mxu0 0
        %4416 = vmatpush2.bf16.xpose.msra.mxu0 0
        %4417 = vmatprep.subr.bf16.mxu0 0
        %4418 = vmatpush2.bf16.xpose.msra.mxu0 0
        %4419 = vmatprep.subr.bf16.mxu0 0
        %4420 = vmatpush2.bf16.xpose.msra.mxu0 0
        %4421 = vmatprep.subr.bf16.mxu0 0
        %4422 = vmatpush2.bf16.xpose.msra.mxu0 0
        %4423 = vmatprep.mubr.bf16.mxu0 0
        %4424 = vmatmul.mubr.bf16.gmra.mxu0 %v4386
        %v4425 = vpop.f32.mrf.mxu0
        %v4426 = vadd.f32 0.0, %v4425
        %v4427 = vpop.f32.mrf.mxu0
        %v4428 = vpop.f32.mrf.mxu0
        %v4429 = vpop.f32.mrf.mxu0
        %4430 = vdwg.mxu0
        %v4432 = vsel %vm1539, %v3872, 0
        %v4435 = vsel %vm1539, %v3904, 0
        %4437 = vmatprep.subr.bf16.mxu0 0
        %4438 = vmatpush1.bf16.xpose.msra.mxu0 0
        %4439 = vmatprep.subr.bf16.mxu0 0
        %4440 = vmatpush1.bf16.xpose.msra.mxu0 0
        %4441 = vmatprep.subr.bf16.mxu0 0
        %4442 = vmatpush1.bf16.xpose.msra.mxu0 0
        %4443 = vmatprep.subr.bf16.mxu0 0
        %4444 = vmatpush1.bf16.xpose.msra.mxu0 0
        %4445 = vmatprep.subr.bf16.mxu0 0
        %4446 = vmatpush1.bf16.xpose.msra.mxu0 0
        %4447 = vmatprep.subr.bf16.mxu0 0
        %4448 = vmatpush1.bf16.xpose.msra.mxu0 0
        %4449 = vmatprep.subr.bf16.mxu0 0
        %4450 = vmatpush1.bf16.xpose.msra.mxu0 0
        %4451 = vmatprep.subr.bf16.mxu0 0
        %4452 = vmatpush1.bf16.xpose.msra.mxu0 %v4435
        %4453 = vmatprep.subr.bf16.mxu0 0
        %4454 = vmatpush2.bf16.xpose.msra.mxu0 0
        %4455 = vmatprep.subr.bf16.mxu0 0
        %4456 = vmatpush2.bf16.xpose.msra.mxu0 0
        %4457 = vmatprep.subr.bf16.mxu0 0
        %4458 = vmatpush2.bf16.xpose.msra.mxu0 0
        %4459 = vmatprep.subr.bf16.mxu0 0
        %4460 = vmatpush2.bf16.xpose.msra.mxu0 0
        %4461 = vmatprep.subr.bf16.mxu0 0
        %4462 = vmatpush2.bf16.xpose.msra.mxu0 0
        %4463 = vmatprep.subr.bf16.mxu0 0
        %4464 = vmatpush2.bf16.xpose.msra.mxu0 0
        %4465 = vmatprep.subr.bf16.mxu0 0
        %4466 = vmatpush2.bf16.xpose.msra.mxu0 0
        %4467 = vmatprep.subr.bf16.mxu0 0
        %4468 = vmatpush2.bf16.xpose.msra.mxu0 0
        %4469 = vmatprep.mubr.bf16.mxu0 0
        %4470 = vmatmul.mubr.bf16.gmra.mxu0 %v4432
        %v4471 = vpop.f32.mrf.mxu0
        %v4472 = vadd.f32 0.0, %v4471
        %v4473 = vpop.f32.mrf.mxu0
        %v4474 = vpop.f32.mrf.mxu0
        %v4475 = vpop.f32.mrf.mxu0
        %4476 = vdwg.mxu0
        %v4478 = vsel %vm1539, %v3873, 0
        %v4481 = vsel %vm1539, %v3905, 0
        %4483 = vmatprep.subr.bf16.mxu0 0
        %4484 = vmatpush1.bf16.xpose.msra.mxu0 0
        %4485 = vmatprep.subr.bf16.mxu0 0
        %4486 = vmatpush1.bf16.xpose.msra.mxu0 0
        %4487 = vmatprep.subr.bf16.mxu0 0
        %4488 = vmatpush1.bf16.xpose.msra.mxu0 0
        %4489 = vmatprep.subr.bf16.mxu0 0
        %4490 = vmatpush1.bf16.xpose.msra.mxu0 0
        %4491 = vmatprep.subr.bf16.mxu0 0
        %4492 = vmatpush1.bf16.xpose.msra.mxu0 0
        %4493 = vmatprep.subr.bf16.mxu0 0
        %4494 = vmatpush1.bf16.xpose.msra.mxu0 0
        %4495 = vmatprep.subr.bf16.mxu0 0
        %4496 = vmatpush1.bf16.xpose.msra.mxu0 0
        %4497 = vmatprep.subr.bf16.mxu0 0
        %4498 = vmatpush1.bf16.xpose.msra.mxu0 %v4481
        %4499 = vmatprep.subr.bf16.mxu0 0
        %4500 = vmatpush2.bf16.xpose.msra.mxu0 0
        %4501 = vmatprep.subr.bf16.mxu0 0
        %4502 = vmatpush2.bf16.xpose.msra.mxu0 0
        %4503 = vmatprep.subr.bf16.mxu0 0
        %4504 = vmatpush2.bf16.xpose.msra.mxu0 0
        %4505 = vmatprep.subr.bf16.mxu0 0
        %4506 = vmatpush2.bf16.xpose.msra.mxu0 0
        %4507 = vmatprep.subr.bf16.mxu0 0
        %4508 = vmatpush2.bf16.xpose.msra.mxu0 0
        %4509 = vmatprep.subr.bf16.mxu0 0
        %4510 = vmatpush2.bf16.xpose.msra.mxu0 0
        %4511 = vmatprep.subr.bf16.mxu0 0
        %4512 = vmatpush2.bf16.xpose.msra.mxu0 0
        %4513 = vmatprep.subr.bf16.mxu0 0
        %4514 = vmatpush2.bf16.xpose.msra.mxu0 0
        %4515 = vmatprep.mubr.bf16.mxu0 0
        %4516 = vmatmul.mubr.bf16.gmra.mxu0 %v4478
        %v4517 = vpop.f32.mrf.mxu0
        %v4518 = vadd.f32 0.0, %v4517
        %v4519 = vpop.f32.mrf.mxu0
        %v4520 = vpop.f32.mrf.mxu0
        %v4521 = vpop.f32.mrf.mxu0
        %4522 = vdwg.mxu0
        %v4524 = vsel %vm1539, %v3874, 0
        %v4527 = vsel %vm1539, %v3906, 0
        %4529 = vmatprep.subr.bf16.mxu0 0
        %4530 = vmatpush1.bf16.xpose.msra.mxu0 0
        %4531 = vmatprep.subr.bf16.mxu0 0
        %4532 = vmatpush1.bf16.xpose.msra.mxu0 0
        %4533 = vmatprep.subr.bf16.mxu0 0
        %4534 = vmatpush1.bf16.xpose.msra.mxu0 0
        %4535 = vmatprep.subr.bf16.mxu0 0
        %4536 = vmatpush1.bf16.xpose.msra.mxu0 0
        %4537 = vmatprep.subr.bf16.mxu0 0
        %4538 = vmatpush1.bf16.xpose.msra.mxu0 0
        %4539 = vmatprep.subr.bf16.mxu0 0
        %4540 = vmatpush1.bf16.xpose.msra.mxu0 0
        %4541 = vmatprep.subr.bf16.mxu0 0
        %4542 = vmatpush1.bf16.xpose.msra.mxu0 0
        %4543 = vmatprep.subr.bf16.mxu0 0
        %4544 = vmatpush1.bf16.xpose.msra.mxu0 %v4527
        %4545 = vmatprep.subr.bf16.mxu0 0
        %4546 = vmatpush2.bf16.xpose.msra.mxu0 0
        %4547 = vmatprep.subr.bf16.mxu0 0
        %4548 = vmatpush2.bf16.xpose.msra.mxu0 0
        %4549 = vmatprep.subr.bf16.mxu0 0
        %4550 = vmatpush2.bf16.xpose.msra.mxu0 0
        %4551 = vmatprep.subr.bf16.mxu0 0
        %4552 = vmatpush2.bf16.xpose.msra.mxu0 0
        %4553 = vmatprep.subr.bf16.mxu0 0
        %4554 = vmatpush2.bf16.xpose.msra.mxu0 0
        %4555 = vmatprep.subr.bf16.mxu0 0
        %4556 = vmatpush2.bf16.xpose.msra.mxu0 0
        %4557 = vmatprep.subr.bf16.mxu0 0
        %4558 = vmatpush2.bf16.xpose.msra.mxu0 0
        %4559 = vmatprep.subr.bf16.mxu0 0
        %4560 = vmatpush2.bf16.xpose.msra.mxu0 0
        %4561 = vmatprep.mubr.bf16.mxu0 0
        %4562 = vmatmul.mubr.bf16.gmra.mxu0 %v4524
        %v4563 = vpop.f32.mrf.mxu0
        %v4564 = vadd.f32 0.0, %v4563
        %v4565 = vpop.f32.mrf.mxu0
        %v4566 = vpop.f32.mrf.mxu0
        %v4567 = vpop.f32.mrf.mxu0
        %4568 = vdwg.mxu0
        %v4570 = vsel %vm1539, %v3875, 0
        %v4573 = vsel %vm1539, %v3907, 0
        %4575 = vmatprep.subr.bf16.mxu0 0
        %4576 = vmatpush1.bf16.xpose.msra.mxu0 0
        %4577 = vmatprep.subr.bf16.mxu0 0
        %4578 = vmatpush1.bf16.xpose.msra.mxu0 0
        %4579 = vmatprep.subr.bf16.mxu0 0
        %4580 = vmatpush1.bf16.xpose.msra.mxu0 0
        %4581 = vmatprep.subr.bf16.mxu0 0
        %4582 = vmatpush1.bf16.xpose.msra.mxu0 0
        %4583 = vmatprep.subr.bf16.mxu0 0
        %4584 = vmatpush1.bf16.xpose.msra.mxu0 0
        %4585 = vmatprep.subr.bf16.mxu0 0
        %4586 = vmatpush1.bf16.xpose.msra.mxu0 0
        %4587 = vmatprep.subr.bf16.mxu0 0
        %4588 = vmatpush1.bf16.xpose.msra.mxu0 0
        %4589 = vmatprep.subr.bf16.mxu0 0
        %4590 = vmatpush1.bf16.xpose.msra.mxu0 %v4573
        %4591 = vmatprep.subr.bf16.mxu0 0
        %4592 = vmatpush2.bf16.xpose.msra.mxu0 0
        %4593 = vmatprep.subr.bf16.mxu0 0
        %4594 = vmatpush2.bf16.xpose.msra.mxu0 0
        %4595 = vmatprep.subr.bf16.mxu0 0
        %4596 = vmatpush2.bf16.xpose.msra.mxu0 0
        %4597 = vmatprep.subr.bf16.mxu0 0
        %4598 = vmatpush2.bf16.xpose.msra.mxu0 0
        %4599 = vmatprep.subr.bf16.mxu0 0
        %4600 = vmatpush2.bf16.xpose.msra.mxu0 0
        %4601 = vmatprep.subr.bf16.mxu0 0
        %4602 = vmatpush2.bf16.xpose.msra.mxu0 0
        %4603 = vmatprep.subr.bf16.mxu0 0
        %4604 = vmatpush2.bf16.xpose.msra.mxu0 0
        %4605 = vmatprep.subr.bf16.mxu0 0
        %4606 = vmatpush2.bf16.xpose.msra.mxu0 0
        %4607 = vmatprep.mubr.bf16.mxu0 0
        %4608 = vmatmul.mubr.bf16.gmra.mxu0 %v4570
        %v4609 = vpop.f32.mrf.mxu0
        %v4610 = vadd.f32 0.0, %v4609
        %v4611 = vpop.f32.mrf.mxu0
        %v4612 = vpop.f32.mrf.mxu0
        %v4613 = vpop.f32.mrf.mxu0
        %4614 = vdwg.mxu0
        %v4616 = vsel %vm1539, %v3876, 0
        %v4619 = vsel %vm1539, %v3908, 0
        %4621 = vmatprep.subr.bf16.mxu0 0
        %4622 = vmatpush1.bf16.xpose.msra.mxu0 0
        %4623 = vmatprep.subr.bf16.mxu0 0
        %4624 = vmatpush1.bf16.xpose.msra.mxu0 0
        %4625 = vmatprep.subr.bf16.mxu0 0
        %4626 = vmatpush1.bf16.xpose.msra.mxu0 0
        %4627 = vmatprep.subr.bf16.mxu0 0
        %4628 = vmatpush1.bf16.xpose.msra.mxu0 0
        %4629 = vmatprep.subr.bf16.mxu0 0
        %4630 = vmatpush1.bf16.xpose.msra.mxu0 0
        %4631 = vmatprep.subr.bf16.mxu0 0
        %4632 = vmatpush1.bf16.xpose.msra.mxu0 0
        %4633 = vmatprep.subr.bf16.mxu0 0
        %4634 = vmatpush1.bf16.xpose.msra.mxu0 0
        %4635 = vmatprep.subr.bf16.mxu0 0
        %4636 = vmatpush1.bf16.xpose.msra.mxu0 %v4619
        %4637 = vmatprep.subr.bf16.mxu0 0
        %4638 = vmatpush2.bf16.xpose.msra.mxu0 0
        %4639 = vmatprep.subr.bf16.mxu0 0
        %4640 = vmatpush2.bf16.xpose.msra.mxu0 0
        %4641 = vmatprep.subr.bf16.mxu0 0
        %4642 = vmatpush2.bf16.xpose.msra.mxu0 0
        %4643 = vmatprep.subr.bf16.mxu0 0
        %4644 = vmatpush2.bf16.xpose.msra.mxu0 0
        %4645 = vmatprep.subr.bf16.mxu0 0
        %4646 = vmatpush2.bf16.xpose.msra.mxu0 0
        %4647 = vmatprep.subr.bf16.mxu0 0
        %4648 = vmatpush2.bf16.xpose.msra.mxu0 0
        %4649 = vmatprep.subr.bf16.mxu0 0
        %4650 = vmatpush2.bf16.xpose.msra.mxu0 0
        %4651 = vmatprep.subr.bf16.mxu0 0
        %4652 = vmatpush2.bf16.xpose.msra.mxu0 0
        %4653 = vmatprep.mubr.bf16.mxu0 0
        %4654 = vmatmul.mubr.bf16.gmra.mxu0 %v4616
        %v4655 = vpop.f32.mrf.mxu0
        %v4656 = vadd.f32 0.0, %v4655
        %v4657 = vpop.f32.mrf.mxu0
        %v4658 = vpop.f32.mrf.mxu0
        %v4659 = vpop.f32.mrf.mxu0
        %4660 = vdwg.mxu0
        %v4662 = vsel %vm1539, %v3877, 0
        %v4665 = vsel %vm1539, %v3909, 0
        %4667 = vmatprep.subr.bf16.mxu0 0
        %4668 = vmatpush1.bf16.xpose.msra.mxu0 0
        %4669 = vmatprep.subr.bf16.mxu0 0
        %4670 = vmatpush1.bf16.xpose.msra.mxu0 0
        %4671 = vmatprep.subr.bf16.mxu0 0
        %4672 = vmatpush1.bf16.xpose.msra.mxu0 0
        %4673 = vmatprep.subr.bf16.mxu0 0
        %4674 = vmatpush1.bf16.xpose.msra.mxu0 0
        %4675 = vmatprep.subr.bf16.mxu0 0
        %4676 = vmatpush1.bf16.xpose.msra.mxu0 0
        %4677 = vmatprep.subr.bf16.mxu0 0
        %4678 = vmatpush1.bf16.xpose.msra.mxu0 0
        %4679 = vmatprep.subr.bf16.mxu0 0
        %4680 = vmatpush1.bf16.xpose.msra.mxu0 0
        %4681 = vmatprep.subr.bf16.mxu0 0
        %4682 = vmatpush1.bf16.xpose.msra.mxu0 %v4665
        %4683 = vmatprep.subr.bf16.mxu0 0
        %4684 = vmatpush2.bf16.xpose.msra.mxu0 0
        %4685 = vmatprep.subr.bf16.mxu0 0
        %4686 = vmatpush2.bf16.xpose.msra.mxu0 0
        %4687 = vmatprep.subr.bf16.mxu0 0
        %4688 = vmatpush2.bf16.xpose.msra.mxu0 0
        %4689 = vmatprep.subr.bf16.mxu0 0
        %4690 = vmatpush2.bf16.xpose.msra.mxu0 0
        %4691 = vmatprep.subr.bf16.mxu0 0
        %4692 = vmatpush2.bf16.xpose.msra.mxu0 0
        %4693 = vmatprep.subr.bf16.mxu0 0
        %4694 = vmatpush2.bf16.xpose.msra.mxu0 0
        %4695 = vmatprep.subr.bf16.mxu0 0
        %4696 = vmatpush2.bf16.xpose.msra.mxu0 0
        %4697 = vmatprep.subr.bf16.mxu0 0
        %4698 = vmatpush2.bf16.xpose.msra.mxu0 0
        %4699 = vmatprep.mubr.bf16.mxu0 0
        %4700 = vmatmul.mubr.bf16.gmra.mxu0 %v4662
        %v4701 = vpop.f32.mrf.mxu0
        %v4702 = vadd.f32 0.0, %v4701
        %v4703 = vpop.f32.mrf.mxu0
        %v4704 = vpop.f32.mrf.mxu0
        %v4705 = vpop.f32.mrf.mxu0
        %4706 = vdwg.mxu0
        %v4708 = vsel %vm1539, %v3878, 0
        %v4711 = vsel %vm1539, %v3910, 0
        %4713 = vmatprep.subr.bf16.mxu0 0
        %4714 = vmatpush1.bf16.xpose.msra.mxu0 0
        %4715 = vmatprep.subr.bf16.mxu0 0
        %4716 = vmatpush1.bf16.xpose.msra.mxu0 0
        %4717 = vmatprep.subr.bf16.mxu0 0
        %4718 = vmatpush1.bf16.xpose.msra.mxu0 0
        %4719 = vmatprep.subr.bf16.mxu0 0
        %4720 = vmatpush1.bf16.xpose.msra.mxu0 0
        %4721 = vmatprep.subr.bf16.mxu0 0
        %4722 = vmatpush1.bf16.xpose.msra.mxu0 0
        %4723 = vmatprep.subr.bf16.mxu0 0
        %4724 = vmatpush1.bf16.xpose.msra.mxu0 0
        %4725 = vmatprep.subr.bf16.mxu0 0
        %4726 = vmatpush1.bf16.xpose.msra.mxu0 0
        %4727 = vmatprep.subr.bf16.mxu0 0
        %4728 = vmatpush1.bf16.xpose.msra.mxu0 %v4711
        %4729 = vmatprep.subr.bf16.mxu0 0
        %4730 = vmatpush2.bf16.xpose.msra.mxu0 0
        %4731 = vmatprep.subr.bf16.mxu0 0
        %4732 = vmatpush2.bf16.xpose.msra.mxu0 0
        %4733 = vmatprep.subr.bf16.mxu0 0
        %4734 = vmatpush2.bf16.xpose.msra.mxu0 0
        %4735 = vmatprep.subr.bf16.mxu0 0
        %4736 = vmatpush2.bf16.xpose.msra.mxu0 0
        %4737 = vmatprep.subr.bf16.mxu0 0
        %4738 = vmatpush2.bf16.xpose.msra.mxu0 0
        %4739 = vmatprep.subr.bf16.mxu0 0
        %4740 = vmatpush2.bf16.xpose.msra.mxu0 0
        %4741 = vmatprep.subr.bf16.mxu0 0
        %4742 = vmatpush2.bf16.xpose.msra.mxu0 0
        %4743 = vmatprep.subr.bf16.mxu0 0
        %4744 = vmatpush2.bf16.xpose.msra.mxu0 0
        %4745 = vmatprep.mubr.bf16.mxu0 0
        %4746 = vmatmul.mubr.bf16.gmra.mxu0 %v4708
        %v4747 = vpop.f32.mrf.mxu0
        %v4748 = vadd.f32 0.0, %v4747
        %v4749 = vpop.f32.mrf.mxu0
        %v4750 = vpop.f32.mrf.mxu0
        %v4751 = vpop.f32.mrf.mxu0
        %4752 = vdwg.mxu0
        %v4754 = vsel %vm1539, %v3879, 0
        %v4757 = vsel %vm1539, %v3911, 0
        %4759 = vmatprep.subr.bf16.mxu0 0
        %4760 = vmatpush1.bf16.xpose.msra.mxu0 0
        %4761 = vmatprep.subr.bf16.mxu0 0
        %4762 = vmatpush1.bf16.xpose.msra.mxu0 0
        %4763 = vmatprep.subr.bf16.mxu0 0
        %4764 = vmatpush1.bf16.xpose.msra.mxu0 0
        %4765 = vmatprep.subr.bf16.mxu0 0
        %4766 = vmatpush1.bf16.xpose.msra.mxu0 0
        %4767 = vmatprep.subr.bf16.mxu0 0
        %4768 = vmatpush1.bf16.xpose.msra.mxu0 0
        %4769 = vmatprep.subr.bf16.mxu0 0
        %4770 = vmatpush1.bf16.xpose.msra.mxu0 0
        %4771 = vmatprep.subr.bf16.mxu0 0
        %4772 = vmatpush1.bf16.xpose.msra.mxu0 0
        %4773 = vmatprep.subr.bf16.mxu0 0
        %4774 = vmatpush1.bf16.xpose.msra.mxu0 %v4757
        %4775 = vmatprep.subr.bf16.mxu0 0
        %4776 = vmatpush2.bf16.xpose.msra.mxu0 0
        %4777 = vmatprep.subr.bf16.mxu0 0
        %4778 = vmatpush2.bf16.xpose.msra.mxu0 0
        %4779 = vmatprep.subr.bf16.mxu0 0
        %4780 = vmatpush2.bf16.xpose.msra.mxu0 0
        %4781 = vmatprep.subr.bf16.mxu0 0
        %4782 = vmatpush2.bf16.xpose.msra.mxu0 0
        %4783 = vmatprep.subr.bf16.mxu0 0
        %4784 = vmatpush2.bf16.xpose.msra.mxu0 0
        %4785 = vmatprep.subr.bf16.mxu0 0
        %4786 = vmatpush2.bf16.xpose.msra.mxu0 0
        %4787 = vmatprep.subr.bf16.mxu0 0
        %4788 = vmatpush2.bf16.xpose.msra.mxu0 0
        %4789 = vmatprep.subr.bf16.mxu0 0
        %4790 = vmatpush2.bf16.xpose.msra.mxu0 0
        %4791 = vmatprep.mubr.bf16.mxu0 0
        %4792 = vmatmul.mubr.bf16.gmra.mxu0 %v4754
        %v4793 = vpop.f32.mrf.mxu0
        %v4794 = vadd.f32 0.0, %v4793
        %v4795 = vpop.f32.mrf.mxu0
        %v4796 = vpop.f32.mrf.mxu0
        %v4797 = vpop.f32.mrf.mxu0
        %4798 = vdwg.mxu0
        %v4800 = vsel %vm1539, %v3880, 0
        %v4803 = vsel %vm1539, %v3912, 0
        %4805 = vmatprep.subr.bf16.mxu0 0
        %4806 = vmatpush1.bf16.xpose.msra.mxu0 0
        %4807 = vmatprep.subr.bf16.mxu0 0
        %4808 = vmatpush1.bf16.xpose.msra.mxu0 0
        %4809 = vmatprep.subr.bf16.mxu0 0
        %4810 = vmatpush1.bf16.xpose.msra.mxu0 0
        %4811 = vmatprep.subr.bf16.mxu0 0
        %4812 = vmatpush1.bf16.xpose.msra.mxu0 0
        %4813 = vmatprep.subr.bf16.mxu0 0
        %4814 = vmatpush1.bf16.xpose.msra.mxu0 0
        %4815 = vmatprep.subr.bf16.mxu0 0
        %4816 = vmatpush1.bf16.xpose.msra.mxu0 0
        %4817 = vmatprep.subr.bf16.mxu0 0
        %4818 = vmatpush1.bf16.xpose.msra.mxu0 0
        %4819 = vmatprep.subr.bf16.mxu0 0
        %4820 = vmatpush1.bf16.xpose.msra.mxu0 %v4803
        %4821 = vmatprep.subr.bf16.mxu0 0
        %4822 = vmatpush2.bf16.xpose.msra.mxu0 0
        %4823 = vmatprep.subr.bf16.mxu0 0
        %4824 = vmatpush2.bf16.xpose.msra.mxu0 0
        %4825 = vmatprep.subr.bf16.mxu0 0
        %4826 = vmatpush2.bf16.xpose.msra.mxu0 0
        %4827 = vmatprep.subr.bf16.mxu0 0
        %4828 = vmatpush2.bf16.xpose.msra.mxu0 0
        %4829 = vmatprep.subr.bf16.mxu0 0
        %4830 = vmatpush2.bf16.xpose.msra.mxu0 0
        %4831 = vmatprep.subr.bf16.mxu0 0
        %4832 = vmatpush2.bf16.xpose.msra.mxu0 0
        %4833 = vmatprep.subr.bf16.mxu0 0
        %4834 = vmatpush2.bf16.xpose.msra.mxu0 0
        %4835 = vmatprep.subr.bf16.mxu0 0
        %4836 = vmatpush2.bf16.xpose.msra.mxu0 0
        %4837 = vmatprep.mubr.bf16.mxu0 0
        %4838 = vmatmul.mubr.bf16.gmra.mxu0 %v4800
        %v4839 = vpop.f32.mrf.mxu0
        %v4840 = vadd.f32 0.0, %v4839
        %v4841 = vpop.f32.mrf.mxu0
        %v4842 = vpop.f32.mrf.mxu0
        %v4843 = vpop.f32.mrf.mxu0
        %4844 = vdwg.mxu0
        %v4846 = vsel %vm1539, %v3881, 0
        %v4849 = vsel %vm1539, %v3913, 0
        %4851 = vmatprep.subr.bf16.mxu0 0
        %4852 = vmatpush1.bf16.xpose.msra.mxu0 0
        %4853 = vmatprep.subr.bf16.mxu0 0
        %4854 = vmatpush1.bf16.xpose.msra.mxu0 0
        %4855 = vmatprep.subr.bf16.mxu0 0
        %4856 = vmatpush1.bf16.xpose.msra.mxu0 0
        %4857 = vmatprep.subr.bf16.mxu0 0
        %4858 = vmatpush1.bf16.xpose.msra.mxu0 0
        %4859 = vmatprep.subr.bf16.mxu0 0
        %4860 = vmatpush1.bf16.xpose.msra.mxu0 0
        %4861 = vmatprep.subr.bf16.mxu0 0
        %4862 = vmatpush1.bf16.xpose.msra.mxu0 0
        %4863 = vmatprep.subr.bf16.mxu0 0
        %4864 = vmatpush1.bf16.xpose.msra.mxu0 0
        %4865 = vmatprep.subr.bf16.mxu0 0
        %4866 = vmatpush1.bf16.xpose.msra.mxu0 %v4849
        %4867 = vmatprep.subr.bf16.mxu0 0
        %4868 = vmatpush2.bf16.xpose.msra.mxu0 0
        %4869 = vmatprep.subr.bf16.mxu0 0
        %4870 = vmatpush2.bf16.xpose.msra.mxu0 0
        %4871 = vmatprep.subr.bf16.mxu0 0
        %4872 = vmatpush2.bf16.xpose.msra.mxu0 0
        %4873 = vmatprep.subr.bf16.mxu0 0
        %4874 = vmatpush2.bf16.xpose.msra.mxu0 0
        %4875 = vmatprep.subr.bf16.mxu0 0
        %4876 = vmatpush2.bf16.xpose.msra.mxu0 0
        %4877 = vmatprep.subr.bf16.mxu0 0
        %4878 = vmatpush2.bf16.xpose.msra.mxu0 0
        %4879 = vmatprep.subr.bf16.mxu0 0
        %4880 = vmatpush2.bf16.xpose.msra.mxu0 0
        %4881 = vmatprep.subr.bf16.mxu0 0
        %4882 = vmatpush2.bf16.xpose.msra.mxu0 0
        %4883 = vmatprep.mubr.bf16.mxu0 0
        %4884 = vmatmul.mubr.bf16.gmra.mxu0 %v4846
        %v4885 = vpop.f32.mrf.mxu0
        %v4886 = vadd.f32 0.0, %v4885
        %v4887 = vpop.f32.mrf.mxu0
        %v4888 = vpop.f32.mrf.mxu0
        %v4889 = vpop.f32.mrf.mxu0
        %4890 = vdwg.mxu0
        %v4892 = vsel %vm1539, %v3882, 0
        %v4895 = vsel %vm1539, %v3914, 0
        %4897 = vmatprep.subr.bf16.mxu0 0
        %4898 = vmatpush1.bf16.xpose.msra.mxu0 0
        %4899 = vmatprep.subr.bf16.mxu0 0
        %4900 = vmatpush1.bf16.xpose.msra.mxu0 0
        %4901 = vmatprep.subr.bf16.mxu0 0
        %4902 = vmatpush1.bf16.xpose.msra.mxu0 0
        %4903 = vmatprep.subr.bf16.mxu0 0
        %4904 = vmatpush1.bf16.xpose.msra.mxu0 0
        %4905 = vmatprep.subr.bf16.mxu0 0
        %4906 = vmatpush1.bf16.xpose.msra.mxu0 0
        %4907 = vmatprep.subr.bf16.mxu0 0
        %4908 = vmatpush1.bf16.xpose.msra.mxu0 0
        %4909 = vmatprep.subr.bf16.mxu0 0
        %4910 = vmatpush1.bf16.xpose.msra.mxu0 0
        %4911 = vmatprep.subr.bf16.mxu0 0
        %4912 = vmatpush1.bf16.xpose.msra.mxu0 %v4895
        %4913 = vmatprep.subr.bf16.mxu0 0
        %4914 = vmatpush2.bf16.xpose.msra.mxu0 0
        %4915 = vmatprep.subr.bf16.mxu0 0
        %4916 = vmatpush2.bf16.xpose.msra.mxu0 0
        %4917 = vmatprep.subr.bf16.mxu0 0
        %4918 = vmatpush2.bf16.xpose.msra.mxu0 0
        %4919 = vmatprep.subr.bf16.mxu0 0
        %4920 = vmatpush2.bf16.xpose.msra.mxu0 0
        %4921 = vmatprep.subr.bf16.mxu0 0
        %4922 = vmatpush2.bf16.xpose.msra.mxu0 0
        %4923 = vmatprep.subr.bf16.mxu0 0
        %4924 = vmatpush2.bf16.xpose.msra.mxu0 0
        %4925 = vmatprep.subr.bf16.mxu0 0
        %4926 = vmatpush2.bf16.xpose.msra.mxu0 0
        %4927 = vmatprep.subr.bf16.mxu0 0
        %4928 = vmatpush2.bf16.xpose.msra.mxu0 0
        %4929 = vmatprep.mubr.bf16.mxu0 0
        %4930 = vmatmul.mubr.bf16.gmra.mxu0 %v4892
        %v4931 = vpop.f32.mrf.mxu0
        %v4932 = vadd.f32 0.0, %v4931
        %v4933 = vpop.f32.mrf.mxu0
        %v4934 = vpop.f32.mrf.mxu0
        %v4935 = vpop.f32.mrf.mxu0
        %4936 = vdwg.mxu0
        %v4938 = vsel %vm1539, %v3883, 0
        %v4941 = vsel %vm1539, %v3915, 0
        %4943 = vmatprep.subr.bf16.mxu0 0
        %4944 = vmatpush1.bf16.xpose.msra.mxu0 0
        %4945 = vmatprep.subr.bf16.mxu0 0
        %4946 = vmatpush1.bf16.xpose.msra.mxu0 0
        %4947 = vmatprep.subr.bf16.mxu0 0
        %4948 = vmatpush1.bf16.xpose.msra.mxu0 0
        %4949 = vmatprep.subr.bf16.mxu0 0
        %4950 = vmatpush1.bf16.xpose.msra.mxu0 0
        %4951 = vmatprep.subr.bf16.mxu0 0
        %4952 = vmatpush1.bf16.xpose.msra.mxu0 0
        %4953 = vmatprep.subr.bf16.mxu0 0
        %4954 = vmatpush1.bf16.xpose.msra.mxu0 0
        %4955 = vmatprep.subr.bf16.mxu0 0
        %4956 = vmatpush1.bf16.xpose.msra.mxu0 0
        %4957 = vmatprep.subr.bf16.mxu0 0
        %4958 = vmatpush1.bf16.xpose.msra.mxu0 %v4941
        %4959 = vmatprep.subr.bf16.mxu0 0
        %4960 = vmatpush2.bf16.xpose.msra.mxu0 0
        %4961 = vmatprep.subr.bf16.mxu0 0
        %4962 = vmatpush2.bf16.xpose.msra.mxu0 0
        %4963 = vmatprep.subr.bf16.mxu0 0
        %4964 = vmatpush2.bf16.xpose.msra.mxu0 0
        %4965 = vmatprep.subr.bf16.mxu0 0
        %4966 = vmatpush2.bf16.xpose.msra.mxu0 0
        %4967 = vmatprep.subr.bf16.mxu0 0
        %4968 = vmatpush2.bf16.xpose.msra.mxu0 0
        %4969 = vmatprep.subr.bf16.mxu0 0
        %4970 = vmatpush2.bf16.xpose.msra.mxu0 0
        %4971 = vmatprep.subr.bf16.mxu0 0
        %4972 = vmatpush2.bf16.xpose.msra.mxu0 0
        %4973 = vmatprep.subr.bf16.mxu0 0
        %4974 = vmatpush2.bf16.xpose.msra.mxu0 0
        %4975 = vmatprep.mubr.bf16.mxu0 0
        %4976 = vmatmul.mubr.bf16.gmra.mxu0 %v4938
        %v4977 = vpop.f32.mrf.mxu0
        %v4978 = vadd.f32 0.0, %v4977
        %v4979 = vpop.f32.mrf.mxu0
        %v4980 = vpop.f32.mrf.mxu0
        %v4981 = vpop.f32.mrf.mxu0
        %4982 = vdwg.mxu0
        %v4984 = vsel %vm1539, %v3884, 0
        %v4987 = vsel %vm1539, %v3916, 0
        %4989 = vmatprep.subr.bf16.mxu0 0
        %4990 = vmatpush1.bf16.xpose.msra.mxu0 0
        %4991 = vmatprep.subr.bf16.mxu0 0
        %4992 = vmatpush1.bf16.xpose.msra.mxu0 0
        %4993 = vmatprep.subr.bf16.mxu0 0
        %4994 = vmatpush1.bf16.xpose.msra.mxu0 0
        %4995 = vmatprep.subr.bf16.mxu0 0
        %4996 = vmatpush1.bf16.xpose.msra.mxu0 0
        %4997 = vmatprep.subr.bf16.mxu0 0
        %4998 = vmatpush1.bf16.xpose.msra.mxu0 0
        %4999 = vmatprep.subr.bf16.mxu0 0
        %5000 = vmatpush1.bf16.xpose.msra.mxu0 0
        %5001 = vmatprep.subr.bf16.mxu0 0
        %5002 = vmatpush1.bf16.xpose.msra.mxu0 0
        %5003 = vmatprep.subr.bf16.mxu0 0
        %5004 = vmatpush1.bf16.xpose.msra.mxu0 %v4987
        %5005 = vmatprep.subr.bf16.mxu0 0
        %5006 = vmatpush2.bf16.xpose.msra.mxu0 0
        %5007 = vmatprep.subr.bf16.mxu0 0
        %5008 = vmatpush2.bf16.xpose.msra.mxu0 0
        %5009 = vmatprep.subr.bf16.mxu0 0
        %5010 = vmatpush2.bf16.xpose.msra.mxu0 0
        %5011 = vmatprep.subr.bf16.mxu0 0
        %5012 = vmatpush2.bf16.xpose.msra.mxu0 0
        %5013 = vmatprep.subr.bf16.mxu0 0
        %5014 = vmatpush2.bf16.xpose.msra.mxu0 0
        %5015 = vmatprep.subr.bf16.mxu0 0
        %5016 = vmatpush2.bf16.xpose.msra.mxu0 0
        %5017 = vmatprep.subr.bf16.mxu0 0
        %5018 = vmatpush2.bf16.xpose.msra.mxu0 0
        %5019 = vmatprep.subr.bf16.mxu0 0
        %5020 = vmatpush2.bf16.xpose.msra.mxu0 0
        %5021 = vmatprep.mubr.bf16.mxu0 0
        %5022 = vmatmul.mubr.bf16.gmra.mxu0 %v4984
        %v5023 = vpop.f32.mrf.mxu0
        %v5024 = vadd.f32 0.0, %v5023
        %v5025 = vpop.f32.mrf.mxu0
        %v5026 = vpop.f32.mrf.mxu0
        %v5027 = vpop.f32.mrf.mxu0
        %5028 = vdwg.mxu0
        %v5030 = vsel %vm1539, %v3885, 0
        %v5033 = vsel %vm1539, %v3917, 0
        %5035 = vmatprep.subr.bf16.mxu0 0
        %5036 = vmatpush1.bf16.xpose.msra.mxu0 0
        %5037 = vmatprep.subr.bf16.mxu0 0
        %5038 = vmatpush1.bf16.xpose.msra.mxu0 0
        %5039 = vmatprep.subr.bf16.mxu0 0
        %5040 = vmatpush1.bf16.xpose.msra.mxu0 0
        %5041 = vmatprep.subr.bf16.mxu0 0
        %5042 = vmatpush1.bf16.xpose.msra.mxu0 0
        %5043 = vmatprep.subr.bf16.mxu0 0
        %5044 = vmatpush1.bf16.xpose.msra.mxu0 0
        %5045 = vmatprep.subr.bf16.mxu0 0
        %5046 = vmatpush1.bf16.xpose.msra.mxu0 0
        %5047 = vmatprep.subr.bf16.mxu0 0
        %5048 = vmatpush1.bf16.xpose.msra.mxu0 0
        %5049 = vmatprep.subr.bf16.mxu0 0
        %5050 = vmatpush1.bf16.xpose.msra.mxu0 %v5033
        %5051 = vmatprep.subr.bf16.mxu0 0
        %5052 = vmatpush2.bf16.xpose.msra.mxu0 0
        %5053 = vmatprep.subr.bf16.mxu0 0
        %5054 = vmatpush2.bf16.xpose.msra.mxu0 0
        %5055 = vmatprep.subr.bf16.mxu0 0
        %5056 = vmatpush2.bf16.xpose.msra.mxu0 0
        %5057 = vmatprep.subr.bf16.mxu0 0
        %5058 = vmatpush2.bf16.xpose.msra.mxu0 0
        %5059 = vmatprep.subr.bf16.mxu0 0
        %5060 = vmatpush2.bf16.xpose.msra.mxu0 0
        %5061 = vmatprep.subr.bf16.mxu0 0
        %5062 = vmatpush2.bf16.xpose.msra.mxu0 0
        %5063 = vmatprep.subr.bf16.mxu0 0
        %5064 = vmatpush2.bf16.xpose.msra.mxu0 0
        %5065 = vmatprep.subr.bf16.mxu0 0
        %5066 = vmatpush2.bf16.xpose.msra.mxu0 0
        %5067 = vmatprep.mubr.bf16.mxu0 0
        %5068 = vmatmul.mubr.bf16.gmra.mxu0 %v5030
        %v5069 = vpop.f32.mrf.mxu0
        %v5070 = vadd.f32 0.0, %v5069
        %v5071 = vpop.f32.mrf.mxu0
        %v5072 = vpop.f32.mrf.mxu0
        %v5073 = vpop.f32.mrf.mxu0
        %5074 = vdwg.mxu0
        %v5076 = vsel %vm1539, %v3886, 0
        %v5079 = vsel %vm1539, %v3918, 0
        %5081 = vmatprep.subr.bf16.mxu0 0
        %5082 = vmatpush1.bf16.xpose.msra.mxu0 0
        %5083 = vmatprep.subr.bf16.mxu0 0
        %5084 = vmatpush1.bf16.xpose.msra.mxu0 0
        %5085 = vmatprep.subr.bf16.mxu0 0
        %5086 = vmatpush1.bf16.xpose.msra.mxu0 0
        %5087 = vmatprep.subr.bf16.mxu0 0
        %5088 = vmatpush1.bf16.xpose.msra.mxu0 0
        %5089 = vmatprep.subr.bf16.mxu0 0
        %5090 = vmatpush1.bf16.xpose.msra.mxu0 0
        %5091 = vmatprep.subr.bf16.mxu0 0
        %5092 = vmatpush1.bf16.xpose.msra.mxu0 0
        %5093 = vmatprep.subr.bf16.mxu0 0
        %5094 = vmatpush1.bf16.xpose.msra.mxu0 0
        %5095 = vmatprep.subr.bf16.mxu0 0
        %5096 = vmatpush1.bf16.xpose.msra.mxu0 %v5079
        %5097 = vmatprep.subr.bf16.mxu0 0
        %5098 = vmatpush2.bf16.xpose.msra.mxu0 0
        %5099 = vmatprep.subr.bf16.mxu0 0
        %5100 = vmatpush2.bf16.xpose.msra.mxu0 0
        %5101 = vmatprep.subr.bf16.mxu0 0
        %5102 = vmatpush2.bf16.xpose.msra.mxu0 0
        %5103 = vmatprep.subr.bf16.mxu0 0
        %5104 = vmatpush2.bf16.xpose.msra.mxu0 0
        %5105 = vmatprep.subr.bf16.mxu0 0
        %5106 = vmatpush2.bf16.xpose.msra.mxu0 0
        %5107 = vmatprep.subr.bf16.mxu0 0
        %5108 = vmatpush2.bf16.xpose.msra.mxu0 0
        %5109 = vmatprep.subr.bf16.mxu0 0
        %5110 = vmatpush2.bf16.xpose.msra.mxu0 0
        %5111 = vmatprep.subr.bf16.mxu0 0
        %5112 = vmatpush2.bf16.xpose.msra.mxu0 0
        %5113 = vmatprep.mubr.bf16.mxu0 0
        %5114 = vmatmul.mubr.bf16.gmra.mxu0 %v5076
        %v5115 = vpop.f32.mrf.mxu0
        %v5116 = vadd.f32 0.0, %v5115
        %v5117 = vpop.f32.mrf.mxu0
        %v5118 = vpop.f32.mrf.mxu0
        %v5119 = vpop.f32.mrf.mxu0
        %5120 = vdwg.mxu0
        %v5122 = vsel %vm1539, %v3887, 0
        %v5125 = vsel %vm1539, %v3919, 0
        %5127 = vmatprep.subr.bf16.mxu0 0
        %5128 = vmatpush1.bf16.xpose.msra.mxu0 0
        %5129 = vmatprep.subr.bf16.mxu0 0
        %5130 = vmatpush1.bf16.xpose.msra.mxu0 0
        %5131 = vmatprep.subr.bf16.mxu0 0
        %5132 = vmatpush1.bf16.xpose.msra.mxu0 0
        %5133 = vmatprep.subr.bf16.mxu0 0
        %5134 = vmatpush1.bf16.xpose.msra.mxu0 0
        %5135 = vmatprep.subr.bf16.mxu0 0
        %5136 = vmatpush1.bf16.xpose.msra.mxu0 0
        %5137 = vmatprep.subr.bf16.mxu0 0
        %5138 = vmatpush1.bf16.xpose.msra.mxu0 0
        %5139 = vmatprep.subr.bf16.mxu0 0
        %5140 = vmatpush1.bf16.xpose.msra.mxu0 0
        %5141 = vmatprep.subr.bf16.mxu0 0
        %5142 = vmatpush1.bf16.xpose.msra.mxu0 %v5125
        %5143 = vmatprep.subr.bf16.mxu0 0
        %5144 = vmatpush2.bf16.xpose.msra.mxu0 0
        %5145 = vmatprep.subr.bf16.mxu0 0
        %5146 = vmatpush2.bf16.xpose.msra.mxu0 0
        %5147 = vmatprep.subr.bf16.mxu0 0
        %5148 = vmatpush2.bf16.xpose.msra.mxu0 0
        %5149 = vmatprep.subr.bf16.mxu0 0
        %5150 = vmatpush2.bf16.xpose.msra.mxu0 0
        %5151 = vmatprep.subr.bf16.mxu0 0
        %5152 = vmatpush2.bf16.xpose.msra.mxu0 0
        %5153 = vmatprep.subr.bf16.mxu0 0
        %5154 = vmatpush2.bf16.xpose.msra.mxu0 0
        %5155 = vmatprep.subr.bf16.mxu0 0
        %5156 = vmatpush2.bf16.xpose.msra.mxu0 0
        %5157 = vmatprep.subr.bf16.mxu0 0
        %5158 = vmatpush2.bf16.xpose.msra.mxu0 0
        %5159 = vmatprep.mubr.bf16.mxu0 0
        %5160 = vmatmul.mubr.bf16.gmra.mxu0 %v5122
        %v5161 = vpop.f32.mrf.mxu0
        %v5162 = vadd.f32 0.0, %v5161
        %v5163 = vpop.f32.mrf.mxu0
        %v5164 = vpop.f32.mrf.mxu0
        %v5165 = vpop.f32.mrf.mxu0
        %5166 = vdwg.mxu0
        %v5168 = vsel %vm1539, %v3888, 0
        %v5171 = vsel %vm1539, %v3920, 0
        %5173 = vmatprep.subr.bf16.mxu0 0
        %5174 = vmatpush1.bf16.xpose.msra.mxu0 0
        %5175 = vmatprep.subr.bf16.mxu0 0
        %5176 = vmatpush1.bf16.xpose.msra.mxu0 0
        %5177 = vmatprep.subr.bf16.mxu0 0
        %5178 = vmatpush1.bf16.xpose.msra.mxu0 0
        %5179 = vmatprep.subr.bf16.mxu0 0
        %5180 = vmatpush1.bf16.xpose.msra.mxu0 0
        %5181 = vmatprep.subr.bf16.mxu0 0
        %5182 = vmatpush1.bf16.xpose.msra.mxu0 0
        %5183 = vmatprep.subr.bf16.mxu0 0
        %5184 = vmatpush1.bf16.xpose.msra.mxu0 0
        %5185 = vmatprep.subr.bf16.mxu0 0
        %5186 = vmatpush1.bf16.xpose.msra.mxu0 0
        %5187 = vmatprep.subr.bf16.mxu0 0
        %5188 = vmatpush1.bf16.xpose.msra.mxu0 %v5171
        %5189 = vmatprep.subr.bf16.mxu0 0
        %5190 = vmatpush2.bf16.xpose.msra.mxu0 0
        %5191 = vmatprep.subr.bf16.mxu0 0
        %5192 = vmatpush2.bf16.xpose.msra.mxu0 0
        %5193 = vmatprep.subr.bf16.mxu0 0
        %5194 = vmatpush2.bf16.xpose.msra.mxu0 0
        %5195 = vmatprep.subr.bf16.mxu0 0
        %5196 = vmatpush2.bf16.xpose.msra.mxu0 0
        %5197 = vmatprep.subr.bf16.mxu0 0
        %5198 = vmatpush2.bf16.xpose.msra.mxu0 0
        %5199 = vmatprep.subr.bf16.mxu0 0
        %5200 = vmatpush2.bf16.xpose.msra.mxu0 0
        %5201 = vmatprep.subr.bf16.mxu0 0
        %5202 = vmatpush2.bf16.xpose.msra.mxu0 0
        %5203 = vmatprep.subr.bf16.mxu0 0
        %5204 = vmatpush2.bf16.xpose.msra.mxu0 0
        %5205 = vmatprep.mubr.bf16.mxu0 0
        %5206 = vmatmul.mubr.bf16.gmra.mxu0 %v5168
        %v5207 = vpop.f32.mrf.mxu0
        %v5208 = vadd.f32 0.0, %v5207
        %v5209 = vpop.f32.mrf.mxu0
        %v5210 = vpop.f32.mrf.mxu0
        %v5211 = vpop.f32.mrf.mxu0
        %5212 = vdwg.mxu0
        %v5214 = vsel %vm1539, %v3889, 0
        %v5217 = vsel %vm1539, %v3921, 0
        %5219 = vmatprep.subr.bf16.mxu0 0
        %5220 = vmatpush1.bf16.xpose.msra.mxu0 0
        %5221 = vmatprep.subr.bf16.mxu0 0
        %5222 = vmatpush1.bf16.xpose.msra.mxu0 0
        %5223 = vmatprep.subr.bf16.mxu0 0
        %5224 = vmatpush1.bf16.xpose.msra.mxu0 0
        %5225 = vmatprep.subr.bf16.mxu0 0
        %5226 = vmatpush1.bf16.xpose.msra.mxu0 0
        %5227 = vmatprep.subr.bf16.mxu0 0
        %5228 = vmatpush1.bf16.xpose.msra.mxu0 0
        %5229 = vmatprep.subr.bf16.mxu0 0
        %5230 = vmatpush1.bf16.xpose.msra.mxu0 0
        %5231 = vmatprep.subr.bf16.mxu0 0
        %5232 = vmatpush1.bf16.xpose.msra.mxu0 0
        %5233 = vmatprep.subr.bf16.mxu0 0
        %5234 = vmatpush1.bf16.xpose.msra.mxu0 %v5217
        %5235 = vmatprep.subr.bf16.mxu0 0
        %5236 = vmatpush2.bf16.xpose.msra.mxu0 0
        %5237 = vmatprep.subr.bf16.mxu0 0
        %5238 = vmatpush2.bf16.xpose.msra.mxu0 0
        %5239 = vmatprep.subr.bf16.mxu0 0
        %5240 = vmatpush2.bf16.xpose.msra.mxu0 0
        %5241 = vmatprep.subr.bf16.mxu0 0
        %5242 = vmatpush2.bf16.xpose.msra.mxu0 0
        %5243 = vmatprep.subr.bf16.mxu0 0
        %5244 = vmatpush2.bf16.xpose.msra.mxu0 0
        %5245 = vmatprep.subr.bf16.mxu0 0
        %5246 = vmatpush2.bf16.xpose.msra.mxu0 0
        %5247 = vmatprep.subr.bf16.mxu0 0
        %5248 = vmatpush2.bf16.xpose.msra.mxu0 0
        %5249 = vmatprep.subr.bf16.mxu0 0
        %5250 = vmatpush2.bf16.xpose.msra.mxu0 0
        %5251 = vmatprep.mubr.bf16.mxu0 0
        %5252 = vmatmul.mubr.bf16.gmra.mxu0 %v5214
        %v5253 = vpop.f32.mrf.mxu0
        %v5254 = vadd.f32 0.0, %v5253
        %v5255 = vpop.f32.mrf.mxu0
        %v5256 = vpop.f32.mrf.mxu0
        %v5257 = vpop.f32.mrf.mxu0
        %5258 = vdwg.mxu0
        %v5260 = vsel %vm1539, %v3890, 0
        %v5263 = vsel %vm1539, %v3922, 0
        %5265 = vmatprep.subr.bf16.mxu0 0
        %5266 = vmatpush1.bf16.xpose.msra.mxu0 0
        %5267 = vmatprep.subr.bf16.mxu0 0
        %5268 = vmatpush1.bf16.xpose.msra.mxu0 0
        %5269 = vmatprep.subr.bf16.mxu0 0
        %5270 = vmatpush1.bf16.xpose.msra.mxu0 0
        %5271 = vmatprep.subr.bf16.mxu0 0
        %5272 = vmatpush1.bf16.xpose.msra.mxu0 0
        %5273 = vmatprep.subr.bf16.mxu0 0
        %5274 = vmatpush1.bf16.xpose.msra.mxu0 0
        %5275 = vmatprep.subr.bf16.mxu0 0
        %5276 = vmatpush1.bf16.xpose.msra.mxu0 0
        %5277 = vmatprep.subr.bf16.mxu0 0
        %5278 = vmatpush1.bf16.xpose.msra.mxu0 0
        %5279 = vmatprep.subr.bf16.mxu0 0
        %5280 = vmatpush1.bf16.xpose.msra.mxu0 %v5263
        %5281 = vmatprep.subr.bf16.mxu0 0
        %5282 = vmatpush2.bf16.xpose.msra.mxu0 0
        %5283 = vmatprep.subr.bf16.mxu0 0
        %5284 = vmatpush2.bf16.xpose.msra.mxu0 0
        %5285 = vmatprep.subr.bf16.mxu0 0
        %5286 = vmatpush2.bf16.xpose.msra.mxu0 0
        %5287 = vmatprep.subr.bf16.mxu0 0
        %5288 = vmatpush2.bf16.xpose.msra.mxu0 0
        %5289 = vmatprep.subr.bf16.mxu0 0
        %5290 = vmatpush2.bf16.xpose.msra.mxu0 0
        %5291 = vmatprep.subr.bf16.mxu0 0
        %5292 = vmatpush2.bf16.xpose.msra.mxu0 0
        %5293 = vmatprep.subr.bf16.mxu0 0
        %5294 = vmatpush2.bf16.xpose.msra.mxu0 0
        %5295 = vmatprep.subr.bf16.mxu0 0
        %5296 = vmatpush2.bf16.xpose.msra.mxu0 0
        %5297 = vmatprep.mubr.bf16.mxu0 0
        %5298 = vmatmul.mubr.bf16.gmra.mxu0 %v5260
        %v5299 = vpop.f32.mrf.mxu0
        %v5300 = vadd.f32 0.0, %v5299
        %v5301 = vpop.f32.mrf.mxu0
        %v5302 = vpop.f32.mrf.mxu0
        %v5303 = vpop.f32.mrf.mxu0
        %5304 = vdwg.mxu0
        %v5306 = vsel %vm1539, %v3891, 0
        %v5309 = vsel %vm1539, %v3923, 0
        %5311 = vmatprep.subr.bf16.mxu0 0
        %5312 = vmatpush1.bf16.xpose.msra.mxu0 0
        %5313 = vmatprep.subr.bf16.mxu0 0
        %5314 = vmatpush1.bf16.xpose.msra.mxu0 0
        %5315 = vmatprep.subr.bf16.mxu0 0
        %5316 = vmatpush1.bf16.xpose.msra.mxu0 0
        %5317 = vmatprep.subr.bf16.mxu0 0
        %5318 = vmatpush1.bf16.xpose.msra.mxu0 0
        %5319 = vmatprep.subr.bf16.mxu0 0
        %5320 = vmatpush1.bf16.xpose.msra.mxu0 0
        %5321 = vmatprep.subr.bf16.mxu0 0
        %5322 = vmatpush1.bf16.xpose.msra.mxu0 0
        %5323 = vmatprep.subr.bf16.mxu0 0
        %5324 = vmatpush1.bf16.xpose.msra.mxu0 0
        %5325 = vmatprep.subr.bf16.mxu0 0
        %5326 = vmatpush1.bf16.xpose.msra.mxu0 %v5309
        %5327 = vmatprep.subr.bf16.mxu0 0
        %5328 = vmatpush2.bf16.xpose.msra.mxu0 0
        %5329 = vmatprep.subr.bf16.mxu0 0
        %5330 = vmatpush2.bf16.xpose.msra.mxu0 0
        %5331 = vmatprep.subr.bf16.mxu0 0
        %5332 = vmatpush2.bf16.xpose.msra.mxu0 0
        %5333 = vmatprep.subr.bf16.mxu0 0
        %5334 = vmatpush2.bf16.xpose.msra.mxu0 0
        %5335 = vmatprep.subr.bf16.mxu0 0
        %5336 = vmatpush2.bf16.xpose.msra.mxu0 0
        %5337 = vmatprep.subr.bf16.mxu0 0
        %5338 = vmatpush2.bf16.xpose.msra.mxu0 0
        %5339 = vmatprep.subr.bf16.mxu0 0
        %5340 = vmatpush2.bf16.xpose.msra.mxu0 0
        %5341 = vmatprep.subr.bf16.mxu0 0
        %5342 = vmatpush2.bf16.xpose.msra.mxu0 0
        %5343 = vmatprep.mubr.bf16.mxu0 0
        %5344 = vmatmul.mubr.bf16.gmra.mxu0 %v5306
        %v5345 = vpop.f32.mrf.mxu0
        %v5346 = vadd.f32 0.0, %v5345
        %v5347 = vpop.f32.mrf.mxu0
        %v5348 = vpop.f32.mrf.mxu0
        %v5349 = vpop.f32.mrf.mxu0
        %5350 = vdwg.mxu0
        %v5352 = vsel %vm1539, %v3892, 0
        %v5355 = vsel %vm1539, %v3924, 0
        %5357 = vmatprep.subr.bf16.mxu0 0
        %5358 = vmatpush1.bf16.xpose.msra.mxu0 0
        %5359 = vmatprep.subr.bf16.mxu0 0
        %5360 = vmatpush1.bf16.xpose.msra.mxu0 0
        %5361 = vmatprep.subr.bf16.mxu0 0
        %5362 = vmatpush1.bf16.xpose.msra.mxu0 0
        %5363 = vmatprep.subr.bf16.mxu0 0
        %5364 = vmatpush1.bf16.xpose.msra.mxu0 0
        %5365 = vmatprep.subr.bf16.mxu0 0
        %5366 = vmatpush1.bf16.xpose.msra.mxu0 0
        %5367 = vmatprep.subr.bf16.mxu0 0
        %5368 = vmatpush1.bf16.xpose.msra.mxu0 0
        %5369 = vmatprep.subr.bf16.mxu0 0
        %5370 = vmatpush1.bf16.xpose.msra.mxu0 0
        %5371 = vmatprep.subr.bf16.mxu0 0
        %5372 = vmatpush1.bf16.xpose.msra.mxu0 %v5355
        %5373 = vmatprep.subr.bf16.mxu0 0
        %5374 = vmatpush2.bf16.xpose.msra.mxu0 0
        %5375 = vmatprep.subr.bf16.mxu0 0
        %5376 = vmatpush2.bf16.xpose.msra.mxu0 0
        %5377 = vmatprep.subr.bf16.mxu0 0
        %5378 = vmatpush2.bf16.xpose.msra.mxu0 0
        %5379 = vmatprep.subr.bf16.mxu0 0
        %5380 = vmatpush2.bf16.xpose.msra.mxu0 0
        %5381 = vmatprep.subr.bf16.mxu0 0
        %5382 = vmatpush2.bf16.xpose.msra.mxu0 0
        %5383 = vmatprep.subr.bf16.mxu0 0
        %5384 = vmatpush2.bf16.xpose.msra.mxu0 0
        %5385 = vmatprep.subr.bf16.mxu0 0
        %5386 = vmatpush2.bf16.xpose.msra.mxu0 0
        %5387 = vmatprep.subr.bf16.mxu0 0
        %5388 = vmatpush2.bf16.xpose.msra.mxu0 0
        %5389 = vmatprep.mubr.bf16.mxu0 0
        %5390 = vmatmul.mubr.bf16.gmra.mxu0 %v5352
        %v5391 = vpop.f32.mrf.mxu0
        %v5392 = vadd.f32 0.0, %v5391
        %v5393 = vpop.f32.mrf.mxu0
        %v5394 = vpop.f32.mrf.mxu0
        %v5395 = vpop.f32.mrf.mxu0
        %5396 = vdwg.mxu0
        %5397 = vxpose.xlu0.b32.start [1/16] %v3966, 128
        %5398 = vxpose.xlu0.b32.cont [2/16] %v4012, 128
        %5399 = vxpose.xlu0.b32.cont [3/16] %v4058, 128
        %5400 = vxpose.xlu0.b32.cont [4/16] %v4104, 128
        %5401 = vxpose.xlu0.b32.cont [5/16] 0.0, 128
        %5402 = vxpose.xlu0.b32.cont [6/16] 0.0, 128
        %5403 = vxpose.xlu0.b32.cont [7/16] 0.0, 128
        %5404 = vxpose.xlu0.b32.cont [8/16] 0.0, 128
        %5405 = vxpose.xlu0.b32.cont [9/16] 0.0, 128
        %5406 = vxpose.xlu0.b32.cont [10/16] 0.0, 128
        %5407 = vxpose.xlu0.b32.cont [11/16] 0.0, 128
        %5408 = vxpose.xlu0.b32.cont [12/16] 0.0, 128
        %5409 = vxpose.xlu0.b32.cont [13/16] 0.0, 128
        %5410 = vxpose.xlu0.b32.cont [14/16] 0.0, 128
        %5411 = vxpose.xlu0.b32.cont [15/16] 0.0, 128
        %5412 = vxpose.xlu0.b32.end [16/16] 0.0, 128
        %v5413 = vpop.trf.xlu0
        %v5414 = vpop.trf.xlu0
        %v5415 = vpop.trf.xlu0
        %v5416 = vpop.trf.xlu0
        %v5417 = vpop.trf.xlu0
        %v5418 = vpop.trf.xlu0
        %v5419 = vpop.trf.xlu0
        %v5420 = vpop.trf.xlu0
        %v5421 = vpop.trf.xlu0
        %v5422 = vpop.trf.xlu0
        %v5423 = vpop.trf.xlu0
        %v5424 = vpop.trf.xlu0
        %v5425 = vpop.trf.xlu0
        %v5426 = vpop.trf.xlu0
        %v5427 = vpop.trf.xlu0
        %v5428 = vpop.trf.xlu0
        %5429 = vxpose.xlu0.b32.start [1/16] %v4150, 128
        %5430 = vxpose.xlu0.b32.cont [2/16] %v4196, 128
        %5431 = vxpose.xlu0.b32.cont [3/16] %v4242, 128
        %5432 = vxpose.xlu0.b32.cont [4/16] %v4288, 128
        %5433 = vxpose.xlu0.b32.cont [5/16] 0.0, 128
        %5434 = vxpose.xlu0.b32.cont [6/16] 0.0, 128
        %5435 = vxpose.xlu0.b32.cont [7/16] 0.0, 128
        %5436 = vxpose.xlu0.b32.cont [8/16] 0.0, 128
        %5437 = vxpose.xlu0.b32.cont [9/16] 0.0, 128
        %5438 = vxpose.xlu0.b32.cont [10/16] 0.0, 128
        %5439 = vxpose.xlu0.b32.cont [11/16] 0.0, 128
        %5440 = vxpose.xlu0.b32.cont [12/16] 0.0, 128
        %5441 = vxpose.xlu0.b32.cont [13/16] 0.0, 128
        %5442 = vxpose.xlu0.b32.cont [14/16] 0.0, 128
        %5443 = vxpose.xlu0.b32.cont [15/16] 0.0, 128
        %5444 = vxpose.xlu0.b32.end [16/16] 0.0, 128
        %v5445 = vpop.trf.xlu0
        %v5446 = vpop.trf.xlu0
        %v5447 = vpop.trf.xlu0
        %v5448 = vpop.trf.xlu0
        %v5449 = vpop.trf.xlu0
        %v5450 = vpop.trf.xlu0
        %v5451 = vpop.trf.xlu0
        %v5452 = vpop.trf.xlu0
        %v5453 = vpop.trf.xlu0
        %v5454 = vpop.trf.xlu0
        %v5455 = vpop.trf.xlu0
        %v5456 = vpop.trf.xlu0
        %v5457 = vpop.trf.xlu0
        %v5458 = vpop.trf.xlu0
        %v5459 = vpop.trf.xlu0
        %v5460 = vpop.trf.xlu0
        %5461 = vxpose.xlu0.b32.start [1/16] %v4334, 128
        %5462 = vxpose.xlu0.b32.cont [2/16] %v4380, 128
        %5463 = vxpose.xlu0.b32.cont [3/16] %v4426, 128
        %5464 = vxpose.xlu0.b32.cont [4/16] %v4472, 128
        %5465 = vxpose.xlu0.b32.cont [5/16] 0.0, 128
        %5466 = vxpose.xlu0.b32.cont [6/16] 0.0, 128
        %5467 = vxpose.xlu0.b32.cont [7/16] 0.0, 128
        %5468 = vxpose.xlu0.b32.cont [8/16] 0.0, 128
        %5469 = vxpose.xlu0.b32.cont [9/16] 0.0, 128
        %5470 = vxpose.xlu0.b32.cont [10/16] 0.0, 128
        %5471 = vxpose.xlu0.b32.cont [11/16] 0.0, 128
        %5472 = vxpose.xlu0.b32.cont [12/16] 0.0, 128
        %5473 = vxpose.xlu0.b32.cont [13/16] 0.0, 128
        %5474 = vxpose.xlu0.b32.cont [14/16] 0.0, 128
        %5475 = vxpose.xlu0.b32.cont [15/16] 0.0, 128
        %5476 = vxpose.xlu0.b32.end [16/16] 0.0, 128
        %v5477 = vpop.trf.xlu0
        %v5478 = vpop.trf.xlu0
        %v5479 = vpop.trf.xlu0
        %v5480 = vpop.trf.xlu0
        %v5481 = vpop.trf.xlu0
        %v5482 = vpop.trf.xlu0
        %v5483 = vpop.trf.xlu0
        %v5484 = vpop.trf.xlu0
        %v5485 = vpop.trf.xlu0
        %v5486 = vpop.trf.xlu0
        %v5487 = vpop.trf.xlu0
        %v5488 = vpop.trf.xlu0
        %v5489 = vpop.trf.xlu0
        %v5490 = vpop.trf.xlu0
        %v5491 = vpop.trf.xlu0
        %v5492 = vpop.trf.xlu0
        %5493 = vxpose.xlu0.b32.start [1/16] %v4518, 128
        %5494 = vxpose.xlu0.b32.cont [2/16] %v4564, 128
        %5495 = vxpose.xlu0.b32.cont [3/16] %v4610, 128
        %5496 = vxpose.xlu0.b32.cont [4/16] %v4656, 128
        %5497 = vxpose.xlu0.b32.cont [5/16] 0.0, 128
        %5498 = vxpose.xlu0.b32.cont [6/16] 0.0, 128
        %5499 = vxpose.xlu0.b32.cont [7/16] 0.0, 128
        %5500 = vxpose.xlu0.b32.cont [8/16] 0.0, 128
        %5501 = vxpose.xlu0.b32.cont [9/16] 0.0, 128
        %5502 = vxpose.xlu0.b32.cont [10/16] 0.0, 128
        %5503 = vxpose.xlu0.b32.cont [11/16] 0.0, 128
        %5504 = vxpose.xlu0.b32.cont [12/16] 0.0, 128
        %5505 = vxpose.xlu0.b32.cont [13/16] 0.0, 128
        %5506 = vxpose.xlu0.b32.cont [14/16] 0.0, 128
        %5507 = vxpose.xlu0.b32.cont [15/16] 0.0, 128
        %5508 = vxpose.xlu0.b32.end [16/16] 0.0, 128
        %v5509 = vpop.trf.xlu0
        %v5510 = vpop.trf.xlu0
        %v5511 = vpop.trf.xlu0
        %v5512 = vpop.trf.xlu0
        %v5513 = vpop.trf.xlu0
        %v5514 = vpop.trf.xlu0
        %v5515 = vpop.trf.xlu0
        %v5516 = vpop.trf.xlu0
        %v5517 = vpop.trf.xlu0
        %v5518 = vpop.trf.xlu0
        %v5519 = vpop.trf.xlu0
        %v5520 = vpop.trf.xlu0
        %v5521 = vpop.trf.xlu0
        %v5522 = vpop.trf.xlu0
        %v5523 = vpop.trf.xlu0
        %v5524 = vpop.trf.xlu0
        %5525 = vxpose.xlu0.b32.start [1/16] %v4702, 128
        %5526 = vxpose.xlu0.b32.cont [2/16] %v4748, 128
        %5527 = vxpose.xlu0.b32.cont [3/16] %v4794, 128
        %5528 = vxpose.xlu0.b32.cont [4/16] %v4840, 128
        %5529 = vxpose.xlu0.b32.cont [5/16] 0.0, 128
        %5530 = vxpose.xlu0.b32.cont [6/16] 0.0, 128
        %5531 = vxpose.xlu0.b32.cont [7/16] 0.0, 128
        %5532 = vxpose.xlu0.b32.cont [8/16] 0.0, 128
        %5533 = vxpose.xlu0.b32.cont [9/16] 0.0, 128
        %5534 = vxpose.xlu0.b32.cont [10/16] 0.0, 128
        %5535 = vxpose.xlu0.b32.cont [11/16] 0.0, 128
        %5536 = vxpose.xlu0.b32.cont [12/16] 0.0, 128
        %5537 = vxpose.xlu0.b32.cont [13/16] 0.0, 128
        %5538 = vxpose.xlu0.b32.cont [14/16] 0.0, 128
        %5539 = vxpose.xlu0.b32.cont [15/16] 0.0, 128
        %5540 = vxpose.xlu0.b32.end [16/16] 0.0, 128
        %v5541 = vpop.trf.xlu0
        %v5542 = vpop.trf.xlu0
        %v5543 = vpop.trf.xlu0
        %v5544 = vpop.trf.xlu0
        %v5545 = vpop.trf.xlu0
        %v5546 = vpop.trf.xlu0
        %v5547 = vpop.trf.xlu0
        %v5548 = vpop.trf.xlu0
        %v5549 = vpop.trf.xlu0
        %v5550 = vpop.trf.xlu0
        %v5551 = vpop.trf.xlu0
        %v5552 = vpop.trf.xlu0
        %v5553 = vpop.trf.xlu0
        %v5554 = vpop.trf.xlu0
        %v5555 = vpop.trf.xlu0
        %v5556 = vpop.trf.xlu0
        %5557 = vxpose.xlu0.b32.start [1/16] %v4886, 128
        %5558 = vxpose.xlu0.b32.cont [2/16] %v4932, 128
        %5559 = vxpose.xlu0.b32.cont [3/16] %v4978, 128
        %5560 = vxpose.xlu0.b32.cont [4/16] %v5024, 128
        %5561 = vxpose.xlu0.b32.cont [5/16] 0.0, 128
        %5562 = vxpose.xlu0.b32.cont [6/16] 0.0, 128
        %5563 = vxpose.xlu0.b32.cont [7/16] 0.0, 128
        %5564 = vxpose.xlu0.b32.cont [8/16] 0.0, 128
        %5565 = vxpose.xlu0.b32.cont [9/16] 0.0, 128
        %5566 = vxpose.xlu0.b32.cont [10/16] 0.0, 128
        %5567 = vxpose.xlu0.b32.cont [11/16] 0.0, 128
        %5568 = vxpose.xlu0.b32.cont [12/16] 0.0, 128
        %5569 = vxpose.xlu0.b32.cont [13/16] 0.0, 128
        %5570 = vxpose.xlu0.b32.cont [14/16] 0.0, 128
        %5571 = vxpose.xlu0.b32.cont [15/16] 0.0, 128
        %5572 = vxpose.xlu0.b32.end [16/16] 0.0, 128
        %v5573 = vpop.trf.xlu0
        %v5574 = vpop.trf.xlu0
        %v5575 = vpop.trf.xlu0
        %v5576 = vpop.trf.xlu0
        %v5577 = vpop.trf.xlu0
        %v5578 = vpop.trf.xlu0
        %v5579 = vpop.trf.xlu0
        %v5580 = vpop.trf.xlu0
        %v5581 = vpop.trf.xlu0
        %v5582 = vpop.trf.xlu0
        %v5583 = vpop.trf.xlu0
        %v5584 = vpop.trf.xlu0
        %v5585 = vpop.trf.xlu0
        %v5586 = vpop.trf.xlu0
        %v5587 = vpop.trf.xlu0
        %v5588 = vpop.trf.xlu0
        %5589 = vxpose.xlu0.b32.start [1/16] %v5070, 128
        %5590 = vxpose.xlu0.b32.cont [2/16] %v5116, 128
        %5591 = vxpose.xlu0.b32.cont [3/16] %v5162, 128
        %5592 = vxpose.xlu0.b32.cont [4/16] %v5208, 128
        %5593 = vxpose.xlu0.b32.cont [5/16] 0.0, 128
        %5594 = vxpose.xlu0.b32.cont [6/16] 0.0, 128
        %5595 = vxpose.xlu0.b32.cont [7/16] 0.0, 128
        %5596 = vxpose.xlu0.b32.cont [8/16] 0.0, 128
        %5597 = vxpose.xlu0.b32.cont [9/16] 0.0, 128
        %5598 = vxpose.xlu0.b32.cont [10/16] 0.0, 128
        %5599 = vxpose.xlu0.b32.cont [11/16] 0.0, 128
        %5600 = vxpose.xlu0.b32.cont [12/16] 0.0, 128
        %5601 = vxpose.xlu0.b32.cont [13/16] 0.0, 128
        %5602 = vxpose.xlu0.b32.cont [14/16] 0.0, 128
        %5603 = vxpose.xlu0.b32.cont [15/16] 0.0, 128
        %5604 = vxpose.xlu0.b32.end [16/16] 0.0, 128
        %v5605 = vpop.trf.xlu0
        %v5606 = vpop.trf.xlu0
        %v5607 = vpop.trf.xlu0
        %v5608 = vpop.trf.xlu0
        %v5609 = vpop.trf.xlu0
        %v5610 = vpop.trf.xlu0
        %v5611 = vpop.trf.xlu0
        %v5612 = vpop.trf.xlu0
        %v5613 = vpop.trf.xlu0
        %v5614 = vpop.trf.xlu0
        %v5615 = vpop.trf.xlu0
        %v5616 = vpop.trf.xlu0
        %v5617 = vpop.trf.xlu0
        %v5618 = vpop.trf.xlu0
        %v5619 = vpop.trf.xlu0
        %v5620 = vpop.trf.xlu0
        %5621 = vxpose.xlu0.b32.start [1/16] %v5254, 128
        %5622 = vxpose.xlu0.b32.cont [2/16] %v5300, 128
        %5623 = vxpose.xlu0.b32.cont [3/16] %v5346, 128
        %5624 = vxpose.xlu0.b32.cont [4/16] %v5392, 128
        %5625 = vxpose.xlu0.b32.cont [5/16] 0.0, 128
        %5626 = vxpose.xlu0.b32.cont [6/16] 0.0, 128
        %5627 = vxpose.xlu0.b32.cont [7/16] 0.0, 128
        %5628 = vxpose.xlu0.b32.cont [8/16] 0.0, 128
        %5629 = vxpose.xlu0.b32.cont [9/16] 0.0, 128
        %5630 = vxpose.xlu0.b32.cont [10/16] 0.0, 128
        %5631 = vxpose.xlu0.b32.cont [11/16] 0.0, 128
        %5632 = vxpose.xlu0.b32.cont [12/16] 0.0, 128
        %5633 = vxpose.xlu0.b32.cont [13/16] 0.0, 128
        %5634 = vxpose.xlu0.b32.cont [14/16] 0.0, 128
        %5635 = vxpose.xlu0.b32.cont [15/16] 0.0, 128
        %5636 = vxpose.xlu0.b32.end [16/16] 0.0, 128
        %v5637 = vpop.trf.xlu0
        %v5638 = vpop.trf.xlu0
        %v5639 = vpop.trf.xlu0
        %v5640 = vpop.trf.xlu0
        %v5641 = vpop.trf.xlu0
        %v5642 = vpop.trf.xlu0
        %v5643 = vpop.trf.xlu0
        %v5644 = vpop.trf.xlu0
        %v5645 = vpop.trf.xlu0
        %v5646 = vpop.trf.xlu0
        %v5647 = vpop.trf.xlu0
        %v5648 = vpop.trf.xlu0
        %v5649 = vpop.trf.xlu0
        %v5650 = vpop.trf.xlu0
        %v5651 = vpop.trf.xlu0
        %v5652 = vpop.trf.xlu0
        %v5653 = vpack.c.bf16 %v5445, %v5413
        %v5654 = vpack.c.bf16 %v5509, %v5477
        %v5655 = vpack.c.bf16 %v5573, %v5541
        %v5656 = vpack.c.bf16 %v5637, %v5605
        %v5657 = vld [vmem:[%s872] sm:$0xf]
        %v5658 = vld [vmem:[%s872 + $0x4] sm:$0xf]
        %v5659 = vld [vmem:[%s872 + $0x8] sm:$0xf]
        %v5660 = vld [vmem:[%s872 + $0xc] sm:$0xf]
        %v5661 = vld [vmem:[%s741] sm:$0x1]
        %v5663 = vlaneseq
        %v5664 = vshrl.u32 %v5663, 7
        %v5665 = vsub.s32 0, %v5664
        %v5666 = vrot.slane %v5661, %v5665
        %v5672 = vunpack.c.l.b16 %v5657
        %v5673 = vunpack.c.l.b16 %v5658
        %v5674 = vunpack.c.l.b16 %v5659
        %v5675 = vunpack.c.l.b16 %v5660
        %v5676 = vpack.c.b16 %v5673, %v5672
        %v5677 = vpack.c.b16 %v5675, %v5674
        %v5681 = vsel %vm932, %v5653, 0
        %v5684 = vsel %vm932, %v5654, 0
        %v5687 = vsel %vm932, %v5655, 0
        %v5690 = vsel %vm932, %v5656, 0
        %5692 = vmatprep.subr.bf16.mxu0 0
        %5693 = vmatpush1.bf16.msra.mxu0 0
        %5694 = vmatprep.subr.bf16.mxu0 0
        %5695 = vmatpush1.bf16.msra.mxu0 0
        %5696 = vmatprep.subr.bf16.mxu0 0
        %5697 = vmatpush1.bf16.msra.mxu0 0
        %5698 = vmatprep.subr.bf16.mxu0 0
        %5699 = vmatpush1.bf16.msra.mxu0 0
        %5700 = vmatprep.subr.bf16.mxu0 0
        %5701 = vmatpush1.bf16.msra.mxu0 0
        %5702 = vmatprep.subr.bf16.mxu0 0
        %5703 = vmatpush1.bf16.msra.mxu0 0
        %5704 = vmatprep.subr.bf16.mxu0 0
        %5705 = vmatpush1.bf16.msra.mxu0 %v5677
        %5706 = vmatprep.subr.bf16.mxu0 0
        %5707 = vmatpush1.bf16.msra.mxu0 %v5676
        %5708 = vmatprep.subr.bf16.mxu0 0
        %5709 = vmatpush2.bf16.msra.mxu0 0
        %5710 = vmatprep.subr.bf16.mxu0 0
        %5711 = vmatpush2.bf16.msra.mxu0 0
        %5712 = vmatprep.subr.bf16.mxu0 0
        %5713 = vmatpush2.bf16.msra.mxu0 0
        %5714 = vmatprep.subr.bf16.mxu0 0
        %5715 = vmatpush2.bf16.msra.mxu0 0
        %5716 = vmatprep.subr.bf16.mxu0 0
        %5717 = vmatpush2.bf16.msra.mxu0 0
        %5718 = vmatprep.subr.bf16.mxu0 0
        %5719 = vmatpush2.bf16.msra.mxu0 0
        %5720 = vmatprep.subr.bf16.mxu0 0
        %5721 = vmatpush2.bf16.msra.mxu0 0
        %5722 = vmatprep.subr.bf16.mxu0 0
        %5723 = vmatpush2.bf16.msra.mxu0 0
        %5724 = vmatprep.mubr.bf16.mxu0 0
        %5725 = vmatmul.mubr.bf16.gmra.mxu0 %v5681
        %v5726 = vpop.f32.mrf.mxu0
        %v5727 = vadd.f32 %v5666, %v5726
        %v5728 = vpop.f32.mrf.mxu0
        %v5729 = vpop.f32.mrf.mxu0
        %v5730 = vadd.f32 %v5666, %v5729
        %v5731 = vpop.f32.mrf.mxu0
        %5732 = vmatprep.mubr.bf16.mxu0 0
        %5733 = vmatmul.mubr.bf16.gmra.mxu0 %v5684
        %v5734 = vpop.f32.mrf.mxu0
        %v5735 = vadd.f32 %v5666, %v5734
        %v5736 = vpop.f32.mrf.mxu0
        %v5737 = vpop.f32.mrf.mxu0
        %v5738 = vadd.f32 %v5666, %v5737
        %v5739 = vpop.f32.mrf.mxu0
        %5740 = vmatprep.mubr.bf16.mxu0 0
        %5741 = vmatmul.mubr.bf16.gmra.mxu0 %v5687
        %v5742 = vpop.f32.mrf.mxu0
        %v5743 = vadd.f32 %v5666, %v5742
        %v5744 = vpop.f32.mrf.mxu0
        %v5745 = vpop.f32.mrf.mxu0
        %v5746 = vadd.f32 %v5666, %v5745
        %v5747 = vpop.f32.mrf.mxu0
        %5748 = vmatprep.mubr.bf16.mxu0 0
        %5749 = vmatmul.mubr.bf16.gmra.mxu0 %v5690
        %v5750 = vpop.f32.mrf.mxu0
        %v5751 = vadd.f32 %v5666, %v5750
        %v5752 = vpop.f32.mrf.mxu0
        %v5753 = vpop.f32.mrf.mxu0
        %v5754 = vadd.f32 %v5666, %v5753
        %v5755 = vpop.f32.mrf.mxu0
        %5756 = vdwg.mxu0
        %v5757 = vadd.f32 %v922, %v5727
        %v5758 = vadd.f32 %v923, %v5730
        %v5759 = vadd.f32 %v924, %v5735
        %v5760 = vadd.f32 %v925, %v5738
        %v5761 = vadd.f32 %v926, %v5743
        %v5762 = vadd.f32 %v927, %v5746
        %v5763 = vadd.f32 %v928, %v5751
        %v5764 = vadd.f32 %v929, %v5754
        %v5765 = vld [vmem:[%s749] sm:$0x1]
        %v5766 = vld [vmem:[%s875] sm:$0x1]
        %v5767 = vsel %vm932, %v5757, 0.0
        %5768 = vadd.xlane.f32.xlu0 %v5767
        %v5769 = vpop.xlane.xlu0 %5768
        %v5770 = vsel %vm932, %v5758, 0.0
        %5771 = vadd.xlane.f32.xlu0 %v5770
        %v5772 = vpop.xlane.xlu0 %5771
        %v5773 = vsel %vm932, %v5759, 0.0
        %5774 = vadd.xlane.f32.xlu0 %v5773
        %v5775 = vpop.xlane.xlu0 %5774
        %v5776 = vsel %vm932, %v5760, 0.0
        %5777 = vadd.xlane.f32.xlu0 %v5776
        %v5778 = vpop.xlane.xlu0 %5777
        %v5779 = vsel %vm932, %v5761, 0.0
        %5780 = vadd.xlane.f32.xlu0 %v5779
        %v5781 = vpop.xlane.xlu0 %5780
        %v5782 = vsel %vm932, %v5762, 0.0
        %5783 = vadd.xlane.f32.xlu0 %v5782
        %v5784 = vpop.xlane.xlu0 %5783
        %v5785 = vsel %vm932, %v5763, 0.0
        %5786 = vadd.xlane.f32.xlu0 %v5785
        %v5787 = vpop.xlane.xlu0 %5786
        %v5788 = vsel %vm932, %v5764, 0.0
        %5789 = vadd.xlane.f32.xlu0 %v5788
        %v5790 = vpop.xlane.xlu0 %5789
        %v5791 = vmul.f32 %v5769, %v957
        %v5792 = vmul.f32 %v5772, %v957
        %v5793 = vmul.f32 %v5775, %v957
        %v5794 = vmul.f32 %v5778, %v957
        %v5795 = vmul.f32 %v5781, %v957
        %v5796 = vmul.f32 %v5784, %v957
        %v5797 = vmul.f32 %v5787, %v957
        %v5798 = vmul.f32 %v5790, %v957
        %v5799 = vsub.f32 %v5757, %v5791
        %v5800 = vsub.f32 %v5758, %v5792
        %v5801 = vsub.f32 %v5759, %v5793
        %v5802 = vsub.f32 %v5760, %v5794
        %v5803 = vsub.f32 %v5761, %v5795
        %v5804 = vsub.f32 %v5762, %v5796
        %v5805 = vsub.f32 %v5763, %v5797
        %v5806 = vsub.f32 %v5764, %v5798
        %v5807 = vmul.f32 %v5799, %v5799
        %v5808 = vmul.f32 %v5800, %v5800
        %v5809 = vmul.f32 %v5801, %v5801
        %v5810 = vmul.f32 %v5802, %v5802
        %v5811 = vmul.f32 %v5803, %v5803
        %v5812 = vmul.f32 %v5804, %v5804
        %v5813 = vmul.f32 %v5805, %v5805
        %v5814 = vmul.f32 %v5806, %v5806
        %v5815 = vsel %vm932, %v5807, 0.0
        %5816 = vadd.xlane.f32.xlu0 %v5815
        %v5817 = vpop.xlane.xlu0 %5816
        %v5818 = vsel %vm932, %v5808, 0.0
        %5819 = vadd.xlane.f32.xlu0 %v5818
        %v5820 = vpop.xlane.xlu0 %5819
        %v5821 = vsel %vm932, %v5809, 0.0
        %5822 = vadd.xlane.f32.xlu0 %v5821
        %v5823 = vpop.xlane.xlu0 %5822
        %v5824 = vsel %vm932, %v5810, 0.0
        %5825 = vadd.xlane.f32.xlu0 %v5824
        %v5826 = vpop.xlane.xlu0 %5825
        %v5827 = vsel %vm932, %v5811, 0.0
        %5828 = vadd.xlane.f32.xlu0 %v5827
        %v5829 = vpop.xlane.xlu0 %5828
        %v5830 = vsel %vm932, %v5812, 0.0
        %5831 = vadd.xlane.f32.xlu0 %v5830
        %v5832 = vpop.xlane.xlu0 %5831
        %v5833 = vsel %vm932, %v5813, 0.0
        %5834 = vadd.xlane.f32.xlu0 %v5833
        %v5835 = vpop.xlane.xlu0 %5834
        %v5836 = vsel %vm932, %v5814, 0.0
        %5837 = vadd.xlane.f32.xlu0 %v5836
        %v5838 = vpop.xlane.xlu0 %5837
        %v5839 = vmul.f32 %v5817, %v957
        %v5840 = vmul.f32 %v5820, %v957
        %v5841 = vmul.f32 %v5823, %v957
        %v5842 = vmul.f32 %v5826, %v957
        %v5843 = vmul.f32 %v5829, %v957
        %v5844 = vmul.f32 %v5832, %v957
        %v5845 = vmul.f32 %v5835, %v957
        %v5846 = vmul.f32 %v5838, %v957
        %v5847 = vadd.f32 %v5839, 1e-05
        %v5848 = vadd.f32 %v5840, 1e-05
        %v5849 = vadd.f32 %v5841, 1e-05
        %v5850 = vadd.f32 %v5842, 1e-05
        %v5851 = vadd.f32 %v5843, 1e-05
        %v5852 = vadd.f32 %v5844, 1e-05
        %v5853 = vadd.f32 %v5845, 1e-05
        %v5854 = vadd.f32 %v5846, 1e-05
        %v5855 = vrsqrt.pop %v5847
        %v5856 = vrsqrt.pop %v5848
        %v5857 = vrsqrt.pop %v5849
        %v5858 = vrsqrt.pop %v5850
        %v5859 = vrsqrt.pop %v5851
        %v5860 = vrsqrt.pop %v5852
        %v5861 = vrsqrt.pop %v5853
        %v5862 = vrsqrt.pop %v5854
        %v5863 = vmul.f32 %v5799, %v5855
        %v5864 = vmul.f32 %v5800, %v5856
        %v5865 = vmul.f32 %v5801, %v5857
        %v5866 = vmul.f32 %v5802, %v5858
        %v5867 = vmul.f32 %v5803, %v5859
        %v5868 = vmul.f32 %v5804, %v5860
        %v5869 = vmul.f32 %v5805, %v5861
        %v5870 = vmul.f32 %v5806, %v5862
        %v5872 = vlaneseq
        %v5873 = vshrl.u32 %v5872, 7
        %v5874 = vsub.s32 0, %v5873
        %v5875 = vrot.slane %v5765, %v5874
        %v5877 = vmul.f32 %v5863, %v5875
        %v5878 = vmul.f32 %v5864, %v5875
        %v5879 = vmul.f32 %v5865, %v5875
        %v5880 = vmul.f32 %v5866, %v5875
        %v5881 = vmul.f32 %v5867, %v5875
        %v5882 = vmul.f32 %v5868, %v5875
        %v5883 = vmul.f32 %v5869, %v5875
        %v5884 = vmul.f32 %v5870, %v5875
        %v5886 = vlaneseq
        %v5887 = vshrl.u32 %v5886, 7
        %v5888 = vsub.s32 0, %v5887
        %v5889 = vrot.slane %v5766, %v5888
        %v5891 = vadd.f32 %v5877, %v5889
        %v5892 = vadd.f32 %v5878, %v5889
        %v5893 = vadd.f32 %v5879, %v5889
        %v5894 = vadd.f32 %v5880, %v5889
        %v5895 = vadd.f32 %v5881, %v5889
        %v5896 = vadd.f32 %v5882, %v5889
        %v5897 = vadd.f32 %v5883, %v5889
        %v5898 = vadd.f32 %v5884, %v5889
        %v5899 = vpack.c.bf16 %v5892, %v5891
        %v5900 = vpack.c.bf16 %v5894, %v5893
        %v5901 = vpack.c.bf16 %v5896, %v5895
        %v5902 = vpack.c.bf16 %v5898, %v5897
        %v5903 = vld [vmem:[%s880] sm:$0xf]
        %v5904 = vld [vmem:[%s880 + $0x4] sm:$0xf]
        %v5905 = vld [vmem:[%s880 + $0x8] sm:$0xf]
        %v5906 = vld [vmem:[%s880 + $0xc] sm:$0xf]
        %v5907 = vld [vmem:[%s757] sm:$0x1]
        %v5909 = vlaneseq
        %v5910 = vshrl.u32 %v5909, 7
        %v5911 = vsub.s32 0, %v5910
        %v5912 = vrot.slane %v5907, %v5911
        %v5918 = vunpack.c.l.b16 %v5903
        %v5919 = vunpack.c.l.b16 %v5904
        %v5920 = vunpack.c.l.b16 %v5905
        %v5921 = vunpack.c.l.b16 %v5906
        %v5922 = vpack.c.b16 %v5919, %v5918
        %v5923 = vpack.c.b16 %v5921, %v5920
        %v5927 = vsel %vm932, %v5899, 0
        %v5930 = vsel %vm932, %v5900, 0
        %v5933 = vsel %vm932, %v5901, 0
        %v5936 = vsel %vm932, %v5902, 0
        %5938 = vmatprep.subr.bf16.mxu0 0
        %5939 = vmatpush1.bf16.msra.mxu0 0
        %5940 = vmatprep.subr.bf16.mxu0 0
        %5941 = vmatpush1.bf16.msra.mxu0 0
        %5942 = vmatprep.subr.bf16.mxu0 0
        %5943 = vmatpush1.bf16.msra.mxu0 0
        %5944 = vmatprep.subr.bf16.mxu0 0
        %5945 = vmatpush1.bf16.msra.mxu0 0
        %5946 = vmatprep.subr.bf16.mxu0 0
        %5947 = vmatpush1.bf16.msra.mxu0 0
        %5948 = vmatprep.subr.bf16.mxu0 0
        %5949 = vmatpush1.bf16.msra.mxu0 0
        %5950 = vmatprep.subr.bf16.mxu0 0
        %5951 = vmatpush1.bf16.msra.mxu0 %v5923
        %5952 = vmatprep.subr.bf16.mxu0 0
        %5953 = vmatpush1.bf16.msra.mxu0 %v5922
        %5954 = vmatprep.subr.bf16.mxu0 0
        %5955 = vmatpush2.bf16.msra.mxu0 0
        %5956 = vmatprep.subr.bf16.mxu0 0
        %5957 = vmatpush2.bf16.msra.mxu0 0
        %5958 = vmatprep.subr.bf16.mxu0 0
        %5959 = vmatpush2.bf16.msra.mxu0 0
        %5960 = vmatprep.subr.bf16.mxu0 0
        %5961 = vmatpush2.bf16.msra.mxu0 0
        %5962 = vmatprep.subr.bf16.mxu0 0
        %5963 = vmatpush2.bf16.msra.mxu0 0
        %5964 = vmatprep.subr.bf16.mxu0 0
        %5965 = vmatpush2.bf16.msra.mxu0 0
        %5966 = vmatprep.subr.bf16.mxu0 0
        %5967 = vmatpush2.bf16.msra.mxu0 0
        %5968 = vmatprep.subr.bf16.mxu0 0
        %5969 = vmatpush2.bf16.msra.mxu0 0
        %5970 = vmatprep.mubr.bf16.mxu0 0
        %5971 = vmatmul.mubr.bf16.gmra.mxu0 %v5927
        %v5972 = vpop.f32.mrf.mxu0
        %v5973 = vadd.f32 %v5912, %v5972
        %v5974 = vpop.f32.mrf.mxu0
        %v5975 = vpop.f32.mrf.mxu0
        %v5976 = vadd.f32 %v5912, %v5975
        %v5977 = vpop.f32.mrf.mxu0
        %5978 = vmatprep.mubr.bf16.mxu0 0
        %5979 = vmatmul.mubr.bf16.gmra.mxu0 %v5930
        %v5980 = vpop.f32.mrf.mxu0
        %v5981 = vadd.f32 %v5912, %v5980
        %v5982 = vpop.f32.mrf.mxu0
        %v5983 = vpop.f32.mrf.mxu0
        %v5984 = vadd.f32 %v5912, %v5983
        %v5985 = vpop.f32.mrf.mxu0
        %5986 = vmatprep.mubr.bf16.mxu0 0
        %5987 = vmatmul.mubr.bf16.gmra.mxu0 %v5933
        %v5988 = vpop.f32.mrf.mxu0
        %v5989 = vadd.f32 %v5912, %v5988
        %v5990 = vpop.f32.mrf.mxu0
        %v5991 = vpop.f32.mrf.mxu0
        %v5992 = vadd.f32 %v5912, %v5991
        %v5993 = vpop.f32.mrf.mxu0
        %5994 = vmatprep.mubr.bf16.mxu0 0
        %5995 = vmatmul.mubr.bf16.gmra.mxu0 %v5936
        %v5996 = vpop.f32.mrf.mxu0
        %v5997 = vadd.f32 %v5912, %v5996
        %v5998 = vpop.f32.mrf.mxu0
        %v5999 = vpop.f32.mrf.mxu0
        %v6000 = vadd.f32 %v5912, %v5999
        %v6001 = vpop.f32.mrf.mxu0
        %6002 = vdwg.mxu0
        %v6003 = vpack.c.bf16 %v5976, %v5973
        %v6004 = vpack.c.bf16 %v5984, %v5981
        %v6005 = vpack.c.bf16 %v5992, %v5989
        %v6006 = vpack.c.bf16 %v6000, %v5997
        %v6007 = vmul.bf16 %v6003, 1071267802
        %v6008 = vmul.bf16 %v6004, 1071267802
        %v6009 = vmul.bf16 %v6005, 1071267802
        %v6010 = vmul.bf16 %v6006, 1071267802
        %v6011 = vxor.u32 %v6007, 2147516416
        %v6012 = vxor.u32 %v6008, 2147516416
        %v6013 = vxor.u32 %v6009, 2147516416
        %v6014 = vxor.u32 %v6010, 2147516416
        %v6016 = vmul.bf16 %v6011, 1069105081
        %v6017 = vpow.bf16.pop %v6016
        %v6019 = vmul.bf16 %v6012, 1069105081
        %v6020 = vpow.bf16.pop %v6019
        %v6022 = vmul.bf16 %v6013, 1069105081
        %v6023 = vpow.bf16.pop %v6022
        %v6025 = vmul.bf16 %v6014, 1069105081
        %v6026 = vpow.bf16.pop %v6025
        %v6027 = vadd.bf16 %v6017, 1065369472
        %v6028 = vadd.bf16 %v6020, 1065369472
        %v6029 = vadd.bf16 %v6023, 1065369472
        %v6030 = vadd.bf16 %v6026, 1065369472
        %v6031 = vrcp.bf16.pop %v6027
        %v6032 = vmul.bf16 1065369472, %v6031
        %v6033 = vrcp.bf16.pop %v6028
        %v6034 = vmul.bf16 1065369472, %v6033
        %v6035 = vrcp.bf16.pop %v6029
        %v6036 = vmul.bf16 1065369472, %v6035
        %v6037 = vrcp.bf16.pop %v6030
        %v6038 = vmul.bf16 1065369472, %v6037
        %v6039 = vmul.bf16 %v6003, %v6032
        %v6040 = vmul.bf16 %v6004, %v6034
        %v6041 = vmul.bf16 %v6005, %v6036
        %v6042 = vmul.bf16 %v6006, %v6038
        %v6043 = vld [vmem:[%s885] sm:$0xf]
        %v6044 = vld [vmem:[%s885 + $0x4] sm:$0xf]
        %v6045 = vld [vmem:[%s885 + $0x8] sm:$0xf]
        %v6046 = vld [vmem:[%s885 + $0xc] sm:$0xf]
        %v6047 = vld [vmem:[%s885 + $0x10] sm:$0xf]
        %v6048 = vld [vmem:[%s885 + $0x14] sm:$0xf]
        %v6049 = vld [vmem:[%s885 + $0x18] sm:$0xf]
        %v6050 = vld [vmem:[%s885 + $0x1c] sm:$0xf]
        %v6051 = vld [vmem:[%s885 + $0x20] sm:$0xf]
        %v6052 = vld [vmem:[%s885 + $0x24] sm:$0xf]
        %v6053 = vld [vmem:[%s885 + $0x28] sm:$0xf]
        %v6054 = vld [vmem:[%s885 + $0x2c] sm:$0xf]
        %v6055 = vld [vmem:[%s885 + $0x30] sm:$0xf]
        %v6056 = vld [vmem:[%s885 + $0x34] sm:$0xf]
        %v6057 = vld [vmem:[%s885 + $0x38] sm:$0xf]
        %v6058 = vld [vmem:[%s885 + $0x3c] sm:$0xf]
        %v6075 = vunpack.c.l.b16 %v6043
        %v6076 = vunpack.c.l.b16 %v6044
        %v6077 = vunpack.c.l.b16 %v6045
        %v6078 = vunpack.c.l.b16 %v6046
        %v6079 = vunpack.c.l.b16 %v6047
        %v6080 = vunpack.c.l.b16 %v6048
        %v6081 = vunpack.c.l.b16 %v6049
        %v6082 = vunpack.c.l.b16 %v6050
        %v6083 = vunpack.c.l.b16 %v6051
        %v6084 = vunpack.c.l.b16 %v6052
        %v6085 = vunpack.c.l.b16 %v6053
        %v6086 = vunpack.c.l.b16 %v6054
        %v6087 = vunpack.c.l.b16 %v6055
        %v6088 = vunpack.c.l.b16 %v6056
        %v6089 = vunpack.c.l.b16 %v6057
        %v6090 = vunpack.c.l.b16 %v6058
        %v6091 = vpack.c.b16 %v6076, %v6075
        %v6092 = vpack.c.b16 %v6078, %v6077
        %v6093 = vpack.c.b16 %v6080, %v6079
        %v6094 = vpack.c.b16 %v6082, %v6081
        %v6095 = vpack.c.b16 %v6084, %v6083
        %v6096 = vpack.c.b16 %v6086, %v6085
        %v6097 = vpack.c.b16 %v6088, %v6087
        %v6098 = vpack.c.b16 %v6090, %v6089
        %6107 = vmatprep.subr.bf16.mxu0 0
        %6108 = vmatpush1.bf16.msra.mxu0 %v6098
        %6109 = vmatprep.subr.bf16.mxu0 0
        %6110 = vmatpush1.bf16.msra.mxu0 %v6097
        %6111 = vmatprep.subr.bf16.mxu0 0
        %6112 = vmatpush1.bf16.msra.mxu0 %v6096
        %6113 = vmatprep.subr.bf16.mxu0 0
        %6114 = vmatpush1.bf16.msra.mxu0 %v6095
        %6115 = vmatprep.subr.bf16.mxu0 0
        %6116 = vmatpush1.bf16.msra.mxu0 %v6094
        %6117 = vmatprep.subr.bf16.mxu0 0
        %6118 = vmatpush1.bf16.msra.mxu0 %v6093
        %6119 = vmatprep.subr.bf16.mxu0 0
        %6120 = vmatpush1.bf16.msra.mxu0 %v6092
        %6121 = vmatprep.subr.bf16.mxu0 0
        %6122 = vmatpush1.bf16.msra.mxu0 %v6091
        %6123 = vmatprep.subr.bf16.mxu0 0
        %6124 = vmatpush2.bf16.msra.mxu0 0
        %6125 = vmatprep.subr.bf16.mxu0 0
        %6126 = vmatpush2.bf16.msra.mxu0 0
        %6127 = vmatprep.subr.bf16.mxu0 0
        %6128 = vmatpush2.bf16.msra.mxu0 0
        %6129 = vmatprep.subr.bf16.mxu0 0
        %6130 = vmatpush2.bf16.msra.mxu0 0
        %6131 = vmatprep.subr.bf16.mxu0 0
        %6132 = vmatpush2.bf16.msra.mxu0 0
        %6133 = vmatprep.subr.bf16.mxu0 0
        %6134 = vmatpush2.bf16.msra.mxu0 0
        %6135 = vmatprep.subr.bf16.mxu0 0
        %6136 = vmatpush2.bf16.msra.mxu0 0
        %6137 = vmatprep.subr.bf16.mxu0 0
        %6138 = vmatpush2.bf16.msra.mxu0 0
        %6139 = vmatprep.mubr.bf16.mxu0 0
        %6140 = vmatmul.mubr.bf16.gmra.mxu0 %v6039
        %v6141 = vpop.f32.mrf.mxu0
        %v6142 = vadd.f32 0.0, %v6141
        %v6143 = vpop.f32.mrf.mxu0
        %v6144 = vpop.f32.mrf.mxu0
        %v6145 = vadd.f32 0.0, %v6144
        %v6146 = vpop.f32.mrf.mxu0
        %6147 = vmatprep.mubr.bf16.mxu0 0
        %6148 = vmatmul.mubr.bf16.gmra.mxu0 %v6040
        %v6149 = vpop.f32.mrf.mxu0
        %v6150 = vadd.f32 0.0, %v6149
        %v6151 = vpop.f32.mrf.mxu0
        %v6152 = vpop.f32.mrf.mxu0
        %v6153 = vadd.f32 0.0, %v6152
        %v6154 = vpop.f32.mrf.mxu0
        %6155 = vmatprep.mubr.bf16.mxu0 0
        %6156 = vmatmul.mubr.bf16.gmra.mxu0 %v6041
        %v6157 = vpop.f32.mrf.mxu0
        %v6158 = vadd.f32 0.0, %v6157
        %v6159 = vpop.f32.mrf.mxu0
        %v6160 = vpop.f32.mrf.mxu0
        %v6161 = vadd.f32 0.0, %v6160
        %v6162 = vpop.f32.mrf.mxu0
        %6163 = vmatprep.mubr.bf16.mxu0 0
        %6164 = vmatmul.mubr.bf16.gmra.mxu0 %v6042
        %v6165 = vpop.f32.mrf.mxu0
        %v6166 = vadd.f32 0.0, %v6165
        %v6167 = vpop.f32.mrf.mxu0
        %v6168 = vpop.f32.mrf.mxu0
        %v6169 = vadd.f32 0.0, %v6168
        %v6170 = vpop.f32.mrf.mxu0
        %6171 = vdwg.mxu0
        %v6172 = vadd.f32 %v5757, %v6142
        %v6173 = vadd.f32 %v5758, %v6145
        %v6174 = vadd.f32 %v5759, %v6150
        %v6175 = vadd.f32 %v5760, %v6153
        %v6176 = vadd.f32 %v5761, %v6158
        %v6177 = vadd.f32 %v5762, %v6161
        %v6178 = vadd.f32 %v5763, %v6166
        %v6179 = vadd.f32 %v5764, %v6169
        %v6180 = vld [vmem:[%s888] sm:$0x1]
        %v6182 = vlaneseq
        %v6183 = vshrl.u32 %v6182, 7
        %v6184 = vsub.s32 0, %v6183
        %v6185 = vrot.slane %v6180, %v6184
        %v6187 = vadd.f32 %v6172, %v6185
        %v6188 = vadd.f32 %v6173, %v6185
        %v6189 = vadd.f32 %v6174, %v6185
        %v6190 = vadd.f32 %v6175, %v6185
        %v6191 = vadd.f32 %v6176, %v6185
        %v6192 = vadd.f32 %v6177, %v6185
        %v6193 = vadd.f32 %v6178, %v6185
        %v6194 = vadd.f32 %v6179, %v6185
        %6195 = vst.msk [vmem:[#allocation2] sm:$0xff] %vm932, %v6187
        %6196 = vst.msk [vmem:[#allocation2 + $0x8] sm:$0xff] %vm932, %v6188
        %6197 = vst.msk [vmem:[#allocation2 + $0x10] sm:$0xff] %vm932, %v6189
        %6198 = vst.msk [vmem:[#allocation2 + $0x18] sm:$0xff] %vm932, %v6190
        %6199 = vst.msk [vmem:[#allocation2 + $0x20] sm:$0xff] %vm932, %v6191
        %6200 = vst.msk [vmem:[#allocation2 + $0x28] sm:$0xff] %vm932, %v6192
        %6201 = vst.msk [vmem:[#allocation2 + $0x30] sm:$0xff] %vm932, %v6193
        %6202 = vst.msk [vmem:[#allocation2 + $0x38] sm:$0xff] %vm932, %v6194
        %p6203 = scmp.eq.s32.totalorder %s42, 1
        // Predicated region
        $region125: #{tpu_custom_call.1} parent=91 // pred_check
          %p6204 = pneg %p6203
        $region126: #{tpu_custom_call.1} parent=91 // pred_check_branch
          %6206 = sbr.rel (%p6204) target = $region128
        $region127: #{tpu_custom_call.1} parent=91 // pred_region
          %s6207 = smul.u32 %s41, 8
          %s6208 = sld [smem:[#allocation4 + %s6207]]
          %s6209 = scalar_lea.vmem [#allocation2], %s6208
          %v6210 = vld [vmem:[%s6209] sm:$0x1]
          %s6211 = sadd.s32 %s6207, 1
          %s6212 = sld [smem:[#allocation4 + %s6211]]
          %s6213 = sadd.s32 %s6212, 8
          %s6214 = scalar_lea.vmem [#allocation2], %s6213
          %v6215 = vld [vmem:[%s6214] sm:$0x1]
          %s6216 = sadd.s32 %s6207, 2
          %s6217 = sld [smem:[#allocation4 + %s6216]]
          %s6218 = sadd.s32 %s6217, 16
          %s6219 = scalar_lea.vmem [#allocation2], %s6218
          %v6220 = vld [vmem:[%s6219] sm:$0x1]
          %s6221 = sadd.s32 %s6207, 3
          %s6222 = sld [smem:[#allocation4 + %s6221]]
          %s6223 = sadd.s32 %s6222, 24
          %s6224 = scalar_lea.vmem [#allocation2], %s6223
          %v6225 = vld [vmem:[%s6224] sm:$0x1]
          %s6226 = sadd.s32 %s6207, 4
          %s6227 = sld [smem:[#allocation4 + %s6226]]
          %s6228 = sadd.s32 %s6227, 32
          %s6229 = scalar_lea.vmem [#allocation2], %s6228
          %v6230 = vld [vmem:[%s6229] sm:$0x1]
          %s6231 = sadd.s32 %s6207, 5
          %s6232 = sld [smem:[#allocation4 + %s6231]]
          %s6233 = sadd.s32 %s6232, 40
          %s6234 = scalar_lea.vmem [#allocation2], %s6233
          %v6235 = vld [vmem:[%s6234] sm:$0x1]
          %s6236 = sadd.s32 %s6207, 6
          %s6237 = sld [smem:[#allocation4 + %s6236]]
          %s6238 = sadd.s32 %s6237, 48
          %s6239 = scalar_lea.vmem [#allocation2], %s6238
          %v6240 = vld [vmem:[%s6239] sm:$0x1]
          %s6241 = sadd.s32 %s6207, 7
          %s6242 = sld [smem:[#allocation4 + %s6241]]
          %s6243 = sadd.s32 %s6242, 56
          %s6244 = scalar_lea.vmem [#allocation2], %s6243
          %v6245 = vld [vmem:[%s6244] sm:$0x1]
          %v6247 = vrot.slane %v6215, 7
          %v6250 = vrot.slane %v6220, 6
          %v6253 = vrot.slane %v6225, 5
          %v6256 = vrot.slane %v6230, 4
          %v6259 = vrot.slane %v6235, 3
          %v6262 = vrot.slane %v6240, 2
          %v6265 = vrot.slane %v6245, 1
          %vm6267 = vcmask 1040384
          %v6268 = vsel %vm6267, %v6210, %v6247
          %vm6269 = vcmask 1041408
          %v6270 = vsel %vm6269, %v6268, %v6250
          %vm6271 = vcmask 1042432
          %v6272 = vsel %vm6271, %v6270, %v6253
          %v6273 = vsel %vm1543, %v6272, %v6256
          %vm6274 = vcmask 1044480
          %v6275 = vsel %vm6274, %v6273, %v6259
          %vm6276 = vcmask 1045504
          %v6277 = vsel %vm6276, %v6275, %v6262
          %vm6278 = vcmask 1046528
          %v6279 = vsel %vm6278, %v6277, %v6265
          %v6280 = vld [vmem:[%s16] sm:$0x1]
          %v6281 = vld [vmem:[%s17] sm:$0x1]
          %v6282 = vsel %vm932, %v6279, 0.0
          %6283 = vadd.xlane.f32.xlu0 %v6282
          %v6284 = vpop.xlane.xlu0 %6283
          %v6285 = vmul.f32 %v6284, %v957
          %v6286 = vsub.f32 %v6279, %v6285
          %v6287 = vmul.f32 %v6286, %v6286
          %v6288 = vsel %vm932, %v6287, 0.0
          %6289 = vadd.xlane.f32.xlu0 %v6288
          %v6290 = vpop.xlane.xlu0 %6289
          %v6291 = vmul.f32 %v6290, %v957
          %v6292 = vadd.f32 %v6291, 1e-05
          %v6293 = vrsqrt.pop %v6292
          %v6294 = vmul.f32 %v6286, %v6293
          %v6296 = vlaneseq
          %v6297 = vshrl.u32 %v6296, 7
          %v6298 = vsub.s32 0, %v6297
          %v6299 = vrot.slane %v6280, %v6298
          %v6301 = vmul.f32 %v6294, %v6299
          %v6303 = vlaneseq
          %v6304 = vshrl.u32 %v6303, 7
          %v6305 = vsub.s32 0, %v6304
          %v6306 = vrot.slane %v6281, %v6305
          %v6308 = vadd.f32 %v6301, %v6306
          %v6309 = vpack.c.bf16 %v6308, %v6308
          %v6310 = vld [vmem:[%s18] sm:$0xf]
          %v6311 = vld [vmem:[%s18 + $0x4] sm:$0xf]
          %v6312 = vld [vmem:[%s18 + $0x8] sm:$0xf]
          %v6313 = vld [vmem:[%s18 + $0xc] sm:$0xf]
          %v6318 = vunpack.c.l.b16 %v6310
          %v6319 = vunpack.c.l.b16 %v6311
          %v6320 = vunpack.c.l.b16 %v6312
          %v6321 = vunpack.c.l.b16 %v6313
          %v6322 = vpack.c.b16 %v6319, %v6318
          %v6323 = vpack.c.b16 %v6321, %v6320
          %v6327 = vsel %vm932, %v6309, 0
          %6329 = vmatprep.subr.bf16.mxu0 0
          %6330 = vmatpush1.bf16.msra.mxu0 0
          %6331 = vmatprep.subr.bf16.mxu0 0
          %6332 = vmatpush1.bf16.msra.mxu0 0
          %6333 = vmatprep.subr.bf16.mxu0 0
          %6334 = vmatpush1.bf16.msra.mxu0 0
          %6335 = vmatprep.subr.bf16.mxu0 0
          %6336 = vmatpush1.bf16.msra.mxu0 0
          %6337 = vmatprep.subr.bf16.mxu0 0
          %6338 = vmatpush1.bf16.msra.mxu0 0
          %6339 = vmatprep.subr.bf16.mxu0 0
          %6340 = vmatpush1.bf16.msra.mxu0 0
          %6341 = vmatprep.subr.bf16.mxu0 0
          %6342 = vmatpush1.bf16.msra.mxu0 %v6323
          %6343 = vmatprep.subr.bf16.mxu0 0
          %6344 = vmatpush1.bf16.msra.mxu0 %v6322
          %6345 = vmatprep.subr.bf16.mxu0 0
          %6346 = vmatpush2.bf16.msra.mxu0 0
          %6347 = vmatprep.subr.bf16.mxu0 0
          %6348 = vmatpush2.bf16.msra.mxu0 0
          %6349 = vmatprep.subr.bf16.mxu0 0
          %6350 = vmatpush2.bf16.msra.mxu0 0
          %6351 = vmatprep.subr.bf16.mxu0 0
          %6352 = vmatpush2.bf16.msra.mxu0 0
          %6353 = vmatprep.subr.bf16.mxu0 0
          %6354 = vmatpush2.bf16.msra.mxu0 0
          %6355 = vmatprep.subr.bf16.mxu0 0
          %6356 = vmatpush2.bf16.msra.mxu0 0
          %6357 = vmatprep.subr.bf16.mxu0 0
          %6358 = vmatpush2.bf16.msra.mxu0 0
          %6359 = vmatprep.subr.bf16.mxu0 0
          %6360 = vmatpush2.bf16.msra.mxu0 0
          %6361 = vmatprep.mubr.bf16.mxu0 0
          %6362 = vmatmul.mubr.bf16.gmra.mxu0 %v6327
          %v6363 = vpop.f32.mrf.mxu0
          %v6364 = vadd.f32 0.0, %v6363
          %v6365 = vpop.f32.mrf.mxu0
          %v6366 = vpop.f32.mrf.mxu0
          %v6367 = vpop.f32.mrf.mxu0
          %6368 = vdwg.mxu0
          %vm6369 = vcmask 523264
          %6370 = vst.msk [vmem:[#allocation15] sm:$0xff] %vm6369, %v6364
        $region128: #{tpu_custom_call.1} parent=91 // pred_fallthru
          _
        // Predicated region
        $region129: #{tpu_custom_call.1} parent=91 // pred_check
          %p6371 = pneg %p510
        $region130: #{tpu_custom_call.1} parent=91 // pred_check_branch
          %6373 = sbr.rel (%p6371) target = $region132
        $region131: #{tpu_custom_call.1} parent=91 // pred_region
          %s6375 = ssub.s32 128, 128
          %6376 = vsyncadd [#allocation7], %s6375
          %s6377 = smul.addr %s41, 128
          %s6378 = scalar_lea.hbm %s19, %s6377
          %s6380 = sshll.u32 [#allocation15], 4
          %s6381 = int_to_ptr.vmem [resolvable:$true] %s6380
          %6383 = dma.vmem_to_hbm [thread:$0]  %s6381, 128, %s6378, [#allocation7]
        $region132: #{tpu_custom_call.1} parent=91 // pred_fallthru
          _
        // Predicated region
        $region133: #{tpu_custom_call.1} parent=91 // pred_check
          %p6384 = pneg %p510
        $region134: #{tpu_custom_call.1} parent=91 // pred_check_branch
          %6386 = sbr.rel (%p6384) target = $region136
        $region135: #{tpu_custom_call.1} parent=91 // pred_region
          %6387 = dma.done [#allocation7], 128
        $region136: #{tpu_custom_call.1} parent=91 // pred_fallthru
          _
      $region92: #{tpu_custom_call.1} parent=5 // pred_fallthru
        _
      %p6388 = scmp.le.s32.totalorder 2, %s32
      // Predicated region
      $region137: #{tpu_custom_call.1} parent=5 // pred_check
        %p6389 = pneg %p6388
      $region138: #{tpu_custom_call.1} parent=5 // pred_check_branch
        %6391 = sbr.rel (%p6389) target = $region140
      $region139: #{tpu_custom_call.1} parent=5 // pred_region
        %s6392 = ssub.s32 %s32, 2
      $region140: #{tpu_custom_call.1} parent=5 // pred_fallthru
        _
    $region6: #{tpu_custom_call.1} parent=1 // loop_footer
      %s36 = sadd.s32 1, %s32
    $region7: #{tpu_custom_call.1} parent=1 // loop_footer_branch
      %31 = sbr.rel target = $region3
    $region8: #{tpu_custom_call.1} parent=1 // loop_exit
      _
    %6393 = vsyncpa [#allocation6], 1
    %s6394 = scalar_lea.sflag [#allocation6], 1
    %6395 = vsyncpa %s6394, 1
    %6396 = vsyncpa [#allocation9], 1
    %6397 = vsyncpa [#allocation7], 1
    %s6398 = scalar_lea.sflag [#allocation7], 1
    %6399 = vsyncpa %s6398, 1

</llo_original>
